<compile_context>
chip_gen: v6e
topology: v6e:2x2x1
jax: 0.10.0
libtpu: 0.0.40
codegen_flags: <defaults>
</compile_context>

<pallas_src>
import functools
import math

import jax
import jax.numpy as jnp
from jax.experimental import pallas as pl
from jax.experimental.pallas import tpu as pltpu


def _round_up(x, m):
    return ((x + m - 1) // m) * m


# ----------------------------------------------------------------------------
# The fused kernel (one batch element per grid step)
# ----------------------------------------------------------------------------
def _fused_forward_kernel(
    cxr_ref, enh_ref,            # (1, HW, Cin) f32 each
    convw_ref, convb_ref,        # (2, Cin, C) bf16 / (2, 1, C) f32
    tok_ref,                     # (T, C) f32   (cls_token + pos_emb pre-combined)
    ln1g_ref, ln1b_ref,          # (L, 1, C) f32
    wqkv_ref, bqkv_ref,          # (L, C, 3C) bf16 / (L, 1, 3C) f32 (q part pre-scaled)
    wo_ref, bo_ref,              # (L, C, C) bf16 / (L, 1, C) f32
    ln2g_ref, ln2b_ref,          # (L, 1, C) f32
    wfc1_ref, bfc1_ref,          # (L, C, H) bf16 / (L, 1, H) f32
    wfc2_ref, bfc2_ref,          # (L, H, C) bf16 / (L, 1, C) f32
    lnfg_ref, lnfb_ref,          # (1, C) f32
    wcls_ref, bcls_ref,          # (C, NPAD) bf16 / (1, NPAD) f32
    out_ref,                     # (1, 1, NPAD) f32
    xs_ref, ysc_ref,             # scratch: (T, C) f32, (T, C) f32
    *, n_layer, n_head, eps,
):
    T, C = xs_ref.shape
    HW = cxr_ref.shape[1]
    hd = C // n_head

    def layer_norm(v, g, b):
        mean = jnp.mean(v, axis=-1, keepdims=True)
        var = jnp.mean(jnp.square(v - mean), axis=-1, keepdims=True)
        return (v - mean) * jax.lax.rsqrt(var + eps) * g + b

    # --- 1x1-conv embeddings + token assembly: [cls | image tokens | lidar tokens]
    img = jnp.dot(cxr_ref[0].astype(jnp.bfloat16), convw_ref[0],
                  preferred_element_type=jnp.float32) + convb_ref[0]       # (HW, C)
    lid = jnp.dot(enh_ref[0].astype(jnp.bfloat16), convw_ref[1],
                  preferred_element_type=jnp.float32) + convb_ref[1]       # (HW, C)
    xs_ref[0:1, :] = tok_ref[0:1, :]                       # cls + pos_emb[0]
    xs_ref[1:1 + HW, :] = tok_ref[1:1 + HW, :] + img
    xs_ref[1 + HW:T, :] = tok_ref[1 + HW:T, :] + lid
    x = xs_ref[...]                                        # (T, C) f32

    # --- transformer blocks (static unroll over layers; weights VMEM-resident)
    for l in range(n_layer):
        # LN1 + fused QKV projection (softmax scale is folded into the q weights)
        h1 = layer_norm(x, ln1g_ref[l], ln1b_ref[l])
        qkv = jnp.dot(h1.astype(jnp.bfloat16), wqkv_ref[l],
                      preferred_element_type=jnp.float32) + bqkv_ref[l]    # (T, 3C)
        qkv16 = qkv.astype(jnp.bfloat16)

        # Per-head attention; normalized outputs land in lane slices of ysc_ref so a
        # single full-depth (K=C) matmul against wo follows.
        for hh in range(n_head):
            q = qkv16[:, hh * hd:(hh + 1) * hd]                            # (T, hd)
            k = qkv16[:, C + hh * hd:C + (hh + 1) * hd]                    # (T, hd)
            v = qkv16[:, 2 * C + hh * hd:2 * C + (hh + 1) * hd]            # (T, hd)
            s = jax.lax.dot_general(q, k, (((1,), (1,)), ((), ())),
                                    preferred_element_type=jnp.float32)    # (T, T)
            s = s - jnp.max(s, axis=-1, keepdims=True)
            p = jnp.exp(s)
            denom = jnp.sum(p, axis=-1, keepdims=True)
            y = jax.lax.dot_general(p.astype(jnp.bfloat16), v,
                                    (((1,), (0,)), ((), ())),
                                    preferred_element_type=jnp.float32)    # (T, hd)
            ysc_ref[:, hh * hd:(hh + 1) * hd] = y * (1.0 / denom)

        att = jnp.dot(ysc_ref[...].astype(jnp.bfloat16), wo_ref[l],
                      preferred_element_type=jnp.float32) + bo_ref[l]      # (T, C)
        x = x + att

        # LN2 + MLP (fc1 -> ReLU -> fc2) + residual
        h2 = layer_norm(x, ln2g_ref[l], ln2b_ref[l])
        m = jnp.dot(h2.astype(jnp.bfloat16), wfc1_ref[l],
                    preferred_element_type=jnp.float32) + bfc1_ref[l]
        m = jnp.maximum(m, 0.0)
        x = x + jnp.dot(m.astype(jnp.bfloat16), wfc2_ref[l],
                        preferred_element_type=jnp.float32) + bfc2_ref[l]

    # --- ln_f + all classifier heads (lane-padded); only the CLS row is needed.
    hf = layer_norm(x, lnfg_ref[...], lnfb_ref[...])
    logits = jnp.dot(hf.astype(jnp.bfloat16), wcls_ref[...],
                     preferred_element_type=jnp.float32) + bcls_ref[...]   # (T, NPAD)
    out_ref[0] = logits[0:1, :]


# ----------------------------------------------------------------------------
# Wrapper: one pallas_call for the whole forward pass
# ----------------------------------------------------------------------------
def fus_attention_forward(cxr_feat, enh_feat, params, cfg):
    """Fus_Attention.forward (backbone omitted -> inputs are backbone features, NCHW)."""
    assert cfg["n_views"] == 1 and cfg["seq_len"] == 1, "fused kernel implements s=1"
    B, Cin, H, W = cxr_feat.shape
    HW = H * W
    C = cfg["n_embd"]
    L = cfg["n_layer"]
    Hd = cfg["block_exp"] * C
    T = params["tok_bias"].shape[0]
    NPAD = params["wcls"].shape[1]

    # NCHW -> (B, HW, Cin): the only wrapper-side data-movement ops (tiny, entry path).
    cxr = jnp.transpose(cxr_feat, (0, 2, 3, 1)).reshape(B, HW, Cin)
    enh = jnp.transpose(enh_feat, (0, 2, 3, 1)).reshape(B, HW, Cin)

    kernel = functools.partial(
        _fused_forward_kernel,
        n_layer=L, n_head=cfg["n_head"], eps=1e-6,
    )

    def full(shape):
        return pl.BlockSpec(shape, lambda b, _s=len(shape): (0,) * _s)

    out = pl.pallas_call(
        kernel,
        out_shape=jax.ShapeDtypeStruct((B, 1, NPAD), jnp.float32),
        grid=(B,),
        in_specs=[
            pl.BlockSpec((1, HW, Cin), lambda b: (b, 0, 0)),   # cxr features
            pl.BlockSpec((1, HW, Cin), lambda b: (b, 0, 0)),   # enh features
            full((2, Cin, C)), full((2, 1, C)),                # conv1x1 weights/biases
            full((T, C)),                                      # cls + pos_emb
            full((L, 1, C)), full((L, 1, C)),                  # ln1
            full((L, C, 3 * C)), full((L, 1, 3 * C)),          # wqkv / bqkv
            full((L, C, C)), full((L, 1, C)),                  # wo / bo
            full((L, 1, C)), full((L, 1, C)),                  # ln2
            full((L, C, Hd)), full((L, 1, Hd)),                # fc1
            full((L, Hd, C)), full((L, 1, C)),                 # fc2
            full((1, C)), full((1, C)),                        # ln_f
            full((C, NPAD)), full((1, NPAD)),                  # fused classifiers
        ],
        out_specs=pl.BlockSpec((1, 1, NPAD), lambda b: (b, 0, 0)),
        scratch_shapes=[
            pltpu.VMEM((T, C), jnp.float32),   # token slab
            pltpu.VMEM((T, C), jnp.float32),   # per-head attention outputs
        ],
        compiler_params=pltpu.CompilerParams(
            dimension_semantics=("parallel",),
            # ~8 MiB used (double-buffered); keep under 32 MiB scoped limit.
            # NOTE: v7x has only 64 MiB physical VMEM -> re-budget if scaling T/C/L.
            vmem_limit_bytes=32 * 1024 * 1024,
        ),
    )(
        cxr, enh,
        params["conv_w"], params["conv_b"], params["tok_bias"],
        params["ln1_g"], params["ln1_b"],
        params["wqkv"], params["bqkv"],
        params["wo"], params["bo"],
        params["ln2_g"], params["ln2_b"],
        params["w_fc1"], params["b_fc1"],
        params["w_fc2"], params["b_fc2"],
        params["lnf_g"], params["lnf_b"],
        params["wcls"], params["bcls"],
    )

    logits_all = out[:, 0, :]                  # (B, NPAD)
    logits, off = [], 0
    for nc in params["cls_sizes"]:
        logits.append(logits_all[:, off:off + nc])
        off += nc
    return logits


# ----------------------------------------------------------------------------
# Deterministic parameter init (matches module __init__ shapes) + fusion/cast
# ----------------------------------------------------------------------------
def init_params(key, cfg, num_classes):
    n_embd = cfg["n_embd"]
    hidden = cfg["block_exp"] * n_embd
    seq_tokens = (
        (cfg["n_views"] + 1) * cfg["seq_len"] * cfg["vert_anchors"] * cfg["horz_anchors"]
        + 1
    )

    def nrm(k, shape, std):
        return std * jax.random.normal(k, shape, dtype=jnp.float32)

    keys = iter(jax.random.split(key, 64))
    params = {
        "conv_cxr_w": nrm(next(keys), (1024, n_embd), 0.02),
        "conv_cxr_b": jnp.zeros((n_embd,), jnp.float32),
        "conv_enh_w": nrm(next(keys), (1024, n_embd), 0.02),
        "conv_enh_b": jnp.zeros((n_embd,), jnp.float32),
    }
    blocks = []
    for _ in range(cfg["n_layer"]):
        blocks.append(
            {
                "ln1_g": jnp.ones((n_embd,), jnp.float32),
                "ln1_b": jnp.zeros((n_embd,), jnp.float32),
                "ln2_g": jnp.ones((n_embd,), jnp.float32),
                "ln2_b": jnp.zeros((n_embd,), jnp.float32),
                "wq": nrm(next(keys), (n_embd, n_embd), 0.02),
                "bq": jnp.zeros((n_embd,), jnp.float32),
                "wk": nrm(next(keys), (n_embd, n_embd), 0.02),
                "bk": jnp.zeros((n_embd,), jnp.float32),
                "wv": nrm(next(keys), (n_embd, n_embd), 0.02),
                "bv": jnp.zeros((n_embd,), jnp.float32),
                "wo": nrm(next(keys), (n_embd, n_embd), 0.02),
                "bo": jnp.zeros((n_embd,), jnp.float32),
                "w_fc1": nrm(next(keys), (n_embd, hidden), 0.02),
                "b_fc1": jnp.zeros((hidden,), jnp.float32),
                "w_fc2": nrm(next(keys), (hidden, n_embd), 0.02),
                "b_fc2": jnp.zeros((n_embd,), jnp.float32),
            }
        )
    params["gpt"] = {
        "pos_emb": jnp.zeros((1, seq_tokens, n_embd), jnp.float32),
        "cls_token": jnp.zeros((1, 1, n_embd), jnp.float32),
        "blocks": blocks,
        "lnf_g": jnp.ones((n_embd,), jnp.float32),
        "lnf_b": jnp.zeros((n_embd,), jnp.float32),
    }
    classifiers = []
    for nc in num_classes:
        classifiers.append(
            (nrm(next(keys), (n_embd, nc), 0.01), jnp.zeros((nc,), jnp.float32))
        )
    params["classifiers"] = classifiers
    return params


def prepare_params(params, cfg):
    """Stack per-layer weights, fold softmax scale into wq, fuse QKV / classifiers,
    pre-cast matmul weights to bf16, and pre-combine cls_token + pos_emb."""
    C = cfg["n_embd"]
    scale = 1.0 / math.sqrt(C // cfg["n_head"])
    gpt = params["gpt"]
    blocks = gpt["blocks"]

    out = {
        "conv_w": jnp.stack(
            [params["conv_cxr_w"], params["conv_enh_w"]]).astype(jnp.bfloat16),
        "conv_b": jnp.stack([params["conv_cxr_b"], params["conv_enh_b"]])[:, None, :],
    }
    # Token bias: row 0 = cls_token + pos_emb[0], remaining rows = pos_emb rows.
    out["tok_bias"] = gpt["pos_emb"][0].at[0].add(gpt["cls_token"][0, 0])

    wqkv, bqkv = [], []
    for blk in blocks:
        wqkv.append(jnp.concatenate([blk["wq"] * scale, blk["wk"], blk["wv"]], axis=1))
        bqkv.append(jnp.concatenate([blk["bq"] * scale, blk["bk"], blk["bv"]]))
    out["wqkv"] = jnp.stack(wqkv).astype(jnp.bfloat16)
    out["bqkv"] = jnp.stack(bqkv)[:, None, :]
    out["ln1_g"] = jnp.stack([b["ln1_g"] for b in blocks])[:, None, :]
    out["ln1_b"] = jnp.stack([b["ln1_b"] for b in blocks])[:, None, :]
    out["wo"] = jnp.stack([b["wo"] for b in blocks]).astype(jnp.bfloat16)
    out["bo"] = jnp.stack([b["bo"] for b in blocks])[:, None, :]
    out["ln2_g"] = jnp.stack([b["ln2_g"] for b in blocks])[:, None, :]
    out["ln2_b"] = jnp.stack([b["ln2_b"] for b in blocks])[:, None, :]
    out["w_fc1"] = jnp.stack([b["w_fc1"] for b in blocks]).astype(jnp.bfloat16)
    out["b_fc1"] = jnp.stack([b["b_fc1"] for b in blocks])[:, None, :]
    out["w_fc2"] = jnp.stack([b["w_fc2"] for b in blocks]).astype(jnp.bfloat16)
    out["b_fc2"] = jnp.stack([b["b_fc2"] for b in blocks])[:, None, :]
    out["lnf_g"] = gpt["lnf_g"][None, :]
    out["lnf_b"] = gpt["lnf_b"][None, :]

    ws = [w for w, _ in params["classifiers"]]
    bs = [b for _, b in params["classifiers"]]
    wcat = jnp.concatenate(ws, axis=1)
    bcat = jnp.concatenate(bs)
    npad = _round_up(wcat.shape[1], 128)   # lane-dense classifier output
    out["wcls"] = jnp.pad(wcat, ((0, 0), (0, npad - wcat.shape[1]))).astype(jnp.bfloat16)
    out["bcls"] = jnp.pad(bcat, (0, npad - bcat.shape[0]))[None, :]
    out["cls_sizes"] = [w.shape[1] for w in ws]
    return out


# ----------------------------------------------------------------------------
if __name__ == "__main__":
    cfg = {
        "n_embd": 256,
        "n_head": 4,
        "block_exp": 4,
        "n_layer": 2,
        "n_views": 1,
        "seq_len": 1,
        "vert_anchors": 2,
        "horz_anchors": 2,
    }
    num_classes = [3, 5]

    key = jax.random.PRNGKey(0)
    k_params, k_cxr, k_enh = jax.random.split(key, 3)
    params = prepare_params(init_params(k_params, cfg, num_classes), cfg)

    # Backbone feature maps (stand-ins for the pretrained CNN outputs), NCHW.
    B, C_feat = 2, 1024
    H = cfg["vert_anchors"]
    W = cfg["horz_anchors"]
    cxr_feat = jax.random.normal(k_cxr, (B, C_feat, H, W), dtype=jnp.float32)
    enh_feat = jax.random.normal(k_enh, (B, C_feat, H, W), dtype=jnp.float32)

    logits = fus_attention_forward(cxr_feat, enh_feat, params, cfg)
    logits = [jax.block_until_ready(l) for l in logits]

    assert logits[0].shape == (B, num_classes[0])
    assert logits[1].shape == (B, num_classes[1])
    assert all(bool(jnp.all(jnp.isfinite(l))) for l in logits)
    print("KERNEL_OK")
</pallas_src>

<mosaic_0001>
module attributes {stable_mosaic.version = 11 : i64} {
  func.func @_fused_forward_kernel(%arg0: i32, %arg1: memref<1x4x1024xf32, #tpu.memory_space<vmem>>, %arg2: memref<1x4x1024xf32, #tpu.memory_space<vmem>>, %arg3: memref<2x1024x256xbf16, #tpu.memory_space<vmem>>, %arg4: memref<2x1x256xf32, #tpu.memory_space<vmem>>, %arg5: memref<9x256xf32, #tpu.memory_space<vmem>>, %arg6: memref<2x1x256xf32, #tpu.memory_space<vmem>>, %arg7: memref<2x1x256xf32, #tpu.memory_space<vmem>>, %arg8: memref<2x256x768xbf16, #tpu.memory_space<vmem>>, %arg9: memref<2x1x768xf32, #tpu.memory_space<vmem>>, %arg10: memref<2x256x256xbf16, #tpu.memory_space<vmem>>, %arg11: memref<2x1x256xf32, #tpu.memory_space<vmem>>, %arg12: memref<2x1x256xf32, #tpu.memory_space<vmem>>, %arg13: memref<2x1x256xf32, #tpu.memory_space<vmem>>, %arg14: memref<2x256x1024xbf16, #tpu.memory_space<vmem>>, %arg15: memref<2x1x1024xf32, #tpu.memory_space<vmem>>, %arg16: memref<2x1024x256xbf16, #tpu.memory_space<vmem>>, %arg17: memref<2x1x256xf32, #tpu.memory_space<vmem>>, %arg18: memref<1x256xf32, #tpu.memory_space<vmem>>, %arg19: memref<1x256xf32, #tpu.memory_space<vmem>>, %arg20: memref<256x128xbf16, #tpu.memory_space<vmem>>, %arg21: memref<1x128xf32, #tpu.memory_space<vmem>>, %arg22: memref<1x1x128xf32, #tpu.memory_space<vmem>>, %arg23: memref<9x256xf32, #tpu.memory_space<vmem>>, %arg24: memref<9x256xf32, #tpu.memory_space<vmem>>) attributes {dimension_semantics = [#tpu.dimension_semantics<parallel>], iteration_bounds = array<i64: 2>, scalar_prefetch = 0 : i64, scratch_operands = 2 : i64, tpu.core_type = #tpu.core_type<tc>, window_params = [{transform_indices = @transform_0, window_bounds = array<i64: 1, 4, 1024>}, {transform_indices = @transform_1, window_bounds = array<i64: 1, 4, 1024>}, {pipeline_mode = #tpu.pipeline_mode<synchronous>, transform_indices = @transform_2, window_bounds = array<i64: 2, 1024, 256>}, {pipeline_mode = #tpu.pipeline_mode<synchronous>, transform_indices = @transform_3, window_bounds = array<i64: 2, 1, 256>}, {pipeline_mode = #tpu.pipeline_mode<synchronous>, transform_indices = @transform_4, window_bounds = array<i64: 9, 256>}, {pipeline_mode = #tpu.pipeline_mode<synchronous>, transform_indices = @transform_5, window_bounds = array<i64: 2, 1, 256>}, {pipeline_mode = #tpu.pipeline_mode<synchronous>, transform_indices = @transform_6, window_bounds = array<i64: 2, 1, 256>}, {pipeline_mode = #tpu.pipeline_mode<synchronous>, transform_indices = @transform_7, window_bounds = array<i64: 2, 256, 768>}, {pipeline_mode = #tpu.pipeline_mode<synchronous>, transform_indices = @transform_8, window_bounds = array<i64: 2, 1, 768>}, {pipeline_mode = #tpu.pipeline_mode<synchronous>, transform_indices = @transform_9, window_bounds = array<i64: 2, 256, 256>}, {pipeline_mode = #tpu.pipeline_mode<synchronous>, transform_indices = @transform_10, window_bounds = array<i64: 2, 1, 256>}, {pipeline_mode = #tpu.pipeline_mode<synchronous>, transform_indices = @transform_11, window_bounds = array<i64: 2, 1, 256>}, {pipeline_mode = #tpu.pipeline_mode<synchronous>, transform_indices = @transform_12, window_bounds = array<i64: 2, 1, 256>}, {pipeline_mode = #tpu.pipeline_mode<synchronous>, transform_indices = @transform_13, window_bounds = array<i64: 2, 256, 1024>}, {pipeline_mode = #tpu.pipeline_mode<synchronous>, transform_indices = @transform_14, window_bounds = array<i64: 2, 1, 1024>}, {pipeline_mode = #tpu.pipeline_mode<synchronous>, transform_indices = @transform_15, window_bounds = array<i64: 2, 1024, 256>}, {pipeline_mode = #tpu.pipeline_mode<synchronous>, transform_indices = @transform_16, window_bounds = array<i64: 2, 1, 256>}, {pipeline_mode = #tpu.pipeline_mode<synchronous>, transform_indices = @transform_17, window_bounds = array<i64: 1, 256>}, {pipeline_mode = #tpu.pipeline_mode<synchronous>, transform_indices = @transform_18, window_bounds = array<i64: 1, 256>}, {pipeline_mode = #tpu.pipeline_mode<synchronous>, transform_indices = @transform_19, window_bounds = array<i64: 256, 128>}, {pipeline_mode = #tpu.pipeline_mode<synchronous>, transform_indices = @transform_20, window_bounds = array<i64: 1, 128>}, {transform_indices = @transform_21, window_bounds = array<i64: 1, 1, 128>}]} {
    %c0 = arith.constant 0 : index
    %c0_0 = arith.constant 0 : index
    %c0_1 = arith.constant 0 : index
    %0 = vector.load %arg1[%c0, %c0_0, %c0_1] : memref<1x4x1024xf32, #tpu.memory_space<vmem>>, vector<1x4x1024xf32>
    %1 = vector.shape_cast %0 : vector<1x4x1024xf32> to vector<4x1024xf32>
    %2 = arith.truncf %1 : vector<4x1024xf32> to vector<4x1024xbf16>
    %c0_2 = arith.constant 0 : index
    %c0_3 = arith.constant 0 : index
    %c0_4 = arith.constant 0 : index
    %3 = vector.load %arg3[%c0_2, %c0_3, %c0_4] : memref<2x1024x256xbf16, #tpu.memory_space<vmem>>, vector<1x1024x256xbf16>
    %4 = vector.shape_cast %3 : vector<1x1024x256xbf16> to vector<1024x256xbf16>
    %cst = arith.constant dense<0.000000e+00> : vector<4x256xf32>
    %5 = tpu.matmul %2, %4, %cst {dimension_numbers = #tpu.dot_dimension_numbers<[1], [0], [0], [1], [0, 0, 1, 1], [], []>} : vector<4x1024xbf16>, vector<1024x256xbf16>, vector<4x256xf32> -> vector<4x256xf32>
    %c0_5 = arith.constant 0 : index
    %c0_6 = arith.constant 0 : index
    %c0_7 = arith.constant 0 : index
    %6 = vector.load %arg4[%c0_5, %c0_6, %c0_7] : memref<2x1x256xf32, #tpu.memory_space<vmem>>, vector<1x1x256xf32>
    %7 = vector.shape_cast %6 : vector<1x1x256xf32> to vector<1x256xf32>
    %8 = vector.broadcast %7 : vector<1x256xf32> to vector<4x256xf32>
    %9 = arith.addf %5, %8 : vector<4x256xf32>
    %c0_8 = arith.constant 0 : index
    %c0_9 = arith.constant 0 : index
    %c0_10 = arith.constant 0 : index
    %10 = vector.load %arg2[%c0_8, %c0_9, %c0_10] : memref<1x4x1024xf32, #tpu.memory_space<vmem>>, vector<1x4x1024xf32>
    %11 = vector.shape_cast %10 : vector<1x4x1024xf32> to vector<4x1024xf32>
    %12 = arith.truncf %11 : vector<4x1024xf32> to vector<4x1024xbf16>
    %c1 = arith.constant 1 : index
    %c0_11 = arith.constant 0 : index
    %c0_12 = arith.constant 0 : index
    %13 = vector.load %arg3[%c1, %c0_11, %c0_12] : memref<2x1024x256xbf16, #tpu.memory_space<vmem>>, vector<1x1024x256xbf16>
    %14 = vector.shape_cast %13 : vector<1x1024x256xbf16> to vector<1024x256xbf16>
    %cst_13 = arith.constant dense<0.000000e+00> : vector<4x256xf32>
    %15 = tpu.matmul %12, %14, %cst_13 {dimension_numbers = #tpu.dot_dimension_numbers<[1], [0], [0], [1], [0, 0, 1, 1], [], []>} : vector<4x1024xbf16>, vector<1024x256xbf16>, vector<4x256xf32> -> vector<4x256xf32>
    %c1_14 = arith.constant 1 : index
    %c0_15 = arith.constant 0 : index
    %c0_16 = arith.constant 0 : index
    %16 = vector.load %arg4[%c1_14, %c0_15, %c0_16] : memref<2x1x256xf32, #tpu.memory_space<vmem>>, vector<1x1x256xf32>
    %17 = vector.shape_cast %16 : vector<1x1x256xf32> to vector<1x256xf32>
    %18 = vector.broadcast %17 : vector<1x256xf32> to vector<4x256xf32>
    %19 = arith.addf %15, %18 : vector<4x256xf32>
    %c0_17 = arith.constant 0 : index
    %c0_18 = arith.constant 0 : index
    %20 = vector.load %arg5[%c0_17, %c0_18] : memref<9x256xf32, #tpu.memory_space<vmem>>, vector<1x256xf32>
    %c0_19 = arith.constant 0 : index
    %c0_20 = arith.constant 0 : index
    %21 = vector.load %arg23[%c0_19, %c0_20] : memref<9x256xf32, #tpu.memory_space<vmem>>, vector<1x256xf32>
    tpu.vector_store %arg23[%c0_19, %c0_20], %20 {strides = array<i32>} : memref<9x256xf32, #tpu.memory_space<vmem>>, vector<1x256xf32>,
    %c1_21 = arith.constant 1 : index
    %c0_22 = arith.constant 0 : index
    %22 = vector.load %arg5[%c1_21, %c0_22] : memref<9x256xf32, #tpu.memory_space<vmem>>, vector<4x256xf32>
    %23 = arith.addf %22, %9 : vector<4x256xf32>
    %c1_23 = arith.constant 1 : index
    %c0_24 = arith.constant 0 : index
    %24 = vector.load %arg23[%c1_23, %c0_24] : memref<9x256xf32, #tpu.memory_space<vmem>>, vector<4x256xf32>
    tpu.vector_store %arg23[%c1_23, %c0_24], %23 {strides = array<i32>} : memref<9x256xf32, #tpu.memory_space<vmem>>, vector<4x256xf32>,
    %c5 = arith.constant 5 : index
    %c0_25 = arith.constant 0 : index
    %25 = vector.load %arg5[%c5, %c0_25] : memref<9x256xf32, #tpu.memory_space<vmem>>, vector<4x256xf32>
    %26 = arith.addf %25, %19 : vector<4x256xf32>
    %c5_26 = arith.constant 5 : index
    %c0_27 = arith.constant 0 : index
    %27 = vector.load %arg23[%c5_26, %c0_27] : memref<9x256xf32, #tpu.memory_space<vmem>>, vector<4x256xf32>
    tpu.vector_store %arg23[%c5_26, %c0_27], %26 {strides = array<i32>} : memref<9x256xf32, #tpu.memory_space<vmem>>, vector<4x256xf32>,
    %c0_28 = arith.constant 0 : index
    %c0_29 = arith.constant 0 : index
    %28 = vector.load %arg23[%c0_28, %c0_29] : memref<9x256xf32, #tpu.memory_space<vmem>>, vector<9x256xf32>
    %c0_30 = arith.constant 0 : index
    %c0_31 = arith.constant 0 : index
    %c0_32 = arith.constant 0 : index
    %29 = vector.load %arg6[%c0_30, %c0_31, %c0_32] : memref<2x1x256xf32, #tpu.memory_space<vmem>>, vector<1x1x256xf32>
    %30 = vector.shape_cast %29 : vector<1x1x256xf32> to vector<1x256xf32>
    %c0_33 = arith.constant 0 : index
    %c0_34 = arith.constant 0 : index
    %c0_35 = arith.constant 0 : index
    %31 = vector.load %arg7[%c0_33, %c0_34, %c0_35] : memref<2x1x256xf32, #tpu.memory_space<vmem>>, vector<1x1x256xf32>
    %32 = vector.shape_cast %31 : vector<1x1x256xf32> to vector<1x256xf32>
    %cst_36 = arith.constant dense<0.000000e+00> : vector<9xf32>
    %33 = vector.multi_reduction <add>, %28, %cst_36 [1] : vector<9x256xf32> to vector<9xf32>
    %34 = vector.shape_cast %33 : vector<9xf32> to vector<9x1xf32>
    %cst_37 = arith.constant 2.560000e+02 : f32
    %35 = vector.broadcast %cst_37 : f32 to vector<9x1xf32>
    %36 = arith.divf %34, %35 : vector<9x1xf32>
    %37 = vector.broadcast %36 : vector<9x1xf32> to vector<9x256xf32>
    %38 = arith.subf %28, %37 : vector<9x256xf32>
    %39 = arith.mulf %38, %38 : vector<9x256xf32>
    %cst_38 = arith.constant dense<0.000000e+00> : vector<9xf32>
    %40 = vector.multi_reduction <add>, %39, %cst_38 [1] : vector<9x256xf32> to vector<9xf32>
    %41 = vector.shape_cast %40 : vector<9xf32> to vector<9x1xf32>
    %cst_39 = arith.constant 2.560000e+02 : f32
    %42 = vector.broadcast %cst_39 : f32 to vector<9x1xf32>
    %43 = arith.divf %41, %42 : vector<9x1xf32>
    %44 = vector.broadcast %36 : vector<9x1xf32> to vector<9x256xf32>
    %45 = arith.subf %28, %44 : vector<9x256xf32>
    %cst_40 = arith.constant 9.99999997E-7 : f32
    %46 = vector.broadcast %cst_40 : f32 to vector<9x1xf32>
    %47 = arith.addf %43, %46 : vector<9x1xf32>
    %48 = math.rsqrt %47 : vector<9x1xf32>
    %49 = vector.broadcast %48 : vector<9x1xf32> to vector<9x256xf32>
    %50 = arith.mulf %45, %49 : vector<9x256xf32>
    %51 = vector.broadcast %30 : vector<1x256xf32> to vector<9x256xf32>
    %52 = arith.mulf %50, %51 : vector<9x256xf32>
    %53 = vector.broadcast %32 : vector<1x256xf32> to vector<9x256xf32>
    %54 = arith.addf %52, %53 : vector<9x256xf32>
    %55 = arith.truncf %54 : vector<9x256xf32> to vector<9x256xbf16>
    %c0_41 = arith.constant 0 : index
    %c0_42 = arith.constant 0 : index
    %c0_43 = arith.constant 0 : index
    %56 = vector.load %arg8[%c0_41, %c0_42, %c0_43] : memref<2x256x768xbf16, #tpu.memory_space<vmem>>, vector<1x256x768xbf16>
    %57 = vector.shape_cast %56 : vector<1x256x768xbf16> to vector<256x768xbf16>
    %cst_44 = arith.constant dense<0.000000e+00> : vector<9x768xf32>
    %58 = tpu.matmul %55, %57, %cst_44 {dimension_numbers = #tpu.dot_dimension_numbers<[1], [0], [0], [1], [0, 0, 1, 1], [], []>} : vector<9x256xbf16>, vector<256x768xbf16>, vector<9x768xf32> -> vector<9x768xf32>
    %c0_45 = arith.constant 0 : index
    %c0_46 = arith.constant 0 : index
    %c0_47 = arith.constant 0 : index
    %59 = vector.load %arg9[%c0_45, %c0_46, %c0_47] : memref<2x1x768xf32, #tpu.memory_space<vmem>>, vector<1x1x768xf32>
    %60 = vector.shape_cast %59 : vector<1x1x768xf32> to vector<1x768xf32>
    %61 = vector.broadcast %60 : vector<1x768xf32> to vector<9x768xf32>
    %62 = arith.addf %58, %61 : vector<9x768xf32>
    %63 = arith.truncf %62 : vector<9x768xf32> to vector<9x768xbf16>
    %64 = vector.extract_strided_slice %63 {offsets = [0, 0], sizes = [9, 64], strides = [1, 1]} : vector<9x768xbf16> to vector<9x64xbf16>
    %65 = vector.extract_strided_slice %63 {offsets = [0, 256], sizes = [9, 64], strides = [1, 1]} : vector<9x768xbf16> to vector<9x64xbf16>
    %66 = vector.extract_strided_slice %63 {offsets = [0, 512], sizes = [9, 64], strides = [1, 1]} : vector<9x768xbf16> to vector<9x64xbf16>
    %cst_48 = arith.constant dense<0.000000e+00> : vector<9x9xf32>
    %67 = tpu.matmul %64, %65, %cst_48 {dimension_numbers = #tpu.dot_dimension_numbers<[1], [1], [0], [0], [0, 0, 1, 0], [], []>} : vector<9x64xbf16>, vector<9x64xbf16>, vector<9x9xf32> -> vector<9x9xf32>
    %cst_49 = arith.constant dense<0xFF800000> : vector<9xf32>
    %68 = vector.multi_reduction <maximumf>, %67, %cst_49 [1] : vector<9x9xf32> to vector<9xf32>
    %69 = vector.shape_cast %68 : vector<9xf32> to vector<9x1xf32>
    %70 = vector.broadcast %69 : vector<9x1xf32> to vector<9x9xf32>
    %71 = arith.subf %67, %70 : vector<9x9xf32>
    %72 = math.exp %71 : vector<9x9xf32>
    %cst_50 = arith.constant dense<0.000000e+00> : vector<9xf32>
    %73 = vector.multi_reduction <add>, %72, %cst_50 [1] : vector<9x9xf32> to vector<9xf32>
    %74 = vector.shape_cast %73 : vector<9xf32> to vector<9x1xf32>
    %75 = arith.truncf %72 : vector<9x9xf32> to vector<9x9xbf16>
    %cst_51 = arith.constant dense<0.000000e+00> : vector<9x64xf32>
    %76 = tpu.matmul %75, %66, %cst_51 {dimension_numbers = #tpu.dot_dimension_numbers<[1], [0], [0], [1], [0, 0, 1, 1], [], []>} : vector<9x9xbf16>, vector<9x64xbf16>, vector<9x64xf32> -> vector<9x64xf32>
    %cst_52 = arith.constant 1.000000e+00 : f32
    %77 = vector.broadcast %cst_52 : f32 to vector<9x1xf32>
    %78 = arith.divf %77, %74 : vector<9x1xf32>
    %79 = vector.broadcast %78 : vector<9x1xf32> to vector<9x64xf32>
    %80 = arith.mulf %76, %79 : vector<9x64xf32>
    %c0_53 = arith.constant 0 : index
    %c0_54 = arith.constant 0 : index
    %81 = vector.load %arg24[%c0_53, %c0_54] : memref<9x256xf32, #tpu.memory_space<vmem>>, vector<9x64xf32>
    tpu.vector_store %arg24[%c0_53, %c0_54], %80 {strides = array<i32>} : memref<9x256xf32, #tpu.memory_space<vmem>>, vector<9x64xf32>,
    %82 = vector.extract_strided_slice %63 {offsets = [0, 64], sizes = [9, 64], strides = [1, 1]} : vector<9x768xbf16> to vector<9x64xbf16>
    %83 = vector.extract_strided_slice %63 {offsets = [0, 320], sizes = [9, 64], strides = [1, 1]} : vector<9x768xbf16> to vector<9x64xbf16>
    %84 = vector.extract_strided_slice %63 {offsets = [0, 576], sizes = [9, 64], strides = [1, 1]} : vector<9x768xbf16> to vector<9x64xbf16>
    %cst_55 = arith.constant dense<0.000000e+00> : vector<9x9xf32>
    %85 = tpu.matmul %82, %83, %cst_55 {dimension_numbers = #tpu.dot_dimension_numbers<[1], [1], [0], [0], [0, 0, 1, 0], [], []>} : vector<9x64xbf16>, vector<9x64xbf16>, vector<9x9xf32> -> vector<9x9xf32>
    %cst_56 = arith.constant dense<0xFF800000> : vector<9xf32>
    %86 = vector.multi_reduction <maximumf>, %85, %cst_56 [1] : vector<9x9xf32> to vector<9xf32>
    %87 = vector.shape_cast %86 : vector<9xf32> to vector<9x1xf32>
    %88 = vector.broadcast %87 : vector<9x1xf32> to vector<9x9xf32>
    %89 = arith.subf %85, %88 : vector<9x9xf32>
    %90 = math.exp %89 : vector<9x9xf32>
    %cst_57 = arith.constant dense<0.000000e+00> : vector<9xf32>
    %91 = vector.multi_reduction <add>, %90, %cst_57 [1] : vector<9x9xf32> to vector<9xf32>
    %92 = vector.shape_cast %91 : vector<9xf32> to vector<9x1xf32>
    %93 = arith.truncf %90 : vector<9x9xf32> to vector<9x9xbf16>
    %cst_58 = arith.constant dense<0.000000e+00> : vector<9x64xf32>
    %94 = tpu.matmul %93, %84, %cst_58 {dimension_numbers = #tpu.dot_dimension_numbers<[1], [0], [0], [1], [0, 0, 1, 1], [], []>} : vector<9x9xbf16>, vector<9x64xbf16>, vector<9x64xf32> -> vector<9x64xf32>
    %cst_59 = arith.constant 1.000000e+00 : f32
    %95 = vector.broadcast %cst_59 : f32 to vector<9x1xf32>
    %96 = arith.divf %95, %92 : vector<9x1xf32>
    %97 = vector.broadcast %96 : vector<9x1xf32> to vector<9x64xf32>
    %98 = arith.mulf %94, %97 : vector<9x64xf32>
    %c0_60 = arith.constant 0 : index
    %c64 = arith.constant 64 : index
    %99 = vector.load %arg24[%c0_60, %c64] : memref<9x256xf32, #tpu.memory_space<vmem>>, vector<9x64xf32>
    tpu.vector_store %arg24[%c0_60, %c64], %98 {strides = array<i32>} : memref<9x256xf32, #tpu.memory_space<vmem>>, vector<9x64xf32>,
    %100 = vector.extract_strided_slice %63 {offsets = [0, 128], sizes = [9, 64], strides = [1, 1]} : vector<9x768xbf16> to vector<9x64xbf16>
    %101 = vector.extract_strided_slice %63 {offsets = [0, 384], sizes = [9, 64], strides = [1, 1]} : vector<9x768xbf16> to vector<9x64xbf16>
    %102 = vector.extract_strided_slice %63 {offsets = [0, 640], sizes = [9, 64], strides = [1, 1]} : vector<9x768xbf16> to vector<9x64xbf16>
    %cst_61 = arith.constant dense<0.000000e+00> : vector<9x9xf32>
    %103 = tpu.matmul %100, %101, %cst_61 {dimension_numbers = #tpu.dot_dimension_numbers<[1], [1], [0], [0], [0, 0, 1, 0], [], []>} : vector<9x64xbf16>, vector<9x64xbf16>, vector<9x9xf32> -> vector<9x9xf32>
    %cst_62 = arith.constant dense<0xFF800000> : vector<9xf32>
    %104 = vector.multi_reduction <maximumf>, %103, %cst_62 [1] : vector<9x9xf32> to vector<9xf32>
    %105 = vector.shape_cast %104 : vector<9xf32> to vector<9x1xf32>
    %106 = vector.broadcast %105 : vector<9x1xf32> to vector<9x9xf32>
    %107 = arith.subf %103, %106 : vector<9x9xf32>
    %108 = math.exp %107 : vector<9x9xf32>
    %cst_63 = arith.constant dense<0.000000e+00> : vector<9xf32>
    %109 = vector.multi_reduction <add>, %108, %cst_63 [1] : vector<9x9xf32> to vector<9xf32>
    %110 = vector.shape_cast %109 : vector<9xf32> to vector<9x1xf32>
    %111 = arith.truncf %108 : vector<9x9xf32> to vector<9x9xbf16>
    %cst_64 = arith.constant dense<0.000000e+00> : vector<9x64xf32>
    %112 = tpu.matmul %111, %102, %cst_64 {dimension_numbers = #tpu.dot_dimension_numbers<[1], [0], [0], [1], [0, 0, 1, 1], [], []>} : vector<9x9xbf16>, vector<9x64xbf16>, vector<9x64xf32> -> vector<9x64xf32>
    %cst_65 = arith.constant 1.000000e+00 : f32
    %113 = vector.broadcast %cst_65 : f32 to vector<9x1xf32>
    %114 = arith.divf %113, %110 : vector<9x1xf32>
    %115 = vector.broadcast %114 : vector<9x1xf32> to vector<9x64xf32>
    %116 = arith.mulf %112, %115 : vector<9x64xf32>
    %c0_66 = arith.constant 0 : index
    %c128 = arith.constant 128 : index
    %117 = vector.load %arg24[%c0_66, %c128] : memref<9x256xf32, #tpu.memory_space<vmem>>, vector<9x64xf32>
    tpu.vector_store %arg24[%c0_66, %c128], %116 {strides = array<i32>} : memref<9x256xf32, #tpu.memory_space<vmem>>, vector<9x64xf32>,
    %118 = vector.extract_strided_slice %63 {offsets = [0, 192], sizes = [9, 64], strides = [1, 1]} : vector<9x768xbf16> to vector<9x64xbf16>
    %119 = vector.extract_strided_slice %63 {offsets = [0, 448], sizes = [9, 64], strides = [1, 1]} : vector<9x768xbf16> to vector<9x64xbf16>
    %120 = vector.extract_strided_slice %63 {offsets = [0, 704], sizes = [9, 64], strides = [1, 1]} : vector<9x768xbf16> to vector<9x64xbf16>
    %cst_67 = arith.constant dense<0.000000e+00> : vector<9x9xf32>
    %121 = tpu.matmul %118, %119, %cst_67 {dimension_numbers = #tpu.dot_dimension_numbers<[1], [1], [0], [0], [0, 0, 1, 0], [], []>} : vector<9x64xbf16>, vector<9x64xbf16>, vector<9x9xf32> -> vector<9x9xf32>
    %cst_68 = arith.constant dense<0xFF800000> : vector<9xf32>
    %122 = vector.multi_reduction <maximumf>, %121, %cst_68 [1] : vector<9x9xf32> to vector<9xf32>
    %123 = vector.shape_cast %122 : vector<9xf32> to vector<9x1xf32>
    %124 = vector.broadcast %123 : vector<9x1xf32> to vector<9x9xf32>
    %125 = arith.subf %121, %124 : vector<9x9xf32>
    %126 = math.exp %125 : vector<9x9xf32>
    %cst_69 = arith.constant dense<0.000000e+00> : vector<9xf32>
    %127 = vector.multi_reduction <add>, %126, %cst_69 [1] : vector<9x9xf32> to vector<9xf32>
    %128 = vector.shape_cast %127 : vector<9xf32> to vector<9x1xf32>
    %129 = arith.truncf %126 : vector<9x9xf32> to vector<9x9xbf16>
    %cst_70 = arith.constant dense<0.000000e+00> : vector<9x64xf32>
    %130 = tpu.matmul %129, %120, %cst_70 {dimension_numbers = #tpu.dot_dimension_numbers<[1], [0], [0], [1], [0, 0, 1, 1], [], []>} : vector<9x9xbf16>, vector<9x64xbf16>, vector<9x64xf32> -> vector<9x64xf32>
    %cst_71 = arith.constant 1.000000e+00 : f32
    %131 = vector.broadcast %cst_71 : f32 to vector<9x1xf32>
    %132 = arith.divf %131, %128 : vector<9x1xf32>
    %133 = vector.broadcast %132 : vector<9x1xf32> to vector<9x64xf32>
    %134 = arith.mulf %130, %133 : vector<9x64xf32>
    %c0_72 = arith.constant 0 : index
    %c192 = arith.constant 192 : index
    %135 = vector.load %arg24[%c0_72, %c192] : memref<9x256xf32, #tpu.memory_space<vmem>>, vector<9x64xf32>
    tpu.vector_store %arg24[%c0_72, %c192], %134 {strides = array<i32>} : memref<9x256xf32, #tpu.memory_space<vmem>>, vector<9x64xf32>,
    %c0_73 = arith.constant 0 : index
    %c0_74 = arith.constant 0 : index
    %136 = vector.load %arg24[%c0_73, %c0_74] : memref<9x256xf32, #tpu.memory_space<vmem>>, vector<9x256xf32>
    %137 = arith.truncf %136 : vector<9x256xf32> to vector<9x256xbf16>
    %c0_75 = arith.constant 0 : index
    %c0_76 = arith.constant 0 : index
    %c0_77 = arith.constant 0 : index
    %138 = vector.load %arg10[%c0_75, %c0_76, %c0_77] : memref<2x256x256xbf16, #tpu.memory_space<vmem>>, vector<1x256x256xbf16>
    %139 = vector.shape_cast %138 : vector<1x256x256xbf16> to vector<256x256xbf16>
    %cst_78 = arith.constant dense<0.000000e+00> : vector<9x256xf32>
    %140 = tpu.matmul %137, %139, %cst_78 {dimension_numbers = #tpu.dot_dimension_numbers<[1], [0], [0], [1], [0, 0, 1, 1], [], []>} : vector<9x256xbf16>, vector<256x256xbf16>, vector<9x256xf32> -> vector<9x256xf32>
    %c0_79 = arith.constant 0 : index
    %c0_80 = arith.constant 0 : index
    %c0_81 = arith.constant 0 : index
    %141 = vector.load %arg11[%c0_79, %c0_80, %c0_81] : memref<2x1x256xf32, #tpu.memory_space<vmem>>, vector<1x1x256xf32>
    %142 = vector.shape_cast %141 : vector<1x1x256xf32> to vector<1x256xf32>
    %143 = vector.broadcast %142 : vector<1x256xf32> to vector<9x256xf32>
    %144 = arith.addf %140, %143 : vector<9x256xf32>
    %145 = arith.addf %28, %144 : vector<9x256xf32>
    %c0_82 = arith.constant 0 : index
    %c0_83 = arith.constant 0 : index
    %c0_84 = arith.constant 0 : index
    %146 = vector.load %arg12[%c0_82, %c0_83, %c0_84] : memref<2x1x256xf32, #tpu.memory_space<vmem>>, vector<1x1x256xf32>
    %147 = vector.shape_cast %146 : vector<1x1x256xf32> to vector<1x256xf32>
    %c0_85 = arith.constant 0 : index
    %c0_86 = arith.constant 0 : index
    %c0_87 = arith.constant 0 : index
    %148 = vector.load %arg13[%c0_85, %c0_86, %c0_87] : memref<2x1x256xf32, #tpu.memory_space<vmem>>, vector<1x1x256xf32>
    %149 = vector.shape_cast %148 : vector<1x1x256xf32> to vector<1x256xf32>
    %cst_88 = arith.constant dense<0.000000e+00> : vector<9xf32>
    %150 = vector.multi_reduction <add>, %145, %cst_88 [1] : vector<9x256xf32> to vector<9xf32>
    %151 = vector.shape_cast %150 : vector<9xf32> to vector<9x1xf32>
    %cst_89 = arith.constant 2.560000e+02 : f32
    %152 = vector.broadcast %cst_89 : f32 to vector<9x1xf32>
    %153 = arith.divf %151, %152 : vector<9x1xf32>
    %154 = vector.broadcast %153 : vector<9x1xf32> to vector<9x256xf32>
    %155 = arith.subf %145, %154 : vector<9x256xf32>
    %156 = arith.mulf %155, %155 : vector<9x256xf32>
    %cst_90 = arith.constant dense<0.000000e+00> : vector<9xf32>
    %157 = vector.multi_reduction <add>, %156, %cst_90 [1] : vector<9x256xf32> to vector<9xf32>
    %158 = vector.shape_cast %157 : vector<9xf32> to vector<9x1xf32>
    %cst_91 = arith.constant 2.560000e+02 : f32
    %159 = vector.broadcast %cst_91 : f32 to vector<9x1xf32>
    %160 = arith.divf %158, %159 : vector<9x1xf32>
    %161 = vector.broadcast %153 : vector<9x1xf32> to vector<9x256xf32>
    %162 = arith.subf %145, %161 : vector<9x256xf32>
    %cst_92 = arith.constant 9.99999997E-7 : f32
    %163 = vector.broadcast %cst_92 : f32 to vector<9x1xf32>
    %164 = arith.addf %160, %163 : vector<9x1xf32>
    %165 = math.rsqrt %164 : vector<9x1xf32>
    %166 = vector.broadcast %165 : vector<9x1xf32> to vector<9x256xf32>
    %167 = arith.mulf %162, %166 : vector<9x256xf32>
    %168 = vector.broadcast %147 : vector<1x256xf32> to vector<9x256xf32>
    %169 = arith.mulf %167, %168 : vector<9x256xf32>
    %170 = vector.broadcast %149 : vector<1x256xf32> to vector<9x256xf32>
    %171 = arith.addf %169, %170 : vector<9x256xf32>
    %172 = arith.truncf %171 : vector<9x256xf32> to vector<9x256xbf16>
    %c0_93 = arith.constant 0 : index
    %c0_94 = arith.constant 0 : index
    %c0_95 = arith.constant 0 : index
    %173 = vector.load %arg14[%c0_93, %c0_94, %c0_95] : memref<2x256x1024xbf16, #tpu.memory_space<vmem>>, vector<1x256x1024xbf16>
    %174 = vector.shape_cast %173 : vector<1x256x1024xbf16> to vector<256x1024xbf16>
    %cst_96 = arith.constant dense<0.000000e+00> : vector<9x1024xf32>
    %175 = tpu.matmul %172, %174, %cst_96 {dimension_numbers = #tpu.dot_dimension_numbers<[1], [0], [0], [1], [0, 0, 1, 1], [], []>} : vector<9x256xbf16>, vector<256x1024xbf16>, vector<9x1024xf32> -> vector<9x1024xf32>
    %c0_97 = arith.constant 0 : index
    %c0_98 = arith.constant 0 : index
    %c0_99 = arith.constant 0 : index
    %176 = vector.load %arg15[%c0_97, %c0_98, %c0_99] : memref<2x1x1024xf32, #tpu.memory_space<vmem>>, vector<1x1x1024xf32>
    %177 = vector.shape_cast %176 : vector<1x1x1024xf32> to vector<1x1024xf32>
    %178 = vector.broadcast %177 : vector<1x1024xf32> to vector<9x1024xf32>
    %179 = arith.addf %175, %178 : vector<9x1024xf32>
    %cst_100 = arith.constant 0.000000e+00 : f32
    %180 = vector.broadcast %cst_100 : f32 to vector<9x1024xf32>
    %181 = arith.maximumf %179, %180 : vector<9x1024xf32>
    %182 = arith.truncf %181 : vector<9x1024xf32> to vector<9x1024xbf16>
    %c0_101 = arith.constant 0 : index
    %c0_102 = arith.constant 0 : index
    %c0_103 = arith.constant 0 : index
    %183 = vector.load %arg16[%c0_101, %c0_102, %c0_103] : memref<2x1024x256xbf16, #tpu.memory_space<vmem>>, vector<1x1024x256xbf16>
    %184 = vector.shape_cast %183 : vector<1x1024x256xbf16> to vector<1024x256xbf16>
    %cst_104 = arith.constant dense<0.000000e+00> : vector<9x256xf32>
    %185 = tpu.matmul %182, %184, %cst_104 {dimension_numbers = #tpu.dot_dimension_numbers<[1], [0], [0], [1], [0, 0, 1, 1], [], []>} : vector<9x1024xbf16>, vector<1024x256xbf16>, vector<9x256xf32> -> vector<9x256xf32>
    %186 = arith.addf %145, %185 : vector<9x256xf32>
    %c0_105 = arith.constant 0 : index
    %c0_106 = arith.constant 0 : index
    %c0_107 = arith.constant 0 : index
    %187 = vector.load %arg17[%c0_105, %c0_106, %c0_107] : memref<2x1x256xf32, #tpu.memory_space<vmem>>, vector<1x1x256xf32>
    %188 = vector.shape_cast %187 : vector<1x1x256xf32> to vector<1x256xf32>
    %189 = vector.broadcast %188 : vector<1x256xf32> to vector<9x256xf32>
    %190 = arith.addf %186, %189 : vector<9x256xf32>
    %c1_108 = arith.constant 1 : index
    %c0_109 = arith.constant 0 : index
    %c0_110 = arith.constant 0 : index
    %191 = vector.load %arg6[%c1_108, %c0_109, %c0_110] : memref<2x1x256xf32, #tpu.memory_space<vmem>>, vector<1x1x256xf32>
    %192 = vector.shape_cast %191 : vector<1x1x256xf32> to vector<1x256xf32>
    %c1_111 = arith.constant 1 : index
    %c0_112 = arith.constant 0 : index
    %c0_113 = arith.constant 0 : index
    %193 = vector.load %arg7[%c1_111, %c0_112, %c0_113] : memref<2x1x256xf32, #tpu.memory_space<vmem>>, vector<1x1x256xf32>
    %194 = vector.shape_cast %193 : vector<1x1x256xf32> to vector<1x256xf32>
    %cst_114 = arith.constant dense<0.000000e+00> : vector<9xf32>
    %195 = vector.multi_reduction <add>, %190, %cst_114 [1] : vector<9x256xf32> to vector<9xf32>
    %196 = vector.shape_cast %195 : vector<9xf32> to vector<9x1xf32>
    %cst_115 = arith.constant 2.560000e+02 : f32
    %197 = vector.broadcast %cst_115 : f32 to vector<9x1xf32>
    %198 = arith.divf %196, %197 : vector<9x1xf32>
    %199 = vector.broadcast %198 : vector<9x1xf32> to vector<9x256xf32>
    %200 = arith.subf %190, %199 : vector<9x256xf32>
    %201 = arith.mulf %200, %200 : vector<9x256xf32>
    %cst_116 = arith.constant dense<0.000000e+00> : vector<9xf32>
    %202 = vector.multi_reduction <add>, %201, %cst_116 [1] : vector<9x256xf32> to vector<9xf32>
    %203 = vector.shape_cast %202 : vector<9xf32> to vector<9x1xf32>
    %cst_117 = arith.constant 2.560000e+02 : f32
    %204 = vector.broadcast %cst_117 : f32 to vector<9x1xf32>
    %205 = arith.divf %203, %204 : vector<9x1xf32>
    %206 = vector.broadcast %198 : vector<9x1xf32> to vector<9x256xf32>
    %207 = arith.subf %190, %206 : vector<9x256xf32>
    %cst_118 = arith.constant 9.99999997E-7 : f32
    %208 = vector.broadcast %cst_118 : f32 to vector<9x1xf32>
    %209 = arith.addf %205, %208 : vector<9x1xf32>
    %210 = math.rsqrt %209 : vector<9x1xf32>
    %211 = vector.broadcast %210 : vector<9x1xf32> to vector<9x256xf32>
    %212 = arith.mulf %207, %211 : vector<9x256xf32>
    %213 = vector.broadcast %192 : vector<1x256xf32> to vector<9x256xf32>
    %214 = arith.mulf %212, %213 : vector<9x256xf32>
    %215 = vector.broadcast %194 : vector<1x256xf32> to vector<9x256xf32>
    %216 = arith.addf %214, %215 : vector<9x256xf32>
    %217 = arith.truncf %216 : vector<9x256xf32> to vector<9x256xbf16>
    %c1_119 = arith.constant 1 : index
    %c0_120 = arith.constant 0 : index
    %c0_121 = arith.constant 0 : index
    %218 = vector.load %arg8[%c1_119, %c0_120, %c0_121] : memref<2x256x768xbf16, #tpu.memory_space<vmem>>, vector<1x256x768xbf16>
    %219 = vector.shape_cast %218 : vector<1x256x768xbf16> to vector<256x768xbf16>
    %cst_122 = arith.constant dense<0.000000e+00> : vector<9x768xf32>
    %220 = tpu.matmul %217, %219, %cst_122 {dimension_numbers = #tpu.dot_dimension_numbers<[1], [0], [0], [1], [0, 0, 1, 1], [], []>} : vector<9x256xbf16>, vector<256x768xbf16>, vector<9x768xf32> -> vector<9x768xf32>
    %c1_123 = arith.constant 1 : index
    %c0_124 = arith.constant 0 : index
    %c0_125 = arith.constant 0 : index
    %221 = vector.load %arg9[%c1_123, %c0_124, %c0_125] : memref<2x1x768xf32, #tpu.memory_space<vmem>>, vector<1x1x768xf32>
    %222 = vector.shape_cast %221 : vector<1x1x768xf32> to vector<1x768xf32>
    %223 = vector.broadcast %222 : vector<1x768xf32> to vector<9x768xf32>
    %224 = arith.addf %220, %223 : vector<9x768xf32>
    %225 = arith.truncf %224 : vector<9x768xf32> to vector<9x768xbf16>
    %226 = vector.extract_strided_slice %225 {offsets = [0, 0], sizes = [9, 64], strides = [1, 1]} : vector<9x768xbf16> to vector<9x64xbf16>
    %227 = vector.extract_strided_slice %225 {offsets = [0, 256], sizes = [9, 64], strides = [1, 1]} : vector<9x768xbf16> to vector<9x64xbf16>
    %228 = vector.extract_strided_slice %225 {offsets = [0, 512], sizes = [9, 64], strides = [1, 1]} : vector<9x768xbf16> to vector<9x64xbf16>
    %cst_126 = arith.constant dense<0.000000e+00> : vector<9x9xf32>
    %229 = tpu.matmul %226, %227, %cst_126 {dimension_numbers = #tpu.dot_dimension_numbers<[1], [1], [0], [0], [0, 0, 1, 0], [], []>} : vector<9x64xbf16>, vector<9x64xbf16>, vector<9x9xf32> -> vector<9x9xf32>
    %cst_127 = arith.constant dense<0xFF800000> : vector<9xf32>
    %230 = vector.multi_reduction <maximumf>, %229, %cst_127 [1] : vector<9x9xf32> to vector<9xf32>
    %231 = vector.shape_cast %230 : vector<9xf32> to vector<9x1xf32>
    %232 = vector.broadcast %231 : vector<9x1xf32> to vector<9x9xf32>
    %233 = arith.subf %229, %232 : vector<9x9xf32>
    %234 = math.exp %233 : vector<9x9xf32>
    %cst_128 = arith.constant dense<0.000000e+00> : vector<9xf32>
    %235 = vector.multi_reduction <add>, %234, %cst_128 [1] : vector<9x9xf32> to vector<9xf32>
    %236 = vector.shape_cast %235 : vector<9xf32> to vector<9x1xf32>
    %237 = arith.truncf %234 : vector<9x9xf32> to vector<9x9xbf16>
    %cst_129 = arith.constant dense<0.000000e+00> : vector<9x64xf32>
    %238 = tpu.matmul %237, %228, %cst_129 {dimension_numbers = #tpu.dot_dimension_numbers<[1], [0], [0], [1], [0, 0, 1, 1], [], []>} : vector<9x9xbf16>, vector<9x64xbf16>, vector<9x64xf32> -> vector<9x64xf32>
    %cst_130 = arith.constant 1.000000e+00 : f32
    %239 = vector.broadcast %cst_130 : f32 to vector<9x1xf32>
    %240 = arith.divf %239, %236 : vector<9x1xf32>
    %241 = vector.broadcast %240 : vector<9x1xf32> to vector<9x64xf32>
    %242 = arith.mulf %238, %241 : vector<9x64xf32>
    %c0_131 = arith.constant 0 : index
    %c0_132 = arith.constant 0 : index
    %243 = vector.load %arg24[%c0_131, %c0_132] : memref<9x256xf32, #tpu.memory_space<vmem>>, vector<9x64xf32>
    tpu.vector_store %arg24[%c0_131, %c0_132], %242 {strides = array<i32>} : memref<9x256xf32, #tpu.memory_space<vmem>>, vector<9x64xf32>,
    %244 = vector.extract_strided_slice %225 {offsets = [0, 64], sizes = [9, 64], strides = [1, 1]} : vector<9x768xbf16> to vector<9x64xbf16>
    %245 = vector.extract_strided_slice %225 {offsets = [0, 320], sizes = [9, 64], strides = [1, 1]} : vector<9x768xbf16> to vector<9x64xbf16>
    %246 = vector.extract_strided_slice %225 {offsets = [0, 576], sizes = [9, 64], strides = [1, 1]} : vector<9x768xbf16> to vector<9x64xbf16>
    %cst_133 = arith.constant dense<0.000000e+00> : vector<9x9xf32>
    %247 = tpu.matmul %244, %245, %cst_133 {dimension_numbers = #tpu.dot_dimension_numbers<[1], [1], [0], [0], [0, 0, 1, 0], [], []>} : vector<9x64xbf16>, vector<9x64xbf16>, vector<9x9xf32> -> vector<9x9xf32>
    %cst_134 = arith.constant dense<0xFF800000> : vector<9xf32>
    %248 = vector.multi_reduction <maximumf>, %247, %cst_134 [1] : vector<9x9xf32> to vector<9xf32>
    %249 = vector.shape_cast %248 : vector<9xf32> to vector<9x1xf32>
    %250 = vector.broadcast %249 : vector<9x1xf32> to vector<9x9xf32>
    %251 = arith.subf %247, %250 : vector<9x9xf32>
    %252 = math.exp %251 : vector<9x9xf32>
    %cst_135 = arith.constant dense<0.000000e+00> : vector<9xf32>
    %253 = vector.multi_reduction <add>, %252, %cst_135 [1] : vector<9x9xf32> to vector<9xf32>
    %254 = vector.shape_cast %253 : vector<9xf32> to vector<9x1xf32>
    %255 = arith.truncf %252 : vector<9x9xf32> to vector<9x9xbf16>
    %cst_136 = arith.constant dense<0.000000e+00> : vector<9x64xf32>
    %256 = tpu.matmul %255, %246, %cst_136 {dimension_numbers = #tpu.dot_dimension_numbers<[1], [0], [0], [1], [0, 0, 1, 1], [], []>} : vector<9x9xbf16>, vector<9x64xbf16>, vector<9x64xf32> -> vector<9x64xf32>
    %cst_137 = arith.constant 1.000000e+00 : f32
    %257 = vector.broadcast %cst_137 : f32 to vector<9x1xf32>
    %258 = arith.divf %257, %254 : vector<9x1xf32>
    %259 = vector.broadcast %258 : vector<9x1xf32> to vector<9x64xf32>
    %260 = arith.mulf %256, %259 : vector<9x64xf32>
    %c0_138 = arith.constant 0 : index
    %c64_139 = arith.constant 64 : index
    %261 = vector.load %arg24[%c0_138, %c64_139] : memref<9x256xf32, #tpu.memory_space<vmem>>, vector<9x64xf32>
    tpu.vector_store %arg24[%c0_138, %c64_139], %260 {strides = array<i32>} : memref<9x256xf32, #tpu.memory_space<vmem>>, vector<9x64xf32>,
    %262 = vector.extract_strided_slice %225 {offsets = [0, 128], sizes = [9, 64], strides = [1, 1]} : vector<9x768xbf16> to vector<9x64xbf16>
    %263 = vector.extract_strided_slice %225 {offsets = [0, 384], sizes = [9, 64], strides = [1, 1]} : vector<9x768xbf16> to vector<9x64xbf16>
    %264 = vector.extract_strided_slice %225 {offsets = [0, 640], sizes = [9, 64], strides = [1, 1]} : vector<9x768xbf16> to vector<9x64xbf16>
    %cst_140 = arith.constant dense<0.000000e+00> : vector<9x9xf32>
    %265 = tpu.matmul %262, %263, %cst_140 {dimension_numbers = #tpu.dot_dimension_numbers<[1], [1], [0], [0], [0, 0, 1, 0], [], []>} : vector<9x64xbf16>, vector<9x64xbf16>, vector<9x9xf32> -> vector<9x9xf32>
    %cst_141 = arith.constant dense<0xFF800000> : vector<9xf32>
    %266 = vector.multi_reduction <maximumf>, %265, %cst_141 [1] : vector<9x9xf32> to vector<9xf32>
    %267 = vector.shape_cast %266 : vector<9xf32> to vector<9x1xf32>
    %268 = vector.broadcast %267 : vector<9x1xf32> to vector<9x9xf32>
    %269 = arith.subf %265, %268 : vector<9x9xf32>
    %270 = math.exp %269 : vector<9x9xf32>
    %cst_142 = arith.constant dense<0.000000e+00> : vector<9xf32>
    %271 = vector.multi_reduction <add>, %270, %cst_142 [1] : vector<9x9xf32> to vector<9xf32>
    %272 = vector.shape_cast %271 : vector<9xf32> to vector<9x1xf32>
    %273 = arith.truncf %270 : vector<9x9xf32> to vector<9x9xbf16>
    %cst_143 = arith.constant dense<0.000000e+00> : vector<9x64xf32>
    %274 = tpu.matmul %273, %264, %cst_143 {dimension_numbers = #tpu.dot_dimension_numbers<[1], [0], [0], [1], [0, 0, 1, 1], [], []>} : vector<9x9xbf16>, vector<9x64xbf16>, vector<9x64xf32> -> vector<9x64xf32>
    %cst_144 = arith.constant 1.000000e+00 : f32
    %275 = vector.broadcast %cst_144 : f32 to vector<9x1xf32>
    %276 = arith.divf %275, %272 : vector<9x1xf32>
    %277 = vector.broadcast %276 : vector<9x1xf32> to vector<9x64xf32>
    %278 = arith.mulf %274, %277 : vector<9x64xf32>
    %c0_145 = arith.constant 0 : index
    %c128_146 = arith.constant 128 : index
    %279 = vector.load %arg24[%c0_145, %c128_146] : memref<9x256xf32, #tpu.memory_space<vmem>>, vector<9x64xf32>
    tpu.vector_store %arg24[%c0_145, %c128_146], %278 {strides = array<i32>} : memref<9x256xf32, #tpu.memory_space<vmem>>, vector<9x64xf32>,
    %280 = vector.extract_strided_slice %225 {offsets = [0, 192], sizes = [9, 64], strides = [1, 1]} : vector<9x768xbf16> to vector<9x64xbf16>
    %281 = vector.extract_strided_slice %225 {offsets = [0, 448], sizes = [9, 64], strides = [1, 1]} : vector<9x768xbf16> to vector<9x64xbf16>
    %282 = vector.extract_strided_slice %225 {offsets = [0, 704], sizes = [9, 64], strides = [1, 1]} : vector<9x768xbf16> to vector<9x64xbf16>
    %cst_147 = arith.constant dense<0.000000e+00> : vector<9x9xf32>
    %283 = tpu.matmul %280, %281, %cst_147 {dimension_numbers = #tpu.dot_dimension_numbers<[1], [1], [0], [0], [0, 0, 1, 0], [], []>} : vector<9x64xbf16>, vector<9x64xbf16>, vector<9x9xf32> -> vector<9x9xf32>
    %cst_148 = arith.constant dense<0xFF800000> : vector<9xf32>
    %284 = vector.multi_reduction <maximumf>, %283, %cst_148 [1] : vector<9x9xf32> to vector<9xf32>
    %285 = vector.shape_cast %284 : vector<9xf32> to vector<9x1xf32>
    %286 = vector.broadcast %285 : vector<9x1xf32> to vector<9x9xf32>
    %287 = arith.subf %283, %286 : vector<9x9xf32>
    %288 = math.exp %287 : vector<9x9xf32>
    %cst_149 = arith.constant dense<0.000000e+00> : vector<9xf32>
    %289 = vector.multi_reduction <add>, %288, %cst_149 [1] : vector<9x9xf32> to vector<9xf32>
    %290 = vector.shape_cast %289 : vector<9xf32> to vector<9x1xf32>
    %291 = arith.truncf %288 : vector<9x9xf32> to vector<9x9xbf16>
    %cst_150 = arith.constant dense<0.000000e+00> : vector<9x64xf32>
    %292 = tpu.matmul %291, %282, %cst_150 {dimension_numbers = #tpu.dot_dimension_numbers<[1], [0], [0], [1], [0, 0, 1, 1], [], []>} : vector<9x9xbf16>, vector<9x64xbf16>, vector<9x64xf32> -> vector<9x64xf32>
    %cst_151 = arith.constant 1.000000e+00 : f32
    %293 = vector.broadcast %cst_151 : f32 to vector<9x1xf32>
    %294 = arith.divf %293, %290 : vector<9x1xf32>
    %295 = vector.broadcast %294 : vector<9x1xf32> to vector<9x64xf32>
    %296 = arith.mulf %292, %295 : vector<9x64xf32>
    %c0_152 = arith.constant 0 : index
    %c192_153 = arith.constant 192 : index
    %297 = vector.load %arg24[%c0_152, %c192_153] : memref<9x256xf32, #tpu.memory_space<vmem>>, vector<9x64xf32>
    tpu.vector_store %arg24[%c0_152, %c192_153], %296 {strides = array<i32>} : memref<9x256xf32, #tpu.memory_space<vmem>>, vector<9x64xf32>,
    %c0_154 = arith.constant 0 : index
    %c0_155 = arith.constant 0 : index
    %298 = vector.load %arg24[%c0_154, %c0_155] : memref<9x256xf32, #tpu.memory_space<vmem>>, vector<9x256xf32>
    %299 = arith.truncf %298 : vector<9x256xf32> to vector<9x256xbf16>
    %c1_156 = arith.constant 1 : index
    %c0_157 = arith.constant 0 : index
    %c0_158 = arith.constant 0 : index
    %300 = vector.load %arg10[%c1_156, %c0_157, %c0_158] : memref<2x256x256xbf16, #tpu.memory_space<vmem>>, vector<1x256x256xbf16>
    %301 = vector.shape_cast %300 : vector<1x256x256xbf16> to vector<256x256xbf16>
    %cst_159 = arith.constant dense<0.000000e+00> : vector<9x256xf32>
    %302 = tpu.matmul %299, %301, %cst_159 {dimension_numbers = #tpu.dot_dimension_numbers<[1], [0], [0], [1], [0, 0, 1, 1], [], []>} : vector<9x256xbf16>, vector<256x256xbf16>, vector<9x256xf32> -> vector<9x256xf32>
    %c1_160 = arith.constant 1 : index
    %c0_161 = arith.constant 0 : index
    %c0_162 = arith.constant 0 : index
    %303 = vector.load %arg11[%c1_160, %c0_161, %c0_162] : memref<2x1x256xf32, #tpu.memory_space<vmem>>, vector<1x1x256xf32>
    %304 = vector.shape_cast %303 : vector<1x1x256xf32> to vector<1x256xf32>
    %305 = vector.broadcast %304 : vector<1x256xf32> to vector<9x256xf32>
    %306 = arith.addf %302, %305 : vector<9x256xf32>
    %307 = arith.addf %190, %306 : vector<9x256xf32>
    %c1_163 = arith.constant 1 : index
    %c0_164 = arith.constant 0 : index
    %c0_165 = arith.constant 0 : index
    %308 = vector.load %arg12[%c1_163, %c0_164, %c0_165] : memref<2x1x256xf32, #tpu.memory_space<vmem>>, vector<1x1x256xf32>
    %309 = vector.shape_cast %308 : vector<1x1x256xf32> to vector<1x256xf32>
    %c1_166 = arith.constant 1 : index
    %c0_167 = arith.constant 0 : index
    %c0_168 = arith.constant 0 : index
    %310 = vector.load %arg13[%c1_166, %c0_167, %c0_168] : memref<2x1x256xf32, #tpu.memory_space<vmem>>, vector<1x1x256xf32>
    %311 = vector.shape_cast %310 : vector<1x1x256xf32> to vector<1x256xf32>
    %cst_169 = arith.constant dense<0.000000e+00> : vector<9xf32>
    %312 = vector.multi_reduction <add>, %307, %cst_169 [1] : vector<9x256xf32> to vector<9xf32>
    %313 = vector.shape_cast %312 : vector<9xf32> to vector<9x1xf32>
    %cst_170 = arith.constant 2.560000e+02 : f32
    %314 = vector.broadcast %cst_170 : f32 to vector<9x1xf32>
    %315 = arith.divf %313, %314 : vector<9x1xf32>
    %316 = vector.broadcast %315 : vector<9x1xf32> to vector<9x256xf32>
    %317 = arith.subf %307, %316 : vector<9x256xf32>
    %318 = arith.mulf %317, %317 : vector<9x256xf32>
    %cst_171 = arith.constant dense<0.000000e+00> : vector<9xf32>
    %319 = vector.multi_reduction <add>, %318, %cst_171 [1] : vector<9x256xf32> to vector<9xf32>
    %320 = vector.shape_cast %319 : vector<9xf32> to vector<9x1xf32>
    %cst_172 = arith.constant 2.560000e+02 : f32
    %321 = vector.broadcast %cst_172 : f32 to vector<9x1xf32>
    %322 = arith.divf %320, %321 : vector<9x1xf32>
    %323 = vector.broadcast %315 : vector<9x1xf32> to vector<9x256xf32>
    %324 = arith.subf %307, %323 : vector<9x256xf32>
    %cst_173 = arith.constant 9.99999997E-7 : f32
    %325 = vector.broadcast %cst_173 : f32 to vector<9x1xf32>
    %326 = arith.addf %322, %325 : vector<9x1xf32>
    %327 = math.rsqrt %326 : vector<9x1xf32>
    %328 = vector.broadcast %327 : vector<9x1xf32> to vector<9x256xf32>
    %329 = arith.mulf %324, %328 : vector<9x256xf32>
    %330 = vector.broadcast %309 : vector<1x256xf32> to vector<9x256xf32>
    %331 = arith.mulf %329, %330 : vector<9x256xf32>
    %332 = vector.broadcast %311 : vector<1x256xf32> to vector<9x256xf32>
    %333 = arith.addf %331, %332 : vector<9x256xf32>
    %334 = arith.truncf %333 : vector<9x256xf32> to vector<9x256xbf16>
    %c1_174 = arith.constant 1 : index
    %c0_175 = arith.constant 0 : index
    %c0_176 = arith.constant 0 : index
    %335 = vector.load %arg14[%c1_174, %c0_175, %c0_176] : memref<2x256x1024xbf16, #tpu.memory_space<vmem>>, vector<1x256x1024xbf16>
    %336 = vector.shape_cast %335 : vector<1x256x1024xbf16> to vector<256x1024xbf16>
    %cst_177 = arith.constant dense<0.000000e+00> : vector<9x1024xf32>
    %337 = tpu.matmul %334, %336, %cst_177 {dimension_numbers = #tpu.dot_dimension_numbers<[1], [0], [0], [1], [0, 0, 1, 1], [], []>} : vector<9x256xbf16>, vector<256x1024xbf16>, vector<9x1024xf32> -> vector<9x1024xf32>
    %c1_178 = arith.constant 1 : index
    %c0_179 = arith.constant 0 : index
    %c0_180 = arith.constant 0 : index
    %338 = vector.load %arg15[%c1_178, %c0_179, %c0_180] : memref<2x1x1024xf32, #tpu.memory_space<vmem>>, vector<1x1x1024xf32>
    %339 = vector.shape_cast %338 : vector<1x1x1024xf32> to vector<1x1024xf32>
    %340 = vector.broadcast %339 : vector<1x1024xf32> to vector<9x1024xf32>
    %341 = arith.addf %337, %340 : vector<9x1024xf32>
    %cst_181 = arith.constant 0.000000e+00 : f32
    %342 = vector.broadcast %cst_181 : f32 to vector<9x1024xf32>
    %343 = arith.maximumf %341, %342 : vector<9x1024xf32>
    %344 = arith.truncf %343 : vector<9x1024xf32> to vector<9x1024xbf16>
    %c1_182 = arith.constant 1 : index
    %c0_183 = arith.constant 0 : index
    %c0_184 = arith.constant 0 : index
    %345 = vector.load %arg16[%c1_182, %c0_183, %c0_184] : memref<2x1024x256xbf16, #tpu.memory_space<vmem>>, vector<1x1024x256xbf16>
    %346 = vector.shape_cast %345 : vector<1x1024x256xbf16> to vector<1024x256xbf16>
    %cst_185 = arith.constant dense<0.000000e+00> : vector<9x256xf32>
    %347 = tpu.matmul %344, %346, %cst_185 {dimension_numbers = #tpu.dot_dimension_numbers<[1], [0], [0], [1], [0, 0, 1, 1], [], []>} : vector<9x1024xbf16>, vector<1024x256xbf16>, vector<9x256xf32> -> vector<9x256xf32>
    %348 = arith.addf %307, %347 : vector<9x256xf32>
    %c1_186 = arith.constant 1 : index
    %c0_187 = arith.constant 0 : index
    %c0_188 = arith.constant 0 : index
    %349 = vector.load %arg17[%c1_186, %c0_187, %c0_188] : memref<2x1x256xf32, #tpu.memory_space<vmem>>, vector<1x1x256xf32>
    %350 = vector.shape_cast %349 : vector<1x1x256xf32> to vector<1x256xf32>
    %351 = vector.broadcast %350 : vector<1x256xf32> to vector<9x256xf32>
    %352 = arith.addf %348, %351 : vector<9x256xf32>
    %c0_189 = arith.constant 0 : index
    %c0_190 = arith.constant 0 : index
    %353 = vector.load %arg18[%c0_189, %c0_190] : memref<1x256xf32, #tpu.memory_space<vmem>>, vector<1x256xf32>
    %c0_191 = arith.constant 0 : index
    %c0_192 = arith.constant 0 : index
    %354 = vector.load %arg19[%c0_191, %c0_192] : memref<1x256xf32, #tpu.memory_space<vmem>>, vector<1x256xf32>
    %cst_193 = arith.constant dense<0.000000e+00> : vector<9xf32>
    %355 = vector.multi_reduction <add>, %352, %cst_193 [1] : vector<9x256xf32> to vector<9xf32>
    %356 = vector.shape_cast %355 : vector<9xf32> to vector<9x1xf32>
    %cst_194 = arith.constant 2.560000e+02 : f32
    %357 = vector.broadcast %cst_194 : f32 to vector<9x1xf32>
    %358 = arith.divf %356, %357 : vector<9x1xf32>
    %359 = vector.broadcast %358 : vector<9x1xf32> to vector<9x256xf32>
    %360 = arith.subf %352, %359 : vector<9x256xf32>
    %361 = arith.mulf %360, %360 : vector<9x256xf32>
    %cst_195 = arith.constant dense<0.000000e+00> : vector<9xf32>
    %362 = vector.multi_reduction <add>, %361, %cst_195 [1] : vector<9x256xf32> to vector<9xf32>
    %363 = vector.shape_cast %362 : vector<9xf32> to vector<9x1xf32>
    %cst_196 = arith.constant 2.560000e+02 : f32
    %364 = vector.broadcast %cst_196 : f32 to vector<9x1xf32>
    %365 = arith.divf %363, %364 : vector<9x1xf32>
    %366 = vector.broadcast %358 : vector<9x1xf32> to vector<9x256xf32>
    %367 = arith.subf %352, %366 : vector<9x256xf32>
    %cst_197 = arith.constant 9.99999997E-7 : f32
    %368 = vector.broadcast %cst_197 : f32 to vector<9x1xf32>
    %369 = arith.addf %365, %368 : vector<9x1xf32>
    %370 = math.rsqrt %369 : vector<9x1xf32>
    %371 = vector.broadcast %370 : vector<9x1xf32> to vector<9x256xf32>
    %372 = arith.mulf %367, %371 : vector<9x256xf32>
    %373 = vector.broadcast %353 : vector<1x256xf32> to vector<9x256xf32>
    %374 = arith.mulf %372, %373 : vector<9x256xf32>
    %375 = vector.broadcast %354 : vector<1x256xf32> to vector<9x256xf32>
    %376 = arith.addf %374, %375 : vector<9x256xf32>
    %377 = arith.truncf %376 : vector<9x256xf32> to vector<9x256xbf16>
    %c0_198 = arith.constant 0 : index
    %c0_199 = arith.constant 0 : index
    %378 = vector.load %arg20[%c0_198, %c0_199] : memref<256x128xbf16, #tpu.memory_space<vmem>>, vector<256x128xbf16>
    %cst_200 = arith.constant dense<0.000000e+00> : vector<9x128xf32>
    %379 = tpu.matmul %377, %378, %cst_200 {dimension_numbers = #tpu.dot_dimension_numbers<[1], [0], [0], [1], [0, 0, 1, 1], [], []>} : vector<9x256xbf16>, vector<256x128xbf16>, vector<9x128xf32> -> vector<9x128xf32>
    %c0_201 = arith.constant 0 : index
    %c0_202 = arith.constant 0 : index
    %380 = vector.load %arg21[%c0_201, %c0_202] : memref<1x128xf32, #tpu.memory_space<vmem>>, vector<1x128xf32>
    %381 = vector.broadcast %380 : vector<1x128xf32> to vector<9x128xf32>
    %382 = arith.addf %379, %381 : vector<9x128xf32>
    %383 = vector.extract_strided_slice %382 {offsets = [0, 0], sizes = [1, 128], strides = [1, 1]} : vector<9x128xf32> to vector<1x128xf32>
    %c0_203 = arith.constant 0 : index
    %c0_204 = arith.constant 0 : index
    %c0_205 = arith.constant 0 : index
    %384 = vector.load %arg22[%c0_203, %c0_204, %c0_205] : memref<1x1x128xf32, #tpu.memory_space<vmem>>, vector<1x1x128xf32>
    %385 = vector.shape_cast %384 : vector<1x1x128xf32> to vector<1x128xf32>
    %386 = vector.shape_cast %383 : vector<1x128xf32> to vector<1x1x128xf32>
    tpu.vector_store %arg22[%c0_203, %c0_204, %c0_205], %386 {strides = array<i32>} : memref<1x1x128xf32, #tpu.memory_space<vmem>>, vector<1x1x128xf32>,
    return
  }
  func.func @transform_0(%arg0: i32) -> (i32, i32, i32) {
    %c0_i32 = arith.constant 0 : i32
    %c0_i32_0 = arith.constant 0 : i32
    %c0_i32_1 = arith.constant 0 : i32
    return %arg0, %c0_i32, %c0_i32_0 : i32, i32, i32
  }
  func.func @transform_1(%arg0: i32) -> (i32, i32, i32) {
    %c0_i32 = arith.constant 0 : i32
    %c0_i32_0 = arith.constant 0 : i32
    %c0_i32_1 = arith.constant 0 : i32
    return %arg0, %c0_i32, %c0_i32_0 : i32, i32, i32
  }
  func.func @transform_2(%arg0: i32) -> (i32, i32, i32) {
    %c0_i32 = arith.constant 0 : i32
    %c0_i32_0 = arith.constant 0 : i32
    %c0_i32_1 = arith.constant 0 : i32
    %c0_i32_2 = arith.constant 0 : i32
    return %c0_i32, %c0_i32_0, %c0_i32_1 : i32, i32, i32
  }
  func.func @transform_3(%arg0: i32) -> (i32, i32, i32) {
    %c0_i32 = arith.constant 0 : i32
    %c0_i32_0 = arith.constant 0 : i32
    %c0_i32_1 = arith.constant 0 : i32
    %c0_i32_2 = arith.constant 0 : i32
    return %c0_i32, %c0_i32_0, %c0_i32_1 : i32, i32, i32
  }
  func.func @transform_4(%arg0: i32) -> (i32, i32) {
    %c0_i32 = arith.constant 0 : i32
    %c0_i32_0 = arith.constant 0 : i32
    %c0_i32_1 = arith.constant 0 : i32
    return %c0_i32, %c0_i32_0 : i32, i32
  }
  func.func @transform_5(%arg0: i32) -> (i32, i32, i32) {
    %c0_i32 = arith.constant 0 : i32
    %c0_i32_0 = arith.constant 0 : i32
    %c0_i32_1 = arith.constant 0 : i32
    %c0_i32_2 = arith.constant 0 : i32
    return %c0_i32, %c0_i32_0, %c0_i32_1 : i32, i32, i32
  }
  func.func @transform_6(%arg0: i32) -> (i32, i32, i32) {
    %c0_i32 = arith.constant 0 : i32
    %c0_i32_0 = arith.constant 0 : i32
    %c0_i32_1 = arith.constant 0 : i32
    %c0_i32_2 = arith.constant 0 : i32
    return %c0_i32, %c0_i32_0, %c0_i32_1 : i32, i32, i32
  }
  func.func @transform_7(%arg0: i32) -> (i32, i32, i32) {
    %c0_i32 = arith.constant 0 : i32
    %c0_i32_0 = arith.constant 0 : i32
    %c0_i32_1 = arith.constant 0 : i32
    %c0_i32_2 = arith.constant 0 : i32
    return %c0_i32, %c0_i32_0, %c0_i32_1 : i32, i32, i32
  }
  func.func @transform_8(%arg0: i32) -> (i32, i32, i32) {
    %c0_i32 = arith.constant 0 : i32
    %c0_i32_0 = arith.constant 0 : i32
    %c0_i32_1 = arith.constant 0 : i32
    %c0_i32_2 = arith.constant 0 : i32
    return %c0_i32, %c0_i32_0, %c0_i32_1 : i32, i32, i32
  }
  func.func @transform_9(%arg0: i32) -> (i32, i32, i32) {
    %c0_i32 = arith.constant 0 : i32
    %c0_i32_0 = arith.constant 0 : i32
    %c0_i32_1 = arith.constant 0 : i32
    %c0_i32_2 = arith.constant 0 : i32
    return %c0_i32, %c0_i32_0, %c0_i32_1 : i32, i32, i32
  }
  func.func @transform_10(%arg0: i32) -> (i32, i32, i32) {
    %c0_i32 = arith.constant 0 : i32
    %c0_i32_0 = arith.constant 0 : i32
    %c0_i32_1 = arith.constant 0 : i32
    %c0_i32_2 = arith.constant 0 : i32
    return %c0_i32, %c0_i32_0, %c0_i32_1 : i32, i32, i32
  }
  func.func @transform_11(%arg0: i32) -> (i32, i32, i32) {
    %c0_i32 = arith.constant 0 : i32
    %c0_i32_0 = arith.constant 0 : i32
    %c0_i32_1 = arith.constant 0 : i32
    %c0_i32_2 = arith.constant 0 : i32
    return %c0_i32, %c0_i32_0, %c0_i32_1 : i32, i32, i32
  }
  func.func @transform_12(%arg0: i32) -> (i32, i32, i32) {
    %c0_i32 = arith.constant 0 : i32
    %c0_i32_0 = arith.constant 0 : i32
    %c0_i32_1 = arith.constant 0 : i32
    %c0_i32_2 = arith.constant 0 : i32
    return %c0_i32, %c0_i32_0, %c0_i32_1 : i32, i32, i32
  }
  func.func @transform_13(%arg0: i32) -> (i32, i32, i32) {
    %c0_i32 = arith.constant 0 : i32
    %c0_i32_0 = arith.constant 0 : i32
    %c0_i32_1 = arith.constant 0 : i32
    %c0_i32_2 = arith.constant 0 : i32
    return %c0_i32, %c0_i32_0, %c0_i32_1 : i32, i32, i32
  }
  func.func @transform_14(%arg0: i32) -> (i32, i32, i32) {
    %c0_i32 = arith.constant 0 : i32
    %c0_i32_0 = arith.constant 0 : i32
    %c0_i32_1 = arith.constant 0 : i32
    %c0_i32_2 = arith.constant 0 : i32
    return %c0_i32, %c0_i32_0, %c0_i32_1 : i32, i32, i32
  }
  func.func @transform_15(%arg0: i32) -> (i32, i32, i32) {
    %c0_i32 = arith.constant 0 : i32
    %c0_i32_0 = arith.constant 0 : i32
    %c0_i32_1 = arith.constant 0 : i32
    %c0_i32_2 = arith.constant 0 : i32
    return %c0_i32, %c0_i32_0, %c0_i32_1 : i32, i32, i32
  }
  func.func @transform_16(%arg0: i32) -> (i32, i32, i32) {
    %c0_i32 = arith.constant 0 : i32
    %c0_i32_0 = arith.constant 0 : i32
    %c0_i32_1 = arith.constant 0 : i32
    %c0_i32_2 = arith.constant 0 : i32
    return %c0_i32, %c0_i32_0, %c0_i32_1 : i32, i32, i32
  }
  func.func @transform_17(%arg0: i32) -> (i32, i32) {
    %c0_i32 = arith.constant 0 : i32
    %c0_i32_0 = arith.constant 0 : i32
    %c0_i32_1 = arith.constant 0 : i32
    return %c0_i32, %c0_i32_0 : i32, i32
  }
  func.func @transform_18(%arg0: i32) -> (i32, i32) {
    %c0_i32 = arith.constant 0 : i32
    %c0_i32_0 = arith.constant 0 : i32
    %c0_i32_1 = arith.constant 0 : i32
    return %c0_i32, %c0_i32_0 : i32, i32
  }
  func.func @transform_19(%arg0: i32) -> (i32, i32) {
    %c0_i32 = arith.constant 0 : i32
    %c0_i32_0 = arith.constant 0 : i32
    %c0_i32_1 = arith.constant 0 : i32
    return %c0_i32, %c0_i32_0 : i32, i32
  }
  func.func @transform_20(%arg0: i32) -> (i32, i32) {
    %c0_i32 = arith.constant 0 : i32
    %c0_i32_0 = arith.constant 0 : i32
    %c0_i32_1 = arith.constant 0 : i32
    return %c0_i32, %c0_i32_0 : i32, i32
  }
  func.func @transform_21(%arg0: i32) -> (i32, i32, i32) {
    %c0_i32 = arith.constant 0 : i32
    %c0_i32_0 = arith.constant 0 : i32
    %c0_i32_1 = arith.constant 0 : i32
    return %arg0, %c0_i32, %c0_i32_0 : i32, i32, i32
  }
}

</mosaic_0001>

<llo_original>
// kernel: tpu_custom_call.1
$region0: #{tpu_custom_call.1}
  #allocation0 [shape = 'u32[]', space=smem, size = 0x4, offset = 0x4, fixed_abs, tag = 'smem constant byte address 0x4 - core index']
  #allocation1 [shape = 'u32[144,128]{1,0:T(1,128)}', space=vmem, size = 0x12000, scoped, tag = 'internal scratch']
  #allocation2 [shape = 'f32[9,256]{1,0:T(8,128)}', space=vmem, size = 0x4000, scoped, tag = 'scratch operand']
  #allocation3 [shape = 'f32[9,256]{1,0:T(8,128)}', space=vmem, size = 0x4000, scoped, tag = 'scratch operand']
  %s0 = inlined_call_operand.hbm [shape: f32[2,4,1024], index: 0, kind: input, shape index: {}]
  %s1 = inlined_call_operand.hbm [shape: f32[2,4,1024], index: 1, kind: input, shape index: {}]
  %s2 = inlined_call_operand.hbm [shape: bf16[2,1024,256], index: 2, kind: input, shape index: {}]
  %s3 = inlined_call_operand.vmem [shape: f32[2,1,256], index: 3, kind: input, shape index: {}]
  %s4 = inlined_call_operand.hbm [shape: f32[9,256], index: 4, kind: input, shape index: {}]
  %s5 = inlined_call_operand.vmem [shape: f32[2,1,256], index: 5, kind: input, shape index: {}]
  %s6 = inlined_call_operand.hbm [shape: f32[2,1,256], index: 6, kind: input, shape index: {}]
  %s7 = inlined_call_operand.hbm [shape: bf16[2,256,768], index: 7, kind: input, shape index: {}]
  %s8 = inlined_call_operand.hbm [shape: f32[2,1,768], index: 8, kind: input, shape index: {}]
  %s9 = inlined_call_operand.hbm [shape: bf16[2,256,256], index: 9, kind: input, shape index: {}]
  %s10 = inlined_call_operand.hbm [shape: f32[2,1,256], index: 10, kind: input, shape index: {}]
  %s11 = inlined_call_operand.hbm [shape: f32[2,1,256], index: 11, kind: input, shape index: {}]
  %s12 = inlined_call_operand.hbm [shape: f32[2,1,256], index: 12, kind: input, shape index: {}]
  %s13 = inlined_call_operand.hbm [shape: bf16[2,256,1024], index: 13, kind: input, shape index: {}]
  %s14 = inlined_call_operand.vmem [shape: f32[2,1,1024], index: 14, kind: input, shape index: {}]
  %s15 = inlined_call_operand.hbm [shape: bf16[2,1024,256], index: 15, kind: input, shape index: {}]
  %s16 = inlined_call_operand.vmem [shape: f32[2,1,256], index: 16, kind: input, shape index: {}]
  %s17 = inlined_call_operand.vmem [shape: f32[1,256], index: 17, kind: input, shape index: {}]
  %s18 = inlined_call_operand.vmem [shape: f32[1,256], index: 18, kind: input, shape index: {}]
  %s19 = inlined_call_operand.hbm [shape: bf16[256,128], index: 19, kind: input, shape index: {}]
  %s20 = inlined_call_operand.vmem [shape: f32[1,128], index: 20, kind: input, shape index: {}]
  %s21 = inlined_call_operand.hbm [shape: f32[2,1,128], index: 21, kind: output, shape index: {}]
  %s22 = sld [smem:[#allocation0]]
  $region173: #{tpu_custom_call.1} parent=0
    _
  %s24 = ssub.s32 1, %s22
  %s25 = scalar_select 0, %s24, %s22
  $region1: #{tpu_custom_call.1} parent=0
    #allocation4 [shape = 'u8[32768]{0}', space=vmem, size = 0x8000, scoped, tag = 'input window, operand 0']
    #allocation5 [shape = 's32[2]{0}', space=sflag, size = 0x8, scoped, tag = 'scoped memory for tpu_custom_call.1']
    #allocation6 [shape = 's32[2]{0}', space=sflag, size = 0x8, scoped, tag = 'scoped memory for tpu_custom_call.1']
    #allocation7 [shape = 'u8[32768]{0}', space=vmem, size = 0x8000, scoped, tag = 'input window, operand 1']
    #allocation8 [shape = 's32[2]{0}', space=sflag, size = 0x8, scoped, tag = 'scoped memory for tpu_custom_call.1']
    #allocation9 [shape = 'u8[1048576]{0}', space=vmem, size = 0x100000, scoped, tag = 'input window, operand 2, single buffered']
    #allocation10 [shape = 'u8[16384]{0}', space=vmem, size = 0x4000, scoped, tag = 'input window, operand 4, single buffered']
    #allocation11 [shape = 's32[1]{0}', space=sflag, size = 0x4, scoped, tag = 'scoped memory for tpu_custom_call.1']
    #allocation12 [shape = 'u8[2048]{0}', space=vmem, size = 0x800, scoped, tag = 'input window, operand 6, single buffered']
    #allocation13 [shape = 'u8[786432]{0}', space=vmem, size = 0xc0000, scoped, tag = 'input window, operand 7, single buffered']
    #allocation14 [shape = 's32[1]{0}', space=sflag, size = 0x4, scoped, tag = 'scoped memory for tpu_custom_call.1']
    #allocation15 [shape = 'u8[6144]{0}', space=vmem, size = 0x1800, scoped, tag = 'input window, operand 8, single buffered']
    #allocation16 [shape = 'u8[262144]{0}', space=vmem, size = 0x40000, scoped, tag = 'input window, operand 9, single buffered']
    #allocation17 [shape = 's32[1]{0}', space=sflag, size = 0x4, scoped, tag = 'scoped memory for tpu_custom_call.1']
    #allocation18 [shape = 'u8[2048]{0}', space=vmem, size = 0x800, scoped, tag = 'input window, operand 10, single buffered']
    #allocation19 [shape = 'u8[2048]{0}', space=vmem, size = 0x800, scoped, tag = 'input window, operand 11, single buffered']
    #allocation20 [shape = 's32[1]{0}', space=sflag, size = 0x4, scoped, tag = 'scoped memory for tpu_custom_call.1']
    #allocation21 [shape = 'u8[2048]{0}', space=vmem, size = 0x800, scoped, tag = 'input window, operand 12, single buffered']
    #allocation22 [shape = 'u8[1048576]{0}', space=vmem, size = 0x100000, scoped, tag = 'input window, operand 13, single buffered']
    #allocation23 [shape = 's32[1]{0}', space=sflag, size = 0x4, scoped, tag = 'scoped memory for tpu_custom_call.1']
    #allocation24 [shape = 'u8[1048576]{0}', space=vmem, size = 0x100000, scoped, tag = 'input window, operand 15, single buffered']
    #allocation25 [shape = 'u8[65536]{0}', space=vmem, size = 0x10000, scoped, tag = 'input window, operand 19, single buffered']
    #allocation26 [shape = 's32[1]{0}', space=sflag, size = 0x4, scoped, tag = 'scoped memory for tpu_custom_call.1']
    #allocation27 [shape = 'u8[1024]{0}', space=vmem, size = 0x400, scoped, tag = 'output window, operand 0']
    %26 = vsyncpa [#allocation5], 0
    %s27 = scalar_lea.sflag [#allocation5], 1
    %28 = vsyncpa %s27, 0
    %29 = vsyncpa [#allocation8], 0
    %s30 = scalar_lea.sflag [#allocation8], 1
    %31 = vsyncpa %s30, 0
    %32 = vsyncpa [#allocation11], 0
    %33 = vsyncpa [#allocation14], 0
    %34 = vsyncpa [#allocation17], 0
    %35 = vsyncpa [#allocation20], 0
    %36 = vsyncpa [#allocation23], 0
    %37 = vsyncpa [#allocation26], 0
    %38 = vsyncpa [#allocation6], 0
    %s39 = scalar_lea.sflag [#allocation6], 1
    %40 = vsyncpa %s39, 0
    loop: start=0, step=1, limit=4
    $region2: #{tpu_custom_call.1} parent=1 // loop_pre_header
      _
    $region3: #{tpu_custom_call.1} parent=1 // loop_header
      %s42 = sphi 0, %s46
      %p43 = scmp.ge.s32.totalorder %s42, 4
      %s52 = sphi 0, %s54
      %s55 = sphi 0, %s52
      %s56 = sphi 0, %s55
      %s72 = sphi 0, %s56
      %s78 = sphi 0, %s80
      %s81 = sphi 0, %s78
      %s82 = sphi 0, %s81
      %s98 = sphi 0, %s82
      %s102 = sphi 0, %s102
      %s104 = sphi 0, %s102
      %s105 = sphi 0, %s104
      %s119 = sphi 0, %s105
      %s123 = sphi 0, %s123
      %s125 = sphi 0, %s123
      %s126 = sphi 0, %s125
      %s140 = sphi 0, %s126
      %s144 = sphi 0, %s144
      %s146 = sphi 0, %s144
      %s147 = sphi 0, %s146
      %s161 = sphi 0, %s147
      %s165 = sphi 0, %s165
      %s167 = sphi 0, %s165
      %s168 = sphi 0, %s167
      %s182 = sphi 0, %s168
      %s186 = sphi 0, %s186
      %s188 = sphi 0, %s186
      %s189 = sphi 0, %s188
      %s203 = sphi 0, %s189
      %s207 = sphi 0, %s207
      %s209 = sphi 0, %s207
      %s210 = sphi 0, %s209
      %s224 = sphi 0, %s210
      %s228 = sphi 0, %s228
      %s230 = sphi 0, %s228
      %s231 = sphi 0, %s230
      %s245 = sphi 0, %s231
      %s249 = sphi 0, %s249
      %s251 = sphi 0, %s249
      %s252 = sphi 0, %s251
      %s266 = sphi 0, %s252
      %s270 = sphi 0, %s270
      %s272 = sphi 0, %s270
      %s273 = sphi 0, %s272
      %s287 = sphi 0, %s273
      %s291 = sphi 0, %s291
      %s293 = sphi 0, %s291
      %s294 = sphi 0, %s293
      %s308 = sphi 0, %s294
      %s312 = sphi 0, %s312
      %s314 = sphi 0, %s312
      %s315 = sphi 0, %s314
      %s329 = sphi 0, %s315
      %s333 = sphi 0, %s333
      %s335 = sphi 0, %s333
      %s336 = sphi 0, %s335
      %s350 = sphi 0, %s336
      %s354 = sphi 0, %s354
      %s356 = sphi 0, %s354
      %s357 = sphi 0, %s356
      %s371 = sphi 0, %s357
      %s375 = sphi 0, %s375
      %s377 = sphi 0, %s375
      %s378 = sphi 0, %s377
      %s392 = sphi 0, %s378
      %s396 = sphi 0, %s396
      %s398 = sphi 0, %s396
      %s399 = sphi 0, %s398
      %s413 = sphi 0, %s399
      %s417 = sphi 0, %s417
      %s419 = sphi 0, %s417
      %s420 = sphi 0, %s419
      %s434 = sphi 0, %s420
      %s438 = sphi 0, %s438
      %s440 = sphi 0, %s438
      %s441 = sphi 0, %s440
      %s455 = sphi 0, %s441
      %s459 = sphi 0, %s459
      %s461 = sphi 0, %s459
      %s462 = sphi 0, %s461
      %s476 = sphi 0, %s462
      %s480 = sphi 0, %s480
      %s482 = sphi 0, %s480
      %s483 = sphi 0, %s482
      %s497 = sphi 0, %s483
      %s503 = sphi 0, %s505
      %s506 = sphi 0, %s503
      %s507 = sphi 0, %s506
      %s523 = sphi 0, %s507
    $region4: #{tpu_custom_call.1} parent=1 // loop_header_branch
      %45 = sbr.rel (%p43) target = $region8
    $region5: #{tpu_custom_call.1} parent=1 // loop_body
      %s47 = ssub.s32 %s42, 1
      %s48 = ssub.s32 %s42, 2
      %s49 = sadd.s32 %s42, 1
      %s50 = ssub.s32 %s42, %s49
      %p51 = scmp.eq.s32.totalorder %s50, 0
      %s53 = sadd.s32 %s52, 1
      %s54 = scalar_select %p51, %s52, %s53
      %p57 = pneg %p51
      %p58 = scmp.eq.s32.totalorder %s42, 1
      %p59 = por %p57, %p58
      %p60 = scmp.ne.s32.totalorder %s52, %s55
      %p61 = scmp.eq.s32.totalorder %s42, 0
      %p62 = por %p60, %p61
      %p63 = scmp.ne.s32.totalorder %s52, %s55
      %p64 = scmp.eq.s32.totalorder %s47, 1
      %p65 = por %p63, %p64
      %p66 = scmp.ne.s32.totalorder %s55, %s56
      %p67 = scmp.eq.s32.totalorder %s47, 0
      %p68 = por %p66, %p67
      %p69 = scmp.ne.s32.totalorder %s55, %s56
      %p70 = scmp.eq.s32.totalorder %s48, 1
      %p71 = por %p69, %p70
      %p73 = scmp.ne.s32.totalorder %s56, %s72
      %p74 = scmp.eq.s32.totalorder %s48, 0
      %p75 = por %p73, %p74
      %s76 = ssub.s32 %s42, %s49
      %p77 = scmp.eq.s32.totalorder %s76, 0
      %s79 = sadd.s32 %s78, 1
      %s80 = scalar_select %p77, %s78, %s79
      %p83 = pneg %p77
      %p84 = scmp.eq.s32.totalorder %s42, 1
      %p85 = por %p83, %p84
      %p86 = scmp.ne.s32.totalorder %s78, %s81
      %p87 = scmp.eq.s32.totalorder %s42, 0
      %p88 = por %p86, %p87
      %p89 = scmp.ne.s32.totalorder %s78, %s81
      %p90 = scmp.eq.s32.totalorder %s47, 1
      %p91 = por %p89, %p90
      %p92 = scmp.ne.s32.totalorder %s81, %s82
      %p93 = scmp.eq.s32.totalorder %s47, 0
      %p94 = por %p92, %p93
      %p95 = scmp.ne.s32.totalorder %s81, %s82
      %p96 = scmp.eq.s32.totalorder %s48, 1
      %p97 = por %p95, %p96
      %p99 = scmp.ne.s32.totalorder %s82, %s98
      %p100 = scmp.eq.s32.totalorder %s48, 0
      %p101 = por %p99, %p100
      %s103 = sadd.s32 %s102, 1
      %p106 = scmp.eq.s32.totalorder %s42, 1
      %p107 = scmp.ne.s32.totalorder %s102, %s104
      %p108 = scmp.eq.s32.totalorder %s42, 0
      %p109 = por %p107, %p108
      %p110 = scmp.ne.s32.totalorder %s102, %s104
      %p111 = scmp.eq.s32.totalorder %s47, 1
      %p112 = por %p110, %p111
      %p113 = scmp.ne.s32.totalorder %s104, %s105
      %p114 = scmp.eq.s32.totalorder %s47, 0
      %p115 = por %p113, %p114
      %p116 = scmp.ne.s32.totalorder %s104, %s105
      %p117 = scmp.eq.s32.totalorder %s48, 1
      %p118 = por %p116, %p117
      %p120 = scmp.ne.s32.totalorder %s105, %s119
      %p121 = scmp.eq.s32.totalorder %s48, 0
      %p122 = por %p120, %p121
      %s124 = sadd.s32 %s123, 1
      %p127 = scmp.eq.s32.totalorder %s42, 1
      %p128 = scmp.ne.s32.totalorder %s123, %s125
      %p129 = scmp.eq.s32.totalorder %s42, 0
      %p130 = por %p128, %p129
      %p131 = scmp.ne.s32.totalorder %s123, %s125
      %p132 = scmp.eq.s32.totalorder %s47, 1
      %p133 = por %p131, %p132
      %p134 = scmp.ne.s32.totalorder %s125, %s126
      %p135 = scmp.eq.s32.totalorder %s47, 0
      %p136 = por %p134, %p135
      %p137 = scmp.ne.s32.totalorder %s125, %s126
      %p138 = scmp.eq.s32.totalorder %s48, 1
      %p139 = por %p137, %p138
      %p141 = scmp.ne.s32.totalorder %s126, %s140
      %p142 = scmp.eq.s32.totalorder %s48, 0
      %p143 = por %p141, %p142
      %s145 = sadd.s32 %s144, 1
      %p148 = scmp.eq.s32.totalorder %s42, 1
      %p149 = scmp.ne.s32.totalorder %s144, %s146
      %p150 = scmp.eq.s32.totalorder %s42, 0
      %p151 = por %p149, %p150
      %p152 = scmp.ne.s32.totalorder %s144, %s146
      %p153 = scmp.eq.s32.totalorder %s47, 1
      %p154 = por %p152, %p153
      %p155 = scmp.ne.s32.totalorder %s146, %s147
      %p156 = scmp.eq.s32.totalorder %s47, 0
      %p157 = por %p155, %p156
      %p158 = scmp.ne.s32.totalorder %s146, %s147
      %p159 = scmp.eq.s32.totalorder %s48, 1
      %p160 = por %p158, %p159
      %p162 = scmp.ne.s32.totalorder %s147, %s161
      %p163 = scmp.eq.s32.totalorder %s48, 0
      %p164 = por %p162, %p163
      %s166 = sadd.s32 %s165, 1
      %p169 = scmp.eq.s32.totalorder %s42, 1
      %p170 = scmp.ne.s32.totalorder %s165, %s167
      %p171 = scmp.eq.s32.totalorder %s42, 0
      %p172 = por %p170, %p171
      %p173 = scmp.ne.s32.totalorder %s165, %s167
      %p174 = scmp.eq.s32.totalorder %s47, 1
      %p175 = por %p173, %p174
      %p176 = scmp.ne.s32.totalorder %s167, %s168
      %p177 = scmp.eq.s32.totalorder %s47, 0
      %p178 = por %p176, %p177
      %p179 = scmp.ne.s32.totalorder %s167, %s168
      %p180 = scmp.eq.s32.totalorder %s48, 1
      %p181 = por %p179, %p180
      %p183 = scmp.ne.s32.totalorder %s168, %s182
      %p184 = scmp.eq.s32.totalorder %s48, 0
      %p185 = por %p183, %p184
      %s187 = sadd.s32 %s186, 1
      %p190 = scmp.eq.s32.totalorder %s42, 1
      %p191 = scmp.ne.s32.totalorder %s186, %s188
      %p192 = scmp.eq.s32.totalorder %s42, 0
      %p193 = por %p191, %p192
      %p194 = scmp.ne.s32.totalorder %s186, %s188
      %p195 = scmp.eq.s32.totalorder %s47, 1
      %p196 = por %p194, %p195
      %p197 = scmp.ne.s32.totalorder %s188, %s189
      %p198 = scmp.eq.s32.totalorder %s47, 0
      %p199 = por %p197, %p198
      %p200 = scmp.ne.s32.totalorder %s188, %s189
      %p201 = scmp.eq.s32.totalorder %s48, 1
      %p202 = por %p200, %p201
      %p204 = scmp.ne.s32.totalorder %s189, %s203
      %p205 = scmp.eq.s32.totalorder %s48, 0
      %p206 = por %p204, %p205
      %s208 = sadd.s32 %s207, 1
      %p211 = scmp.eq.s32.totalorder %s42, 1
      %p212 = scmp.ne.s32.totalorder %s207, %s209
      %p213 = scmp.eq.s32.totalorder %s42, 0
      %p214 = por %p212, %p213
      %p215 = scmp.ne.s32.totalorder %s207, %s209
      %p216 = scmp.eq.s32.totalorder %s47, 1
      %p217 = por %p215, %p216
      %p218 = scmp.ne.s32.totalorder %s209, %s210
      %p219 = scmp.eq.s32.totalorder %s47, 0
      %p220 = por %p218, %p219
      %p221 = scmp.ne.s32.totalorder %s209, %s210
      %p222 = scmp.eq.s32.totalorder %s48, 1
      %p223 = por %p221, %p222
      %p225 = scmp.ne.s32.totalorder %s210, %s224
      %p226 = scmp.eq.s32.totalorder %s48, 0
      %p227 = por %p225, %p226
      %s229 = sadd.s32 %s228, 1
      %p232 = scmp.eq.s32.totalorder %s42, 1
      %p233 = scmp.ne.s32.totalorder %s228, %s230
      %p234 = scmp.eq.s32.totalorder %s42, 0
      %p235 = por %p233, %p234
      %p236 = scmp.ne.s32.totalorder %s228, %s230
      %p237 = scmp.eq.s32.totalorder %s47, 1
      %p238 = por %p236, %p237
      %p239 = scmp.ne.s32.totalorder %s230, %s231
      %p240 = scmp.eq.s32.totalorder %s47, 0
      %p241 = por %p239, %p240
      %p242 = scmp.ne.s32.totalorder %s230, %s231
      %p243 = scmp.eq.s32.totalorder %s48, 1
      %p244 = por %p242, %p243
      %p246 = scmp.ne.s32.totalorder %s231, %s245
      %p247 = scmp.eq.s32.totalorder %s48, 0
      %p248 = por %p246, %p247
      %s250 = sadd.s32 %s249, 1
      %p253 = scmp.eq.s32.totalorder %s42, 1
      %p254 = scmp.ne.s32.totalorder %s249, %s251
      %p255 = scmp.eq.s32.totalorder %s42, 0
      %p256 = por %p254, %p255
      %p257 = scmp.ne.s32.totalorder %s249, %s251
      %p258 = scmp.eq.s32.totalorder %s47, 1
      %p259 = por %p257, %p258
      %p260 = scmp.ne.s32.totalorder %s251, %s252
      %p261 = scmp.eq.s32.totalorder %s47, 0
      %p262 = por %p260, %p261
      %p263 = scmp.ne.s32.totalorder %s251, %s252
      %p264 = scmp.eq.s32.totalorder %s48, 1
      %p265 = por %p263, %p264
      %p267 = scmp.ne.s32.totalorder %s252, %s266
      %p268 = scmp.eq.s32.totalorder %s48, 0
      %p269 = por %p267, %p268
      %s271 = sadd.s32 %s270, 1
      %p274 = scmp.eq.s32.totalorder %s42, 1
      %p275 = scmp.ne.s32.totalorder %s270, %s272
      %p276 = scmp.eq.s32.totalorder %s42, 0
      %p277 = por %p275, %p276
      %p278 = scmp.ne.s32.totalorder %s270, %s272
      %p279 = scmp.eq.s32.totalorder %s47, 1
      %p280 = por %p278, %p279
      %p281 = scmp.ne.s32.totalorder %s272, %s273
      %p282 = scmp.eq.s32.totalorder %s47, 0
      %p283 = por %p281, %p282
      %p284 = scmp.ne.s32.totalorder %s272, %s273
      %p285 = scmp.eq.s32.totalorder %s48, 1
      %p286 = por %p284, %p285
      %p288 = scmp.ne.s32.totalorder %s273, %s287
      %p289 = scmp.eq.s32.totalorder %s48, 0
      %p290 = por %p288, %p289
      %s292 = sadd.s32 %s291, 1
      %p295 = scmp.eq.s32.totalorder %s42, 1
      %p296 = scmp.ne.s32.totalorder %s291, %s293
      %p297 = scmp.eq.s32.totalorder %s42, 0
      %p298 = por %p296, %p297
      %p299 = scmp.ne.s32.totalorder %s291, %s293
      %p300 = scmp.eq.s32.totalorder %s47, 1
      %p301 = por %p299, %p300
      %p302 = scmp.ne.s32.totalorder %s293, %s294
      %p303 = scmp.eq.s32.totalorder %s47, 0
      %p304 = por %p302, %p303
      %p305 = scmp.ne.s32.totalorder %s293, %s294
      %p306 = scmp.eq.s32.totalorder %s48, 1
      %p307 = por %p305, %p306
      %p309 = scmp.ne.s32.totalorder %s294, %s308
      %p310 = scmp.eq.s32.totalorder %s48, 0
      %p311 = por %p309, %p310
      %s313 = sadd.s32 %s312, 1
      %p316 = scmp.eq.s32.totalorder %s42, 1
      %p317 = scmp.ne.s32.totalorder %s312, %s314
      %p318 = scmp.eq.s32.totalorder %s42, 0
      %p319 = por %p317, %p318
      %p320 = scmp.ne.s32.totalorder %s312, %s314
      %p321 = scmp.eq.s32.totalorder %s47, 1
      %p322 = por %p320, %p321
      %p323 = scmp.ne.s32.totalorder %s314, %s315
      %p324 = scmp.eq.s32.totalorder %s47, 0
      %p325 = por %p323, %p324
      %p326 = scmp.ne.s32.totalorder %s314, %s315
      %p327 = scmp.eq.s32.totalorder %s48, 1
      %p328 = por %p326, %p327
      %p330 = scmp.ne.s32.totalorder %s315, %s329
      %p331 = scmp.eq.s32.totalorder %s48, 0
      %p332 = por %p330, %p331
      %s334 = sadd.s32 %s333, 1
      %p337 = scmp.eq.s32.totalorder %s42, 1
      %p338 = scmp.ne.s32.totalorder %s333, %s335
      %p339 = scmp.eq.s32.totalorder %s42, 0
      %p340 = por %p338, %p339
      %p341 = scmp.ne.s32.totalorder %s333, %s335
      %p342 = scmp.eq.s32.totalorder %s47, 1
      %p343 = por %p341, %p342
      %p344 = scmp.ne.s32.totalorder %s335, %s336
      %p345 = scmp.eq.s32.totalorder %s47, 0
      %p346 = por %p344, %p345
      %p347 = scmp.ne.s32.totalorder %s335, %s336
      %p348 = scmp.eq.s32.totalorder %s48, 1
      %p349 = por %p347, %p348
      %p351 = scmp.ne.s32.totalorder %s336, %s350
      %p352 = scmp.eq.s32.totalorder %s48, 0
      %p353 = por %p351, %p352
      %s355 = sadd.s32 %s354, 1
      %p358 = scmp.eq.s32.totalorder %s42, 1
      %p359 = scmp.ne.s32.totalorder %s354, %s356
      %p360 = scmp.eq.s32.totalorder %s42, 0
      %p361 = por %p359, %p360
      %p362 = scmp.ne.s32.totalorder %s354, %s356
      %p363 = scmp.eq.s32.totalorder %s47, 1
      %p364 = por %p362, %p363
      %p365 = scmp.ne.s32.totalorder %s356, %s357
      %p366 = scmp.eq.s32.totalorder %s47, 0
      %p367 = por %p365, %p366
      %p368 = scmp.ne.s32.totalorder %s356, %s357
      %p369 = scmp.eq.s32.totalorder %s48, 1
      %p370 = por %p368, %p369
      %p372 = scmp.ne.s32.totalorder %s357, %s371
      %p373 = scmp.eq.s32.totalorder %s48, 0
      %p374 = por %p372, %p373
      %s376 = sadd.s32 %s375, 1
      %p379 = scmp.eq.s32.totalorder %s42, 1
      %p380 = scmp.ne.s32.totalorder %s375, %s377
      %p381 = scmp.eq.s32.totalorder %s42, 0
      %p382 = por %p380, %p381
      %p383 = scmp.ne.s32.totalorder %s375, %s377
      %p384 = scmp.eq.s32.totalorder %s47, 1
      %p385 = por %p383, %p384
      %p386 = scmp.ne.s32.totalorder %s377, %s378
      %p387 = scmp.eq.s32.totalorder %s47, 0
      %p388 = por %p386, %p387
      %p389 = scmp.ne.s32.totalorder %s377, %s378
      %p390 = scmp.eq.s32.totalorder %s48, 1
      %p391 = por %p389, %p390
      %p393 = scmp.ne.s32.totalorder %s378, %s392
      %p394 = scmp.eq.s32.totalorder %s48, 0
      %p395 = por %p393, %p394
      %s397 = sadd.s32 %s396, 1
      %p400 = scmp.eq.s32.totalorder %s42, 1
      %p401 = scmp.ne.s32.totalorder %s396, %s398
      %p402 = scmp.eq.s32.totalorder %s42, 0
      %p403 = por %p401, %p402
      %p404 = scmp.ne.s32.totalorder %s396, %s398
      %p405 = scmp.eq.s32.totalorder %s47, 1
      %p406 = por %p404, %p405
      %p407 = scmp.ne.s32.totalorder %s398, %s399
      %p408 = scmp.eq.s32.totalorder %s47, 0
      %p409 = por %p407, %p408
      %p410 = scmp.ne.s32.totalorder %s398, %s399
      %p411 = scmp.eq.s32.totalorder %s48, 1
      %p412 = por %p410, %p411
      %p414 = scmp.ne.s32.totalorder %s399, %s413
      %p415 = scmp.eq.s32.totalorder %s48, 0
      %p416 = por %p414, %p415
      %s418 = sadd.s32 %s417, 1
      %p421 = scmp.eq.s32.totalorder %s42, 1
      %p422 = scmp.ne.s32.totalorder %s417, %s419
      %p423 = scmp.eq.s32.totalorder %s42, 0
      %p424 = por %p422, %p423
      %p425 = scmp.ne.s32.totalorder %s417, %s419
      %p426 = scmp.eq.s32.totalorder %s47, 1
      %p427 = por %p425, %p426
      %p428 = scmp.ne.s32.totalorder %s419, %s420
      %p429 = scmp.eq.s32.totalorder %s47, 0
      %p430 = por %p428, %p429
      %p431 = scmp.ne.s32.totalorder %s419, %s420
      %p432 = scmp.eq.s32.totalorder %s48, 1
      %p433 = por %p431, %p432
      %p435 = scmp.ne.s32.totalorder %s420, %s434
      %p436 = scmp.eq.s32.totalorder %s48, 0
      %p437 = por %p435, %p436
      %s439 = sadd.s32 %s438, 1
      %p442 = scmp.eq.s32.totalorder %s42, 1
      %p443 = scmp.ne.s32.totalorder %s438, %s440
      %p444 = scmp.eq.s32.totalorder %s42, 0
      %p445 = por %p443, %p444
      %p446 = scmp.ne.s32.totalorder %s438, %s440
      %p447 = scmp.eq.s32.totalorder %s47, 1
      %p448 = por %p446, %p447
      %p449 = scmp.ne.s32.totalorder %s440, %s441
      %p450 = scmp.eq.s32.totalorder %s47, 0
      %p451 = por %p449, %p450
      %p452 = scmp.ne.s32.totalorder %s440, %s441
      %p453 = scmp.eq.s32.totalorder %s48, 1
      %p454 = por %p452, %p453
      %p456 = scmp.ne.s32.totalorder %s441, %s455
      %p457 = scmp.eq.s32.totalorder %s48, 0
      %p458 = por %p456, %p457
      %s460 = sadd.s32 %s459, 1
      %p463 = scmp.eq.s32.totalorder %s42, 1
      %p464 = scmp.ne.s32.totalorder %s459, %s461
      %p465 = scmp.eq.s32.totalorder %s42, 0
      %p466 = por %p464, %p465
      %p467 = scmp.ne.s32.totalorder %s459, %s461
      %p468 = scmp.eq.s32.totalorder %s47, 1
      %p469 = por %p467, %p468
      %p470 = scmp.ne.s32.totalorder %s461, %s462
      %p471 = scmp.eq.s32.totalorder %s47, 0
      %p472 = por %p470, %p471
      %p473 = scmp.ne.s32.totalorder %s461, %s462
      %p474 = scmp.eq.s32.totalorder %s48, 1
      %p475 = por %p473, %p474
      %p477 = scmp.ne.s32.totalorder %s462, %s476
      %p478 = scmp.eq.s32.totalorder %s48, 0
      %p479 = por %p477, %p478
      %s481 = sadd.s32 %s480, 1
      %p484 = scmp.eq.s32.totalorder %s42, 1
      %p485 = scmp.ne.s32.totalorder %s480, %s482
      %p486 = scmp.eq.s32.totalorder %s42, 0
      %p487 = por %p485, %p486
      %p488 = scmp.ne.s32.totalorder %s480, %s482
      %p489 = scmp.eq.s32.totalorder %s47, 1
      %p490 = por %p488, %p489
      %p491 = scmp.ne.s32.totalorder %s482, %s483
      %p492 = scmp.eq.s32.totalorder %s47, 0
      %p493 = por %p491, %p492
      %p494 = scmp.ne.s32.totalorder %s482, %s483
      %p495 = scmp.eq.s32.totalorder %s48, 1
      %p496 = por %p494, %p495
      %p498 = scmp.ne.s32.totalorder %s483, %s497
      %p499 = scmp.eq.s32.totalorder %s48, 0
      %p500 = por %p498, %p499
      %s501 = ssub.s32 %s42, %s49
      %p502 = scmp.eq.s32.totalorder %s501, 0
      %s504 = sadd.s32 %s503, 1
      %s505 = scalar_select %p502, %s503, %s504
      %p508 = pneg %p502
      %p509 = scmp.eq.s32.totalorder %s42, 1
      %p510 = por %p508, %p509
      %p511 = scmp.ne.s32.totalorder %s503, %s506
      %p512 = scmp.eq.s32.totalorder %s42, 0
      %p513 = por %p511, %p512
      %p514 = scmp.ne.s32.totalorder %s503, %s506
      %p515 = scmp.eq.s32.totalorder %s47, 1
      %p516 = por %p514, %p515
      %p517 = scmp.ne.s32.totalorder %s506, %s507
      %p518 = scmp.eq.s32.totalorder %s47, 0
      %p519 = por %p517, %p518
      %p520 = scmp.ne.s32.totalorder %s506, %s507
      %p521 = scmp.eq.s32.totalorder %s48, 1
      %p522 = por %p520, %p521
      %p524 = scmp.ne.s32.totalorder %s507, %s523
      %p525 = scmp.eq.s32.totalorder %s48, 0
      %p526 = por %p524, %p525
      %p527 = scmp.le.s32.totalorder 1, %s42
      %p528 = scmp.lt.s32.totalorder %s42, 3
      %p529 = pnand %p527, %p528
      %p530 = pneg %p529
      // Predicated region
      $region9: #{tpu_custom_call.1} parent=5 // pred_check
        _
      $region10: #{tpu_custom_call.1} parent=5 // pred_check_branch
        %532 = sbr.rel (%p529) target = $region12
      $region11: #{tpu_custom_call.1} parent=5 // pred_region
        %s533 = ssub.s32 %s42, 1
        // Predicated region
        $region13: #{tpu_custom_call.1} parent=11 // pred_check
          %p534 = pneg %p115
        $region14: #{tpu_custom_call.1} parent=11 // pred_check_branch
          %536 = sbr.rel (%p534) target = $region16
        $region15: #{tpu_custom_call.1} parent=11 // pred_region
          %s538 = ssub.s32 32768, 32768
          %539 = vsyncadd [#allocation8], %s538
          %s540 = sshll.u32 [#allocation9], 4
          %s541 = int_to_ptr.vmem [resolvable:$true] %s540
          %546 = dma.hbm_to_vmem [thread:$0]  %s2, 32768, %s541, [#allocation8], 128, 128, 8
        $region16: #{tpu_custom_call.1} parent=11 // pred_fallthru
          _
        // Predicated region
        $region17: #{tpu_custom_call.1} parent=11 // pred_check
          %p547 = pneg %p136
        $region18: #{tpu_custom_call.1} parent=11 // pred_check_branch
          %549 = sbr.rel (%p547) target = $region20
        $region19: #{tpu_custom_call.1} parent=11 // pred_region
          _
        $region20: #{tpu_custom_call.1} parent=11 // pred_fallthru
          _
        // Predicated region
        $region21: #{tpu_custom_call.1} parent=11 // pred_check
          %p550 = pneg %p157
        $region22: #{tpu_custom_call.1} parent=11 // pred_check_branch
          %552 = sbr.rel (%p550) target = $region24
        $region23: #{tpu_custom_call.1} parent=11 // pred_region
          %s554 = ssub.s32 512, 512
          %555 = vsyncadd [#allocation11], %s554
          %s556 = sshll.u32 [#allocation10], 4
          %s557 = int_to_ptr.vmem [resolvable:$true] %s556
          %562 = dma.hbm_to_vmem [thread:$0]  %s4, 512, %s557, [#allocation11], 256, 256, 16
        $region24: #{tpu_custom_call.1} parent=11 // pred_fallthru
          _
        // Predicated region
        $region25: #{tpu_custom_call.1} parent=11 // pred_check
          %p563 = pneg %p178
        $region26: #{tpu_custom_call.1} parent=11 // pred_check_branch
          %565 = sbr.rel (%p563) target = $region28
        $region27: #{tpu_custom_call.1} parent=11 // pred_region
          _
        $region28: #{tpu_custom_call.1} parent=11 // pred_fallthru
          _
        // Predicated region
        $region29: #{tpu_custom_call.1} parent=11 // pred_check
          %p566 = pneg %p199
        $region30: #{tpu_custom_call.1} parent=11 // pred_check_branch
          %568 = sbr.rel (%p566) target = $region32
        $region31: #{tpu_custom_call.1} parent=11 // pred_region
          %s570 = ssub.s32 64, 64
          %571 = vsyncadd [#allocation11], %s570
          %s572 = sshll.u32 [#allocation12], 4
          %s573 = int_to_ptr.vmem [resolvable:$true] %s572
          %578 = dma.hbm_to_vmem [thread:$0]  %s6, 64, %s573, [#allocation11], 32, 32, 2
        $region32: #{tpu_custom_call.1} parent=11 // pred_fallthru
          _
        // Predicated region
        $region33: #{tpu_custom_call.1} parent=11 // pred_check
          %p579 = pneg %p220
        $region34: #{tpu_custom_call.1} parent=11 // pred_check_branch
          %581 = sbr.rel (%p579) target = $region36
        $region35: #{tpu_custom_call.1} parent=11 // pred_region
          %s583 = ssub.s32 24576, 24576
          %584 = vsyncadd [#allocation14], %s583
          %s585 = sshll.u32 [#allocation13], 4
          %s586 = int_to_ptr.vmem [resolvable:$true] %s585
          %591 = dma.hbm_to_vmem [thread:$0]  %s7, 24576, %s586, [#allocation14], 384, 384, 24
        $region36: #{tpu_custom_call.1} parent=11 // pred_fallthru
          _
        // Predicated region
        $region37: #{tpu_custom_call.1} parent=11 // pred_check
          %p592 = pneg %p241
        $region38: #{tpu_custom_call.1} parent=11 // pred_check_branch
          %594 = sbr.rel (%p592) target = $region40
        $region39: #{tpu_custom_call.1} parent=11 // pred_region
          %s596 = ssub.s32 192, 192
          %597 = vsyncadd [#allocation14], %s596
          %s598 = sshll.u32 [#allocation15], 4
          %s599 = int_to_ptr.vmem [resolvable:$true] %s598
          %604 = dma.hbm_to_vmem [thread:$0]  %s8, 192, %s599, [#allocation14], 96, 96, 6
        $region40: #{tpu_custom_call.1} parent=11 // pred_fallthru
          _
        // Predicated region
        $region41: #{tpu_custom_call.1} parent=11 // pred_check
          %p605 = pneg %p262
        $region42: #{tpu_custom_call.1} parent=11 // pred_check_branch
          %607 = sbr.rel (%p605) target = $region44
        $region43: #{tpu_custom_call.1} parent=11 // pred_region
          %s609 = ssub.s32 8192, 8192
          %610 = vsyncadd [#allocation17], %s609
          %s611 = sshll.u32 [#allocation16], 4
          %s612 = int_to_ptr.vmem [resolvable:$true] %s611
          %617 = dma.hbm_to_vmem [thread:$0]  %s9, 8192, %s612, [#allocation17], 128, 128, 8
        $region44: #{tpu_custom_call.1} parent=11 // pred_fallthru
          _
        // Predicated region
        $region45: #{tpu_custom_call.1} parent=11 // pred_check
          %p618 = pneg %p283
        $region46: #{tpu_custom_call.1} parent=11 // pred_check_branch
          %620 = sbr.rel (%p618) target = $region48
        $region47: #{tpu_custom_call.1} parent=11 // pred_region
          %s622 = ssub.s32 64, 64
          %623 = vsyncadd [#allocation17], %s622
          %s624 = sshll.u32 [#allocation18], 4
          %s625 = int_to_ptr.vmem [resolvable:$true] %s624
          %630 = dma.hbm_to_vmem [thread:$0]  %s10, 64, %s625, [#allocation17], 32, 32, 2
        $region48: #{tpu_custom_call.1} parent=11 // pred_fallthru
          _
        // Predicated region
        $region49: #{tpu_custom_call.1} parent=11 // pred_check
          %p631 = pneg %p304
        $region50: #{tpu_custom_call.1} parent=11 // pred_check_branch
          %633 = sbr.rel (%p631) target = $region52
        $region51: #{tpu_custom_call.1} parent=11 // pred_region
          %s635 = ssub.s32 64, 64
          %636 = vsyncadd [#allocation20], %s635
          %s637 = sshll.u32 [#allocation19], 4
          %s638 = int_to_ptr.vmem [resolvable:$true] %s637
          %643 = dma.hbm_to_vmem [thread:$0]  %s11, 64, %s638, [#allocation20], 32, 32, 2
        $region52: #{tpu_custom_call.1} parent=11 // pred_fallthru
          _
        // Predicated region
        $region53: #{tpu_custom_call.1} parent=11 // pred_check
          %p644 = pneg %p325
        $region54: #{tpu_custom_call.1} parent=11 // pred_check_branch
          %646 = sbr.rel (%p644) target = $region56
        $region55: #{tpu_custom_call.1} parent=11 // pred_region
          %s648 = ssub.s32 64, 64
          %649 = vsyncadd [#allocation20], %s648
          %s650 = sshll.u32 [#allocation21], 4
          %s651 = int_to_ptr.vmem [resolvable:$true] %s650
          %656 = dma.hbm_to_vmem [thread:$0]  %s12, 64, %s651, [#allocation20], 32, 32, 2
        $region56: #{tpu_custom_call.1} parent=11 // pred_fallthru
          _
        // Predicated region
        $region57: #{tpu_custom_call.1} parent=11 // pred_check
          %p657 = pneg %p346
        $region58: #{tpu_custom_call.1} parent=11 // pred_check_branch
          %659 = sbr.rel (%p657) target = $region60
        $region59: #{tpu_custom_call.1} parent=11 // pred_region
          %s661 = ssub.s32 32768, 32768
          %662 = vsyncadd [#allocation23], %s661
          %s663 = sshll.u32 [#allocation22], 4
          %s664 = int_to_ptr.vmem [resolvable:$true] %s663
          %669 = dma.hbm_to_vmem [thread:$0]  %s13, 32768, %s664, [#allocation23], 512, 512, 32
        $region60: #{tpu_custom_call.1} parent=11 // pred_fallthru
          _
        // Predicated region
        $region61: #{tpu_custom_call.1} parent=11 // pred_check
          %p670 = pneg %p367
        $region62: #{tpu_custom_call.1} parent=11 // pred_check_branch
          %672 = sbr.rel (%p670) target = $region64
        $region63: #{tpu_custom_call.1} parent=11 // pred_region
          _
        $region64: #{tpu_custom_call.1} parent=11 // pred_fallthru
          _
        // Predicated region
        $region65: #{tpu_custom_call.1} parent=11 // pred_check
          %p673 = pneg %p388
        $region66: #{tpu_custom_call.1} parent=11 // pred_check_branch
          %675 = sbr.rel (%p673) target = $region68
        $region67: #{tpu_custom_call.1} parent=11 // pred_region
          %s677 = ssub.s32 32768, 32768
          %678 = vsyncadd [#allocation23], %s677
          %s679 = sshll.u32 [#allocation24], 4
          %s680 = int_to_ptr.vmem [resolvable:$true] %s679
          %685 = dma.hbm_to_vmem [thread:$0]  %s15, 32768, %s680, [#allocation23], 128, 128, 8
        $region68: #{tpu_custom_call.1} parent=11 // pred_fallthru
          _
        // Predicated region
        $region69: #{tpu_custom_call.1} parent=11 // pred_check
          %p686 = pneg %p409
        $region70: #{tpu_custom_call.1} parent=11 // pred_check_branch
          %688 = sbr.rel (%p686) target = $region72
        $region71: #{tpu_custom_call.1} parent=11 // pred_region
          _
        $region72: #{tpu_custom_call.1} parent=11 // pred_fallthru
          _
        // Predicated region
        $region73: #{tpu_custom_call.1} parent=11 // pred_check
          %p689 = pneg %p430
        $region74: #{tpu_custom_call.1} parent=11 // pred_check_branch
          %691 = sbr.rel (%p689) target = $region76
        $region75: #{tpu_custom_call.1} parent=11 // pred_region
          _
        $region76: #{tpu_custom_call.1} parent=11 // pred_fallthru
          _
        // Predicated region
        $region77: #{tpu_custom_call.1} parent=11 // pred_check
          %p692 = pneg %p451
        $region78: #{tpu_custom_call.1} parent=11 // pred_check_branch
          %694 = sbr.rel (%p692) target = $region80
        $region79: #{tpu_custom_call.1} parent=11 // pred_region
          _
        $region80: #{tpu_custom_call.1} parent=11 // pred_fallthru
          _
        // Predicated region
        $region81: #{tpu_custom_call.1} parent=11 // pred_check
          %p695 = pneg %p472
        $region82: #{tpu_custom_call.1} parent=11 // pred_check_branch
          %697 = sbr.rel (%p695) target = $region84
        $region83: #{tpu_custom_call.1} parent=11 // pred_region
          %s699 = ssub.s32 2048, 2048
          %700 = vsyncadd [#allocation26], %s699
          %s701 = sshll.u32 [#allocation25], 4
          %s702 = int_to_ptr.vmem [resolvable:$true] %s701
          %707 = dma.hbm_to_vmem [thread:$0]  %s19, 2048, %s702, [#allocation26], 64, 64, 4
        $region84: #{tpu_custom_call.1} parent=11 // pred_fallthru
          _
        // Predicated region
        $region85: #{tpu_custom_call.1} parent=11 // pred_check
          %p708 = pneg %p493
        $region86: #{tpu_custom_call.1} parent=11 // pred_check_branch
          %710 = sbr.rel (%p708) target = $region88
        $region87: #{tpu_custom_call.1} parent=11 // pred_region
          _
        $region88: #{tpu_custom_call.1} parent=11 // pred_fallthru
          _
      $region12: #{tpu_custom_call.1} parent=5 // pred_fallthru
        _
      %p711 = scmp.lt.s32.totalorder %s42, 2
      // Predicated region
      $region89: #{tpu_custom_call.1} parent=5 // pred_check
        %p712 = pneg %p711
      $region90: #{tpu_custom_call.1} parent=5 // pred_check_branch
        %714 = sbr.rel (%p712) target = $region92
      $region91: #{tpu_custom_call.1} parent=5 // pred_region
        // Predicated region
        $region93: #{tpu_custom_call.1} parent=91 // pred_check
          %p715 = pneg %p62
        $region94: #{tpu_custom_call.1} parent=91 // pred_check_branch
          %717 = sbr.rel (%p715) target = $region96
        $region95: #{tpu_custom_call.1} parent=91 // pred_region
          %s718 = sand.u32 %s52, 1
          %s719 = scalar_lea.sflag [#allocation5], %s718
          %s720 = sand.u32 %s52, 1
          %s721 = smul.addr %s720, 32
          %s722 = scalar_lea.vmem [#allocation4], %s721
          %s724 = ssub.s32 512, 512
          %725 = vsyncadd %s719, %s724
          %s726 = smul.addr %s42, 8
          %s727 = smul.addr %s726, 64
          %s728 = scalar_lea.hbm %s0, %s727
          %s730 = sshll.u32 %s722, 4
          %s731 = int_to_ptr.vmem [resolvable:$true] %s730
          %733 = dma.hbm_to_vmem [thread:$0]  %s728, 512, %s731, %s719
        $region96: #{tpu_custom_call.1} parent=91 // pred_fallthru
          _
        // Predicated region
        $region97: #{tpu_custom_call.1} parent=91 // pred_check
          %p734 = pneg %p88
        $region98: #{tpu_custom_call.1} parent=91 // pred_check_branch
          %736 = sbr.rel (%p734) target = $region100
        $region99: #{tpu_custom_call.1} parent=91 // pred_region
          %s737 = sand.u32 %s42, 1
          %s738 = scalar_lea.sflag [#allocation8], %s737
          %s739 = sand.u32 %s78, 1
          %s740 = smul.addr %s739, 32
          %s741 = scalar_lea.vmem [#allocation7], %s740
          %s743 = ssub.s32 512, 512
          %744 = vsyncadd %s738, %s743
          %s745 = smul.addr %s42, 8
          %s746 = smul.addr %s745, 64
          %s747 = scalar_lea.hbm %s1, %s746
          %s749 = sshll.u32 %s741, 4
          %s750 = int_to_ptr.vmem [resolvable:$true] %s749
          %752 = dma.hbm_to_vmem [thread:$0]  %s747, 512, %s750, %s738
        $region100: #{tpu_custom_call.1} parent=91 // pred_fallthru
          _
      $region92: #{tpu_custom_call.1} parent=5 // pred_fallthru
        _
      %p753 = scmp.le.s32.totalorder 1, %s42
      %p754 = scmp.lt.s32.totalorder %s42, 3
      %p755 = pnand %p753, %p754
      %p756 = pneg %p755
      // Predicated region
      $region101: #{tpu_custom_call.1} parent=5 // pred_check
        _
      $region102: #{tpu_custom_call.1} parent=5 // pred_check_branch
        %758 = sbr.rel (%p755) target = $region104
      $region103: #{tpu_custom_call.1} parent=5 // pred_region
        %s759 = ssub.s32 %s42, 1
        %s760 = sand.u32 %s55, 1
        %s761 = scalar_lea.sflag [#allocation5], %s760
        %s762 = sand.u32 %s55, 1
        %s763 = smul.addr %s762, 32
        %s764 = scalar_lea.vmem [#allocation4], %s763
        // Predicated region
        $region105: #{tpu_custom_call.1} parent=103 // pred_check
          %p765 = pneg %p68
        $region106: #{tpu_custom_call.1} parent=103 // pred_check_branch
          %767 = sbr.rel (%p765) target = $region108
        $region107: #{tpu_custom_call.1} parent=103 // pred_region
          %768 = dma.done %s761, 512
        $region108: #{tpu_custom_call.1} parent=103 // pred_fallthru
          _
        %s769 = sand.u32 %s47, 1
        %s770 = scalar_lea.sflag [#allocation8], %s769
        %s771 = sand.u32 %s81, 1
        %s772 = smul.addr %s771, 32
        %s773 = scalar_lea.vmem [#allocation7], %s772
        // Predicated region
        $region109: #{tpu_custom_call.1} parent=103 // pred_check
          %p774 = pneg %p94
        $region110: #{tpu_custom_call.1} parent=103 // pred_check_branch
          %776 = sbr.rel (%p774) target = $region112
        $region111: #{tpu_custom_call.1} parent=103 // pred_region
          %777 = dma.done %s770, 512
        $region112: #{tpu_custom_call.1} parent=103 // pred_fallthru
          _
        // Predicated region
        $region113: #{tpu_custom_call.1} parent=103 // pred_check
          %p778 = pneg %p115
        $region114: #{tpu_custom_call.1} parent=103 // pred_check_branch
          %780 = sbr.rel (%p778) target = $region116
        $region115: #{tpu_custom_call.1} parent=103 // pred_region
          %781 = dma.done [#allocation8], 32768
        $region116: #{tpu_custom_call.1} parent=103 // pred_fallthru
          _
        // Predicated region
        $region117: #{tpu_custom_call.1} parent=103 // pred_check
          %p782 = pneg %p157
        $region118: #{tpu_custom_call.1} parent=103 // pred_check_branch
          %784 = sbr.rel (%p782) target = $region120
        $region119: #{tpu_custom_call.1} parent=103 // pred_region
          %785 = dma.done [#allocation11], 512
        $region120: #{tpu_custom_call.1} parent=103 // pred_fallthru
          _
        // Predicated region
        $region121: #{tpu_custom_call.1} parent=103 // pred_check
          %p786 = pneg %p199
        $region122: #{tpu_custom_call.1} parent=103 // pred_check_branch
          %788 = sbr.rel (%p786) target = $region124
        $region123: #{tpu_custom_call.1} parent=103 // pred_region
          %789 = dma.done [#allocation11], 64
        $region124: #{tpu_custom_call.1} parent=103 // pred_fallthru
          _
        // Predicated region
        $region125: #{tpu_custom_call.1} parent=103 // pred_check
          %p790 = pneg %p220
        $region126: #{tpu_custom_call.1} parent=103 // pred_check_branch
          %792 = sbr.rel (%p790) target = $region128
        $region127: #{tpu_custom_call.1} parent=103 // pred_region
          %793 = dma.done [#allocation14], 24576
        $region128: #{tpu_custom_call.1} parent=103 // pred_fallthru
          _
        // Predicated region
        $region129: #{tpu_custom_call.1} parent=103 // pred_check
          %p794 = pneg %p241
        $region130: #{tpu_custom_call.1} parent=103 // pred_check_branch
          %796 = sbr.rel (%p794) target = $region132
        $region131: #{tpu_custom_call.1} parent=103 // pred_region
          %797 = dma.done [#allocation14], 192
        $region132: #{tpu_custom_call.1} parent=103 // pred_fallthru
          _
        // Predicated region
        $region133: #{tpu_custom_call.1} parent=103 // pred_check
          %p798 = pneg %p262
        $region134: #{tpu_custom_call.1} parent=103 // pred_check_branch
          %800 = sbr.rel (%p798) target = $region136
        $region135: #{tpu_custom_call.1} parent=103 // pred_region
          %801 = dma.done [#allocation17], 8192
        $region136: #{tpu_custom_call.1} parent=103 // pred_fallthru
          _
        // Predicated region
        $region137: #{tpu_custom_call.1} parent=103 // pred_check
          %p802 = pneg %p283
        $region138: #{tpu_custom_call.1} parent=103 // pred_check_branch
          %804 = sbr.rel (%p802) target = $region140
        $region139: #{tpu_custom_call.1} parent=103 // pred_region
          %805 = dma.done [#allocation17], 64
        $region140: #{tpu_custom_call.1} parent=103 // pred_fallthru
          _
        // Predicated region
        $region141: #{tpu_custom_call.1} parent=103 // pred_check
          %p806 = pneg %p304
        $region142: #{tpu_custom_call.1} parent=103 // pred_check_branch
          %808 = sbr.rel (%p806) target = $region144
        $region143: #{tpu_custom_call.1} parent=103 // pred_region
          %809 = dma.done [#allocation20], 64
        $region144: #{tpu_custom_call.1} parent=103 // pred_fallthru
          _
        // Predicated region
        $region145: #{tpu_custom_call.1} parent=103 // pred_check
          %p810 = pneg %p325
        $region146: #{tpu_custom_call.1} parent=103 // pred_check_branch
          %812 = sbr.rel (%p810) target = $region148
        $region147: #{tpu_custom_call.1} parent=103 // pred_region
          %813 = dma.done [#allocation20], 64
        $region148: #{tpu_custom_call.1} parent=103 // pred_fallthru
          _
        // Predicated region
        $region149: #{tpu_custom_call.1} parent=103 // pred_check
          %p814 = pneg %p346
        $region150: #{tpu_custom_call.1} parent=103 // pred_check_branch
          %816 = sbr.rel (%p814) target = $region152
        $region151: #{tpu_custom_call.1} parent=103 // pred_region
          %817 = dma.done [#allocation23], 32768
        $region152: #{tpu_custom_call.1} parent=103 // pred_fallthru
          _
        // Predicated region
        $region153: #{tpu_custom_call.1} parent=103 // pred_check
          %p818 = pneg %p388
        $region154: #{tpu_custom_call.1} parent=103 // pred_check_branch
          %820 = sbr.rel (%p818) target = $region156
        $region155: #{tpu_custom_call.1} parent=103 // pred_region
          %821 = dma.done [#allocation23], 32768
        $region156: #{tpu_custom_call.1} parent=103 // pred_fallthru
          _
        // Predicated region
        $region157: #{tpu_custom_call.1} parent=103 // pred_check
          %p822 = pneg %p472
        $region158: #{tpu_custom_call.1} parent=103 // pred_check_branch
          %824 = sbr.rel (%p822) target = $region160
        $region159: #{tpu_custom_call.1} parent=103 // pred_region
          %825 = dma.done [#allocation26], 2048
        $region160: #{tpu_custom_call.1} parent=103 // pred_fallthru
          _
        %s826 = sand.u32 %s55, 1
        %s827 = scalar_lea.sflag [#allocation5], %s826
        %s828 = sand.u32 %s55, 1
        %s829 = smul.addr %s828, 32
        %s830 = scalar_lea.vmem [#allocation4], %s829
        %p831 = pneg %p68
        %p832 = pneg %p65
        %s833 = sand.u32 %s47, 1
        %s834 = scalar_lea.sflag [#allocation8], %s833
        %s835 = sand.u32 %s81, 1
        %s836 = smul.addr %s835, 32
        %s837 = scalar_lea.vmem [#allocation7], %s836
        %p838 = pneg %p94
        %p839 = pneg %p91
        %p840 = pneg %p115
        %p841 = pneg %p112
        %p842 = pneg %p136
        %p843 = pneg %p133
        %p844 = pneg %p157
        %p845 = pneg %p154
        %p846 = pneg %p178
        %p847 = pneg %p175
        %p848 = pneg %p199
        %p849 = pneg %p196
        %p850 = pneg %p220
        %p851 = pneg %p217
        %p852 = pneg %p241
        %p853 = pneg %p238
        %p854 = pneg %p262
        %p855 = pneg %p259
        %p856 = pneg %p283
        %p857 = pneg %p280
        %p858 = pneg %p304
        %p859 = pneg %p301
        %p860 = pneg %p325
        %p861 = pneg %p322
        %p862 = pneg %p346
        %p863 = pneg %p343
        %p864 = pneg %p367
        %p865 = pneg %p364
        %p866 = pneg %p388
        %p867 = pneg %p385
        %p868 = pneg %p409
        %p869 = pneg %p406
        %p870 = pneg %p430
        %p871 = pneg %p427
        %p872 = pneg %p451
        %p873 = pneg %p448
        %p874 = pneg %p472
        %p875 = pneg %p469
        %p876 = pneg %p493
        %p877 = pneg %p490
        %p878 = pneg %p519
        %p879 = pneg %p516
        %s880 = sand.u32 %s506, 1
        %s881 = scalar_lea.sflag [#allocation6], %s880
        %s882 = sand.u32 %s506, 1
        %s883 = scalar_lea.vmem [#allocation27], %s882
        %v885 = vld [vmem:[%s764] sm:$0xff]
        %v886 = vld [vmem:[%s764 + $0x8] sm:$0xff]
        %v887 = vld [vmem:[%s764 + $0x10] sm:$0xff]
        %v888 = vld [vmem:[%s764 + $0x18] sm:$0xff]
        %v893 = vcombine.high %v885, %v885
        %v894 = vcombine.high %v886, %v886
        %v895 = vcombine.high %v887, %v887
        %v896 = vcombine.high %v888, %v888
        %v901 = vpack.c.bf16 %v885, %v885
        %v902 = vpack.c.bf16 %v893, %v893
        %v903 = vpack.c.bf16 %v886, %v886
        %v904 = vpack.c.bf16 %v894, %v894
        %v905 = vpack.c.bf16 %v887, %v887
        %v906 = vpack.c.bf16 %v895, %v895
        %v907 = vpack.c.bf16 %v888, %v888
        %v908 = vpack.c.bf16 %v896, %v896
        %v909 = vld [vmem:[#allocation9] sm:$0xff]
        %v910 = vld [vmem:[#allocation9 + $0x8] sm:$0xff]
        %v911 = vld [vmem:[#allocation9 + $0x10] sm:$0xff]
        %v912 = vld [vmem:[#allocation9 + $0x18] sm:$0xff]
        %v913 = vld [vmem:[#allocation9 + $0x20] sm:$0xff]
        %v914 = vld [vmem:[#allocation9 + $0x28] sm:$0xff]
        %v915 = vld [vmem:[#allocation9 + $0x30] sm:$0xff]
        %v916 = vld [vmem:[#allocation9 + $0x38] sm:$0xff]
        %v917 = vld [vmem:[#allocation9 + $0x40] sm:$0xff]
        %v918 = vld [vmem:[#allocation9 + $0x48] sm:$0xff]
        %v919 = vld [vmem:[#allocation9 + $0x50] sm:$0xff]
        %v920 = vld [vmem:[#allocation9 + $0x58] sm:$0xff]
        %v921 = vld [vmem:[#allocation9 + $0x60] sm:$0xff]
        %v922 = vld [vmem:[#allocation9 + $0x68] sm:$0xff]
        %v923 = vld [vmem:[#allocation9 + $0x70] sm:$0xff]
        %v924 = vld [vmem:[#allocation9 + $0x78] sm:$0xff]
        %v925 = vld [vmem:[#allocation9 + $0x80] sm:$0xff]
        %v926 = vld [vmem:[#allocation9 + $0x88] sm:$0xff]
        %v927 = vld [vmem:[#allocation9 + $0x90] sm:$0xff]
        %v928 = vld [vmem:[#allocation9 + $0x98] sm:$0xff]
        %v929 = vld [vmem:[#allocation9 + $0xa0] sm:$0xff]
        %v930 = vld [vmem:[#allocation9 + $0xa8] sm:$0xff]
        %v931 = vld [vmem:[#allocation9 + $0xb0] sm:$0xff]
        %v932 = vld [vmem:[#allocation9 + $0xb8] sm:$0xff]
        %v933 = vld [vmem:[#allocation9 + $0xc0] sm:$0xff]
        %v934 = vld [vmem:[#allocation9 + $0xc8] sm:$0xff]
        %v935 = vld [vmem:[#allocation9 + $0xd0] sm:$0xff]
        %v936 = vld [vmem:[#allocation9 + $0xd8] sm:$0xff]
        %v937 = vld [vmem:[#allocation9 + $0xe0] sm:$0xff]
        %v938 = vld [vmem:[#allocation9 + $0xe8] sm:$0xff]
        %v939 = vld [vmem:[#allocation9 + $0xf0] sm:$0xff]
        %v940 = vld [vmem:[#allocation9 + $0xf8] sm:$0xff]
        %v941 = vld [vmem:[#allocation9 + $0x100] sm:$0xff]
        %v942 = vld [vmem:[#allocation9 + $0x108] sm:$0xff]
        %v943 = vld [vmem:[#allocation9 + $0x110] sm:$0xff]
        %v944 = vld [vmem:[#allocation9 + $0x118] sm:$0xff]
        %v945 = vld [vmem:[#allocation9 + $0x120] sm:$0xff]
        %v946 = vld [vmem:[#allocation9 + $0x128] sm:$0xff]
        %v947 = vld [vmem:[#allocation9 + $0x130] sm:$0xff]
        %v948 = vld [vmem:[#allocation9 + $0x138] sm:$0xff]
        %v949 = vld [vmem:[#allocation9 + $0x140] sm:$0xff]
        %v950 = vld [vmem:[#allocation9 + $0x148] sm:$0xff]
        %v951 = vld [vmem:[#allocation9 + $0x150] sm:$0xff]
        %v952 = vld [vmem:[#allocation9 + $0x158] sm:$0xff]
        %v953 = vld [vmem:[#allocation9 + $0x160] sm:$0xff]
        %v954 = vld [vmem:[#allocation9 + $0x168] sm:$0xff]
        %v955 = vld [vmem:[#allocation9 + $0x170] sm:$0xff]
        %v956 = vld [vmem:[#allocation9 + $0x178] sm:$0xff]
        %v957 = vld [vmem:[#allocation9 + $0x180] sm:$0xff]
        %v958 = vld [vmem:[#allocation9 + $0x188] sm:$0xff]
        %v959 = vld [vmem:[#allocation9 + $0x190] sm:$0xff]
        %v960 = vld [vmem:[#allocation9 + $0x198] sm:$0xff]
        %v961 = vld [vmem:[#allocation9 + $0x1a0] sm:$0xff]
        %v962 = vld [vmem:[#allocation9 + $0x1a8] sm:$0xff]
        %v963 = vld [vmem:[#allocation9 + $0x1b0] sm:$0xff]
        %v964 = vld [vmem:[#allocation9 + $0x1b8] sm:$0xff]
        %v965 = vld [vmem:[#allocation9 + $0x1c0] sm:$0xff]
        %v966 = vld [vmem:[#allocation9 + $0x1c8] sm:$0xff]
        %v967 = vld [vmem:[#allocation9 + $0x1d0] sm:$0xff]
        %v968 = vld [vmem:[#allocation9 + $0x1d8] sm:$0xff]
        %v969 = vld [vmem:[#allocation9 + $0x1e0] sm:$0xff]
        %v970 = vld [vmem:[#allocation9 + $0x1e8] sm:$0xff]
        %v971 = vld [vmem:[#allocation9 + $0x1f0] sm:$0xff]
        %v972 = vld [vmem:[#allocation9 + $0x1f8] sm:$0xff]
        %v973 = vld [vmem:[#allocation9 + $0x200] sm:$0xff]
        %v974 = vld [vmem:[#allocation9 + $0x208] sm:$0xff]
        %v975 = vld [vmem:[#allocation9 + $0x210] sm:$0xff]
        %v976 = vld [vmem:[#allocation9 + $0x218] sm:$0xff]
        %v977 = vld [vmem:[#allocation9 + $0x220] sm:$0xff]
        %v978 = vld [vmem:[#allocation9 + $0x228] sm:$0xff]
        %v979 = vld [vmem:[#allocation9 + $0x230] sm:$0xff]
        %v980 = vld [vmem:[#allocation9 + $0x238] sm:$0xff]
        %v981 = vld [vmem:[#allocation9 + $0x240] sm:$0xff]
        %v982 = vld [vmem:[#allocation9 + $0x248] sm:$0xff]
        %v983 = vld [vmem:[#allocation9 + $0x250] sm:$0xff]
        %v984 = vld [vmem:[#allocation9 + $0x258] sm:$0xff]
        %v985 = vld [vmem:[#allocation9 + $0x260] sm:$0xff]
        %v986 = vld [vmem:[#allocation9 + $0x268] sm:$0xff]
        %v987 = vld [vmem:[#allocation9 + $0x270] sm:$0xff]
        %v988 = vld [vmem:[#allocation9 + $0x278] sm:$0xff]
        %v989 = vld [vmem:[#allocation9 + $0x280] sm:$0xff]
        %v990 = vld [vmem:[#allocation9 + $0x288] sm:$0xff]
        %v991 = vld [vmem:[#allocation9 + $0x290] sm:$0xff]
        %v992 = vld [vmem:[#allocation9 + $0x298] sm:$0xff]
        %v993 = vld [vmem:[#allocation9 + $0x2a0] sm:$0xff]
        %v994 = vld [vmem:[#allocation9 + $0x2a8] sm:$0xff]
        %v995 = vld [vmem:[#allocation9 + $0x2b0] sm:$0xff]
        %v996 = vld [vmem:[#allocation9 + $0x2b8] sm:$0xff]
        %v997 = vld [vmem:[#allocation9 + $0x2c0] sm:$0xff]
        %v998 = vld [vmem:[#allocation9 + $0x2c8] sm:$0xff]
        %v999 = vld [vmem:[#allocation9 + $0x2d0] sm:$0xff]
        %v1000 = vld [vmem:[#allocation9 + $0x2d8] sm:$0xff]
        %v1001 = vld [vmem:[#allocation9 + $0x2e0] sm:$0xff]
        %v1002 = vld [vmem:[#allocation9 + $0x2e8] sm:$0xff]
        %v1003 = vld [vmem:[#allocation9 + $0x2f0] sm:$0xff]
        %v1004 = vld [vmem:[#allocation9 + $0x2f8] sm:$0xff]
        %v1005 = vld [vmem:[#allocation9 + $0x300] sm:$0xff]
        %v1006 = vld [vmem:[#allocation9 + $0x308] sm:$0xff]
        %v1007 = vld [vmem:[#allocation9 + $0x310] sm:$0xff]
        %v1008 = vld [vmem:[#allocation9 + $0x318] sm:$0xff]
        %v1009 = vld [vmem:[#allocation9 + $0x320] sm:$0xff]
        %v1010 = vld [vmem:[#allocation9 + $0x328] sm:$0xff]
        %v1011 = vld [vmem:[#allocation9 + $0x330] sm:$0xff]
        %v1012 = vld [vmem:[#allocation9 + $0x338] sm:$0xff]
        %v1013 = vld [vmem:[#allocation9 + $0x340] sm:$0xff]
        %v1014 = vld [vmem:[#allocation9 + $0x348] sm:$0xff]
        %v1015 = vld [vmem:[#allocation9 + $0x350] sm:$0xff]
        %v1016 = vld [vmem:[#allocation9 + $0x358] sm:$0xff]
        %v1017 = vld [vmem:[#allocation9 + $0x360] sm:$0xff]
        %v1018 = vld [vmem:[#allocation9 + $0x368] sm:$0xff]
        %v1019 = vld [vmem:[#allocation9 + $0x370] sm:$0xff]
        %v1020 = vld [vmem:[#allocation9 + $0x378] sm:$0xff]
        %v1021 = vld [vmem:[#allocation9 + $0x380] sm:$0xff]
        %v1022 = vld [vmem:[#allocation9 + $0x388] sm:$0xff]
        %v1023 = vld [vmem:[#allocation9 + $0x390] sm:$0xff]
        %v1024 = vld [vmem:[#allocation9 + $0x398] sm:$0xff]
        %v1025 = vld [vmem:[#allocation9 + $0x3a0] sm:$0xff]
        %v1026 = vld [vmem:[#allocation9 + $0x3a8] sm:$0xff]
        %v1027 = vld [vmem:[#allocation9 + $0x3b0] sm:$0xff]
        %v1028 = vld [vmem:[#allocation9 + $0x3b8] sm:$0xff]
        %v1029 = vld [vmem:[#allocation9 + $0x3c0] sm:$0xff]
        %v1030 = vld [vmem:[#allocation9 + $0x3c8] sm:$0xff]
        %v1031 = vld [vmem:[#allocation9 + $0x3d0] sm:$0xff]
        %v1032 = vld [vmem:[#allocation9 + $0x3d8] sm:$0xff]
        %v1033 = vld [vmem:[#allocation9 + $0x3e0] sm:$0xff]
        %v1034 = vld [vmem:[#allocation9 + $0x3e8] sm:$0xff]
        %v1035 = vld [vmem:[#allocation9 + $0x3f0] sm:$0xff]
        %v1036 = vld [vmem:[#allocation9 + $0x3f8] sm:$0xff]
        %v1037 = vld [vmem:[%s3] sm:$0x3]
        %v1039 = vlaneseq
        %v1040 = vshrl.u32 %v1039, 7
        %v1041 = vsub.s32 0, %v1040
        %v1042 = vrot.slane %v1037, %v1041
        %v1043 = vlaneseq
        %v1044 = vshrl.u32 %v1043, 7
        %v1045 = vsub.s32 1, %v1044
        %v1046 = vrot.slane %v1037, %v1045
        %v1177 = vunpack.c.l.b16 %v909
        %v1178 = vunpack.c.h.b16 %v909
        %v1179 = vunpack.c.l.b16 %v910
        %v1180 = vunpack.c.h.b16 %v910
        %v1181 = vunpack.c.l.b16 %v911
        %v1182 = vunpack.c.h.b16 %v911
        %v1183 = vunpack.c.l.b16 %v912
        %v1184 = vunpack.c.h.b16 %v912
        %v1185 = vunpack.c.l.b16 %v913
        %v1186 = vunpack.c.h.b16 %v913
        %v1187 = vunpack.c.l.b16 %v914
        %v1188 = vunpack.c.h.b16 %v914
        %v1189 = vunpack.c.l.b16 %v915
        %v1190 = vunpack.c.h.b16 %v915
        %v1191 = vunpack.c.l.b16 %v916
        %v1192 = vunpack.c.h.b16 %v916
        %v1193 = vunpack.c.l.b16 %v917
        %v1194 = vunpack.c.h.b16 %v917
        %v1195 = vunpack.c.l.b16 %v918
        %v1196 = vunpack.c.h.b16 %v918
        %v1197 = vunpack.c.l.b16 %v919
        %v1198 = vunpack.c.h.b16 %v919
        %v1199 = vunpack.c.l.b16 %v920
        %v1200 = vunpack.c.h.b16 %v920
        %v1201 = vunpack.c.l.b16 %v921
        %v1202 = vunpack.c.h.b16 %v921
        %v1203 = vunpack.c.l.b16 %v922
        %v1204 = vunpack.c.h.b16 %v922
        %v1205 = vunpack.c.l.b16 %v923
        %v1206 = vunpack.c.h.b16 %v923
        %v1207 = vunpack.c.l.b16 %v924
        %v1208 = vunpack.c.h.b16 %v924
        %v1209 = vunpack.c.l.b16 %v925
        %v1210 = vunpack.c.h.b16 %v925
        %v1211 = vunpack.c.l.b16 %v926
        %v1212 = vunpack.c.h.b16 %v926
        %v1213 = vunpack.c.l.b16 %v927
        %v1214 = vunpack.c.h.b16 %v927
        %v1215 = vunpack.c.l.b16 %v928
        %v1216 = vunpack.c.h.b16 %v928
        %v1217 = vunpack.c.l.b16 %v929
        %v1218 = vunpack.c.h.b16 %v929
        %v1219 = vunpack.c.l.b16 %v930
        %v1220 = vunpack.c.h.b16 %v930
        %v1221 = vunpack.c.l.b16 %v931
        %v1222 = vunpack.c.h.b16 %v931
        %v1223 = vunpack.c.l.b16 %v932
        %v1224 = vunpack.c.h.b16 %v932
        %v1225 = vunpack.c.l.b16 %v933
        %v1226 = vunpack.c.h.b16 %v933
        %v1227 = vunpack.c.l.b16 %v934
        %v1228 = vunpack.c.h.b16 %v934
        %v1229 = vunpack.c.l.b16 %v935
        %v1230 = vunpack.c.h.b16 %v935
        %v1231 = vunpack.c.l.b16 %v936
        %v1232 = vunpack.c.h.b16 %v936
        %v1233 = vunpack.c.l.b16 %v937
        %v1234 = vunpack.c.h.b16 %v937
        %v1235 = vunpack.c.l.b16 %v938
        %v1236 = vunpack.c.h.b16 %v938
        %v1237 = vunpack.c.l.b16 %v939
        %v1238 = vunpack.c.h.b16 %v939
        %v1239 = vunpack.c.l.b16 %v940
        %v1240 = vunpack.c.h.b16 %v940
        %v1241 = vunpack.c.l.b16 %v941
        %v1242 = vunpack.c.h.b16 %v941
        %v1243 = vunpack.c.l.b16 %v942
        %v1244 = vunpack.c.h.b16 %v942
        %v1245 = vunpack.c.l.b16 %v943
        %v1246 = vunpack.c.h.b16 %v943
        %v1247 = vunpack.c.l.b16 %v944
        %v1248 = vunpack.c.h.b16 %v944
        %v1249 = vunpack.c.l.b16 %v945
        %v1250 = vunpack.c.h.b16 %v945
        %v1251 = vunpack.c.l.b16 %v946
        %v1252 = vunpack.c.h.b16 %v946
        %v1253 = vunpack.c.l.b16 %v947
        %v1254 = vunpack.c.h.b16 %v947
        %v1255 = vunpack.c.l.b16 %v948
        %v1256 = vunpack.c.h.b16 %v948
        %v1257 = vunpack.c.l.b16 %v949
        %v1258 = vunpack.c.h.b16 %v949
        %v1259 = vunpack.c.l.b16 %v950
        %v1260 = vunpack.c.h.b16 %v950
        %v1261 = vunpack.c.l.b16 %v951
        %v1262 = vunpack.c.h.b16 %v951
        %v1263 = vunpack.c.l.b16 %v952
        %v1264 = vunpack.c.h.b16 %v952
        %v1265 = vunpack.c.l.b16 %v953
        %v1266 = vunpack.c.h.b16 %v953
        %v1267 = vunpack.c.l.b16 %v954
        %v1268 = vunpack.c.h.b16 %v954
        %v1269 = vunpack.c.l.b16 %v955
        %v1270 = vunpack.c.h.b16 %v955
        %v1271 = vunpack.c.l.b16 %v956
        %v1272 = vunpack.c.h.b16 %v956
        %v1273 = vunpack.c.l.b16 %v957
        %v1274 = vunpack.c.h.b16 %v957
        %v1275 = vunpack.c.l.b16 %v958
        %v1276 = vunpack.c.h.b16 %v958
        %v1277 = vunpack.c.l.b16 %v959
        %v1278 = vunpack.c.h.b16 %v959
        %v1279 = vunpack.c.l.b16 %v960
        %v1280 = vunpack.c.h.b16 %v960
        %v1281 = vunpack.c.l.b16 %v961
        %v1282 = vunpack.c.h.b16 %v961
        %v1283 = vunpack.c.l.b16 %v962
        %v1284 = vunpack.c.h.b16 %v962
        %v1285 = vunpack.c.l.b16 %v963
        %v1286 = vunpack.c.h.b16 %v963
        %v1287 = vunpack.c.l.b16 %v964
        %v1288 = vunpack.c.h.b16 %v964
        %v1289 = vunpack.c.l.b16 %v965
        %v1290 = vunpack.c.h.b16 %v965
        %v1291 = vunpack.c.l.b16 %v966
        %v1292 = vunpack.c.h.b16 %v966
        %v1293 = vunpack.c.l.b16 %v967
        %v1294 = vunpack.c.h.b16 %v967
        %v1295 = vunpack.c.l.b16 %v968
        %v1296 = vunpack.c.h.b16 %v968
        %v1297 = vunpack.c.l.b16 %v969
        %v1298 = vunpack.c.h.b16 %v969
        %v1299 = vunpack.c.l.b16 %v970
        %v1300 = vunpack.c.h.b16 %v970
        %v1301 = vunpack.c.l.b16 %v971
        %v1302 = vunpack.c.h.b16 %v971
        %v1303 = vunpack.c.l.b16 %v972
        %v1304 = vunpack.c.h.b16 %v972
        %v1305 = vunpack.c.l.b16 %v973
        %v1306 = vunpack.c.h.b16 %v973
        %v1307 = vunpack.c.l.b16 %v974
        %v1308 = vunpack.c.h.b16 %v974
        %v1309 = vunpack.c.l.b16 %v975
        %v1310 = vunpack.c.h.b16 %v975
        %v1311 = vunpack.c.l.b16 %v976
        %v1312 = vunpack.c.h.b16 %v976
        %v1313 = vunpack.c.l.b16 %v977
        %v1314 = vunpack.c.h.b16 %v977
        %v1315 = vunpack.c.l.b16 %v978
        %v1316 = vunpack.c.h.b16 %v978
        %v1317 = vunpack.c.l.b16 %v979
        %v1318 = vunpack.c.h.b16 %v979
        %v1319 = vunpack.c.l.b16 %v980
        %v1320 = vunpack.c.h.b16 %v980
        %v1321 = vunpack.c.l.b16 %v981
        %v1322 = vunpack.c.h.b16 %v981
        %v1323 = vunpack.c.l.b16 %v982
        %v1324 = vunpack.c.h.b16 %v982
        %v1325 = vunpack.c.l.b16 %v983
        %v1326 = vunpack.c.h.b16 %v983
        %v1327 = vunpack.c.l.b16 %v984
        %v1328 = vunpack.c.h.b16 %v984
        %v1329 = vunpack.c.l.b16 %v985
        %v1330 = vunpack.c.h.b16 %v985
        %v1331 = vunpack.c.l.b16 %v986
        %v1332 = vunpack.c.h.b16 %v986
        %v1333 = vunpack.c.l.b16 %v987
        %v1334 = vunpack.c.h.b16 %v987
        %v1335 = vunpack.c.l.b16 %v988
        %v1336 = vunpack.c.h.b16 %v988
        %v1337 = vunpack.c.l.b16 %v989
        %v1338 = vunpack.c.h.b16 %v989
        %v1339 = vunpack.c.l.b16 %v990
        %v1340 = vunpack.c.h.b16 %v990
        %v1341 = vunpack.c.l.b16 %v991
        %v1342 = vunpack.c.h.b16 %v991
        %v1343 = vunpack.c.l.b16 %v992
        %v1344 = vunpack.c.h.b16 %v992
        %v1345 = vunpack.c.l.b16 %v993
        %v1346 = vunpack.c.h.b16 %v993
        %v1347 = vunpack.c.l.b16 %v994
        %v1348 = vunpack.c.h.b16 %v994
        %v1349 = vunpack.c.l.b16 %v995
        %v1350 = vunpack.c.h.b16 %v995
        %v1351 = vunpack.c.l.b16 %v996
        %v1352 = vunpack.c.h.b16 %v996
        %v1353 = vunpack.c.l.b16 %v997
        %v1354 = vunpack.c.h.b16 %v997
        %v1355 = vunpack.c.l.b16 %v998
        %v1356 = vunpack.c.h.b16 %v998
        %v1357 = vunpack.c.l.b16 %v999
        %v1358 = vunpack.c.h.b16 %v999
        %v1359 = vunpack.c.l.b16 %v1000
        %v1360 = vunpack.c.h.b16 %v1000
        %v1361 = vunpack.c.l.b16 %v1001
        %v1362 = vunpack.c.h.b16 %v1001
        %v1363 = vunpack.c.l.b16 %v1002
        %v1364 = vunpack.c.h.b16 %v1002
        %v1365 = vunpack.c.l.b16 %v1003
        %v1366 = vunpack.c.h.b16 %v1003
        %v1367 = vunpack.c.l.b16 %v1004
        %v1368 = vunpack.c.h.b16 %v1004
        %v1369 = vunpack.c.l.b16 %v1005
        %v1370 = vunpack.c.h.b16 %v1005
        %v1371 = vunpack.c.l.b16 %v1006
        %v1372 = vunpack.c.h.b16 %v1006
        %v1373 = vunpack.c.l.b16 %v1007
        %v1374 = vunpack.c.h.b16 %v1007
        %v1375 = vunpack.c.l.b16 %v1008
        %v1376 = vunpack.c.h.b16 %v1008
        %v1377 = vunpack.c.l.b16 %v1009
        %v1378 = vunpack.c.h.b16 %v1009
        %v1379 = vunpack.c.l.b16 %v1010
        %v1380 = vunpack.c.h.b16 %v1010
        %v1381 = vunpack.c.l.b16 %v1011
        %v1382 = vunpack.c.h.b16 %v1011
        %v1383 = vunpack.c.l.b16 %v1012
        %v1384 = vunpack.c.h.b16 %v1012
        %v1385 = vunpack.c.l.b16 %v1013
        %v1386 = vunpack.c.h.b16 %v1013
        %v1387 = vunpack.c.l.b16 %v1014
        %v1388 = vunpack.c.h.b16 %v1014
        %v1389 = vunpack.c.l.b16 %v1015
        %v1390 = vunpack.c.h.b16 %v1015
        %v1391 = vunpack.c.l.b16 %v1016
        %v1392 = vunpack.c.h.b16 %v1016
        %v1393 = vunpack.c.l.b16 %v1017
        %v1394 = vunpack.c.h.b16 %v1017
        %v1395 = vunpack.c.l.b16 %v1018
        %v1396 = vunpack.c.h.b16 %v1018
        %v1397 = vunpack.c.l.b16 %v1019
        %v1398 = vunpack.c.h.b16 %v1019
        %v1399 = vunpack.c.l.b16 %v1020
        %v1400 = vunpack.c.h.b16 %v1020
        %v1401 = vunpack.c.l.b16 %v1021
        %v1402 = vunpack.c.h.b16 %v1021
        %v1403 = vunpack.c.l.b16 %v1022
        %v1404 = vunpack.c.h.b16 %v1022
        %v1405 = vunpack.c.l.b16 %v1023
        %v1406 = vunpack.c.h.b16 %v1023
        %v1407 = vunpack.c.l.b16 %v1024
        %v1408 = vunpack.c.h.b16 %v1024
        %v1409 = vunpack.c.l.b16 %v1025
        %v1410 = vunpack.c.h.b16 %v1025
        %v1411 = vunpack.c.l.b16 %v1026
        %v1412 = vunpack.c.h.b16 %v1026
        %v1413 = vunpack.c.l.b16 %v1027
        %v1414 = vunpack.c.h.b16 %v1027
        %v1415 = vunpack.c.l.b16 %v1028
        %v1416 = vunpack.c.h.b16 %v1028
        %v1417 = vunpack.c.l.b16 %v1029
        %v1418 = vunpack.c.h.b16 %v1029
        %v1419 = vunpack.c.l.b16 %v1030
        %v1420 = vunpack.c.h.b16 %v1030
        %v1421 = vunpack.c.l.b16 %v1031
        %v1422 = vunpack.c.h.b16 %v1031
        %v1423 = vunpack.c.l.b16 %v1032
        %v1424 = vunpack.c.h.b16 %v1032
        %v1425 = vunpack.c.l.b16 %v1033
        %v1426 = vunpack.c.h.b16 %v1033
        %v1427 = vunpack.c.l.b16 %v1034
        %v1428 = vunpack.c.h.b16 %v1034
        %v1429 = vunpack.c.l.b16 %v1035
        %v1430 = vunpack.c.h.b16 %v1035
        %v1431 = vunpack.c.l.b16 %v1036
        %v1432 = vunpack.c.h.b16 %v1036
        %v1433 = vpack.c.b16 %v1179, %v1177
        %v1434 = vpack.c.b16 %v1180, %v1178
        %v1435 = vpack.c.b16 %v1183, %v1181
        %v1436 = vpack.c.b16 %v1184, %v1182
        %v1437 = vpack.c.b16 %v1187, %v1185
        %v1438 = vpack.c.b16 %v1188, %v1186
        %v1439 = vpack.c.b16 %v1191, %v1189
        %v1440 = vpack.c.b16 %v1192, %v1190
        %v1441 = vpack.c.b16 %v1195, %v1193
        %v1442 = vpack.c.b16 %v1196, %v1194
        %v1443 = vpack.c.b16 %v1199, %v1197
        %v1444 = vpack.c.b16 %v1200, %v1198
        %v1445 = vpack.c.b16 %v1203, %v1201
        %v1446 = vpack.c.b16 %v1204, %v1202
        %v1447 = vpack.c.b16 %v1207, %v1205
        %v1448 = vpack.c.b16 %v1208, %v1206
        %v1449 = vpack.c.b16 %v1211, %v1209
        %v1450 = vpack.c.b16 %v1212, %v1210
        %v1451 = vpack.c.b16 %v1215, %v1213
        %v1452 = vpack.c.b16 %v1216, %v1214
        %v1453 = vpack.c.b16 %v1219, %v1217
        %v1454 = vpack.c.b16 %v1220, %v1218
        %v1455 = vpack.c.b16 %v1223, %v1221
        %v1456 = vpack.c.b16 %v1224, %v1222
        %v1457 = vpack.c.b16 %v1227, %v1225
        %v1458 = vpack.c.b16 %v1228, %v1226
        %v1459 = vpack.c.b16 %v1231, %v1229
        %v1460 = vpack.c.b16 %v1232, %v1230
        %v1461 = vpack.c.b16 %v1235, %v1233
        %v1462 = vpack.c.b16 %v1236, %v1234
        %v1463 = vpack.c.b16 %v1239, %v1237
        %v1464 = vpack.c.b16 %v1240, %v1238
        %v1465 = vpack.c.b16 %v1243, %v1241
        %v1466 = vpack.c.b16 %v1244, %v1242
        %v1467 = vpack.c.b16 %v1247, %v1245
        %v1468 = vpack.c.b16 %v1248, %v1246
        %v1469 = vpack.c.b16 %v1251, %v1249
        %v1470 = vpack.c.b16 %v1252, %v1250
        %v1471 = vpack.c.b16 %v1255, %v1253
        %v1472 = vpack.c.b16 %v1256, %v1254
        %v1473 = vpack.c.b16 %v1259, %v1257
        %v1474 = vpack.c.b16 %v1260, %v1258
        %v1475 = vpack.c.b16 %v1263, %v1261
        %v1476 = vpack.c.b16 %v1264, %v1262
        %v1477 = vpack.c.b16 %v1267, %v1265
        %v1478 = vpack.c.b16 %v1268, %v1266
        %v1479 = vpack.c.b16 %v1271, %v1269
        %v1480 = vpack.c.b16 %v1272, %v1270
        %v1481 = vpack.c.b16 %v1275, %v1273
        %v1482 = vpack.c.b16 %v1276, %v1274
        %v1483 = vpack.c.b16 %v1279, %v1277
        %v1484 = vpack.c.b16 %v1280, %v1278
        %v1485 = vpack.c.b16 %v1283, %v1281
        %v1486 = vpack.c.b16 %v1284, %v1282
        %v1487 = vpack.c.b16 %v1287, %v1285
        %v1488 = vpack.c.b16 %v1288, %v1286
        %v1489 = vpack.c.b16 %v1291, %v1289
        %v1490 = vpack.c.b16 %v1292, %v1290
        %v1491 = vpack.c.b16 %v1295, %v1293
        %v1492 = vpack.c.b16 %v1296, %v1294
        %v1493 = vpack.c.b16 %v1299, %v1297
        %v1494 = vpack.c.b16 %v1300, %v1298
        %v1495 = vpack.c.b16 %v1303, %v1301
        %v1496 = vpack.c.b16 %v1304, %v1302
        %v1497 = vpack.c.b16 %v1307, %v1305
        %v1498 = vpack.c.b16 %v1308, %v1306
        %v1499 = vpack.c.b16 %v1311, %v1309
        %v1500 = vpack.c.b16 %v1312, %v1310
        %v1501 = vpack.c.b16 %v1315, %v1313
        %v1502 = vpack.c.b16 %v1316, %v1314
        %v1503 = vpack.c.b16 %v1319, %v1317
        %v1504 = vpack.c.b16 %v1320, %v1318
        %v1505 = vpack.c.b16 %v1323, %v1321
        %v1506 = vpack.c.b16 %v1324, %v1322
        %v1507 = vpack.c.b16 %v1327, %v1325
        %v1508 = vpack.c.b16 %v1328, %v1326
        %v1509 = vpack.c.b16 %v1331, %v1329
        %v1510 = vpack.c.b16 %v1332, %v1330
        %v1511 = vpack.c.b16 %v1335, %v1333
        %v1512 = vpack.c.b16 %v1336, %v1334
        %v1513 = vpack.c.b16 %v1339, %v1337
        %v1514 = vpack.c.b16 %v1340, %v1338
        %v1515 = vpack.c.b16 %v1343, %v1341
        %v1516 = vpack.c.b16 %v1344, %v1342
        %v1517 = vpack.c.b16 %v1347, %v1345
        %v1518 = vpack.c.b16 %v1348, %v1346
        %v1519 = vpack.c.b16 %v1351, %v1349
        %v1520 = vpack.c.b16 %v1352, %v1350
        %v1521 = vpack.c.b16 %v1355, %v1353
        %v1522 = vpack.c.b16 %v1356, %v1354
        %v1523 = vpack.c.b16 %v1359, %v1357
        %v1524 = vpack.c.b16 %v1360, %v1358
        %v1525 = vpack.c.b16 %v1363, %v1361
        %v1526 = vpack.c.b16 %v1364, %v1362
        %v1527 = vpack.c.b16 %v1367, %v1365
        %v1528 = vpack.c.b16 %v1368, %v1366
        %v1529 = vpack.c.b16 %v1371, %v1369
        %v1530 = vpack.c.b16 %v1372, %v1370
        %v1531 = vpack.c.b16 %v1375, %v1373
        %v1532 = vpack.c.b16 %v1376, %v1374
        %v1533 = vpack.c.b16 %v1379, %v1377
        %v1534 = vpack.c.b16 %v1380, %v1378
        %v1535 = vpack.c.b16 %v1383, %v1381
        %v1536 = vpack.c.b16 %v1384, %v1382
        %v1537 = vpack.c.b16 %v1387, %v1385
        %v1538 = vpack.c.b16 %v1388, %v1386
        %v1539 = vpack.c.b16 %v1391, %v1389
        %v1540 = vpack.c.b16 %v1392, %v1390
        %v1541 = vpack.c.b16 %v1395, %v1393
        %v1542 = vpack.c.b16 %v1396, %v1394
        %v1543 = vpack.c.b16 %v1399, %v1397
        %v1544 = vpack.c.b16 %v1400, %v1398
        %v1545 = vpack.c.b16 %v1403, %v1401
        %v1546 = vpack.c.b16 %v1404, %v1402
        %v1547 = vpack.c.b16 %v1407, %v1405
        %v1548 = vpack.c.b16 %v1408, %v1406
        %v1549 = vpack.c.b16 %v1411, %v1409
        %v1550 = vpack.c.b16 %v1412, %v1410
        %v1551 = vpack.c.b16 %v1415, %v1413
        %v1552 = vpack.c.b16 %v1416, %v1414
        %v1553 = vpack.c.b16 %v1419, %v1417
        %v1554 = vpack.c.b16 %v1420, %v1418
        %v1555 = vpack.c.b16 %v1423, %v1421
        %v1556 = vpack.c.b16 %v1424, %v1422
        %v1557 = vpack.c.b16 %v1427, %v1425
        %v1558 = vpack.c.b16 %v1428, %v1426
        %v1559 = vpack.c.b16 %v1431, %v1429
        %v1560 = vpack.c.b16 %v1432, %v1430
        %1689 = vmatprep.subr.bf16.mxu0 %v1448
        %1690 = vmatpush1.bf16.msra.mxu0 %v1447
        %1691 = vmatprep.subr.bf16.mxu0 %v1446
        %1692 = vmatpush1.bf16.msra.mxu0 %v1445
        %1693 = vmatprep.subr.bf16.mxu0 %v1444
        %1694 = vmatpush1.bf16.msra.mxu0 %v1443
        %1695 = vmatprep.subr.bf16.mxu0 %v1442
        %1696 = vmatpush1.bf16.msra.mxu0 %v1441
        %1697 = vmatprep.subr.bf16.mxu0 %v1440
        %1698 = vmatpush1.bf16.msra.mxu0 %v1439
        %1699 = vmatprep.subr.bf16.mxu0 %v1438
        %1700 = vmatpush1.bf16.msra.mxu0 %v1437
        %1701 = vmatprep.subr.bf16.mxu0 %v1436
        %1702 = vmatpush1.bf16.msra.mxu0 %v1435
        %1703 = vmatprep.subr.bf16.mxu0 %v1434
        %1704 = vmatpush1.bf16.msra.mxu0 %v1433
        %1705 = vmatprep.subr.bf16.mxu0 %v1464
        %1706 = vmatpush2.bf16.msra.mxu0 %v1463
        %1707 = vmatprep.subr.bf16.mxu0 %v1462
        %1708 = vmatpush2.bf16.msra.mxu0 %v1461
        %1709 = vmatprep.subr.bf16.mxu0 %v1460
        %1710 = vmatpush2.bf16.msra.mxu0 %v1459
        %1711 = vmatprep.subr.bf16.mxu0 %v1458
        %1712 = vmatpush2.bf16.msra.mxu0 %v1457
        %1713 = vmatprep.subr.bf16.mxu0 %v1456
        %1714 = vmatpush2.bf16.msra.mxu0 %v1455
        %1715 = vmatprep.subr.bf16.mxu0 %v1454
        %1716 = vmatpush2.bf16.msra.mxu0 %v1453
        %1717 = vmatprep.subr.bf16.mxu0 %v1452
        %1718 = vmatpush2.bf16.msra.mxu0 %v1451
        %1719 = vmatprep.subr.bf16.mxu0 %v1450
        %1720 = vmatpush2.bf16.msra.mxu0 %v1449
        %1721 = vmatprep.mubr.bf16.mxu0 %v902
        %1722 = vmatmul.mubr.bf16.gmra.mxu0 %v901
        %v1723 = vpop.f32.mrf.mxu0
        %v1724 = vadd.f32 %v1042, %v1723
        %v1725 = vpop.f32.mrf.mxu0
        %v1726 = vadd.f32 %v1046, %v1725
        %v1727 = vpop.f32.mrf.mxu0
        %v1728 = vpop.f32.mrf.mxu0
        %1729 = vdwg.mxu0
        %1730 = vmatprep.subr.bf16.mxu0 %v1480
        %1731 = vmatpush1.bf16.msra.mxu0 %v1479
        %1732 = vmatprep.subr.bf16.mxu0 %v1478
        %1733 = vmatpush1.bf16.msra.mxu0 %v1477
        %1734 = vmatprep.subr.bf16.mxu0 %v1476
        %1735 = vmatpush1.bf16.msra.mxu0 %v1475
        %1736 = vmatprep.subr.bf16.mxu0 %v1474
        %1737 = vmatpush1.bf16.msra.mxu0 %v1473
        %1738 = vmatprep.subr.bf16.mxu0 %v1472
        %1739 = vmatpush1.bf16.msra.mxu0 %v1471
        %1740 = vmatprep.subr.bf16.mxu0 %v1470
        %1741 = vmatpush1.bf16.msra.mxu0 %v1469
        %1742 = vmatprep.subr.bf16.mxu0 %v1468
        %1743 = vmatpush1.bf16.msra.mxu0 %v1467
        %1744 = vmatprep.subr.bf16.mxu0 %v1466
        %1745 = vmatpush1.bf16.msra.mxu0 %v1465
        %1746 = vmatprep.subr.bf16.mxu0 %v1496
        %1747 = vmatpush2.bf16.msra.mxu0 %v1495
        %1748 = vmatprep.subr.bf16.mxu0 %v1494
        %1749 = vmatpush2.bf16.msra.mxu0 %v1493
        %1750 = vmatprep.subr.bf16.mxu0 %v1492
        %1751 = vmatpush2.bf16.msra.mxu0 %v1491
        %1752 = vmatprep.subr.bf16.mxu0 %v1490
        %1753 = vmatpush2.bf16.msra.mxu0 %v1489
        %1754 = vmatprep.subr.bf16.mxu0 %v1488
        %1755 = vmatpush2.bf16.msra.mxu0 %v1487
        %1756 = vmatprep.subr.bf16.mxu0 %v1486
        %1757 = vmatpush2.bf16.msra.mxu0 %v1485
        %1758 = vmatprep.subr.bf16.mxu0 %v1484
        %1759 = vmatpush2.bf16.msra.mxu0 %v1483
        %1760 = vmatprep.subr.bf16.mxu0 %v1482
        %1761 = vmatpush2.bf16.msra.mxu0 %v1481
        %1762 = vmatprep.mubr.bf16.mxu0 %v904
        %1763 = vmatmul.mubr.bf16.gmra.mxu0 %v903
        %v1764 = vpop.f32.mrf.mxu0
        %v1765 = vadd.f32 %v1724, %v1764
        %v1766 = vpop.f32.mrf.mxu0
        %v1767 = vadd.f32 %v1726, %v1766
        %v1768 = vpop.f32.mrf.mxu0
        %v1769 = vpop.f32.mrf.mxu0
        %1770 = vdwg.mxu0
        %1771 = vmatprep.subr.bf16.mxu0 %v1512
        %1772 = vmatpush1.bf16.msra.mxu0 %v1511
        %1773 = vmatprep.subr.bf16.mxu0 %v1510
        %1774 = vmatpush1.bf16.msra.mxu0 %v1509
        %1775 = vmatprep.subr.bf16.mxu0 %v1508
        %1776 = vmatpush1.bf16.msra.mxu0 %v1507
        %1777 = vmatprep.subr.bf16.mxu0 %v1506
        %1778 = vmatpush1.bf16.msra.mxu0 %v1505
        %1779 = vmatprep.subr.bf16.mxu0 %v1504
        %1780 = vmatpush1.bf16.msra.mxu0 %v1503
        %1781 = vmatprep.subr.bf16.mxu0 %v1502
        %1782 = vmatpush1.bf16.msra.mxu0 %v1501
        %1783 = vmatprep.subr.bf16.mxu0 %v1500
        %1784 = vmatpush1.bf16.msra.mxu0 %v1499
        %1785 = vmatprep.subr.bf16.mxu0 %v1498
        %1786 = vmatpush1.bf16.msra.mxu0 %v1497
        %1787 = vmatprep.subr.bf16.mxu0 %v1528
        %1788 = vmatpush2.bf16.msra.mxu0 %v1527
        %1789 = vmatprep.subr.bf16.mxu0 %v1526
        %1790 = vmatpush2.bf16.msra.mxu0 %v1525
        %1791 = vmatprep.subr.bf16.mxu0 %v1524
        %1792 = vmatpush2.bf16.msra.mxu0 %v1523
        %1793 = vmatprep.subr.bf16.mxu0 %v1522
        %1794 = vmatpush2.bf16.msra.mxu0 %v1521
        %1795 = vmatprep.subr.bf16.mxu0 %v1520
        %1796 = vmatpush2.bf16.msra.mxu0 %v1519
        %1797 = vmatprep.subr.bf16.mxu0 %v1518
        %1798 = vmatpush2.bf16.msra.mxu0 %v1517
        %1799 = vmatprep.subr.bf16.mxu0 %v1516
        %1800 = vmatpush2.bf16.msra.mxu0 %v1515
        %1801 = vmatprep.subr.bf16.mxu0 %v1514
        %1802 = vmatpush2.bf16.msra.mxu0 %v1513
        %1803 = vmatprep.mubr.bf16.mxu0 %v906
        %1804 = vmatmul.mubr.bf16.gmra.mxu0 %v905
        %v1805 = vpop.f32.mrf.mxu0
        %v1806 = vadd.f32 %v1765, %v1805
        %v1807 = vpop.f32.mrf.mxu0
        %v1808 = vadd.f32 %v1767, %v1807
        %v1809 = vpop.f32.mrf.mxu0
        %v1810 = vpop.f32.mrf.mxu0
        %1811 = vdwg.mxu0
        %1812 = vmatprep.subr.bf16.mxu0 %v1544
        %1813 = vmatpush1.bf16.msra.mxu0 %v1543
        %1814 = vmatprep.subr.bf16.mxu0 %v1542
        %1815 = vmatpush1.bf16.msra.mxu0 %v1541
        %1816 = vmatprep.subr.bf16.mxu0 %v1540
        %1817 = vmatpush1.bf16.msra.mxu0 %v1539
        %1818 = vmatprep.subr.bf16.mxu0 %v1538
        %1819 = vmatpush1.bf16.msra.mxu0 %v1537
        %1820 = vmatprep.subr.bf16.mxu0 %v1536
        %1821 = vmatpush1.bf16.msra.mxu0 %v1535
        %1822 = vmatprep.subr.bf16.mxu0 %v1534
        %1823 = vmatpush1.bf16.msra.mxu0 %v1533
        %1824 = vmatprep.subr.bf16.mxu0 %v1532
        %1825 = vmatpush1.bf16.msra.mxu0 %v1531
        %1826 = vmatprep.subr.bf16.mxu0 %v1530
        %1827 = vmatpush1.bf16.msra.mxu0 %v1529
        %1828 = vmatprep.subr.bf16.mxu0 %v1560
        %1829 = vmatpush2.bf16.msra.mxu0 %v1559
        %1830 = vmatprep.subr.bf16.mxu0 %v1558
        %1831 = vmatpush2.bf16.msra.mxu0 %v1557
        %1832 = vmatprep.subr.bf16.mxu0 %v1556
        %1833 = vmatpush2.bf16.msra.mxu0 %v1555
        %1834 = vmatprep.subr.bf16.mxu0 %v1554
        %1835 = vmatpush2.bf16.msra.mxu0 %v1553
        %1836 = vmatprep.subr.bf16.mxu0 %v1552
        %1837 = vmatpush2.bf16.msra.mxu0 %v1551
        %1838 = vmatprep.subr.bf16.mxu0 %v1550
        %1839 = vmatpush2.bf16.msra.mxu0 %v1549
        %1840 = vmatprep.subr.bf16.mxu0 %v1548
        %1841 = vmatpush2.bf16.msra.mxu0 %v1547
        %1842 = vmatprep.subr.bf16.mxu0 %v1546
        %1843 = vmatpush2.bf16.msra.mxu0 %v1545
        %1844 = vmatprep.mubr.bf16.mxu0 %v908
        %1845 = vmatmul.mubr.bf16.gmra.mxu0 %v907
        %v1846 = vpop.f32.mrf.mxu0
        %v1847 = vadd.f32 %v1806, %v1846
        %v1848 = vpop.f32.mrf.mxu0
        %v1849 = vadd.f32 %v1808, %v1848
        %v1850 = vpop.f32.mrf.mxu0
        %v1851 = vpop.f32.mrf.mxu0
        %1852 = vdwg.mxu0
        %v1853 = vld [vmem:[%s773] sm:$0xff]
        %v1854 = vld [vmem:[%s773 + $0x8] sm:$0xff]
        %v1855 = vld [vmem:[%s773 + $0x10] sm:$0xff]
        %v1856 = vld [vmem:[%s773 + $0x18] sm:$0xff]
        %v1861 = vcombine.high %v1853, %v1853
        %v1862 = vcombine.high %v1854, %v1854
        %v1863 = vcombine.high %v1855, %v1855
        %v1864 = vcombine.high %v1856, %v1856
        %v1869 = vpack.c.bf16 %v1853, %v1853
        %v1870 = vpack.c.bf16 %v1861, %v1861
        %v1871 = vpack.c.bf16 %v1854, %v1854
        %v1872 = vpack.c.bf16 %v1862, %v1862
        %v1873 = vpack.c.bf16 %v1855, %v1855
        %v1874 = vpack.c.bf16 %v1863, %v1863
        %v1875 = vpack.c.bf16 %v1856, %v1856
        %v1876 = vpack.c.bf16 %v1864, %v1864
        %s1877 = scalar_lea.vmem [#allocation9], 1024
        %v1878 = vld [vmem:[%s1877] sm:$0xff]
        %v1879 = vld [vmem:[%s1877 + $0x8] sm:$0xff]
        %v1880 = vld [vmem:[%s1877 + $0x10] sm:$0xff]
        %v1881 = vld [vmem:[%s1877 + $0x18] sm:$0xff]
        %v1882 = vld [vmem:[%s1877 + $0x20] sm:$0xff]
        %v1883 = vld [vmem:[%s1877 + $0x28] sm:$0xff]
        %v1884 = vld [vmem:[%s1877 + $0x30] sm:$0xff]
        %v1885 = vld [vmem:[%s1877 + $0x38] sm:$0xff]
        %v1886 = vld [vmem:[%s1877 + $0x40] sm:$0xff]
        %v1887 = vld [vmem:[%s1877 + $0x48] sm:$0xff]
        %v1888 = vld [vmem:[%s1877 + $0x50] sm:$0xff]
        %v1889 = vld [vmem:[%s1877 + $0x58] sm:$0xff]
        %v1890 = vld [vmem:[%s1877 + $0x60] sm:$0xff]
        %v1891 = vld [vmem:[%s1877 + $0x68] sm:$0xff]
        %v1892 = vld [vmem:[%s1877 + $0x70] sm:$0xff]
        %v1893 = vld [vmem:[%s1877 + $0x78] sm:$0xff]
        %v1894 = vld [vmem:[%s1877 + $0x80] sm:$0xff]
        %v1895 = vld [vmem:[%s1877 + $0x88] sm:$0xff]
        %v1896 = vld [vmem:[%s1877 + $0x90] sm:$0xff]
        %v1897 = vld [vmem:[%s1877 + $0x98] sm:$0xff]
        %v1898 = vld [vmem:[%s1877 + $0xa0] sm:$0xff]
        %v1899 = vld [vmem:[%s1877 + $0xa8] sm:$0xff]
        %v1900 = vld [vmem:[%s1877 + $0xb0] sm:$0xff]
        %v1901 = vld [vmem:[%s1877 + $0xb8] sm:$0xff]
        %v1902 = vld [vmem:[%s1877 + $0xc0] sm:$0xff]
        %v1903 = vld [vmem:[%s1877 + $0xc8] sm:$0xff]
        %v1904 = vld [vmem:[%s1877 + $0xd0] sm:$0xff]
        %v1905 = vld [vmem:[%s1877 + $0xd8] sm:$0xff]
        %v1906 = vld [vmem:[%s1877 + $0xe0] sm:$0xff]
        %v1907 = vld [vmem:[%s1877 + $0xe8] sm:$0xff]
        %v1908 = vld [vmem:[%s1877 + $0xf0] sm:$0xff]
        %v1909 = vld [vmem:[%s1877 + $0xf8] sm:$0xff]
        %v1910 = vld [vmem:[%s1877 + $0x100] sm:$0xff]
        %v1911 = vld [vmem:[%s1877 + $0x108] sm:$0xff]
        %v1912 = vld [vmem:[%s1877 + $0x110] sm:$0xff]
        %v1913 = vld [vmem:[%s1877 + $0x118] sm:$0xff]
        %v1914 = vld [vmem:[%s1877 + $0x120] sm:$0xff]
        %v1915 = vld [vmem:[%s1877 + $0x128] sm:$0xff]
        %v1916 = vld [vmem:[%s1877 + $0x130] sm:$0xff]
        %v1917 = vld [vmem:[%s1877 + $0x138] sm:$0xff]
        %v1918 = vld [vmem:[%s1877 + $0x140] sm:$0xff]
        %v1919 = vld [vmem:[%s1877 + $0x148] sm:$0xff]
        %v1920 = vld [vmem:[%s1877 + $0x150] sm:$0xff]
        %v1921 = vld [vmem:[%s1877 + $0x158] sm:$0xff]
        %v1922 = vld [vmem:[%s1877 + $0x160] sm:$0xff]
        %v1923 = vld [vmem:[%s1877 + $0x168] sm:$0xff]
        %v1924 = vld [vmem:[%s1877 + $0x170] sm:$0xff]
        %v1925 = vld [vmem:[%s1877 + $0x178] sm:$0xff]
        %v1926 = vld [vmem:[%s1877 + $0x180] sm:$0xff]
        %v1927 = vld [vmem:[%s1877 + $0x188] sm:$0xff]
        %v1928 = vld [vmem:[%s1877 + $0x190] sm:$0xff]
        %v1929 = vld [vmem:[%s1877 + $0x198] sm:$0xff]
        %v1930 = vld [vmem:[%s1877 + $0x1a0] sm:$0xff]
        %v1931 = vld [vmem:[%s1877 + $0x1a8] sm:$0xff]
        %v1932 = vld [vmem:[%s1877 + $0x1b0] sm:$0xff]
        %v1933 = vld [vmem:[%s1877 + $0x1b8] sm:$0xff]
        %v1934 = vld [vmem:[%s1877 + $0x1c0] sm:$0xff]
        %v1935 = vld [vmem:[%s1877 + $0x1c8] sm:$0xff]
        %v1936 = vld [vmem:[%s1877 + $0x1d0] sm:$0xff]
        %v1937 = vld [vmem:[%s1877 + $0x1d8] sm:$0xff]
        %v1938 = vld [vmem:[%s1877 + $0x1e0] sm:$0xff]
        %v1939 = vld [vmem:[%s1877 + $0x1e8] sm:$0xff]
        %v1940 = vld [vmem:[%s1877 + $0x1f0] sm:$0xff]
        %v1941 = vld [vmem:[%s1877 + $0x1f8] sm:$0xff]
        %v1942 = vld [vmem:[%s1877 + $0x200] sm:$0xff]
        %v1943 = vld [vmem:[%s1877 + $0x208] sm:$0xff]
        %v1944 = vld [vmem:[%s1877 + $0x210] sm:$0xff]
        %v1945 = vld [vmem:[%s1877 + $0x218] sm:$0xff]
        %v1946 = vld [vmem:[%s1877 + $0x220] sm:$0xff]
        %v1947 = vld [vmem:[%s1877 + $0x228] sm:$0xff]
        %v1948 = vld [vmem:[%s1877 + $0x230] sm:$0xff]
        %v1949 = vld [vmem:[%s1877 + $0x238] sm:$0xff]
        %v1950 = vld [vmem:[%s1877 + $0x240] sm:$0xff]
        %v1951 = vld [vmem:[%s1877 + $0x248] sm:$0xff]
        %v1952 = vld [vmem:[%s1877 + $0x250] sm:$0xff]
        %v1953 = vld [vmem:[%s1877 + $0x258] sm:$0xff]
        %v1954 = vld [vmem:[%s1877 + $0x260] sm:$0xff]
        %v1955 = vld [vmem:[%s1877 + $0x268] sm:$0xff]
        %v1956 = vld [vmem:[%s1877 + $0x270] sm:$0xff]
        %v1957 = vld [vmem:[%s1877 + $0x278] sm:$0xff]
        %v1958 = vld [vmem:[%s1877 + $0x280] sm:$0xff]
        %v1959 = vld [vmem:[%s1877 + $0x288] sm:$0xff]
        %v1960 = vld [vmem:[%s1877 + $0x290] sm:$0xff]
        %v1961 = vld [vmem:[%s1877 + $0x298] sm:$0xff]
        %v1962 = vld [vmem:[%s1877 + $0x2a0] sm:$0xff]
        %v1963 = vld [vmem:[%s1877 + $0x2a8] sm:$0xff]
        %v1964 = vld [vmem:[%s1877 + $0x2b0] sm:$0xff]
        %v1965 = vld [vmem:[%s1877 + $0x2b8] sm:$0xff]
        %v1966 = vld [vmem:[%s1877 + $0x2c0] sm:$0xff]
        %v1967 = vld [vmem:[%s1877 + $0x2c8] sm:$0xff]
        %v1968 = vld [vmem:[%s1877 + $0x2d0] sm:$0xff]
        %v1969 = vld [vmem:[%s1877 + $0x2d8] sm:$0xff]
        %v1970 = vld [vmem:[%s1877 + $0x2e0] sm:$0xff]
        %v1971 = vld [vmem:[%s1877 + $0x2e8] sm:$0xff]
        %v1972 = vld [vmem:[%s1877 + $0x2f0] sm:$0xff]
        %v1973 = vld [vmem:[%s1877 + $0x2f8] sm:$0xff]
        %v1974 = vld [vmem:[%s1877 + $0x300] sm:$0xff]
        %v1975 = vld [vmem:[%s1877 + $0x308] sm:$0xff]
        %v1976 = vld [vmem:[%s1877 + $0x310] sm:$0xff]
        %v1977 = vld [vmem:[%s1877 + $0x318] sm:$0xff]
        %v1978 = vld [vmem:[%s1877 + $0x320] sm:$0xff]
        %v1979 = vld [vmem:[%s1877 + $0x328] sm:$0xff]
        %v1980 = vld [vmem:[%s1877 + $0x330] sm:$0xff]
        %v1981 = vld [vmem:[%s1877 + $0x338] sm:$0xff]
        %v1982 = vld [vmem:[%s1877 + $0x340] sm:$0xff]
        %v1983 = vld [vmem:[%s1877 + $0x348] sm:$0xff]
        %v1984 = vld [vmem:[%s1877 + $0x350] sm:$0xff]
        %v1985 = vld [vmem:[%s1877 + $0x358] sm:$0xff]
        %v1986 = vld [vmem:[%s1877 + $0x360] sm:$0xff]
        %v1987 = vld [vmem:[%s1877 + $0x368] sm:$0xff]
        %v1988 = vld [vmem:[%s1877 + $0x370] sm:$0xff]
        %v1989 = vld [vmem:[%s1877 + $0x378] sm:$0xff]
        %v1990 = vld [vmem:[%s1877 + $0x380] sm:$0xff]
        %v1991 = vld [vmem:[%s1877 + $0x388] sm:$0xff]
        %v1992 = vld [vmem:[%s1877 + $0x390] sm:$0xff]
        %v1993 = vld [vmem:[%s1877 + $0x398] sm:$0xff]
        %v1994 = vld [vmem:[%s1877 + $0x3a0] sm:$0xff]
        %v1995 = vld [vmem:[%s1877 + $0x3a8] sm:$0xff]
        %v1996 = vld [vmem:[%s1877 + $0x3b0] sm:$0xff]
        %v1997 = vld [vmem:[%s1877 + $0x3b8] sm:$0xff]
        %v1998 = vld [vmem:[%s1877 + $0x3c0] sm:$0xff]
        %v1999 = vld [vmem:[%s1877 + $0x3c8] sm:$0xff]
        %v2000 = vld [vmem:[%s1877 + $0x3d0] sm:$0xff]
        %v2001 = vld [vmem:[%s1877 + $0x3d8] sm:$0xff]
        %v2002 = vld [vmem:[%s1877 + $0x3e0] sm:$0xff]
        %v2003 = vld [vmem:[%s1877 + $0x3e8] sm:$0xff]
        %v2004 = vld [vmem:[%s1877 + $0x3f0] sm:$0xff]
        %v2005 = vld [vmem:[%s1877 + $0x3f8] sm:$0xff]
        %s2006 = scalar_lea.vmem %s3, 2
        %v2007 = vld [vmem:[%s2006] sm:$0x3]
        %v2009 = vlaneseq
        %v2010 = vshrl.u32 %v2009, 7
        %v2011 = vsub.s32 0, %v2010
        %v2012 = vrot.slane %v2007, %v2011
        %v2013 = vlaneseq
        %v2014 = vshrl.u32 %v2013, 7
        %v2015 = vsub.s32 1, %v2014
        %v2016 = vrot.slane %v2007, %v2015
        %v2147 = vunpack.c.l.b16 %v1878
        %v2148 = vunpack.c.h.b16 %v1878
        %v2149 = vunpack.c.l.b16 %v1879
        %v2150 = vunpack.c.h.b16 %v1879
        %v2151 = vunpack.c.l.b16 %v1880
        %v2152 = vunpack.c.h.b16 %v1880
        %v2153 = vunpack.c.l.b16 %v1881
        %v2154 = vunpack.c.h.b16 %v1881
        %v2155 = vunpack.c.l.b16 %v1882
        %v2156 = vunpack.c.h.b16 %v1882
        %v2157 = vunpack.c.l.b16 %v1883
        %v2158 = vunpack.c.h.b16 %v1883
        %v2159 = vunpack.c.l.b16 %v1884
        %v2160 = vunpack.c.h.b16 %v1884
        %v2161 = vunpack.c.l.b16 %v1885
        %v2162 = vunpack.c.h.b16 %v1885
        %v2163 = vunpack.c.l.b16 %v1886
        %v2164 = vunpack.c.h.b16 %v1886
        %v2165 = vunpack.c.l.b16 %v1887
        %v2166 = vunpack.c.h.b16 %v1887
        %v2167 = vunpack.c.l.b16 %v1888
        %v2168 = vunpack.c.h.b16 %v1888
        %v2169 = vunpack.c.l.b16 %v1889
        %v2170 = vunpack.c.h.b16 %v1889
        %v2171 = vunpack.c.l.b16 %v1890
        %v2172 = vunpack.c.h.b16 %v1890
        %v2173 = vunpack.c.l.b16 %v1891
        %v2174 = vunpack.c.h.b16 %v1891
        %v2175 = vunpack.c.l.b16 %v1892
        %v2176 = vunpack.c.h.b16 %v1892
        %v2177 = vunpack.c.l.b16 %v1893
        %v2178 = vunpack.c.h.b16 %v1893
        %v2179 = vunpack.c.l.b16 %v1894
        %v2180 = vunpack.c.h.b16 %v1894
        %v2181 = vunpack.c.l.b16 %v1895
        %v2182 = vunpack.c.h.b16 %v1895
        %v2183 = vunpack.c.l.b16 %v1896
        %v2184 = vunpack.c.h.b16 %v1896
        %v2185 = vunpack.c.l.b16 %v1897
        %v2186 = vunpack.c.h.b16 %v1897
        %v2187 = vunpack.c.l.b16 %v1898
        %v2188 = vunpack.c.h.b16 %v1898
        %v2189 = vunpack.c.l.b16 %v1899
        %v2190 = vunpack.c.h.b16 %v1899
        %v2191 = vunpack.c.l.b16 %v1900
        %v2192 = vunpack.c.h.b16 %v1900
        %v2193 = vunpack.c.l.b16 %v1901
        %v2194 = vunpack.c.h.b16 %v1901
        %v2195 = vunpack.c.l.b16 %v1902
        %v2196 = vunpack.c.h.b16 %v1902
        %v2197 = vunpack.c.l.b16 %v1903
        %v2198 = vunpack.c.h.b16 %v1903
        %v2199 = vunpack.c.l.b16 %v1904
        %v2200 = vunpack.c.h.b16 %v1904
        %v2201 = vunpack.c.l.b16 %v1905
        %v2202 = vunpack.c.h.b16 %v1905
        %v2203 = vunpack.c.l.b16 %v1906
        %v2204 = vunpack.c.h.b16 %v1906
        %v2205 = vunpack.c.l.b16 %v1907
        %v2206 = vunpack.c.h.b16 %v1907
        %v2207 = vunpack.c.l.b16 %v1908
        %v2208 = vunpack.c.h.b16 %v1908
        %v2209 = vunpack.c.l.b16 %v1909
        %v2210 = vunpack.c.h.b16 %v1909
        %v2211 = vunpack.c.l.b16 %v1910
        %v2212 = vunpack.c.h.b16 %v1910
        %v2213 = vunpack.c.l.b16 %v1911
        %v2214 = vunpack.c.h.b16 %v1911
        %v2215 = vunpack.c.l.b16 %v1912
        %v2216 = vunpack.c.h.b16 %v1912
        %v2217 = vunpack.c.l.b16 %v1913
        %v2218 = vunpack.c.h.b16 %v1913
        %v2219 = vunpack.c.l.b16 %v1914
        %v2220 = vunpack.c.h.b16 %v1914
        %v2221 = vunpack.c.l.b16 %v1915
        %v2222 = vunpack.c.h.b16 %v1915
        %v2223 = vunpack.c.l.b16 %v1916
        %v2224 = vunpack.c.h.b16 %v1916
        %v2225 = vunpack.c.l.b16 %v1917
        %v2226 = vunpack.c.h.b16 %v1917
        %v2227 = vunpack.c.l.b16 %v1918
        %v2228 = vunpack.c.h.b16 %v1918
        %v2229 = vunpack.c.l.b16 %v1919
        %v2230 = vunpack.c.h.b16 %v1919
        %v2231 = vunpack.c.l.b16 %v1920
        %v2232 = vunpack.c.h.b16 %v1920
        %v2233 = vunpack.c.l.b16 %v1921
        %v2234 = vunpack.c.h.b16 %v1921
        %v2235 = vunpack.c.l.b16 %v1922
        %v2236 = vunpack.c.h.b16 %v1922
        %v2237 = vunpack.c.l.b16 %v1923
        %v2238 = vunpack.c.h.b16 %v1923
        %v2239 = vunpack.c.l.b16 %v1924
        %v2240 = vunpack.c.h.b16 %v1924
        %v2241 = vunpack.c.l.b16 %v1925
        %v2242 = vunpack.c.h.b16 %v1925
        %v2243 = vunpack.c.l.b16 %v1926
        %v2244 = vunpack.c.h.b16 %v1926
        %v2245 = vunpack.c.l.b16 %v1927
        %v2246 = vunpack.c.h.b16 %v1927
        %v2247 = vunpack.c.l.b16 %v1928
        %v2248 = vunpack.c.h.b16 %v1928
        %v2249 = vunpack.c.l.b16 %v1929
        %v2250 = vunpack.c.h.b16 %v1929
        %v2251 = vunpack.c.l.b16 %v1930
        %v2252 = vunpack.c.h.b16 %v1930
        %v2253 = vunpack.c.l.b16 %v1931
        %v2254 = vunpack.c.h.b16 %v1931
        %v2255 = vunpack.c.l.b16 %v1932
        %v2256 = vunpack.c.h.b16 %v1932
        %v2257 = vunpack.c.l.b16 %v1933
        %v2258 = vunpack.c.h.b16 %v1933
        %v2259 = vunpack.c.l.b16 %v1934
        %v2260 = vunpack.c.h.b16 %v1934
        %v2261 = vunpack.c.l.b16 %v1935
        %v2262 = vunpack.c.h.b16 %v1935
        %v2263 = vunpack.c.l.b16 %v1936
        %v2264 = vunpack.c.h.b16 %v1936
        %v2265 = vunpack.c.l.b16 %v1937
        %v2266 = vunpack.c.h.b16 %v1937
        %v2267 = vunpack.c.l.b16 %v1938
        %v2268 = vunpack.c.h.b16 %v1938
        %v2269 = vunpack.c.l.b16 %v1939
        %v2270 = vunpack.c.h.b16 %v1939
        %v2271 = vunpack.c.l.b16 %v1940
        %v2272 = vunpack.c.h.b16 %v1940
        %v2273 = vunpack.c.l.b16 %v1941
        %v2274 = vunpack.c.h.b16 %v1941
        %v2275 = vunpack.c.l.b16 %v1942
        %v2276 = vunpack.c.h.b16 %v1942
        %v2277 = vunpack.c.l.b16 %v1943
        %v2278 = vunpack.c.h.b16 %v1943
        %v2279 = vunpack.c.l.b16 %v1944
        %v2280 = vunpack.c.h.b16 %v1944
        %v2281 = vunpack.c.l.b16 %v1945
        %v2282 = vunpack.c.h.b16 %v1945
        %v2283 = vunpack.c.l.b16 %v1946
        %v2284 = vunpack.c.h.b16 %v1946
        %v2285 = vunpack.c.l.b16 %v1947
        %v2286 = vunpack.c.h.b16 %v1947
        %v2287 = vunpack.c.l.b16 %v1948
        %v2288 = vunpack.c.h.b16 %v1948
        %v2289 = vunpack.c.l.b16 %v1949
        %v2290 = vunpack.c.h.b16 %v1949
        %v2291 = vunpack.c.l.b16 %v1950
        %v2292 = vunpack.c.h.b16 %v1950
        %v2293 = vunpack.c.l.b16 %v1951
        %v2294 = vunpack.c.h.b16 %v1951
        %v2295 = vunpack.c.l.b16 %v1952
        %v2296 = vunpack.c.h.b16 %v1952
        %v2297 = vunpack.c.l.b16 %v1953
        %v2298 = vunpack.c.h.b16 %v1953
        %v2299 = vunpack.c.l.b16 %v1954
        %v2300 = vunpack.c.h.b16 %v1954
        %v2301 = vunpack.c.l.b16 %v1955
        %v2302 = vunpack.c.h.b16 %v1955
        %v2303 = vunpack.c.l.b16 %v1956
        %v2304 = vunpack.c.h.b16 %v1956
        %v2305 = vunpack.c.l.b16 %v1957
        %v2306 = vunpack.c.h.b16 %v1957
        %v2307 = vunpack.c.l.b16 %v1958
        %v2308 = vunpack.c.h.b16 %v1958
        %v2309 = vunpack.c.l.b16 %v1959
        %v2310 = vunpack.c.h.b16 %v1959
        %v2311 = vunpack.c.l.b16 %v1960
        %v2312 = vunpack.c.h.b16 %v1960
        %v2313 = vunpack.c.l.b16 %v1961
        %v2314 = vunpack.c.h.b16 %v1961
        %v2315 = vunpack.c.l.b16 %v1962
        %v2316 = vunpack.c.h.b16 %v1962
        %v2317 = vunpack.c.l.b16 %v1963
        %v2318 = vunpack.c.h.b16 %v1963
        %v2319 = vunpack.c.l.b16 %v1964
        %v2320 = vunpack.c.h.b16 %v1964
        %v2321 = vunpack.c.l.b16 %v1965
        %v2322 = vunpack.c.h.b16 %v1965
        %v2323 = vunpack.c.l.b16 %v1966
        %v2324 = vunpack.c.h.b16 %v1966
        %v2325 = vunpack.c.l.b16 %v1967
        %v2326 = vunpack.c.h.b16 %v1967
        %v2327 = vunpack.c.l.b16 %v1968
        %v2328 = vunpack.c.h.b16 %v1968
        %v2329 = vunpack.c.l.b16 %v1969
        %v2330 = vunpack.c.h.b16 %v1969
        %v2331 = vunpack.c.l.b16 %v1970
        %v2332 = vunpack.c.h.b16 %v1970
        %v2333 = vunpack.c.l.b16 %v1971
        %v2334 = vunpack.c.h.b16 %v1971
        %v2335 = vunpack.c.l.b16 %v1972
        %v2336 = vunpack.c.h.b16 %v1972
        %v2337 = vunpack.c.l.b16 %v1973
        %v2338 = vunpack.c.h.b16 %v1973
        %v2339 = vunpack.c.l.b16 %v1974
        %v2340 = vunpack.c.h.b16 %v1974
        %v2341 = vunpack.c.l.b16 %v1975
        %v2342 = vunpack.c.h.b16 %v1975
        %v2343 = vunpack.c.l.b16 %v1976
        %v2344 = vunpack.c.h.b16 %v1976
        %v2345 = vunpack.c.l.b16 %v1977
        %v2346 = vunpack.c.h.b16 %v1977
        %v2347 = vunpack.c.l.b16 %v1978
        %v2348 = vunpack.c.h.b16 %v1978
        %v2349 = vunpack.c.l.b16 %v1979
        %v2350 = vunpack.c.h.b16 %v1979
        %v2351 = vunpack.c.l.b16 %v1980
        %v2352 = vunpack.c.h.b16 %v1980
        %v2353 = vunpack.c.l.b16 %v1981
        %v2354 = vunpack.c.h.b16 %v1981
        %v2355 = vunpack.c.l.b16 %v1982
        %v2356 = vunpack.c.h.b16 %v1982
        %v2357 = vunpack.c.l.b16 %v1983
        %v2358 = vunpack.c.h.b16 %v1983
        %v2359 = vunpack.c.l.b16 %v1984
        %v2360 = vunpack.c.h.b16 %v1984
        %v2361 = vunpack.c.l.b16 %v1985
        %v2362 = vunpack.c.h.b16 %v1985
        %v2363 = vunpack.c.l.b16 %v1986
        %v2364 = vunpack.c.h.b16 %v1986
        %v2365 = vunpack.c.l.b16 %v1987
        %v2366 = vunpack.c.h.b16 %v1987
        %v2367 = vunpack.c.l.b16 %v1988
        %v2368 = vunpack.c.h.b16 %v1988
        %v2369 = vunpack.c.l.b16 %v1989
        %v2370 = vunpack.c.h.b16 %v1989
        %v2371 = vunpack.c.l.b16 %v1990
        %v2372 = vunpack.c.h.b16 %v1990
        %v2373 = vunpack.c.l.b16 %v1991
        %v2374 = vunpack.c.h.b16 %v1991
        %v2375 = vunpack.c.l.b16 %v1992
        %v2376 = vunpack.c.h.b16 %v1992
        %v2377 = vunpack.c.l.b16 %v1993
        %v2378 = vunpack.c.h.b16 %v1993
        %v2379 = vunpack.c.l.b16 %v1994
        %v2380 = vunpack.c.h.b16 %v1994
        %v2381 = vunpack.c.l.b16 %v1995
        %v2382 = vunpack.c.h.b16 %v1995
        %v2383 = vunpack.c.l.b16 %v1996
        %v2384 = vunpack.c.h.b16 %v1996
        %v2385 = vunpack.c.l.b16 %v1997
        %v2386 = vunpack.c.h.b16 %v1997
        %v2387 = vunpack.c.l.b16 %v1998
        %v2388 = vunpack.c.h.b16 %v1998
        %v2389 = vunpack.c.l.b16 %v1999
        %v2390 = vunpack.c.h.b16 %v1999
        %v2391 = vunpack.c.l.b16 %v2000
        %v2392 = vunpack.c.h.b16 %v2000
        %v2393 = vunpack.c.l.b16 %v2001
        %v2394 = vunpack.c.h.b16 %v2001
        %v2395 = vunpack.c.l.b16 %v2002
        %v2396 = vunpack.c.h.b16 %v2002
        %v2397 = vunpack.c.l.b16 %v2003
        %v2398 = vunpack.c.h.b16 %v2003
        %v2399 = vunpack.c.l.b16 %v2004
        %v2400 = vunpack.c.h.b16 %v2004
        %v2401 = vunpack.c.l.b16 %v2005
        %v2402 = vunpack.c.h.b16 %v2005
        %v2403 = vpack.c.b16 %v2149, %v2147
        %v2404 = vpack.c.b16 %v2150, %v2148
        %v2405 = vpack.c.b16 %v2153, %v2151
        %v2406 = vpack.c.b16 %v2154, %v2152
        %v2407 = vpack.c.b16 %v2157, %v2155
        %v2408 = vpack.c.b16 %v2158, %v2156
        %v2409 = vpack.c.b16 %v2161, %v2159
        %v2410 = vpack.c.b16 %v2162, %v2160
        %v2411 = vpack.c.b16 %v2165, %v2163
        %v2412 = vpack.c.b16 %v2166, %v2164
        %v2413 = vpack.c.b16 %v2169, %v2167
        %v2414 = vpack.c.b16 %v2170, %v2168
        %v2415 = vpack.c.b16 %v2173, %v2171
        %v2416 = vpack.c.b16 %v2174, %v2172
        %v2417 = vpack.c.b16 %v2177, %v2175
        %v2418 = vpack.c.b16 %v2178, %v2176
        %v2419 = vpack.c.b16 %v2181, %v2179
        %v2420 = vpack.c.b16 %v2182, %v2180
        %v2421 = vpack.c.b16 %v2185, %v2183
        %v2422 = vpack.c.b16 %v2186, %v2184
        %v2423 = vpack.c.b16 %v2189, %v2187
        %v2424 = vpack.c.b16 %v2190, %v2188
        %v2425 = vpack.c.b16 %v2193, %v2191
        %v2426 = vpack.c.b16 %v2194, %v2192
        %v2427 = vpack.c.b16 %v2197, %v2195
        %v2428 = vpack.c.b16 %v2198, %v2196
        %v2429 = vpack.c.b16 %v2201, %v2199
        %v2430 = vpack.c.b16 %v2202, %v2200
        %v2431 = vpack.c.b16 %v2205, %v2203
        %v2432 = vpack.c.b16 %v2206, %v2204
        %v2433 = vpack.c.b16 %v2209, %v2207
        %v2434 = vpack.c.b16 %v2210, %v2208
        %v2435 = vpack.c.b16 %v2213, %v2211
        %v2436 = vpack.c.b16 %v2214, %v2212
        %v2437 = vpack.c.b16 %v2217, %v2215
        %v2438 = vpack.c.b16 %v2218, %v2216
        %v2439 = vpack.c.b16 %v2221, %v2219
        %v2440 = vpack.c.b16 %v2222, %v2220
        %v2441 = vpack.c.b16 %v2225, %v2223
        %v2442 = vpack.c.b16 %v2226, %v2224
        %v2443 = vpack.c.b16 %v2229, %v2227
        %v2444 = vpack.c.b16 %v2230, %v2228
        %v2445 = vpack.c.b16 %v2233, %v2231
        %v2446 = vpack.c.b16 %v2234, %v2232
        %v2447 = vpack.c.b16 %v2237, %v2235
        %v2448 = vpack.c.b16 %v2238, %v2236
        %v2449 = vpack.c.b16 %v2241, %v2239
        %v2450 = vpack.c.b16 %v2242, %v2240
        %v2451 = vpack.c.b16 %v2245, %v2243
        %v2452 = vpack.c.b16 %v2246, %v2244
        %v2453 = vpack.c.b16 %v2249, %v2247
        %v2454 = vpack.c.b16 %v2250, %v2248
        %v2455 = vpack.c.b16 %v2253, %v2251
        %v2456 = vpack.c.b16 %v2254, %v2252
        %v2457 = vpack.c.b16 %v2257, %v2255
        %v2458 = vpack.c.b16 %v2258, %v2256
        %v2459 = vpack.c.b16 %v2261, %v2259
        %v2460 = vpack.c.b16 %v2262, %v2260
        %v2461 = vpack.c.b16 %v2265, %v2263
        %v2462 = vpack.c.b16 %v2266, %v2264
        %v2463 = vpack.c.b16 %v2269, %v2267
        %v2464 = vpack.c.b16 %v2270, %v2268
        %v2465 = vpack.c.b16 %v2273, %v2271
        %v2466 = vpack.c.b16 %v2274, %v2272
        %v2467 = vpack.c.b16 %v2277, %v2275
        %v2468 = vpack.c.b16 %v2278, %v2276
        %v2469 = vpack.c.b16 %v2281, %v2279
        %v2470 = vpack.c.b16 %v2282, %v2280
        %v2471 = vpack.c.b16 %v2285, %v2283
        %v2472 = vpack.c.b16 %v2286, %v2284
        %v2473 = vpack.c.b16 %v2289, %v2287
        %v2474 = vpack.c.b16 %v2290, %v2288
        %v2475 = vpack.c.b16 %v2293, %v2291
        %v2476 = vpack.c.b16 %v2294, %v2292
        %v2477 = vpack.c.b16 %v2297, %v2295
        %v2478 = vpack.c.b16 %v2298, %v2296
        %v2479 = vpack.c.b16 %v2301, %v2299
        %v2480 = vpack.c.b16 %v2302, %v2300
        %v2481 = vpack.c.b16 %v2305, %v2303
        %v2482 = vpack.c.b16 %v2306, %v2304
        %v2483 = vpack.c.b16 %v2309, %v2307
        %v2484 = vpack.c.b16 %v2310, %v2308
        %v2485 = vpack.c.b16 %v2313, %v2311
        %v2486 = vpack.c.b16 %v2314, %v2312
        %v2487 = vpack.c.b16 %v2317, %v2315
        %v2488 = vpack.c.b16 %v2318, %v2316
        %v2489 = vpack.c.b16 %v2321, %v2319
        %v2490 = vpack.c.b16 %v2322, %v2320
        %v2491 = vpack.c.b16 %v2325, %v2323
        %v2492 = vpack.c.b16 %v2326, %v2324
        %v2493 = vpack.c.b16 %v2329, %v2327
        %v2494 = vpack.c.b16 %v2330, %v2328
        %v2495 = vpack.c.b16 %v2333, %v2331
        %v2496 = vpack.c.b16 %v2334, %v2332
        %v2497 = vpack.c.b16 %v2337, %v2335
        %v2498 = vpack.c.b16 %v2338, %v2336
        %v2499 = vpack.c.b16 %v2341, %v2339
        %v2500 = vpack.c.b16 %v2342, %v2340
        %v2501 = vpack.c.b16 %v2345, %v2343
        %v2502 = vpack.c.b16 %v2346, %v2344
        %v2503 = vpack.c.b16 %v2349, %v2347
        %v2504 = vpack.c.b16 %v2350, %v2348
        %v2505 = vpack.c.b16 %v2353, %v2351
        %v2506 = vpack.c.b16 %v2354, %v2352
        %v2507 = vpack.c.b16 %v2357, %v2355
        %v2508 = vpack.c.b16 %v2358, %v2356
        %v2509 = vpack.c.b16 %v2361, %v2359
        %v2510 = vpack.c.b16 %v2362, %v2360
        %v2511 = vpack.c.b16 %v2365, %v2363
        %v2512 = vpack.c.b16 %v2366, %v2364
        %v2513 = vpack.c.b16 %v2369, %v2367
        %v2514 = vpack.c.b16 %v2370, %v2368
        %v2515 = vpack.c.b16 %v2373, %v2371
        %v2516 = vpack.c.b16 %v2374, %v2372
        %v2517 = vpack.c.b16 %v2377, %v2375
        %v2518 = vpack.c.b16 %v2378, %v2376
        %v2519 = vpack.c.b16 %v2381, %v2379
        %v2520 = vpack.c.b16 %v2382, %v2380
        %v2521 = vpack.c.b16 %v2385, %v2383
        %v2522 = vpack.c.b16 %v2386, %v2384
        %v2523 = vpack.c.b16 %v2389, %v2387
        %v2524 = vpack.c.b16 %v2390, %v2388
        %v2525 = vpack.c.b16 %v2393, %v2391
        %v2526 = vpack.c.b16 %v2394, %v2392
        %v2527 = vpack.c.b16 %v2397, %v2395
        %v2528 = vpack.c.b16 %v2398, %v2396
        %v2529 = vpack.c.b16 %v2401, %v2399
        %v2530 = vpack.c.b16 %v2402, %v2400
        %2659 = vmatprep.subr.bf16.mxu0 %v2418
        %2660 = vmatpush1.bf16.msra.mxu0 %v2417
        %2661 = vmatprep.subr.bf16.mxu0 %v2416
        %2662 = vmatpush1.bf16.msra.mxu0 %v2415
        %2663 = vmatprep.subr.bf16.mxu0 %v2414
        %2664 = vmatpush1.bf16.msra.mxu0 %v2413
        %2665 = vmatprep.subr.bf16.mxu0 %v2412
        %2666 = vmatpush1.bf16.msra.mxu0 %v2411
        %2667 = vmatprep.subr.bf16.mxu0 %v2410
        %2668 = vmatpush1.bf16.msra.mxu0 %v2409
        %2669 = vmatprep.subr.bf16.mxu0 %v2408
        %2670 = vmatpush1.bf16.msra.mxu0 %v2407
        %2671 = vmatprep.subr.bf16.mxu0 %v2406
        %2672 = vmatpush1.bf16.msra.mxu0 %v2405
        %2673 = vmatprep.subr.bf16.mxu0 %v2404
        %2674 = vmatpush1.bf16.msra.mxu0 %v2403
        %2675 = vmatprep.subr.bf16.mxu0 %v2434
        %2676 = vmatpush2.bf16.msra.mxu0 %v2433
        %2677 = vmatprep.subr.bf16.mxu0 %v2432
        %2678 = vmatpush2.bf16.msra.mxu0 %v2431
        %2679 = vmatprep.subr.bf16.mxu0 %v2430
        %2680 = vmatpush2.bf16.msra.mxu0 %v2429
        %2681 = vmatprep.subr.bf16.mxu0 %v2428
        %2682 = vmatpush2.bf16.msra.mxu0 %v2427
        %2683 = vmatprep.subr.bf16.mxu0 %v2426
        %2684 = vmatpush2.bf16.msra.mxu0 %v2425
        %2685 = vmatprep.subr.bf16.mxu0 %v2424
        %2686 = vmatpush2.bf16.msra.mxu0 %v2423
        %2687 = vmatprep.subr.bf16.mxu0 %v2422
        %2688 = vmatpush2.bf16.msra.mxu0 %v2421
        %2689 = vmatprep.subr.bf16.mxu0 %v2420
        %2690 = vmatpush2.bf16.msra.mxu0 %v2419
        %2691 = vmatprep.mubr.bf16.mxu0 %v1870
        %2692 = vmatmul.mubr.bf16.gmra.mxu0 %v1869
        %v2693 = vpop.f32.mrf.mxu0
        %v2694 = vadd.f32 %v2012, %v2693
        %v2695 = vpop.f32.mrf.mxu0
        %v2696 = vadd.f32 %v2016, %v2695
        %v2697 = vpop.f32.mrf.mxu0
        %v2698 = vpop.f32.mrf.mxu0
        %2699 = vdwg.mxu0
        %2700 = vmatprep.subr.bf16.mxu0 %v2450
        %2701 = vmatpush1.bf16.msra.mxu0 %v2449
        %2702 = vmatprep.subr.bf16.mxu0 %v2448
        %2703 = vmatpush1.bf16.msra.mxu0 %v2447
        %2704 = vmatprep.subr.bf16.mxu0 %v2446
        %2705 = vmatpush1.bf16.msra.mxu0 %v2445
        %2706 = vmatprep.subr.bf16.mxu0 %v2444
        %2707 = vmatpush1.bf16.msra.mxu0 %v2443
        %2708 = vmatprep.subr.bf16.mxu0 %v2442
        %2709 = vmatpush1.bf16.msra.mxu0 %v2441
        %2710 = vmatprep.subr.bf16.mxu0 %v2440
        %2711 = vmatpush1.bf16.msra.mxu0 %v2439
        %2712 = vmatprep.subr.bf16.mxu0 %v2438
        %2713 = vmatpush1.bf16.msra.mxu0 %v2437
        %2714 = vmatprep.subr.bf16.mxu0 %v2436
        %2715 = vmatpush1.bf16.msra.mxu0 %v2435
        %2716 = vmatprep.subr.bf16.mxu0 %v2466
        %2717 = vmatpush2.bf16.msra.mxu0 %v2465
        %2718 = vmatprep.subr.bf16.mxu0 %v2464
        %2719 = vmatpush2.bf16.msra.mxu0 %v2463
        %2720 = vmatprep.subr.bf16.mxu0 %v2462
        %2721 = vmatpush2.bf16.msra.mxu0 %v2461
        %2722 = vmatprep.subr.bf16.mxu0 %v2460
        %2723 = vmatpush2.bf16.msra.mxu0 %v2459
        %2724 = vmatprep.subr.bf16.mxu0 %v2458
        %2725 = vmatpush2.bf16.msra.mxu0 %v2457
        %2726 = vmatprep.subr.bf16.mxu0 %v2456
        %2727 = vmatpush2.bf16.msra.mxu0 %v2455
        %2728 = vmatprep.subr.bf16.mxu0 %v2454
        %2729 = vmatpush2.bf16.msra.mxu0 %v2453
        %2730 = vmatprep.subr.bf16.mxu0 %v2452
        %2731 = vmatpush2.bf16.msra.mxu0 %v2451
        %2732 = vmatprep.mubr.bf16.mxu0 %v1872
        %2733 = vmatmul.mubr.bf16.gmra.mxu0 %v1871
        %v2734 = vpop.f32.mrf.mxu0
        %v2735 = vadd.f32 %v2694, %v2734
        %v2736 = vpop.f32.mrf.mxu0
        %v2737 = vadd.f32 %v2696, %v2736
        %v2738 = vpop.f32.mrf.mxu0
        %v2739 = vpop.f32.mrf.mxu0
        %2740 = vdwg.mxu0
        %2741 = vmatprep.subr.bf16.mxu0 %v2482
        %2742 = vmatpush1.bf16.msra.mxu0 %v2481
        %2743 = vmatprep.subr.bf16.mxu0 %v2480
        %2744 = vmatpush1.bf16.msra.mxu0 %v2479
        %2745 = vmatprep.subr.bf16.mxu0 %v2478
        %2746 = vmatpush1.bf16.msra.mxu0 %v2477
        %2747 = vmatprep.subr.bf16.mxu0 %v2476
        %2748 = vmatpush1.bf16.msra.mxu0 %v2475
        %2749 = vmatprep.subr.bf16.mxu0 %v2474
        %2750 = vmatpush1.bf16.msra.mxu0 %v2473
        %2751 = vmatprep.subr.bf16.mxu0 %v2472
        %2752 = vmatpush1.bf16.msra.mxu0 %v2471
        %2753 = vmatprep.subr.bf16.mxu0 %v2470
        %2754 = vmatpush1.bf16.msra.mxu0 %v2469
        %2755 = vmatprep.subr.bf16.mxu0 %v2468
        %2756 = vmatpush1.bf16.msra.mxu0 %v2467
        %2757 = vmatprep.subr.bf16.mxu0 %v2498
        %2758 = vmatpush2.bf16.msra.mxu0 %v2497
        %2759 = vmatprep.subr.bf16.mxu0 %v2496
        %2760 = vmatpush2.bf16.msra.mxu0 %v2495
        %2761 = vmatprep.subr.bf16.mxu0 %v2494
        %2762 = vmatpush2.bf16.msra.mxu0 %v2493
        %2763 = vmatprep.subr.bf16.mxu0 %v2492
        %2764 = vmatpush2.bf16.msra.mxu0 %v2491
        %2765 = vmatprep.subr.bf16.mxu0 %v2490
        %2766 = vmatpush2.bf16.msra.mxu0 %v2489
        %2767 = vmatprep.subr.bf16.mxu0 %v2488
        %2768 = vmatpush2.bf16.msra.mxu0 %v2487
        %2769 = vmatprep.subr.bf16.mxu0 %v2486
        %2770 = vmatpush2.bf16.msra.mxu0 %v2485
        %2771 = vmatprep.subr.bf16.mxu0 %v2484
        %2772 = vmatpush2.bf16.msra.mxu0 %v2483
        %2773 = vmatprep.mubr.bf16.mxu0 %v1874
        %2774 = vmatmul.mubr.bf16.gmra.mxu0 %v1873
        %v2775 = vpop.f32.mrf.mxu0
        %v2776 = vadd.f32 %v2735, %v2775
        %v2777 = vpop.f32.mrf.mxu0
        %v2778 = vadd.f32 %v2737, %v2777
        %v2779 = vpop.f32.mrf.mxu0
        %v2780 = vpop.f32.mrf.mxu0
        %2781 = vdwg.mxu0
        %2782 = vmatprep.subr.bf16.mxu0 %v2514
        %2783 = vmatpush1.bf16.msra.mxu0 %v2513
        %2784 = vmatprep.subr.bf16.mxu0 %v2512
        %2785 = vmatpush1.bf16.msra.mxu0 %v2511
        %2786 = vmatprep.subr.bf16.mxu0 %v2510
        %2787 = vmatpush1.bf16.msra.mxu0 %v2509
        %2788 = vmatprep.subr.bf16.mxu0 %v2508
        %2789 = vmatpush1.bf16.msra.mxu0 %v2507
        %2790 = vmatprep.subr.bf16.mxu0 %v2506
        %2791 = vmatpush1.bf16.msra.mxu0 %v2505
        %2792 = vmatprep.subr.bf16.mxu0 %v2504
        %2793 = vmatpush1.bf16.msra.mxu0 %v2503
        %2794 = vmatprep.subr.bf16.mxu0 %v2502
        %2795 = vmatpush1.bf16.msra.mxu0 %v2501
        %2796 = vmatprep.subr.bf16.mxu0 %v2500
        %2797 = vmatpush1.bf16.msra.mxu0 %v2499
        %2798 = vmatprep.subr.bf16.mxu0 %v2530
        %2799 = vmatpush2.bf16.msra.mxu0 %v2529
        %2800 = vmatprep.subr.bf16.mxu0 %v2528
        %2801 = vmatpush2.bf16.msra.mxu0 %v2527
        %2802 = vmatprep.subr.bf16.mxu0 %v2526
        %2803 = vmatpush2.bf16.msra.mxu0 %v2525
        %2804 = vmatprep.subr.bf16.mxu0 %v2524
        %2805 = vmatpush2.bf16.msra.mxu0 %v2523
        %2806 = vmatprep.subr.bf16.mxu0 %v2522
        %2807 = vmatpush2.bf16.msra.mxu0 %v2521
        %2808 = vmatprep.subr.bf16.mxu0 %v2520
        %2809 = vmatpush2.bf16.msra.mxu0 %v2519
        %2810 = vmatprep.subr.bf16.mxu0 %v2518
        %2811 = vmatpush2.bf16.msra.mxu0 %v2517
        %2812 = vmatprep.subr.bf16.mxu0 %v2516
        %2813 = vmatpush2.bf16.msra.mxu0 %v2515
        %2814 = vmatprep.mubr.bf16.mxu0 %v1876
        %2815 = vmatmul.mubr.bf16.gmra.mxu0 %v1875
        %v2816 = vpop.f32.mrf.mxu0
        %v2817 = vadd.f32 %v2776, %v2816
        %v2818 = vpop.f32.mrf.mxu0
        %v2819 = vadd.f32 %v2778, %v2818
        %v2820 = vpop.f32.mrf.mxu0
        %v2821 = vpop.f32.mrf.mxu0
        %2822 = vdwg.mxu0
        %v2823 = vld [vmem:[#allocation10] ss:$8 sm:$0x3]
        %v2824 = vlaneseq
        %vm2825 = vcmp.ge.s32.totalorder %v2824, 0
        %vm2826 = vcmp.lt.s32.totalorder %v2824, 256
        %vm2827 = vmand %vm2825, %vm2826
        %2828 = vst.msk [vmem:[#allocation2] ss:$8 sm:$0x3] %vm2827, %v2823
        %2829 = vst.msk [vmem:[#allocation2] ss:$8 sm:$0x0] %vm2827, %v2823
        %v2830 = vld [vmem:[#allocation10] sm:$0x1e]
        %v2831 = vld [vmem:[#allocation10 + $0x8] sm:$0x1e]
        %v2834 = vrot.slane %v1847, 7
        %v2835 = vrot.slane %v1849, 7
        %v2838 = vadd.f32 %v2830, %v2834
        %v2839 = vadd.f32 %v2831, %v2835
        %2840 = vst [vmem:[#allocation2] sm:$0x1e] %v2838
        %2841 = vst [vmem:[#allocation2 + $0x8] sm:$0x1e] %v2839
        %v2842 = vld [vmem:[#allocation10] sm:$0xe0]
        %v2843 = vld [vmem:[#allocation10 + $0x8] sm:$0xe0]
        %v2844 = vld [vmem:[#allocation10 + $0x10] sm:$0x1]
        %v2845 = vld [vmem:[#allocation10 + $0x18] sm:$0x1]
        %v2848 = vrot.slane %v2817, 3
        %v2849 = vrot.slane %v2819, 3
        %v2852 = vadd.f32 %v2842, %v2848
        %v2853 = vadd.f32 %v2843, %v2849
        %v2854 = vadd.f32 %v2844, %v2848
        %v2855 = vadd.f32 %v2845, %v2849
        %2856 = vst [vmem:[#allocation2] sm:$0xe0] %v2852
        %2857 = vst [vmem:[#allocation2 + $0x8] sm:$0xe0] %v2853
        %2858 = vst [vmem:[#allocation2 + $0x10] sm:$0x1] %v2854
        %2859 = vst [vmem:[#allocation2 + $0x18] sm:$0x1] %v2855
        %v2860 = vld [vmem:[#allocation2] sm:$0xff]
        %v2861 = vld [vmem:[#allocation2 + $0x8] sm:$0xff]
        %v2862 = vld [vmem:[#allocation2 + $0x10] sm:$0x1]
        %v2863 = vld [vmem:[#allocation2 + $0x18] sm:$0x1]
        %v2864 = vld [vmem:[%s5] sm:$0x3]
        %v2865 = vld [vmem:[#allocation12] sm:$0x3]
        %v2866 = vadd.f32 %v2860, %v2861
        %2867 = vadd.xlane.f32.xlu0 %v2866
        %v2868 = vpop.xlane.xlu0 %2867
        %vm2869 = vcmask 1040384
        %v2870 = vsel %vm2869, %v2862, 0.0
        %v2871 = vsel %vm2869, %v2863, 0.0
        %v2872 = vadd.f32 %v2870, %v2871
        %2873 = vadd.xlane.f32.xlu0 %v2872
        %v2874 = vpop.xlane.xlu0 %2873
        %v2875 = vrcp.pop 256.0
        %v2876 = vmul.f32 %v2868, %v2875
        %v2877 = vmul.f32 %v2874, %v2875
        %v2878 = vsub.f32 %v2860, %v2876
        %v2879 = vsub.f32 %v2861, %v2876
        %v2880 = vsub.f32 %v2862, %v2877
        %v2881 = vsub.f32 %v2863, %v2877
        %v2882 = vmul.f32 %v2878, %v2878
        %v2883 = vmul.f32 %v2879, %v2879
        %v2884 = vmul.f32 %v2880, %v2880
        %v2885 = vmul.f32 %v2881, %v2881
        %v2886 = vadd.f32 %v2882, %v2883
        %2887 = vadd.xlane.f32.xlu0 %v2886
        %v2888 = vpop.xlane.xlu0 %2887
        %v2889 = vsel %vm2869, %v2884, 0.0
        %v2890 = vsel %vm2869, %v2885, 0.0
        %v2891 = vadd.f32 %v2889, %v2890
        %2892 = vadd.xlane.f32.xlu0 %v2891
        %v2893 = vpop.xlane.xlu0 %2892
        %v2894 = vmul.f32 %v2888, %v2875
        %v2895 = vmul.f32 %v2893, %v2875
        %v2896 = vadd.f32 %v2894, 1e-06
        %v2897 = vadd.f32 %v2895, 1e-06
        %v2898 = vrsqrt.pop %v2896
        %v2899 = vrsqrt.pop %v2897
        %v2900 = vmul.f32 %v2878, %v2898
        %v2901 = vmul.f32 %v2879, %v2898
        %v2902 = vmul.f32 %v2880, %v2899
        %v2903 = vmul.f32 %v2881, %v2899
        %v2905 = vlaneseq
        %v2906 = vshrl.u32 %v2905, 7
        %v2907 = vsub.s32 0, %v2906
        %v2908 = vrot.slane %v2864, %v2907
        %v2909 = vlaneseq
        %v2910 = vshrl.u32 %v2909, 7
        %v2911 = vsub.s32 1, %v2910
        %v2912 = vrot.slane %v2864, %v2911
        %v2915 = vmul.f32 %v2900, %v2908
        %v2916 = vmul.f32 %v2901, %v2912
        %v2917 = vmul.f32 %v2902, %v2908
        %v2918 = vmul.f32 %v2903, %v2912
        %v2920 = vlaneseq
        %v2921 = vshrl.u32 %v2920, 7
        %v2922 = vsub.s32 0, %v2921
        %v2923 = vrot.slane %v2865, %v2922
        %v2924 = vlaneseq
        %v2925 = vshrl.u32 %v2924, 7
        %v2926 = vsub.s32 1, %v2925
        %v2927 = vrot.slane %v2865, %v2926
        %v2930 = vadd.f32 %v2915, %v2923
        %v2931 = vadd.f32 %v2916, %v2927
        %v2932 = vadd.f32 %v2917, %v2923
        %v2933 = vadd.f32 %v2918, %v2927
        %v2934 = vpack.c.bf16 %v2932, %v2930
        %v2935 = vpack.c.bf16 %v2933, %v2931
        %v2936 = vld [vmem:[#allocation13] sm:$0xff]
        %v2937 = vld [vmem:[#allocation13 + $0x8] sm:$0xff]
        %v2938 = vld [vmem:[#allocation13 + $0x10] sm:$0xff]
        %v2939 = vld [vmem:[#allocation13 + $0x18] sm:$0xff]
        %v2940 = vld [vmem:[#allocation13 + $0x20] sm:$0xff]
        %v2941 = vld [vmem:[#allocation13 + $0x28] sm:$0xff]
        %v2942 = vld [vmem:[#allocation13 + $0x30] sm:$0xff]
        %v2943 = vld [vmem:[#allocation13 + $0x38] sm:$0xff]
        %v2944 = vld [vmem:[#allocation13 + $0x40] sm:$0xff]
        %v2945 = vld [vmem:[#allocation13 + $0x48] sm:$0xff]
        %v2946 = vld [vmem:[#allocation13 + $0x50] sm:$0xff]
        %v2947 = vld [vmem:[#allocation13 + $0x58] sm:$0xff]
        %v2948 = vld [vmem:[#allocation13 + $0x60] sm:$0xff]
        %v2949 = vld [vmem:[#allocation13 + $0x68] sm:$0xff]
        %v2950 = vld [vmem:[#allocation13 + $0x70] sm:$0xff]
        %v2951 = vld [vmem:[#allocation13 + $0x78] sm:$0xff]
        %v2952 = vld [vmem:[#allocation13 + $0x80] sm:$0xff]
        %v2953 = vld [vmem:[#allocation13 + $0x88] sm:$0xff]
        %v2954 = vld [vmem:[#allocation13 + $0x90] sm:$0xff]
        %v2955 = vld [vmem:[#allocation13 + $0x98] sm:$0xff]
        %v2956 = vld [vmem:[#allocation13 + $0xa0] sm:$0xff]
        %v2957 = vld [vmem:[#allocation13 + $0xa8] sm:$0xff]
        %v2958 = vld [vmem:[#allocation13 + $0xb0] sm:$0xff]
        %v2959 = vld [vmem:[#allocation13 + $0xb8] sm:$0xff]
        %v2960 = vld [vmem:[#allocation13 + $0xc0] sm:$0xff]
        %v2961 = vld [vmem:[#allocation13 + $0xc8] sm:$0xff]
        %v2962 = vld [vmem:[#allocation13 + $0xd0] sm:$0xff]
        %v2963 = vld [vmem:[#allocation13 + $0xd8] sm:$0xff]
        %v2964 = vld [vmem:[#allocation13 + $0xe0] sm:$0xff]
        %v2965 = vld [vmem:[#allocation13 + $0xe8] sm:$0xff]
        %v2966 = vld [vmem:[#allocation13 + $0xf0] sm:$0xff]
        %v2967 = vld [vmem:[#allocation13 + $0xf8] sm:$0xff]
        %v2968 = vld [vmem:[#allocation13 + $0x100] sm:$0xff]
        %v2969 = vld [vmem:[#allocation13 + $0x108] sm:$0xff]
        %v2970 = vld [vmem:[#allocation13 + $0x110] sm:$0xff]
        %v2971 = vld [vmem:[#allocation13 + $0x118] sm:$0xff]
        %v2972 = vld [vmem:[#allocation13 + $0x120] sm:$0xff]
        %v2973 = vld [vmem:[#allocation13 + $0x128] sm:$0xff]
        %v2974 = vld [vmem:[#allocation13 + $0x130] sm:$0xff]
        %v2975 = vld [vmem:[#allocation13 + $0x138] sm:$0xff]
        %v2976 = vld [vmem:[#allocation13 + $0x140] sm:$0xff]
        %v2977 = vld [vmem:[#allocation13 + $0x148] sm:$0xff]
        %v2978 = vld [vmem:[#allocation13 + $0x150] sm:$0xff]
        %v2979 = vld [vmem:[#allocation13 + $0x158] sm:$0xff]
        %v2980 = vld [vmem:[#allocation13 + $0x160] sm:$0xff]
        %v2981 = vld [vmem:[#allocation13 + $0x168] sm:$0xff]
        %v2982 = vld [vmem:[#allocation13 + $0x170] sm:$0xff]
        %v2983 = vld [vmem:[#allocation13 + $0x178] sm:$0xff]
        %v2984 = vld [vmem:[#allocation13 + $0x180] sm:$0xff]
        %v2985 = vld [vmem:[#allocation13 + $0x188] sm:$0xff]
        %v2986 = vld [vmem:[#allocation13 + $0x190] sm:$0xff]
        %v2987 = vld [vmem:[#allocation13 + $0x198] sm:$0xff]
        %v2988 = vld [vmem:[#allocation13 + $0x1a0] sm:$0xff]
        %v2989 = vld [vmem:[#allocation13 + $0x1a8] sm:$0xff]
        %v2990 = vld [vmem:[#allocation13 + $0x1b0] sm:$0xff]
        %v2991 = vld [vmem:[#allocation13 + $0x1b8] sm:$0xff]
        %v2992 = vld [vmem:[#allocation13 + $0x1c0] sm:$0xff]
        %v2993 = vld [vmem:[#allocation13 + $0x1c8] sm:$0xff]
        %v2994 = vld [vmem:[#allocation13 + $0x1d0] sm:$0xff]
        %v2995 = vld [vmem:[#allocation13 + $0x1d8] sm:$0xff]
        %v2996 = vld [vmem:[#allocation13 + $0x1e0] sm:$0xff]
        %v2997 = vld [vmem:[#allocation13 + $0x1e8] sm:$0xff]
        %v2998 = vld [vmem:[#allocation13 + $0x1f0] sm:$0xff]
        %v2999 = vld [vmem:[#allocation13 + $0x1f8] sm:$0xff]
        %v3000 = vld [vmem:[#allocation13 + $0x200] sm:$0xff]
        %v3001 = vld [vmem:[#allocation13 + $0x208] sm:$0xff]
        %v3002 = vld [vmem:[#allocation13 + $0x210] sm:$0xff]
        %v3003 = vld [vmem:[#allocation13 + $0x218] sm:$0xff]
        %v3004 = vld [vmem:[#allocation13 + $0x220] sm:$0xff]
        %v3005 = vld [vmem:[#allocation13 + $0x228] sm:$0xff]
        %v3006 = vld [vmem:[#allocation13 + $0x230] sm:$0xff]
        %v3007 = vld [vmem:[#allocation13 + $0x238] sm:$0xff]
        %v3008 = vld [vmem:[#allocation13 + $0x240] sm:$0xff]
        %v3009 = vld [vmem:[#allocation13 + $0x248] sm:$0xff]
        %v3010 = vld [vmem:[#allocation13 + $0x250] sm:$0xff]
        %v3011 = vld [vmem:[#allocation13 + $0x258] sm:$0xff]
        %v3012 = vld [vmem:[#allocation13 + $0x260] sm:$0xff]
        %v3013 = vld [vmem:[#allocation13 + $0x268] sm:$0xff]
        %v3014 = vld [vmem:[#allocation13 + $0x270] sm:$0xff]
        %v3015 = vld [vmem:[#allocation13 + $0x278] sm:$0xff]
        %v3016 = vld [vmem:[#allocation13 + $0x280] sm:$0xff]
        %v3017 = vld [vmem:[#allocation13 + $0x288] sm:$0xff]
        %v3018 = vld [vmem:[#allocation13 + $0x290] sm:$0xff]
        %v3019 = vld [vmem:[#allocation13 + $0x298] sm:$0xff]
        %v3020 = vld [vmem:[#allocation13 + $0x2a0] sm:$0xff]
        %v3021 = vld [vmem:[#allocation13 + $0x2a8] sm:$0xff]
        %v3022 = vld [vmem:[#allocation13 + $0x2b0] sm:$0xff]
        %v3023 = vld [vmem:[#allocation13 + $0x2b8] sm:$0xff]
        %v3024 = vld [vmem:[#allocation13 + $0x2c0] sm:$0xff]
        %v3025 = vld [vmem:[#allocation13 + $0x2c8] sm:$0xff]
        %v3026 = vld [vmem:[#allocation13 + $0x2d0] sm:$0xff]
        %v3027 = vld [vmem:[#allocation13 + $0x2d8] sm:$0xff]
        %v3028 = vld [vmem:[#allocation13 + $0x2e0] sm:$0xff]
        %v3029 = vld [vmem:[#allocation13 + $0x2e8] sm:$0xff]
        %v3030 = vld [vmem:[#allocation13 + $0x2f0] sm:$0xff]
        %v3031 = vld [vmem:[#allocation13 + $0x2f8] sm:$0xff]
        %v3032 = vld [vmem:[#allocation15] sm:$0x3f]
        %v3034 = vlaneseq
        %v3035 = vshrl.u32 %v3034, 7
        %v3036 = vsub.s32 0, %v3035
        %v3037 = vrot.slane %v3032, %v3036
        %v3038 = vlaneseq
        %v3039 = vshrl.u32 %v3038, 7
        %v3040 = vsub.s32 1, %v3039
        %v3041 = vrot.slane %v3032, %v3040
        %v3042 = vlaneseq
        %v3043 = vshrl.u32 %v3042, 7
        %v3044 = vsub.s32 2, %v3043
        %v3045 = vrot.slane %v3032, %v3044
        %v3046 = vlaneseq
        %v3047 = vshrl.u32 %v3046, 7
        %v3048 = vsub.s32 3, %v3047
        %v3049 = vrot.slane %v3032, %v3048
        %v3050 = vlaneseq
        %v3051 = vshrl.u32 %v3050, 7
        %v3052 = vsub.s32 4, %v3051
        %v3053 = vrot.slane %v3032, %v3052
        %v3054 = vlaneseq
        %v3055 = vshrl.u32 %v3054, 7
        %v3056 = vsub.s32 5, %v3055
        %v3057 = vrot.slane %v3032, %v3056
        %v3160 = vunpack.c.l.b16 %v2936
        %v3161 = vunpack.c.h.b16 %v2936
        %v3162 = vunpack.c.l.b16 %v2937
        %v3163 = vunpack.c.h.b16 %v2937
        %v3164 = vunpack.c.l.b16 %v2938
        %v3165 = vunpack.c.h.b16 %v2938
        %v3166 = vunpack.c.l.b16 %v2939
        %v3167 = vunpack.c.h.b16 %v2939
        %v3168 = vunpack.c.l.b16 %v2940
        %v3169 = vunpack.c.h.b16 %v2940
        %v3170 = vunpack.c.l.b16 %v2941
        %v3171 = vunpack.c.h.b16 %v2941
        %v3172 = vunpack.c.l.b16 %v2942
        %v3173 = vunpack.c.h.b16 %v2942
        %v3174 = vunpack.c.l.b16 %v2943
        %v3175 = vunpack.c.h.b16 %v2943
        %v3176 = vunpack.c.l.b16 %v2944
        %v3177 = vunpack.c.h.b16 %v2944
        %v3178 = vunpack.c.l.b16 %v2945
        %v3179 = vunpack.c.h.b16 %v2945
        %v3180 = vunpack.c.l.b16 %v2946
        %v3181 = vunpack.c.h.b16 %v2946
        %v3182 = vunpack.c.l.b16 %v2947
        %v3183 = vunpack.c.h.b16 %v2947
        %v3184 = vunpack.c.l.b16 %v2948
        %v3185 = vunpack.c.h.b16 %v2948
        %v3186 = vunpack.c.l.b16 %v2949
        %v3187 = vunpack.c.h.b16 %v2949
        %v3188 = vunpack.c.l.b16 %v2950
        %v3189 = vunpack.c.h.b16 %v2950
        %v3190 = vunpack.c.l.b16 %v2951
        %v3191 = vunpack.c.h.b16 %v2951
        %v3192 = vunpack.c.l.b16 %v2952
        %v3193 = vunpack.c.h.b16 %v2952
        %v3194 = vunpack.c.l.b16 %v2953
        %v3195 = vunpack.c.h.b16 %v2953
        %v3196 = vunpack.c.l.b16 %v2954
        %v3197 = vunpack.c.h.b16 %v2954
        %v3198 = vunpack.c.l.b16 %v2955
        %v3199 = vunpack.c.h.b16 %v2955
        %v3200 = vunpack.c.l.b16 %v2956
        %v3201 = vunpack.c.h.b16 %v2956
        %v3202 = vunpack.c.l.b16 %v2957
        %v3203 = vunpack.c.h.b16 %v2957
        %v3204 = vunpack.c.l.b16 %v2958
        %v3205 = vunpack.c.h.b16 %v2958
        %v3206 = vunpack.c.l.b16 %v2959
        %v3207 = vunpack.c.h.b16 %v2959
        %v3208 = vunpack.c.l.b16 %v2960
        %v3209 = vunpack.c.h.b16 %v2960
        %v3210 = vunpack.c.l.b16 %v2961
        %v3211 = vunpack.c.h.b16 %v2961
        %v3212 = vunpack.c.l.b16 %v2962
        %v3213 = vunpack.c.h.b16 %v2962
        %v3214 = vunpack.c.l.b16 %v2963
        %v3215 = vunpack.c.h.b16 %v2963
        %v3216 = vunpack.c.l.b16 %v2964
        %v3217 = vunpack.c.h.b16 %v2964
        %v3218 = vunpack.c.l.b16 %v2965
        %v3219 = vunpack.c.h.b16 %v2965
        %v3220 = vunpack.c.l.b16 %v2966
        %v3221 = vunpack.c.h.b16 %v2966
        %v3222 = vunpack.c.l.b16 %v2967
        %v3223 = vunpack.c.h.b16 %v2967
        %v3224 = vunpack.c.l.b16 %v2968
        %v3225 = vunpack.c.h.b16 %v2968
        %v3226 = vunpack.c.l.b16 %v2969
        %v3227 = vunpack.c.h.b16 %v2969
        %v3228 = vunpack.c.l.b16 %v2970
        %v3229 = vunpack.c.h.b16 %v2970
        %v3230 = vunpack.c.l.b16 %v2971
        %v3231 = vunpack.c.h.b16 %v2971
        %v3232 = vunpack.c.l.b16 %v2972
        %v3233 = vunpack.c.h.b16 %v2972
        %v3234 = vunpack.c.l.b16 %v2973
        %v3235 = vunpack.c.h.b16 %v2973
        %v3236 = vunpack.c.l.b16 %v2974
        %v3237 = vunpack.c.h.b16 %v2974
        %v3238 = vunpack.c.l.b16 %v2975
        %v3239 = vunpack.c.h.b16 %v2975
        %v3240 = vunpack.c.l.b16 %v2976
        %v3241 = vunpack.c.h.b16 %v2976
        %v3242 = vunpack.c.l.b16 %v2977
        %v3243 = vunpack.c.h.b16 %v2977
        %v3244 = vunpack.c.l.b16 %v2978
        %v3245 = vunpack.c.h.b16 %v2978
        %v3246 = vunpack.c.l.b16 %v2979
        %v3247 = vunpack.c.h.b16 %v2979
        %v3248 = vunpack.c.l.b16 %v2980
        %v3249 = vunpack.c.h.b16 %v2980
        %v3250 = vunpack.c.l.b16 %v2981
        %v3251 = vunpack.c.h.b16 %v2981
        %v3252 = vunpack.c.l.b16 %v2982
        %v3253 = vunpack.c.h.b16 %v2982
        %v3254 = vunpack.c.l.b16 %v2983
        %v3255 = vunpack.c.h.b16 %v2983
        %v3256 = vunpack.c.l.b16 %v2984
        %v3257 = vunpack.c.h.b16 %v2984
        %v3258 = vunpack.c.l.b16 %v2985
        %v3259 = vunpack.c.h.b16 %v2985
        %v3260 = vunpack.c.l.b16 %v2986
        %v3261 = vunpack.c.h.b16 %v2986
        %v3262 = vunpack.c.l.b16 %v2987
        %v3263 = vunpack.c.h.b16 %v2987
        %v3264 = vunpack.c.l.b16 %v2988
        %v3265 = vunpack.c.h.b16 %v2988
        %v3266 = vunpack.c.l.b16 %v2989
        %v3267 = vunpack.c.h.b16 %v2989
        %v3268 = vunpack.c.l.b16 %v2990
        %v3269 = vunpack.c.h.b16 %v2990
        %v3270 = vunpack.c.l.b16 %v2991
        %v3271 = vunpack.c.h.b16 %v2991
        %v3272 = vunpack.c.l.b16 %v2992
        %v3273 = vunpack.c.h.b16 %v2992
        %v3274 = vunpack.c.l.b16 %v2993
        %v3275 = vunpack.c.h.b16 %v2993
        %v3276 = vunpack.c.l.b16 %v2994
        %v3277 = vunpack.c.h.b16 %v2994
        %v3278 = vunpack.c.l.b16 %v2995
        %v3279 = vunpack.c.h.b16 %v2995
        %v3280 = vunpack.c.l.b16 %v2996
        %v3281 = vunpack.c.h.b16 %v2996
        %v3282 = vunpack.c.l.b16 %v2997
        %v3283 = vunpack.c.h.b16 %v2997
        %v3284 = vunpack.c.l.b16 %v2998
        %v3285 = vunpack.c.h.b16 %v2998
        %v3286 = vunpack.c.l.b16 %v2999
        %v3287 = vunpack.c.h.b16 %v2999
        %v3288 = vunpack.c.l.b16 %v3000
        %v3289 = vunpack.c.h.b16 %v3000
        %v3290 = vunpack.c.l.b16 %v3001
        %v3291 = vunpack.c.h.b16 %v3001
        %v3292 = vunpack.c.l.b16 %v3002
        %v3293 = vunpack.c.h.b16 %v3002
        %v3294 = vunpack.c.l.b16 %v3003
        %v3295 = vunpack.c.h.b16 %v3003
        %v3296 = vunpack.c.l.b16 %v3004
        %v3297 = vunpack.c.h.b16 %v3004
        %v3298 = vunpack.c.l.b16 %v3005
        %v3299 = vunpack.c.h.b16 %v3005
        %v3300 = vunpack.c.l.b16 %v3006
        %v3301 = vunpack.c.h.b16 %v3006
        %v3302 = vunpack.c.l.b16 %v3007
        %v3303 = vunpack.c.h.b16 %v3007
        %v3304 = vunpack.c.l.b16 %v3008
        %v3305 = vunpack.c.h.b16 %v3008
        %v3306 = vunpack.c.l.b16 %v3009
        %v3307 = vunpack.c.h.b16 %v3009
        %v3308 = vunpack.c.l.b16 %v3010
        %v3309 = vunpack.c.h.b16 %v3010
        %v3310 = vunpack.c.l.b16 %v3011
        %v3311 = vunpack.c.h.b16 %v3011
        %v3312 = vunpack.c.l.b16 %v3012
        %v3313 = vunpack.c.h.b16 %v3012
        %v3314 = vunpack.c.l.b16 %v3013
        %v3315 = vunpack.c.h.b16 %v3013
        %v3316 = vunpack.c.l.b16 %v3014
        %v3317 = vunpack.c.h.b16 %v3014
        %v3318 = vunpack.c.l.b16 %v3015
        %v3319 = vunpack.c.h.b16 %v3015
        %v3320 = vunpack.c.l.b16 %v3016
        %v3321 = vunpack.c.h.b16 %v3016
        %v3322 = vunpack.c.l.b16 %v3017
        %v3323 = vunpack.c.h.b16 %v3017
        %v3324 = vunpack.c.l.b16 %v3018
        %v3325 = vunpack.c.h.b16 %v3018
        %v3326 = vunpack.c.l.b16 %v3019
        %v3327 = vunpack.c.h.b16 %v3019
        %v3328 = vunpack.c.l.b16 %v3020
        %v3329 = vunpack.c.h.b16 %v3020
        %v3330 = vunpack.c.l.b16 %v3021
        %v3331 = vunpack.c.h.b16 %v3021
        %v3332 = vunpack.c.l.b16 %v3022
        %v3333 = vunpack.c.h.b16 %v3022
        %v3334 = vunpack.c.l.b16 %v3023
        %v3335 = vunpack.c.h.b16 %v3023
        %v3336 = vunpack.c.l.b16 %v3024
        %v3337 = vunpack.c.h.b16 %v3024
        %v3338 = vunpack.c.l.b16 %v3025
        %v3339 = vunpack.c.h.b16 %v3025
        %v3340 = vunpack.c.l.b16 %v3026
        %v3341 = vunpack.c.h.b16 %v3026
        %v3342 = vunpack.c.l.b16 %v3027
        %v3343 = vunpack.c.h.b16 %v3027
        %v3344 = vunpack.c.l.b16 %v3028
        %v3345 = vunpack.c.h.b16 %v3028
        %v3346 = vunpack.c.l.b16 %v3029
        %v3347 = vunpack.c.h.b16 %v3029
        %v3348 = vunpack.c.l.b16 %v3030
        %v3349 = vunpack.c.h.b16 %v3030
        %v3350 = vunpack.c.l.b16 %v3031
        %v3351 = vunpack.c.h.b16 %v3031
        %v3352 = vpack.c.b16 %v3166, %v3160
        %v3353 = vpack.c.b16 %v3167, %v3161
        %v3354 = vpack.c.b16 %v3168, %v3162
        %v3355 = vpack.c.b16 %v3169, %v3163
        %v3356 = vpack.c.b16 %v3170, %v3164
        %v3357 = vpack.c.b16 %v3171, %v3165
        %v3358 = vpack.c.b16 %v3178, %v3172
        %v3359 = vpack.c.b16 %v3179, %v3173
        %v3360 = vpack.c.b16 %v3180, %v3174
        %v3361 = vpack.c.b16 %v3181, %v3175
        %v3362 = vpack.c.b16 %v3182, %v3176
        %v3363 = vpack.c.b16 %v3183, %v3177
        %v3364 = vpack.c.b16 %v3190, %v3184
        %v3365 = vpack.c.b16 %v3191, %v3185
        %v3366 = vpack.c.b16 %v3192, %v3186
        %v3367 = vpack.c.b16 %v3193, %v3187
        %v3368 = vpack.c.b16 %v3194, %v3188
        %v3369 = vpack.c.b16 %v3195, %v3189
        %v3370 = vpack.c.b16 %v3202, %v3196
        %v3371 = vpack.c.b16 %v3203, %v3197
        %v3372 = vpack.c.b16 %v3204, %v3198
        %v3373 = vpack.c.b16 %v3205, %v3199
        %v3374 = vpack.c.b16 %v3206, %v3200
        %v3375 = vpack.c.b16 %v3207, %v3201
        %v3376 = vpack.c.b16 %v3214, %v3208
        %v3377 = vpack.c.b16 %v3215, %v3209
        %v3378 = vpack.c.b16 %v3216, %v3210
        %v3379 = vpack.c.b16 %v3217, %v3211
        %v3380 = vpack.c.b16 %v3218, %v3212
        %v3381 = vpack.c.b16 %v3219, %v3213
        %v3382 = vpack.c.b16 %v3226, %v3220
        %v3383 = vpack.c.b16 %v3227, %v3221
        %v3384 = vpack.c.b16 %v3228, %v3222
        %v3385 = vpack.c.b16 %v3229, %v3223
        %v3386 = vpack.c.b16 %v3230, %v3224
        %v3387 = vpack.c.b16 %v3231, %v3225
        %v3388 = vpack.c.b16 %v3238, %v3232
        %v3389 = vpack.c.b16 %v3239, %v3233
        %v3390 = vpack.c.b16 %v3240, %v3234
        %v3391 = vpack.c.b16 %v3241, %v3235
        %v3392 = vpack.c.b16 %v3242, %v3236
        %v3393 = vpack.c.b16 %v3243, %v3237
        %v3394 = vpack.c.b16 %v3250, %v3244
        %v3395 = vpack.c.b16 %v3251, %v3245
        %v3396 = vpack.c.b16 %v3252, %v3246
        %v3397 = vpack.c.b16 %v3253, %v3247
        %v3398 = vpack.c.b16 %v3254, %v3248
        %v3399 = vpack.c.b16 %v3255, %v3249
        %v3400 = vpack.c.b16 %v3262, %v3256
        %v3401 = vpack.c.b16 %v3263, %v3257
        %v3402 = vpack.c.b16 %v3264, %v3258
        %v3403 = vpack.c.b16 %v3265, %v3259
        %v3404 = vpack.c.b16 %v3266, %v3260
        %v3405 = vpack.c.b16 %v3267, %v3261
        %v3406 = vpack.c.b16 %v3274, %v3268
        %v3407 = vpack.c.b16 %v3275, %v3269
        %v3408 = vpack.c.b16 %v3276, %v3270
        %v3409 = vpack.c.b16 %v3277, %v3271
        %v3410 = vpack.c.b16 %v3278, %v3272
        %v3411 = vpack.c.b16 %v3279, %v3273
        %v3412 = vpack.c.b16 %v3286, %v3280
        %v3413 = vpack.c.b16 %v3287, %v3281
        %v3414 = vpack.c.b16 %v3288, %v3282
        %v3415 = vpack.c.b16 %v3289, %v3283
        %v3416 = vpack.c.b16 %v3290, %v3284
        %v3417 = vpack.c.b16 %v3291, %v3285
        %v3418 = vpack.c.b16 %v3298, %v3292
        %v3419 = vpack.c.b16 %v3299, %v3293
        %v3420 = vpack.c.b16 %v3300, %v3294
        %v3421 = vpack.c.b16 %v3301, %v3295
        %v3422 = vpack.c.b16 %v3302, %v3296
        %v3423 = vpack.c.b16 %v3303, %v3297
        %v3424 = vpack.c.b16 %v3310, %v3304
        %v3425 = vpack.c.b16 %v3311, %v3305
        %v3426 = vpack.c.b16 %v3312, %v3306
        %v3427 = vpack.c.b16 %v3313, %v3307
        %v3428 = vpack.c.b16 %v3314, %v3308
        %v3429 = vpack.c.b16 %v3315, %v3309
        %v3430 = vpack.c.b16 %v3322, %v3316
        %v3431 = vpack.c.b16 %v3323, %v3317
        %v3432 = vpack.c.b16 %v3324, %v3318
        %v3433 = vpack.c.b16 %v3325, %v3319
        %v3434 = vpack.c.b16 %v3326, %v3320
        %v3435 = vpack.c.b16 %v3327, %v3321
        %v3436 = vpack.c.b16 %v3334, %v3328
        %v3437 = vpack.c.b16 %v3335, %v3329
        %v3438 = vpack.c.b16 %v3336, %v3330
        %v3439 = vpack.c.b16 %v3337, %v3331
        %v3440 = vpack.c.b16 %v3338, %v3332
        %v3441 = vpack.c.b16 %v3339, %v3333
        %v3442 = vpack.c.b16 %v3346, %v3340
        %v3443 = vpack.c.b16 %v3347, %v3341
        %v3444 = vpack.c.b16 %v3348, %v3342
        %v3445 = vpack.c.b16 %v3349, %v3343
        %v3446 = vpack.c.b16 %v3350, %v3344
        %v3447 = vpack.c.b16 %v3351, %v3345
        %3544 = vmatprep.subr.bf16.mxu0 %v3395
        %3545 = vmatpush1.bf16.msra.mxu0 %v3394
        %3546 = vmatprep.subr.bf16.mxu0 %v3389
        %3547 = vmatpush1.bf16.msra.mxu0 %v3388
        %3548 = vmatprep.subr.bf16.mxu0 %v3383
        %3549 = vmatpush1.bf16.msra.mxu0 %v3382
        %3550 = vmatprep.subr.bf16.mxu0 %v3377
        %3551 = vmatpush1.bf16.msra.mxu0 %v3376
        %3552 = vmatprep.subr.bf16.mxu0 %v3371
        %3553 = vmatpush1.bf16.msra.mxu0 %v3370
        %3554 = vmatprep.subr.bf16.mxu0 %v3365
        %3555 = vmatpush1.bf16.msra.mxu0 %v3364
        %3556 = vmatprep.subr.bf16.mxu0 %v3359
        %3557 = vmatpush1.bf16.msra.mxu0 %v3358
        %3558 = vmatprep.subr.bf16.mxu0 %v3353
        %3559 = vmatpush1.bf16.msra.mxu0 %v3352
        %3560 = vmatprep.subr.bf16.mxu0 %v3443
        %3561 = vmatpush2.bf16.msra.mxu0 %v3442
        %3562 = vmatprep.subr.bf16.mxu0 %v3437
        %3563 = vmatpush2.bf16.msra.mxu0 %v3436
        %3564 = vmatprep.subr.bf16.mxu0 %v3431
        %3565 = vmatpush2.bf16.msra.mxu0 %v3430
        %3566 = vmatprep.subr.bf16.mxu0 %v3425
        %3567 = vmatpush2.bf16.msra.mxu0 %v3424
        %3568 = vmatprep.subr.bf16.mxu0 %v3419
        %3569 = vmatpush2.bf16.msra.mxu0 %v3418
        %3570 = vmatprep.subr.bf16.mxu0 %v3413
        %3571 = vmatpush2.bf16.msra.mxu0 %v3412
        %3572 = vmatprep.subr.bf16.mxu0 %v3407
        %3573 = vmatpush2.bf16.msra.mxu0 %v3406
        %3574 = vmatprep.subr.bf16.mxu0 %v3401
        %3575 = vmatpush2.bf16.msra.mxu0 %v3400
        %3576 = vmatprep.mubr.bf16.mxu0 %v2935
        %3577 = vmatmul.mubr.bf16.gmra.mxu0 %v2934
        %v3578 = vpop.f32.mrf.mxu0
        %v3579 = vadd.f32 %v3037, %v3578
        %v3580 = vpop.f32.mrf.mxu0
        %v3581 = vadd.f32 %v3041, %v3580
        %v3582 = vpop.f32.mrf.mxu0
        %v3583 = vadd.f32 %v3037, %v3582
        %v3584 = vpop.f32.mrf.mxu0
        %v3585 = vadd.f32 %v3041, %v3584
        %3586 = vdwg.mxu0
        %3587 = vmatprep.subr.bf16.mxu0 %v3397
        %3588 = vmatpush1.bf16.msra.mxu0 %v3396
        %3589 = vmatprep.subr.bf16.mxu0 %v3391
        %3590 = vmatpush1.bf16.msra.mxu0 %v3390
        %3591 = vmatprep.subr.bf16.mxu0 %v3385
        %3592 = vmatpush1.bf16.msra.mxu0 %v3384
        %3593 = vmatprep.subr.bf16.mxu0 %v3379
        %3594 = vmatpush1.bf16.msra.mxu0 %v3378
        %3595 = vmatprep.subr.bf16.mxu0 %v3373
        %3596 = vmatpush1.bf16.msra.mxu0 %v3372
        %3597 = vmatprep.subr.bf16.mxu0 %v3367
        %3598 = vmatpush1.bf16.msra.mxu0 %v3366
        %3599 = vmatprep.subr.bf16.mxu0 %v3361
        %3600 = vmatpush1.bf16.msra.mxu0 %v3360
        %3601 = vmatprep.subr.bf16.mxu0 %v3355
        %3602 = vmatpush1.bf16.msra.mxu0 %v3354
        %3603 = vmatprep.subr.bf16.mxu0 %v3445
        %3604 = vmatpush2.bf16.msra.mxu0 %v3444
        %3605 = vmatprep.subr.bf16.mxu0 %v3439
        %3606 = vmatpush2.bf16.msra.mxu0 %v3438
        %3607 = vmatprep.subr.bf16.mxu0 %v3433
        %3608 = vmatpush2.bf16.msra.mxu0 %v3432
        %3609 = vmatprep.subr.bf16.mxu0 %v3427
        %3610 = vmatpush2.bf16.msra.mxu0 %v3426
        %3611 = vmatprep.subr.bf16.mxu0 %v3421
        %3612 = vmatpush2.bf16.msra.mxu0 %v3420
        %3613 = vmatprep.subr.bf16.mxu0 %v3415
        %3614 = vmatpush2.bf16.msra.mxu0 %v3414
        %3615 = vmatprep.subr.bf16.mxu0 %v3409
        %3616 = vmatpush2.bf16.msra.mxu0 %v3408
        %3617 = vmatprep.subr.bf16.mxu0 %v3403
        %3618 = vmatpush2.bf16.msra.mxu0 %v3402
        %3619 = vmatprep.mubr.bf16.mxu0 %v2935
        %3620 = vmatmul.mubr.bf16.gmra.mxu0 %v2934
        %v3621 = vpop.f32.mrf.mxu0
        %v3622 = vadd.f32 %v3045, %v3621
        %v3623 = vpop.f32.mrf.mxu0
        %v3624 = vadd.f32 %v3049, %v3623
        %v3625 = vpop.f32.mrf.mxu0
        %v3626 = vadd.f32 %v3045, %v3625
        %v3627 = vpop.f32.mrf.mxu0
        %v3628 = vadd.f32 %v3049, %v3627
        %3629 = vdwg.mxu0
        %3630 = vmatprep.subr.bf16.mxu0 %v3399
        %3631 = vmatpush1.bf16.msra.mxu0 %v3398
        %3632 = vmatprep.subr.bf16.mxu0 %v3393
        %3633 = vmatpush1.bf16.msra.mxu0 %v3392
        %3634 = vmatprep.subr.bf16.mxu0 %v3387
        %3635 = vmatpush1.bf16.msra.mxu0 %v3386
        %3636 = vmatprep.subr.bf16.mxu0 %v3381
        %3637 = vmatpush1.bf16.msra.mxu0 %v3380
        %3638 = vmatprep.subr.bf16.mxu0 %v3375
        %3639 = vmatpush1.bf16.msra.mxu0 %v3374
        %3640 = vmatprep.subr.bf16.mxu0 %v3369
        %3641 = vmatpush1.bf16.msra.mxu0 %v3368
        %3642 = vmatprep.subr.bf16.mxu0 %v3363
        %3643 = vmatpush1.bf16.msra.mxu0 %v3362
        %3644 = vmatprep.subr.bf16.mxu0 %v3357
        %3645 = vmatpush1.bf16.msra.mxu0 %v3356
        %3646 = vmatprep.subr.bf16.mxu0 %v3447
        %3647 = vmatpush2.bf16.msra.mxu0 %v3446
        %3648 = vmatprep.subr.bf16.mxu0 %v3441
        %3649 = vmatpush2.bf16.msra.mxu0 %v3440
        %3650 = vmatprep.subr.bf16.mxu0 %v3435
        %3651 = vmatpush2.bf16.msra.mxu0 %v3434
        %3652 = vmatprep.subr.bf16.mxu0 %v3429
        %3653 = vmatpush2.bf16.msra.mxu0 %v3428
        %3654 = vmatprep.subr.bf16.mxu0 %v3423
        %3655 = vmatpush2.bf16.msra.mxu0 %v3422
        %3656 = vmatprep.subr.bf16.mxu0 %v3417
        %3657 = vmatpush2.bf16.msra.mxu0 %v3416
        %3658 = vmatprep.subr.bf16.mxu0 %v3411
        %3659 = vmatpush2.bf16.msra.mxu0 %v3410
        %3660 = vmatprep.subr.bf16.mxu0 %v3405
        %3661 = vmatpush2.bf16.msra.mxu0 %v3404
        %3662 = vmatprep.mubr.bf16.mxu0 %v2935
        %3663 = vmatmul.mubr.bf16.gmra.mxu0 %v2934
        %v3664 = vpop.f32.mrf.mxu0
        %v3665 = vadd.f32 %v3053, %v3664
        %v3666 = vpop.f32.mrf.mxu0
        %v3667 = vadd.f32 %v3057, %v3666
        %v3668 = vpop.f32.mrf.mxu0
        %v3669 = vadd.f32 %v3053, %v3668
        %v3670 = vpop.f32.mrf.mxu0
        %v3671 = vadd.f32 %v3057, %v3670
        %3672 = vdwg.mxu0
        %v3673 = vpack.c.bf16 %v3583, %v3579
        %v3674 = vpack.c.bf16 %v3585, %v3581
        %v3675 = vpack.c.bf16 %v3626, %v3622
        %v3676 = vpack.c.bf16 %v3628, %v3624
        %v3677 = vpack.c.bf16 %v3669, %v3665
        %v3678 = vpack.c.bf16 %v3671, %v3667
        %vm3679 = vcmask 523264
        %v3681 = vsel %vm3679, %v3673, 0
        %v3684 = vsel %vm3679, %v3675, 0
        %3686 = vmatprep.subr.bf16.mxu0 0
        %3687 = vmatpush1.bf16.xpose.msra.mxu0 0
        %3688 = vmatprep.subr.bf16.mxu0 0
        %3689 = vmatpush1.bf16.xpose.msra.mxu0 0
        %3690 = vmatprep.subr.bf16.mxu0 0
        %3691 = vmatpush1.bf16.xpose.msra.mxu0 0
        %3692 = vmatprep.subr.bf16.mxu0 0
        %3693 = vmatpush1.bf16.xpose.msra.mxu0 0
        %3694 = vmatprep.subr.bf16.mxu0 0
        %3695 = vmatpush1.bf16.xpose.msra.mxu0 0
        %3696 = vmatprep.subr.bf16.mxu0 0
        %3697 = vmatpush1.bf16.xpose.msra.mxu0 0
        %3698 = vmatprep.subr.bf16.mxu0 0
        %3699 = vmatpush1.bf16.xpose.msra.mxu0 0
        %3700 = vmatprep.subr.bf16.mxu0 0
        %3701 = vmatpush1.bf16.xpose.msra.mxu0 %v3684
        %3702 = vmatprep.subr.bf16.mxu0 0
        %3703 = vmatpush2.bf16.xpose.msra.mxu0 0
        %3704 = vmatprep.subr.bf16.mxu0 0
        %3705 = vmatpush2.bf16.xpose.msra.mxu0 0
        %3706 = vmatprep.subr.bf16.mxu0 0
        %3707 = vmatpush2.bf16.xpose.msra.mxu0 0
        %3708 = vmatprep.subr.bf16.mxu0 0
        %3709 = vmatpush2.bf16.xpose.msra.mxu0 0
        %3710 = vmatprep.subr.bf16.mxu0 0
        %3711 = vmatpush2.bf16.xpose.msra.mxu0 0
        %3712 = vmatprep.subr.bf16.mxu0 0
        %3713 = vmatpush2.bf16.xpose.msra.mxu0 0
        %3714 = vmatprep.subr.bf16.mxu0 0
        %3715 = vmatpush2.bf16.xpose.msra.mxu0 0
        %3716 = vmatprep.subr.bf16.mxu0 0
        %3717 = vmatpush2.bf16.xpose.msra.mxu0 0
        %3718 = vmatprep.mubr.bf16.mxu0 0
        %3719 = vmatmul.mubr.bf16.gmra.mxu0 %v3681
        %v3720 = vpop.f32.mrf.mxu0
        %v3721 = vadd.f32 0.0, %v3720
        %v3722 = vpop.f32.mrf.mxu0
        %v3723 = vpop.f32.mrf.mxu0
        %v3724 = vadd.f32 0.0, %v3723
        %v3725 = vpop.f32.mrf.mxu0
        %3726 = vdwg.mxu0
        %vm3727 = vcmask 72704
        %v3728 = vsel %vm3727, %v3721, -inf
        %3729 = vmax.xlane.f32.xlu0 %v3728
        %v3730 = vpop.xlane.xlu0 %3729
        %vm3731 = vcmask 65536
        %v3732 = vsel %vm3731, %v3724, -inf
        %3733 = vmax.xlane.f32.xlu0 %v3732
        %v3734 = vpop.xlane.xlu0 %3733
        %v3735 = vsub.f32 %v3721, %v3730
        %v3736 = vsub.f32 %v3724, %v3734
        %v3737 = vmul.f32 %v3735, 1.442695
        %v3738 = vpow.pop %v3737
        %v3739 = vmul.f32 %v3736, 1.442695
        %v3740 = vpow.pop %v3739
        %v3741 = vsel %vm3727, %v3738, 0.0
        %3742 = vadd.xlane.f32.xlu0 %v3741
        %v3743 = vpop.xlane.xlu0 %3742
        %v3744 = vsel %vm3731, %v3740, 0.0
        %3745 = vadd.xlane.f32.xlu0 %v3744
        %v3746 = vpop.xlane.xlu0 %3745
        %v3747 = vpack.c.bf16 %v3740, %v3738
        %v3749 = vsel %vm3727, %v3747, 0
        %vm3751 = vcmask 1043456
        %vm3752 = vcmask 1044480
        %v3753 = vsel %vm3751, 4294967295, 65535
        %v3754 = vsel %vm3752, %v3753, 0
        %v3756 = vand.u32 %v3677, %v3754
        %3758 = vmatprep.subr.bf16.mxu0 0
        %3759 = vmatpush1.bf16.msra.mxu0 0
        %3760 = vmatprep.subr.bf16.mxu0 0
        %3761 = vmatpush1.bf16.msra.mxu0 0
        %3762 = vmatprep.subr.bf16.mxu0 0
        %3763 = vmatpush1.bf16.msra.mxu0 0
        %3764 = vmatprep.subr.bf16.mxu0 0
        %3765 = vmatpush1.bf16.msra.mxu0 0
        %3766 = vmatprep.subr.bf16.mxu0 0
        %3767 = vmatpush1.bf16.msra.mxu0 0
        %3768 = vmatprep.subr.bf16.mxu0 0
        %3769 = vmatpush1.bf16.msra.mxu0 0
        %3770 = vmatprep.subr.bf16.mxu0 0
        %3771 = vmatpush1.bf16.msra.mxu0 0
        %3772 = vmatprep.subr.bf16.mxu0 0
        %3773 = vmatpush1.bf16.msra.mxu0 %v3756
        %3774 = vmatprep.subr.bf16.mxu0 0
        %3775 = vmatpush2.bf16.msra.mxu0 0
        %3776 = vmatprep.subr.bf16.mxu0 0
        %3777 = vmatpush2.bf16.msra.mxu0 0
        %3778 = vmatprep.subr.bf16.mxu0 0
        %3779 = vmatpush2.bf16.msra.mxu0 0
        %3780 = vmatprep.subr.bf16.mxu0 0
        %3781 = vmatpush2.bf16.msra.mxu0 0
        %3782 = vmatprep.subr.bf16.mxu0 0
        %3783 = vmatpush2.bf16.msra.mxu0 0
        %3784 = vmatprep.subr.bf16.mxu0 0
        %3785 = vmatpush2.bf16.msra.mxu0 0
        %3786 = vmatprep.subr.bf16.mxu0 0
        %3787 = vmatpush2.bf16.msra.mxu0 0
        %3788 = vmatprep.subr.bf16.mxu0 0
        %3789 = vmatpush2.bf16.msra.mxu0 0
        %3790 = vmatprep.mubr.bf16.mxu0 0
        %3791 = vmatmul.mubr.bf16.gmra.mxu0 %v3749
        %v3792 = vpop.f32.mrf.mxu0
        %v3793 = vadd.f32 0.0, %v3792
        %v3794 = vpop.f32.mrf.mxu0
        %v3795 = vpop.f32.mrf.mxu0
        %v3796 = vadd.f32 0.0, %v3795
        %v3797 = vpop.f32.mrf.mxu0
        %3798 = vdwg.mxu0
        %v3799 = vrcp.pop %v3743
        %v3800 = vmul.f32 1.0, %v3799
        %v3801 = vrcp.pop %v3746
        %v3802 = vmul.f32 1.0, %v3801
        %v3803 = vmul.f32 %v3793, %v3800
        %v3804 = vmul.f32 %v3796, %v3802
        %3805 = vst.msk [vmem:[#allocation3] sm:$0xff] %vm3679, %v3803
        %vm3806 = vcmask 516096
        %3807 = vst.msk [vmem:[#allocation3 + $0x10] sm:$0x1] %vm3806, %v3804
        %3809 = vrot.lane.b32.xlu0 %v3673, 64
        %v3810 = vpop.permute.xlu0 %3809
        %3812 = vrot.lane.b32.xlu0 %v3675, 64
        %v3813 = vpop.permute.xlu0 %3812
        %v3815 = vsel %vm3679, %v3810, 0
        %v3818 = vsel %vm3679, %v3813, 0
        %3820 = vmatprep.subr.bf16.mxu0 0
        %3821 = vmatpush1.bf16.xpose.msra.mxu0 0
        %3822 = vmatprep.subr.bf16.mxu0 0
        %3823 = vmatpush1.bf16.xpose.msra.mxu0 0
        %3824 = vmatprep.subr.bf16.mxu0 0
        %3825 = vmatpush1.bf16.xpose.msra.mxu0 0
        %3826 = vmatprep.subr.bf16.mxu0 0
        %3827 = vmatpush1.bf16.xpose.msra.mxu0 0
        %3828 = vmatprep.subr.bf16.mxu0 0
        %3829 = vmatpush1.bf16.xpose.msra.mxu0 0
        %3830 = vmatprep.subr.bf16.mxu0 0
        %3831 = vmatpush1.bf16.xpose.msra.mxu0 0
        %3832 = vmatprep.subr.bf16.mxu0 0
        %3833 = vmatpush1.bf16.xpose.msra.mxu0 0
        %3834 = vmatprep.subr.bf16.mxu0 0
        %3835 = vmatpush1.bf16.xpose.msra.mxu0 %v3818
        %3836 = vmatprep.subr.bf16.mxu0 0
        %3837 = vmatpush2.bf16.xpose.msra.mxu0 0
        %3838 = vmatprep.subr.bf16.mxu0 0
        %3839 = vmatpush2.bf16.xpose.msra.mxu0 0
        %3840 = vmatprep.subr.bf16.mxu0 0
        %3841 = vmatpush2.bf16.xpose.msra.mxu0 0
        %3842 = vmatprep.subr.bf16.mxu0 0
        %3843 = vmatpush2.bf16.xpose.msra.mxu0 0
        %3844 = vmatprep.subr.bf16.mxu0 0
        %3845 = vmatpush2.bf16.xpose.msra.mxu0 0
        %3846 = vmatprep.subr.bf16.mxu0 0
        %3847 = vmatpush2.bf16.xpose.msra.mxu0 0
        %3848 = vmatprep.subr.bf16.mxu0 0
        %3849 = vmatpush2.bf16.xpose.msra.mxu0 0
        %3850 = vmatprep.subr.bf16.mxu0 0
        %3851 = vmatpush2.bf16.xpose.msra.mxu0 0
        %3852 = vmatprep.mubr.bf16.mxu0 0
        %3853 = vmatmul.mubr.bf16.gmra.mxu0 %v3815
        %v3854 = vpop.f32.mrf.mxu0
        %v3855 = vadd.f32 0.0, %v3854
        %v3856 = vpop.f32.mrf.mxu0
        %v3857 = vpop.f32.mrf.mxu0
        %v3858 = vadd.f32 0.0, %v3857
        %v3859 = vpop.f32.mrf.mxu0
        %3860 = vdwg.mxu0
        %v3861 = vsel %vm3727, %v3855, -inf
        %3862 = vmax.xlane.f32.xlu0 %v3861
        %v3863 = vpop.xlane.xlu0 %3862
        %v3864 = vsel %vm3731, %v3858, -inf
        %3865 = vmax.xlane.f32.xlu0 %v3864
        %v3866 = vpop.xlane.xlu0 %3865
        %v3867 = vsub.f32 %v3855, %v3863
        %v3868 = vsub.f32 %v3858, %v3866
        %v3869 = vmul.f32 %v3867, 1.442695
        %v3870 = vpow.pop %v3869
        %v3871 = vmul.f32 %v3868, 1.442695
        %v3872 = vpow.pop %v3871
        %v3873 = vsel %vm3727, %v3870, 0.0
        %3874 = vadd.xlane.f32.xlu0 %v3873
        %v3875 = vpop.xlane.xlu0 %3874
        %v3876 = vsel %vm3731, %v3872, 0.0
        %3877 = vadd.xlane.f32.xlu0 %v3876
        %v3878 = vpop.xlane.xlu0 %3877
        %v3879 = vpack.c.bf16 %v3872, %v3870
        %3881 = vrot.lane.b32.xlu0 %v3677, 64
        %v3882 = vpop.permute.xlu0 %3881
        %v3884 = vsel %vm3727, %v3879, 0
        %v3887 = vand.u32 %v3882, %v3754
        %3889 = vmatprep.subr.bf16.mxu0 0
        %3890 = vmatpush1.bf16.msra.mxu0 0
        %3891 = vmatprep.subr.bf16.mxu0 0
        %3892 = vmatpush1.bf16.msra.mxu0 0
        %3893 = vmatprep.subr.bf16.mxu0 0
        %3894 = vmatpush1.bf16.msra.mxu0 0
        %3895 = vmatprep.subr.bf16.mxu0 0
        %3896 = vmatpush1.bf16.msra.mxu0 0
        %3897 = vmatprep.subr.bf16.mxu0 0
        %3898 = vmatpush1.bf16.msra.mxu0 0
        %3899 = vmatprep.subr.bf16.mxu0 0
        %3900 = vmatpush1.bf16.msra.mxu0 0
        %3901 = vmatprep.subr.bf16.mxu0 0
        %3902 = vmatpush1.bf16.msra.mxu0 0
        %3903 = vmatprep.subr.bf16.mxu0 0
        %3904 = vmatpush1.bf16.msra.mxu0 %v3887
        %3905 = vmatprep.subr.bf16.mxu0 0
        %3906 = vmatpush2.bf16.msra.mxu0 0
        %3907 = vmatprep.subr.bf16.mxu0 0
        %3908 = vmatpush2.bf16.msra.mxu0 0
        %3909 = vmatprep.subr.bf16.mxu0 0
        %3910 = vmatpush2.bf16.msra.mxu0 0
        %3911 = vmatprep.subr.bf16.mxu0 0
        %3912 = vmatpush2.bf16.msra.mxu0 0
        %3913 = vmatprep.subr.bf16.mxu0 0
        %3914 = vmatpush2.bf16.msra.mxu0 0
        %3915 = vmatprep.subr.bf16.mxu0 0
        %3916 = vmatpush2.bf16.msra.mxu0 0
        %3917 = vmatprep.subr.bf16.mxu0 0
        %3918 = vmatpush2.bf16.msra.mxu0 0
        %3919 = vmatprep.subr.bf16.mxu0 0
        %3920 = vmatpush2.bf16.msra.mxu0 0
        %3921 = vmatprep.mubr.bf16.mxu0 0
        %3922 = vmatmul.mubr.bf16.gmra.mxu0 %v3884
        %v3923 = vpop.f32.mrf.mxu0
        %v3924 = vadd.f32 0.0, %v3923
        %v3925 = vpop.f32.mrf.mxu0
        %v3926 = vpop.f32.mrf.mxu0
        %v3927 = vadd.f32 0.0, %v3926
        %v3928 = vpop.f32.mrf.mxu0
        %3929 = vdwg.mxu0
        %v3930 = vrcp.pop %v3875
        %v3931 = vmul.f32 1.0, %v3930
        %v3932 = vrcp.pop %v3878
        %v3933 = vmul.f32 1.0, %v3932
        %v3934 = vmul.f32 %v3924, %v3931
        %v3935 = vmul.f32 %v3927, %v3933
        %3938 = vrot.lane.b32.xlu0 %v3934, 64
        %v3939 = vpop.permute.xlu0 %3938
        %3940 = vrot.lane.b32.xlu0 %v3935, 64
        %v3941 = vpop.permute.xlu0 %3940
        %vm3944 = vcmask 1048064
        %3945 = vst.msk [vmem:[#allocation3] sm:$0xff] %vm3944, %v3939
        %vm3946 = vcmask 1040896
        %3947 = vst.msk [vmem:[#allocation3 + $0x10] sm:$0x1] %vm3946, %v3941
        %v3949 = vsel %vm3679, %v3674, 0
        %v3952 = vsel %vm3679, %v3676, 0
        %3954 = vmatprep.subr.bf16.mxu0 0
        %3955 = vmatpush1.bf16.xpose.msra.mxu0 0
        %3956 = vmatprep.subr.bf16.mxu0 0
        %3957 = vmatpush1.bf16.xpose.msra.mxu0 0
        %3958 = vmatprep.subr.bf16.mxu0 0
        %3959 = vmatpush1.bf16.xpose.msra.mxu0 0
        %3960 = vmatprep.subr.bf16.mxu0 0
        %3961 = vmatpush1.bf16.xpose.msra.mxu0 0
        %3962 = vmatprep.subr.bf16.mxu0 0
        %3963 = vmatpush1.bf16.xpose.msra.mxu0 0
        %3964 = vmatprep.subr.bf16.mxu0 0
        %3965 = vmatpush1.bf16.xpose.msra.mxu0 0
        %3966 = vmatprep.subr.bf16.mxu0 0
        %3967 = vmatpush1.bf16.xpose.msra.mxu0 0
        %3968 = vmatprep.subr.bf16.mxu0 0
        %3969 = vmatpush1.bf16.xpose.msra.mxu0 %v3952
        %3970 = vmatprep.subr.bf16.mxu0 0
        %3971 = vmatpush2.bf16.xpose.msra.mxu0 0
        %3972 = vmatprep.subr.bf16.mxu0 0
        %3973 = vmatpush2.bf16.xpose.msra.mxu0 0
        %3974 = vmatprep.subr.bf16.mxu0 0
        %3975 = vmatpush2.bf16.xpose.msra.mxu0 0
        %3976 = vmatprep.subr.bf16.mxu0 0
        %3977 = vmatpush2.bf16.xpose.msra.mxu0 0
        %3978 = vmatprep.subr.bf16.mxu0 0
        %3979 = vmatpush2.bf16.xpose.msra.mxu0 0
        %3980 = vmatprep.subr.bf16.mxu0 0
        %3981 = vmatpush2.bf16.xpose.msra.mxu0 0
        %3982 = vmatprep.subr.bf16.mxu0 0
        %3983 = vmatpush2.bf16.xpose.msra.mxu0 0
        %3984 = vmatprep.subr.bf16.mxu0 0
        %3985 = vmatpush2.bf16.xpose.msra.mxu0 0
        %3986 = vmatprep.mubr.bf16.mxu0 0
        %3987 = vmatmul.mubr.bf16.gmra.mxu0 %v3949
        %v3988 = vpop.f32.mrf.mxu0
        %v3989 = vadd.f32 0.0, %v3988
        %v3990 = vpop.f32.mrf.mxu0
        %v3991 = vpop.f32.mrf.mxu0
        %v3992 = vadd.f32 0.0, %v3991
        %v3993 = vpop.f32.mrf.mxu0
        %3994 = vdwg.mxu0
        %v3995 = vsel %vm3727, %v3989, -inf
        %3996 = vmax.xlane.f32.xlu0 %v3995
        %v3997 = vpop.xlane.xlu0 %3996
        %v3998 = vsel %vm3731, %v3992, -inf
        %3999 = vmax.xlane.f32.xlu0 %v3998
        %v4000 = vpop.xlane.xlu0 %3999
        %v4001 = vsub.f32 %v3989, %v3997
        %v4002 = vsub.f32 %v3992, %v4000
        %v4003 = vmul.f32 %v4001, 1.442695
        %v4004 = vpow.pop %v4003
        %v4005 = vmul.f32 %v4002, 1.442695
        %v4006 = vpow.pop %v4005
        %v4007 = vsel %vm3727, %v4004, 0.0
        %4008 = vadd.xlane.f32.xlu0 %v4007
        %v4009 = vpop.xlane.xlu0 %4008
        %v4010 = vsel %vm3731, %v4006, 0.0
        %4011 = vadd.xlane.f32.xlu0 %v4010
        %v4012 = vpop.xlane.xlu0 %4011
        %v4013 = vpack.c.bf16 %v4006, %v4004
        %v4015 = vsel %vm3727, %v4013, 0
        %v4018 = vand.u32 %v3678, %v3754
        %4020 = vmatprep.subr.bf16.mxu0 0
        %4021 = vmatpush1.bf16.msra.mxu0 0
        %4022 = vmatprep.subr.bf16.mxu0 0
        %4023 = vmatpush1.bf16.msra.mxu0 0
        %4024 = vmatprep.subr.bf16.mxu0 0
        %4025 = vmatpush1.bf16.msra.mxu0 0
        %4026 = vmatprep.subr.bf16.mxu0 0
        %4027 = vmatpush1.bf16.msra.mxu0 0
        %4028 = vmatprep.subr.bf16.mxu0 0
        %4029 = vmatpush1.bf16.msra.mxu0 0
        %4030 = vmatprep.subr.bf16.mxu0 0
        %4031 = vmatpush1.bf16.msra.mxu0 0
        %4032 = vmatprep.subr.bf16.mxu0 0
        %4033 = vmatpush1.bf16.msra.mxu0 0
        %4034 = vmatprep.subr.bf16.mxu0 0
        %4035 = vmatpush1.bf16.msra.mxu0 %v4018
        %4036 = vmatprep.subr.bf16.mxu0 0
        %4037 = vmatpush2.bf16.msra.mxu0 0
        %4038 = vmatprep.subr.bf16.mxu0 0
        %4039 = vmatpush2.bf16.msra.mxu0 0
        %4040 = vmatprep.subr.bf16.mxu0 0
        %4041 = vmatpush2.bf16.msra.mxu0 0
        %4042 = vmatprep.subr.bf16.mxu0 0
        %4043 = vmatpush2.bf16.msra.mxu0 0
        %4044 = vmatprep.subr.bf16.mxu0 0
        %4045 = vmatpush2.bf16.msra.mxu0 0
        %4046 = vmatprep.subr.bf16.mxu0 0
        %4047 = vmatpush2.bf16.msra.mxu0 0
        %4048 = vmatprep.subr.bf16.mxu0 0
        %4049 = vmatpush2.bf16.msra.mxu0 0
        %4050 = vmatprep.subr.bf16.mxu0 0
        %4051 = vmatpush2.bf16.msra.mxu0 0
        %4052 = vmatprep.mubr.bf16.mxu0 0
        %4053 = vmatmul.mubr.bf16.gmra.mxu0 %v4015
        %v4054 = vpop.f32.mrf.mxu0
        %v4055 = vadd.f32 0.0, %v4054
        %v4056 = vpop.f32.mrf.mxu0
        %v4057 = vpop.f32.mrf.mxu0
        %v4058 = vadd.f32 0.0, %v4057
        %v4059 = vpop.f32.mrf.mxu0
        %4060 = vdwg.mxu0
        %v4061 = vrcp.pop %v4009
        %v4062 = vmul.f32 1.0, %v4061
        %v4063 = vrcp.pop %v4012
        %v4064 = vmul.f32 1.0, %v4063
        %v4065 = vmul.f32 %v4055, %v4062
        %v4066 = vmul.f32 %v4058, %v4064
        %4067 = vst.msk [vmem:[#allocation3 + $0x8] sm:$0xff] %vm3679, %v4065
        %4068 = vst.msk [vmem:[#allocation3 + $0x18] sm:$0x1] %vm3806, %v4066
        %4070 = vrot.lane.b32.xlu0 %v3674, 64
        %v4071 = vpop.permute.xlu0 %4070
        %4073 = vrot.lane.b32.xlu0 %v3676, 64
        %v4074 = vpop.permute.xlu0 %4073
        %v4076 = vsel %vm3679, %v4071, 0
        %v4079 = vsel %vm3679, %v4074, 0
        %4081 = vmatprep.subr.bf16.mxu0 0
        %4082 = vmatpush1.bf16.xpose.msra.mxu0 0
        %4083 = vmatprep.subr.bf16.mxu0 0
        %4084 = vmatpush1.bf16.xpose.msra.mxu0 0
        %4085 = vmatprep.subr.bf16.mxu0 0
        %4086 = vmatpush1.bf16.xpose.msra.mxu0 0
        %4087 = vmatprep.subr.bf16.mxu0 0
        %4088 = vmatpush1.bf16.xpose.msra.mxu0 0
        %4089 = vmatprep.subr.bf16.mxu0 0
        %4090 = vmatpush1.bf16.xpose.msra.mxu0 0
        %4091 = vmatprep.subr.bf16.mxu0 0
        %4092 = vmatpush1.bf16.xpose.msra.mxu0 0
        %4093 = vmatprep.subr.bf16.mxu0 0
        %4094 = vmatpush1.bf16.xpose.msra.mxu0 0
        %4095 = vmatprep.subr.bf16.mxu0 0
        %4096 = vmatpush1.bf16.xpose.msra.mxu0 %v4079
        %4097 = vmatprep.subr.bf16.mxu0 0
        %4098 = vmatpush2.bf16.xpose.msra.mxu0 0
        %4099 = vmatprep.subr.bf16.mxu0 0
        %4100 = vmatpush2.bf16.xpose.msra.mxu0 0
        %4101 = vmatprep.subr.bf16.mxu0 0
        %4102 = vmatpush2.bf16.xpose.msra.mxu0 0
        %4103 = vmatprep.subr.bf16.mxu0 0
        %4104 = vmatpush2.bf16.xpose.msra.mxu0 0
        %4105 = vmatprep.subr.bf16.mxu0 0
        %4106 = vmatpush2.bf16.xpose.msra.mxu0 0
        %4107 = vmatprep.subr.bf16.mxu0 0
        %4108 = vmatpush2.bf16.xpose.msra.mxu0 0
        %4109 = vmatprep.subr.bf16.mxu0 0
        %4110 = vmatpush2.bf16.xpose.msra.mxu0 0
        %4111 = vmatprep.subr.bf16.mxu0 0
        %4112 = vmatpush2.bf16.xpose.msra.mxu0 0
        %4113 = vmatprep.mubr.bf16.mxu0 0
        %4114 = vmatmul.mubr.bf16.gmra.mxu0 %v4076
        %v4115 = vpop.f32.mrf.mxu0
        %v4116 = vadd.f32 0.0, %v4115
        %v4117 = vpop.f32.mrf.mxu0
        %v4118 = vpop.f32.mrf.mxu0
        %v4119 = vadd.f32 0.0, %v4118
        %v4120 = vpop.f32.mrf.mxu0
        %4121 = vdwg.mxu0
        %v4122 = vsel %vm3727, %v4116, -inf
        %4123 = vmax.xlane.f32.xlu0 %v4122
        %v4124 = vpop.xlane.xlu0 %4123
        %v4125 = vsel %vm3731, %v4119, -inf
        %4126 = vmax.xlane.f32.xlu0 %v4125
        %v4127 = vpop.xlane.xlu0 %4126
        %v4128 = vsub.f32 %v4116, %v4124
        %v4129 = vsub.f32 %v4119, %v4127
        %v4130 = vmul.f32 %v4128, 1.442695
        %v4131 = vpow.pop %v4130
        %v4132 = vmul.f32 %v4129, 1.442695
        %v4133 = vpow.pop %v4132
        %v4134 = vsel %vm3727, %v4131, 0.0
        %4135 = vadd.xlane.f32.xlu0 %v4134
        %v4136 = vpop.xlane.xlu0 %4135
        %v4137 = vsel %vm3731, %v4133, 0.0
        %4138 = vadd.xlane.f32.xlu0 %v4137
        %v4139 = vpop.xlane.xlu0 %4138
        %v4140 = vpack.c.bf16 %v4133, %v4131
        %4142 = vrot.lane.b32.xlu0 %v3678, 64
        %v4143 = vpop.permute.xlu0 %4142
        %v4145 = vsel %vm3727, %v4140, 0
        %v4148 = vand.u32 %v4143, %v3754
        %4150 = vmatprep.subr.bf16.mxu0 0
        %4151 = vmatpush1.bf16.msra.mxu0 0
        %4152 = vmatprep.subr.bf16.mxu0 0
        %4153 = vmatpush1.bf16.msra.mxu0 0
        %4154 = vmatprep.subr.bf16.mxu0 0
        %4155 = vmatpush1.bf16.msra.mxu0 0
        %4156 = vmatprep.subr.bf16.mxu0 0
        %4157 = vmatpush1.bf16.msra.mxu0 0
        %4158 = vmatprep.subr.bf16.mxu0 0
        %4159 = vmatpush1.bf16.msra.mxu0 0
        %4160 = vmatprep.subr.bf16.mxu0 0
        %4161 = vmatpush1.bf16.msra.mxu0 0
        %4162 = vmatprep.subr.bf16.mxu0 0
        %4163 = vmatpush1.bf16.msra.mxu0 0
        %4164 = vmatprep.subr.bf16.mxu0 0
        %4165 = vmatpush1.bf16.msra.mxu0 %v4148
        %4166 = vmatprep.subr.bf16.mxu0 0
        %4167 = vmatpush2.bf16.msra.mxu0 0
        %4168 = vmatprep.subr.bf16.mxu0 0
        %4169 = vmatpush2.bf16.msra.mxu0 0
        %4170 = vmatprep.subr.bf16.mxu0 0
        %4171 = vmatpush2.bf16.msra.mxu0 0
        %4172 = vmatprep.subr.bf16.mxu0 0
        %4173 = vmatpush2.bf16.msra.mxu0 0
        %4174 = vmatprep.subr.bf16.mxu0 0
        %4175 = vmatpush2.bf16.msra.mxu0 0
        %4176 = vmatprep.subr.bf16.mxu0 0
        %4177 = vmatpush2.bf16.msra.mxu0 0
        %4178 = vmatprep.subr.bf16.mxu0 0
        %4179 = vmatpush2.bf16.msra.mxu0 0
        %4180 = vmatprep.subr.bf16.mxu0 0
        %4181 = vmatpush2.bf16.msra.mxu0 0
        %4182 = vmatprep.mubr.bf16.mxu0 0
        %4183 = vmatmul.mubr.bf16.gmra.mxu0 %v4145
        %v4184 = vpop.f32.mrf.mxu0
        %v4185 = vadd.f32 0.0, %v4184
        %v4186 = vpop.f32.mrf.mxu0
        %v4187 = vpop.f32.mrf.mxu0
        %v4188 = vadd.f32 0.0, %v4187
        %v4189 = vpop.f32.mrf.mxu0
        %4190 = vdwg.mxu0
        %v4191 = vrcp.pop %v4136
        %v4192 = vmul.f32 1.0, %v4191
        %v4193 = vrcp.pop %v4139
        %v4194 = vmul.f32 1.0, %v4193
        %v4195 = vmul.f32 %v4185, %v4192
        %v4196 = vmul.f32 %v4188, %v4194
        %4199 = vrot.lane.b32.xlu0 %v4195, 64
        %v4200 = vpop.permute.xlu0 %4199
        %4201 = vrot.lane.b32.xlu0 %v4196, 64
        %v4202 = vpop.permute.xlu0 %4201
        %4205 = vst.msk [vmem:[#allocation3 + $0x8] sm:$0xff] %vm3944, %v4200
        %4206 = vst.msk [vmem:[#allocation3 + $0x18] sm:$0x1] %vm3946, %v4202
        %v4207 = vld [vmem:[#allocation3] sm:$0xff]
        %v4208 = vld [vmem:[#allocation3 + $0x8] sm:$0xff]
        %v4209 = vld [vmem:[#allocation3 + $0x10] sm:$0x1]
        %v4210 = vld [vmem:[#allocation3 + $0x18] sm:$0x1]
        %v4211 = vpack.c.bf16 %v4209, %v4207
        %v4212 = vpack.c.bf16 %v4210, %v4208
        %v4213 = vld [vmem:[#allocation16] sm:$0xff]
        %v4214 = vld [vmem:[#allocation16 + $0x8] sm:$0xff]
        %v4215 = vld [vmem:[#allocation16 + $0x10] sm:$0xff]
        %v4216 = vld [vmem:[#allocation16 + $0x18] sm:$0xff]
        %v4217 = vld [vmem:[#allocation16 + $0x20] sm:$0xff]
        %v4218 = vld [vmem:[#allocation16 + $0x28] sm:$0xff]
        %v4219 = vld [vmem:[#allocation16 + $0x30] sm:$0xff]
        %v4220 = vld [vmem:[#allocation16 + $0x38] sm:$0xff]
        %v4221 = vld [vmem:[#allocation16 + $0x40] sm:$0xff]
        %v4222 = vld [vmem:[#allocation16 + $0x48] sm:$0xff]
        %v4223 = vld [vmem:[#allocation16 + $0x50] sm:$0xff]
        %v4224 = vld [vmem:[#allocation16 + $0x58] sm:$0xff]
        %v4225 = vld [vmem:[#allocation16 + $0x60] sm:$0xff]
        %v4226 = vld [vmem:[#allocation16 + $0x68] sm:$0xff]
        %v4227 = vld [vmem:[#allocation16 + $0x70] sm:$0xff]
        %v4228 = vld [vmem:[#allocation16 + $0x78] sm:$0xff]
        %v4229 = vld [vmem:[#allocation16 + $0x80] sm:$0xff]
        %v4230 = vld [vmem:[#allocation16 + $0x88] sm:$0xff]
        %v4231 = vld [vmem:[#allocation16 + $0x90] sm:$0xff]
        %v4232 = vld [vmem:[#allocation16 + $0x98] sm:$0xff]
        %v4233 = vld [vmem:[#allocation16 + $0xa0] sm:$0xff]
        %v4234 = vld [vmem:[#allocation16 + $0xa8] sm:$0xff]
        %v4235 = vld [vmem:[#allocation16 + $0xb0] sm:$0xff]
        %v4236 = vld [vmem:[#allocation16 + $0xb8] sm:$0xff]
        %v4237 = vld [vmem:[#allocation16 + $0xc0] sm:$0xff]
        %v4238 = vld [vmem:[#allocation16 + $0xc8] sm:$0xff]
        %v4239 = vld [vmem:[#allocation16 + $0xd0] sm:$0xff]
        %v4240 = vld [vmem:[#allocation16 + $0xd8] sm:$0xff]
        %v4241 = vld [vmem:[#allocation16 + $0xe0] sm:$0xff]
        %v4242 = vld [vmem:[#allocation16 + $0xe8] sm:$0xff]
        %v4243 = vld [vmem:[#allocation16 + $0xf0] sm:$0xff]
        %v4244 = vld [vmem:[#allocation16 + $0xf8] sm:$0xff]
        %v4245 = vld [vmem:[#allocation18] sm:$0x3]
        %v4247 = vlaneseq
        %v4248 = vshrl.u32 %v4247, 7
        %v4249 = vsub.s32 0, %v4248
        %v4250 = vrot.slane %v4245, %v4249
        %v4251 = vlaneseq
        %v4252 = vshrl.u32 %v4251, 7
        %v4253 = vsub.s32 1, %v4252
        %v4254 = vrot.slane %v4245, %v4253
        %v4289 = vunpack.c.l.b16 %v4213
        %v4290 = vunpack.c.h.b16 %v4213
        %v4291 = vunpack.c.l.b16 %v4214
        %v4292 = vunpack.c.h.b16 %v4214
        %v4293 = vunpack.c.l.b16 %v4215
        %v4294 = vunpack.c.h.b16 %v4215
        %v4295 = vunpack.c.l.b16 %v4216
        %v4296 = vunpack.c.h.b16 %v4216
        %v4297 = vunpack.c.l.b16 %v4217
        %v4298 = vunpack.c.h.b16 %v4217
        %v4299 = vunpack.c.l.b16 %v4218
        %v4300 = vunpack.c.h.b16 %v4218
        %v4301 = vunpack.c.l.b16 %v4219
        %v4302 = vunpack.c.h.b16 %v4219
        %v4303 = vunpack.c.l.b16 %v4220
        %v4304 = vunpack.c.h.b16 %v4220
        %v4305 = vunpack.c.l.b16 %v4221
        %v4306 = vunpack.c.h.b16 %v4221
        %v4307 = vunpack.c.l.b16 %v4222
        %v4308 = vunpack.c.h.b16 %v4222
        %v4309 = vunpack.c.l.b16 %v4223
        %v4310 = vunpack.c.h.b16 %v4223
        %v4311 = vunpack.c.l.b16 %v4224
        %v4312 = vunpack.c.h.b16 %v4224
        %v4313 = vunpack.c.l.b16 %v4225
        %v4314 = vunpack.c.h.b16 %v4225
        %v4315 = vunpack.c.l.b16 %v4226
        %v4316 = vunpack.c.h.b16 %v4226
        %v4317 = vunpack.c.l.b16 %v4227
        %v4318 = vunpack.c.h.b16 %v4227
        %v4319 = vunpack.c.l.b16 %v4228
        %v4320 = vunpack.c.h.b16 %v4228
        %v4321 = vunpack.c.l.b16 %v4229
        %v4322 = vunpack.c.h.b16 %v4229
        %v4323 = vunpack.c.l.b16 %v4230
        %v4324 = vunpack.c.h.b16 %v4230
        %v4325 = vunpack.c.l.b16 %v4231
        %v4326 = vunpack.c.h.b16 %v4231
        %v4327 = vunpack.c.l.b16 %v4232
        %v4328 = vunpack.c.h.b16 %v4232
        %v4329 = vunpack.c.l.b16 %v4233
        %v4330 = vunpack.c.h.b16 %v4233
        %v4331 = vunpack.c.l.b16 %v4234
        %v4332 = vunpack.c.h.b16 %v4234
        %v4333 = vunpack.c.l.b16 %v4235
        %v4334 = vunpack.c.h.b16 %v4235
        %v4335 = vunpack.c.l.b16 %v4236
        %v4336 = vunpack.c.h.b16 %v4236
        %v4337 = vunpack.c.l.b16 %v4237
        %v4338 = vunpack.c.h.b16 %v4237
        %v4339 = vunpack.c.l.b16 %v4238
        %v4340 = vunpack.c.h.b16 %v4238
        %v4341 = vunpack.c.l.b16 %v4239
        %v4342 = vunpack.c.h.b16 %v4239
        %v4343 = vunpack.c.l.b16 %v4240
        %v4344 = vunpack.c.h.b16 %v4240
        %v4345 = vunpack.c.l.b16 %v4241
        %v4346 = vunpack.c.h.b16 %v4241
        %v4347 = vunpack.c.l.b16 %v4242
        %v4348 = vunpack.c.h.b16 %v4242
        %v4349 = vunpack.c.l.b16 %v4243
        %v4350 = vunpack.c.h.b16 %v4243
        %v4351 = vunpack.c.l.b16 %v4244
        %v4352 = vunpack.c.h.b16 %v4244
        %v4353 = vpack.c.b16 %v4291, %v4289
        %v4354 = vpack.c.b16 %v4292, %v4290
        %v4355 = vpack.c.b16 %v4295, %v4293
        %v4356 = vpack.c.b16 %v4296, %v4294
        %v4357 = vpack.c.b16 %v4299, %v4297
        %v4358 = vpack.c.b16 %v4300, %v4298
        %v4359 = vpack.c.b16 %v4303, %v4301
        %v4360 = vpack.c.b16 %v4304, %v4302
        %v4361 = vpack.c.b16 %v4307, %v4305
        %v4362 = vpack.c.b16 %v4308, %v4306
        %v4363 = vpack.c.b16 %v4311, %v4309
        %v4364 = vpack.c.b16 %v4312, %v4310
        %v4365 = vpack.c.b16 %v4315, %v4313
        %v4366 = vpack.c.b16 %v4316, %v4314
        %v4367 = vpack.c.b16 %v4319, %v4317
        %v4368 = vpack.c.b16 %v4320, %v4318
        %v4369 = vpack.c.b16 %v4323, %v4321
        %v4370 = vpack.c.b16 %v4324, %v4322
        %v4371 = vpack.c.b16 %v4327, %v4325
        %v4372 = vpack.c.b16 %v4328, %v4326
        %v4373 = vpack.c.b16 %v4331, %v4329
        %v4374 = vpack.c.b16 %v4332, %v4330
        %v4375 = vpack.c.b16 %v4335, %v4333
        %v4376 = vpack.c.b16 %v4336, %v4334
        %v4377 = vpack.c.b16 %v4339, %v4337
        %v4378 = vpack.c.b16 %v4340, %v4338
        %v4379 = vpack.c.b16 %v4343, %v4341
        %v4380 = vpack.c.b16 %v4344, %v4342
        %v4381 = vpack.c.b16 %v4347, %v4345
        %v4382 = vpack.c.b16 %v4348, %v4346
        %v4383 = vpack.c.b16 %v4351, %v4349
        %v4384 = vpack.c.b16 %v4352, %v4350
        %4417 = vmatprep.subr.bf16.mxu0 %v4368
        %4418 = vmatpush1.bf16.msra.mxu0 %v4367
        %4419 = vmatprep.subr.bf16.mxu0 %v4366
        %4420 = vmatpush1.bf16.msra.mxu0 %v4365
        %4421 = vmatprep.subr.bf16.mxu0 %v4364
        %4422 = vmatpush1.bf16.msra.mxu0 %v4363
        %4423 = vmatprep.subr.bf16.mxu0 %v4362
        %4424 = vmatpush1.bf16.msra.mxu0 %v4361
        %4425 = vmatprep.subr.bf16.mxu0 %v4360
        %4426 = vmatpush1.bf16.msra.mxu0 %v4359
        %4427 = vmatprep.subr.bf16.mxu0 %v4358
        %4428 = vmatpush1.bf16.msra.mxu0 %v4357
        %4429 = vmatprep.subr.bf16.mxu0 %v4356
        %4430 = vmatpush1.bf16.msra.mxu0 %v4355
        %4431 = vmatprep.subr.bf16.mxu0 %v4354
        %4432 = vmatpush1.bf16.msra.mxu0 %v4353
        %4433 = vmatprep.subr.bf16.mxu0 %v4384
        %4434 = vmatpush2.bf16.msra.mxu0 %v4383
        %4435 = vmatprep.subr.bf16.mxu0 %v4382
        %4436 = vmatpush2.bf16.msra.mxu0 %v4381
        %4437 = vmatprep.subr.bf16.mxu0 %v4380
        %4438 = vmatpush2.bf16.msra.mxu0 %v4379
        %4439 = vmatprep.subr.bf16.mxu0 %v4378
        %4440 = vmatpush2.bf16.msra.mxu0 %v4377
        %4441 = vmatprep.subr.bf16.mxu0 %v4376
        %4442 = vmatpush2.bf16.msra.mxu0 %v4375
        %4443 = vmatprep.subr.bf16.mxu0 %v4374
        %4444 = vmatpush2.bf16.msra.mxu0 %v4373
        %4445 = vmatprep.subr.bf16.mxu0 %v4372
        %4446 = vmatpush2.bf16.msra.mxu0 %v4371
        %4447 = vmatprep.subr.bf16.mxu0 %v4370
        %4448 = vmatpush2.bf16.msra.mxu0 %v4369
        %4449 = vmatprep.mubr.bf16.mxu0 %v4212
        %4450 = vmatmul.mubr.bf16.gmra.mxu0 %v4211
        %v4451 = vpop.f32.mrf.mxu0
        %v4452 = vadd.f32 %v4250, %v4451
        %v4453 = vpop.f32.mrf.mxu0
        %v4454 = vadd.f32 %v4254, %v4453
        %v4455 = vpop.f32.mrf.mxu0
        %v4456 = vadd.f32 %v4250, %v4455
        %v4457 = vpop.f32.mrf.mxu0
        %v4458 = vadd.f32 %v4254, %v4457
        %4459 = vdwg.mxu0
        %v4460 = vadd.f32 %v2860, %v4452
        %v4461 = vadd.f32 %v2861, %v4454
        %v4462 = vadd.f32 %v2862, %v4456
        %v4463 = vadd.f32 %v2863, %v4458
        %v4464 = vld [vmem:[#allocation19] sm:$0x3]
        %v4465 = vld [vmem:[#allocation21] sm:$0x3]
        %v4466 = vadd.f32 %v4460, %v4461
        %4467 = vadd.xlane.f32.xlu0 %v4466
        %v4468 = vpop.xlane.xlu0 %4467
        %v4469 = vsel %vm2869, %v4462, 0.0
        %v4470 = vsel %vm2869, %v4463, 0.0
        %v4471 = vadd.f32 %v4469, %v4470
        %4472 = vadd.xlane.f32.xlu0 %v4471
        %v4473 = vpop.xlane.xlu0 %4472
        %v4474 = vmul.f32 %v4468, %v2875
        %v4475 = vmul.f32 %v4473, %v2875
        %v4476 = vsub.f32 %v4460, %v4474
        %v4477 = vsub.f32 %v4461, %v4474
        %v4478 = vsub.f32 %v4462, %v4475
        %v4479 = vsub.f32 %v4463, %v4475
        %v4480 = vmul.f32 %v4476, %v4476
        %v4481 = vmul.f32 %v4477, %v4477
        %v4482 = vmul.f32 %v4478, %v4478
        %v4483 = vmul.f32 %v4479, %v4479
        %v4484 = vadd.f32 %v4480, %v4481
        %4485 = vadd.xlane.f32.xlu0 %v4484
        %v4486 = vpop.xlane.xlu0 %4485
        %v4487 = vsel %vm2869, %v4482, 0.0
        %v4488 = vsel %vm2869, %v4483, 0.0
        %v4489 = vadd.f32 %v4487, %v4488
        %4490 = vadd.xlane.f32.xlu0 %v4489
        %v4491 = vpop.xlane.xlu0 %4490
        %v4492 = vmul.f32 %v4486, %v2875
        %v4493 = vmul.f32 %v4491, %v2875
        %v4494 = vadd.f32 %v4492, 1e-06
        %v4495 = vadd.f32 %v4493, 1e-06
        %v4496 = vrsqrt.pop %v4494
        %v4497 = vrsqrt.pop %v4495
        %v4498 = vmul.f32 %v4476, %v4496
        %v4499 = vmul.f32 %v4477, %v4496
        %v4500 = vmul.f32 %v4478, %v4497
        %v4501 = vmul.f32 %v4479, %v4497
        %v4503 = vlaneseq
        %v4504 = vshrl.u32 %v4503, 7
        %v4505 = vsub.s32 0, %v4504
        %v4506 = vrot.slane %v4464, %v4505
        %v4507 = vlaneseq
        %v4508 = vshrl.u32 %v4507, 7
        %v4509 = vsub.s32 1, %v4508
        %v4510 = vrot.slane %v4464, %v4509
        %v4513 = vmul.f32 %v4498, %v4506
        %v4514 = vmul.f32 %v4499, %v4510
        %v4515 = vmul.f32 %v4500, %v4506
        %v4516 = vmul.f32 %v4501, %v4510
        %v4518 = vlaneseq
        %v4519 = vshrl.u32 %v4518, 7
        %v4520 = vsub.s32 0, %v4519
        %v4521 = vrot.slane %v4465, %v4520
        %v4522 = vlaneseq
        %v4523 = vshrl.u32 %v4522, 7
        %v4524 = vsub.s32 1, %v4523
        %v4525 = vrot.slane %v4465, %v4524
        %v4528 = vadd.f32 %v4513, %v4521
        %v4529 = vadd.f32 %v4514, %v4525
        %v4530 = vadd.f32 %v4515, %v4521
        %v4531 = vadd.f32 %v4516, %v4525
        %v4532 = vpack.c.bf16 %v4530, %v4528
        %v4533 = vpack.c.bf16 %v4531, %v4529
        %v4534 = vld [vmem:[#allocation22] sm:$0xff]
        %v4535 = vld [vmem:[#allocation22 + $0x8] sm:$0xff]
        %v4536 = vld [vmem:[#allocation22 + $0x10] sm:$0xff]
        %v4537 = vld [vmem:[#allocation22 + $0x18] sm:$0xff]
        %v4538 = vld [vmem:[#allocation22 + $0x20] sm:$0xff]
        %v4539 = vld [vmem:[#allocation22 + $0x28] sm:$0xff]
        %v4540 = vld [vmem:[#allocation22 + $0x30] sm:$0xff]
        %v4541 = vld [vmem:[#allocation22 + $0x38] sm:$0xff]
        %v4542 = vld [vmem:[#allocation22 + $0x40] sm:$0xff]
        %v4543 = vld [vmem:[#allocation22 + $0x48] sm:$0xff]
        %v4544 = vld [vmem:[#allocation22 + $0x50] sm:$0xff]
        %v4545 = vld [vmem:[#allocation22 + $0x58] sm:$0xff]
        %v4546 = vld [vmem:[#allocation22 + $0x60] sm:$0xff]
        %v4547 = vld [vmem:[#allocation22 + $0x68] sm:$0xff]
        %v4548 = vld [vmem:[#allocation22 + $0x70] sm:$0xff]
        %v4549 = vld [vmem:[#allocation22 + $0x78] sm:$0xff]
        %v4550 = vld [vmem:[#allocation22 + $0x80] sm:$0xff]
        %v4551 = vld [vmem:[#allocation22 + $0x88] sm:$0xff]
        %v4552 = vld [vmem:[#allocation22 + $0x90] sm:$0xff]
        %v4553 = vld [vmem:[#allocation22 + $0x98] sm:$0xff]
        %v4554 = vld [vmem:[#allocation22 + $0xa0] sm:$0xff]
        %v4555 = vld [vmem:[#allocation22 + $0xa8] sm:$0xff]
        %v4556 = vld [vmem:[#allocation22 + $0xb0] sm:$0xff]
        %v4557 = vld [vmem:[#allocation22 + $0xb8] sm:$0xff]
        %v4558 = vld [vmem:[#allocation22 + $0xc0] sm:$0xff]
        %v4559 = vld [vmem:[#allocation22 + $0xc8] sm:$0xff]
        %v4560 = vld [vmem:[#allocation22 + $0xd0] sm:$0xff]
        %v4561 = vld [vmem:[#allocation22 + $0xd8] sm:$0xff]
        %v4562 = vld [vmem:[#allocation22 + $0xe0] sm:$0xff]
        %v4563 = vld [vmem:[#allocation22 + $0xe8] sm:$0xff]
        %v4564 = vld [vmem:[#allocation22 + $0xf0] sm:$0xff]
        %v4565 = vld [vmem:[#allocation22 + $0xf8] sm:$0xff]
        %v4566 = vld [vmem:[#allocation22 + $0x100] sm:$0xff]
        %v4567 = vld [vmem:[#allocation22 + $0x108] sm:$0xff]
        %v4568 = vld [vmem:[#allocation22 + $0x110] sm:$0xff]
        %v4569 = vld [vmem:[#allocation22 + $0x118] sm:$0xff]
        %v4570 = vld [vmem:[#allocation22 + $0x120] sm:$0xff]
        %v4571 = vld [vmem:[#allocation22 + $0x128] sm:$0xff]
        %v4572 = vld [vmem:[#allocation22 + $0x130] sm:$0xff]
        %v4573 = vld [vmem:[#allocation22 + $0x138] sm:$0xff]
        %v4574 = vld [vmem:[#allocation22 + $0x140] sm:$0xff]
        %v4575 = vld [vmem:[#allocation22 + $0x148] sm:$0xff]
        %v4576 = vld [vmem:[#allocation22 + $0x150] sm:$0xff]
        %v4577 = vld [vmem:[#allocation22 + $0x158] sm:$0xff]
        %v4578 = vld [vmem:[#allocation22 + $0x160] sm:$0xff]
        %v4579 = vld [vmem:[#allocation22 + $0x168] sm:$0xff]
        %v4580 = vld [vmem:[#allocation22 + $0x170] sm:$0xff]
        %v4581 = vld [vmem:[#allocation22 + $0x178] sm:$0xff]
        %v4582 = vld [vmem:[#allocation22 + $0x180] sm:$0xff]
        %v4583 = vld [vmem:[#allocation22 + $0x188] sm:$0xff]
        %v4584 = vld [vmem:[#allocation22 + $0x190] sm:$0xff]
        %v4585 = vld [vmem:[#allocation22 + $0x198] sm:$0xff]
        %v4586 = vld [vmem:[#allocation22 + $0x1a0] sm:$0xff]
        %v4587 = vld [vmem:[#allocation22 + $0x1a8] sm:$0xff]
        %v4588 = vld [vmem:[#allocation22 + $0x1b0] sm:$0xff]
        %v4589 = vld [vmem:[#allocation22 + $0x1b8] sm:$0xff]
        %v4590 = vld [vmem:[#allocation22 + $0x1c0] sm:$0xff]
        %v4591 = vld [vmem:[#allocation22 + $0x1c8] sm:$0xff]
        %v4592 = vld [vmem:[#allocation22 + $0x1d0] sm:$0xff]
        %v4593 = vld [vmem:[#allocation22 + $0x1d8] sm:$0xff]
        %v4594 = vld [vmem:[#allocation22 + $0x1e0] sm:$0xff]
        %v4595 = vld [vmem:[#allocation22 + $0x1e8] sm:$0xff]
        %v4596 = vld [vmem:[#allocation22 + $0x1f0] sm:$0xff]
        %v4597 = vld [vmem:[#allocation22 + $0x1f8] sm:$0xff]
        %v4598 = vld [vmem:[#allocation22 + $0x200] sm:$0xff]
        %v4599 = vld [vmem:[#allocation22 + $0x208] sm:$0xff]
        %v4600 = vld [vmem:[#allocation22 + $0x210] sm:$0xff]
        %v4601 = vld [vmem:[#allocation22 + $0x218] sm:$0xff]
        %v4602 = vld [vmem:[#allocation22 + $0x220] sm:$0xff]
        %v4603 = vld [vmem:[#allocation22 + $0x228] sm:$0xff]
        %v4604 = vld [vmem:[#allocation22 + $0x230] sm:$0xff]
        %v4605 = vld [vmem:[#allocation22 + $0x238] sm:$0xff]
        %v4606 = vld [vmem:[#allocation22 + $0x240] sm:$0xff]
        %v4607 = vld [vmem:[#allocation22 + $0x248] sm:$0xff]
        %v4608 = vld [vmem:[#allocation22 + $0x250] sm:$0xff]
        %v4609 = vld [vmem:[#allocation22 + $0x258] sm:$0xff]
        %v4610 = vld [vmem:[#allocation22 + $0x260] sm:$0xff]
        %v4611 = vld [vmem:[#allocation22 + $0x268] sm:$0xff]
        %v4612 = vld [vmem:[#allocation22 + $0x270] sm:$0xff]
        %v4613 = vld [vmem:[#allocation22 + $0x278] sm:$0xff]
        %v4614 = vld [vmem:[#allocation22 + $0x280] sm:$0xff]
        %v4615 = vld [vmem:[#allocation22 + $0x288] sm:$0xff]
        %v4616 = vld [vmem:[#allocation22 + $0x290] sm:$0xff]
        %v4617 = vld [vmem:[#allocation22 + $0x298] sm:$0xff]
        %v4618 = vld [vmem:[#allocation22 + $0x2a0] sm:$0xff]
        %v4619 = vld [vmem:[#allocation22 + $0x2a8] sm:$0xff]
        %v4620 = vld [vmem:[#allocation22 + $0x2b0] sm:$0xff]
        %v4621 = vld [vmem:[#allocation22 + $0x2b8] sm:$0xff]
        %v4622 = vld [vmem:[#allocation22 + $0x2c0] sm:$0xff]
        %v4623 = vld [vmem:[#allocation22 + $0x2c8] sm:$0xff]
        %v4624 = vld [vmem:[#allocation22 + $0x2d0] sm:$0xff]
        %v4625 = vld [vmem:[#allocation22 + $0x2d8] sm:$0xff]
        %v4626 = vld [vmem:[#allocation22 + $0x2e0] sm:$0xff]
        %v4627 = vld [vmem:[#allocation22 + $0x2e8] sm:$0xff]
        %v4628 = vld [vmem:[#allocation22 + $0x2f0] sm:$0xff]
        %v4629 = vld [vmem:[#allocation22 + $0x2f8] sm:$0xff]
        %v4630 = vld [vmem:[#allocation22 + $0x300] sm:$0xff]
        %v4631 = vld [vmem:[#allocation22 + $0x308] sm:$0xff]
        %v4632 = vld [vmem:[#allocation22 + $0x310] sm:$0xff]
        %v4633 = vld [vmem:[#allocation22 + $0x318] sm:$0xff]
        %v4634 = vld [vmem:[#allocation22 + $0x320] sm:$0xff]
        %v4635 = vld [vmem:[#allocation22 + $0x328] sm:$0xff]
        %v4636 = vld [vmem:[#allocation22 + $0x330] sm:$0xff]
        %v4637 = vld [vmem:[#allocation22 + $0x338] sm:$0xff]
        %v4638 = vld [vmem:[#allocation22 + $0x340] sm:$0xff]
        %v4639 = vld [vmem:[#allocation22 + $0x348] sm:$0xff]
        %v4640 = vld [vmem:[#allocation22 + $0x350] sm:$0xff]
        %v4641 = vld [vmem:[#allocation22 + $0x358] sm:$0xff]
        %v4642 = vld [vmem:[#allocation22 + $0x360] sm:$0xff]
        %v4643 = vld [vmem:[#allocation22 + $0x368] sm:$0xff]
        %v4644 = vld [vmem:[#allocation22 + $0x370] sm:$0xff]
        %v4645 = vld [vmem:[#allocation22 + $0x378] sm:$0xff]
        %v4646 = vld [vmem:[#allocation22 + $0x380] sm:$0xff]
        %v4647 = vld [vmem:[#allocation22 + $0x388] sm:$0xff]
        %v4648 = vld [vmem:[#allocation22 + $0x390] sm:$0xff]
        %v4649 = vld [vmem:[#allocation22 + $0x398] sm:$0xff]
        %v4650 = vld [vmem:[#allocation22 + $0x3a0] sm:$0xff]
        %v4651 = vld [vmem:[#allocation22 + $0x3a8] sm:$0xff]
        %v4652 = vld [vmem:[#allocation22 + $0x3b0] sm:$0xff]
        %v4653 = vld [vmem:[#allocation22 + $0x3b8] sm:$0xff]
        %v4654 = vld [vmem:[#allocation22 + $0x3c0] sm:$0xff]
        %v4655 = vld [vmem:[#allocation22 + $0x3c8] sm:$0xff]
        %v4656 = vld [vmem:[#allocation22 + $0x3d0] sm:$0xff]
        %v4657 = vld [vmem:[#allocation22 + $0x3d8] sm:$0xff]
        %v4658 = vld [vmem:[#allocation22 + $0x3e0] sm:$0xff]
        %v4659 = vld [vmem:[#allocation22 + $0x3e8] sm:$0xff]
        %v4660 = vld [vmem:[#allocation22 + $0x3f0] sm:$0xff]
        %v4661 = vld [vmem:[#allocation22 + $0x3f8] sm:$0xff]
        %v4662 = vld [vmem:[%s14] sm:$0xff]
        %v4664 = vlaneseq
        %v4665 = vshrl.u32 %v4664, 7
        %v4666 = vsub.s32 0, %v4665
        %v4667 = vrot.slane %v4662, %v4666
        %v4668 = vlaneseq
        %v4669 = vshrl.u32 %v4668, 7
        %v4670 = vsub.s32 1, %v4669
        %v4671 = vrot.slane %v4662, %v4670
        %v4672 = vlaneseq
        %v4673 = vshrl.u32 %v4672, 7
        %v4674 = vsub.s32 2, %v4673
        %v4675 = vrot.slane %v4662, %v4674
        %v4676 = vlaneseq
        %v4677 = vshrl.u32 %v4676, 7
        %v4678 = vsub.s32 3, %v4677
        %v4679 = vrot.slane %v4662, %v4678
        %v4680 = vlaneseq
        %v4681 = vshrl.u32 %v4680, 7
        %v4682 = vsub.s32 4, %v4681
        %v4683 = vrot.slane %v4662, %v4682
        %v4684 = vlaneseq
        %v4685 = vshrl.u32 %v4684, 7
        %v4686 = vsub.s32 5, %v4685
        %v4687 = vrot.slane %v4662, %v4686
        %v4688 = vlaneseq
        %v4689 = vshrl.u32 %v4688, 7
        %v4690 = vsub.s32 6, %v4689
        %v4691 = vrot.slane %v4662, %v4690
        %v4692 = vlaneseq
        %v4693 = vshrl.u32 %v4692, 7
        %v4694 = vsub.s32 7, %v4693
        %v4695 = vrot.slane %v4662, %v4694
        %v4832 = vunpack.c.l.b16 %v4534
        %v4833 = vunpack.c.h.b16 %v4534
        %v4834 = vunpack.c.l.b16 %v4535
        %v4835 = vunpack.c.h.b16 %v4535
        %v4836 = vunpack.c.l.b16 %v4536
        %v4837 = vunpack.c.h.b16 %v4536
        %v4838 = vunpack.c.l.b16 %v4537
        %v4839 = vunpack.c.h.b16 %v4537
        %v4840 = vunpack.c.l.b16 %v4538
        %v4841 = vunpack.c.h.b16 %v4538
        %v4842 = vunpack.c.l.b16 %v4539
        %v4843 = vunpack.c.h.b16 %v4539
        %v4844 = vunpack.c.l.b16 %v4540
        %v4845 = vunpack.c.h.b16 %v4540
        %v4846 = vunpack.c.l.b16 %v4541
        %v4847 = vunpack.c.h.b16 %v4541
        %v4848 = vunpack.c.l.b16 %v4542
        %v4849 = vunpack.c.h.b16 %v4542
        %v4850 = vunpack.c.l.b16 %v4543
        %v4851 = vunpack.c.h.b16 %v4543
        %v4852 = vunpack.c.l.b16 %v4544
        %v4853 = vunpack.c.h.b16 %v4544
        %v4854 = vunpack.c.l.b16 %v4545
        %v4855 = vunpack.c.h.b16 %v4545
        %v4856 = vunpack.c.l.b16 %v4546
        %v4857 = vunpack.c.h.b16 %v4546
        %v4858 = vunpack.c.l.b16 %v4547
        %v4859 = vunpack.c.h.b16 %v4547
        %v4860 = vunpack.c.l.b16 %v4548
        %v4861 = vunpack.c.h.b16 %v4548
        %v4862 = vunpack.c.l.b16 %v4549
        %v4863 = vunpack.c.h.b16 %v4549
        %v4864 = vunpack.c.l.b16 %v4550
        %v4865 = vunpack.c.h.b16 %v4550
        %v4866 = vunpack.c.l.b16 %v4551
        %v4867 = vunpack.c.h.b16 %v4551
        %v4868 = vunpack.c.l.b16 %v4552
        %v4869 = vunpack.c.h.b16 %v4552
        %v4870 = vunpack.c.l.b16 %v4553
        %v4871 = vunpack.c.h.b16 %v4553
        %v4872 = vunpack.c.l.b16 %v4554
        %v4873 = vunpack.c.h.b16 %v4554
        %v4874 = vunpack.c.l.b16 %v4555
        %v4875 = vunpack.c.h.b16 %v4555
        %v4876 = vunpack.c.l.b16 %v4556
        %v4877 = vunpack.c.h.b16 %v4556
        %v4878 = vunpack.c.l.b16 %v4557
        %v4879 = vunpack.c.h.b16 %v4557
        %v4880 = vunpack.c.l.b16 %v4558
        %v4881 = vunpack.c.h.b16 %v4558
        %v4882 = vunpack.c.l.b16 %v4559
        %v4883 = vunpack.c.h.b16 %v4559
        %v4884 = vunpack.c.l.b16 %v4560
        %v4885 = vunpack.c.h.b16 %v4560
        %v4886 = vunpack.c.l.b16 %v4561
        %v4887 = vunpack.c.h.b16 %v4561
        %v4888 = vunpack.c.l.b16 %v4562
        %v4889 = vunpack.c.h.b16 %v4562
        %v4890 = vunpack.c.l.b16 %v4563
        %v4891 = vunpack.c.h.b16 %v4563
        %v4892 = vunpack.c.l.b16 %v4564
        %v4893 = vunpack.c.h.b16 %v4564
        %v4894 = vunpack.c.l.b16 %v4565
        %v4895 = vunpack.c.h.b16 %v4565
        %v4896 = vunpack.c.l.b16 %v4566
        %v4897 = vunpack.c.h.b16 %v4566
        %v4898 = vunpack.c.l.b16 %v4567
        %v4899 = vunpack.c.h.b16 %v4567
        %v4900 = vunpack.c.l.b16 %v4568
        %v4901 = vunpack.c.h.b16 %v4568
        %v4902 = vunpack.c.l.b16 %v4569
        %v4903 = vunpack.c.h.b16 %v4569
        %v4904 = vunpack.c.l.b16 %v4570
        %v4905 = vunpack.c.h.b16 %v4570
        %v4906 = vunpack.c.l.b16 %v4571
        %v4907 = vunpack.c.h.b16 %v4571
        %v4908 = vunpack.c.l.b16 %v4572
        %v4909 = vunpack.c.h.b16 %v4572
        %v4910 = vunpack.c.l.b16 %v4573
        %v4911 = vunpack.c.h.b16 %v4573
        %v4912 = vunpack.c.l.b16 %v4574
        %v4913 = vunpack.c.h.b16 %v4574
        %v4914 = vunpack.c.l.b16 %v4575
        %v4915 = vunpack.c.h.b16 %v4575
        %v4916 = vunpack.c.l.b16 %v4576
        %v4917 = vunpack.c.h.b16 %v4576
        %v4918 = vunpack.c.l.b16 %v4577
        %v4919 = vunpack.c.h.b16 %v4577
        %v4920 = vunpack.c.l.b16 %v4578
        %v4921 = vunpack.c.h.b16 %v4578
        %v4922 = vunpack.c.l.b16 %v4579
        %v4923 = vunpack.c.h.b16 %v4579
        %v4924 = vunpack.c.l.b16 %v4580
        %v4925 = vunpack.c.h.b16 %v4580
        %v4926 = vunpack.c.l.b16 %v4581
        %v4927 = vunpack.c.h.b16 %v4581
        %v4928 = vunpack.c.l.b16 %v4582
        %v4929 = vunpack.c.h.b16 %v4582
        %v4930 = vunpack.c.l.b16 %v4583
        %v4931 = vunpack.c.h.b16 %v4583
        %v4932 = vunpack.c.l.b16 %v4584
        %v4933 = vunpack.c.h.b16 %v4584
        %v4934 = vunpack.c.l.b16 %v4585
        %v4935 = vunpack.c.h.b16 %v4585
        %v4936 = vunpack.c.l.b16 %v4586
        %v4937 = vunpack.c.h.b16 %v4586
        %v4938 = vunpack.c.l.b16 %v4587
        %v4939 = vunpack.c.h.b16 %v4587
        %v4940 = vunpack.c.l.b16 %v4588
        %v4941 = vunpack.c.h.b16 %v4588
        %v4942 = vunpack.c.l.b16 %v4589
        %v4943 = vunpack.c.h.b16 %v4589
        %v4944 = vunpack.c.l.b16 %v4590
        %v4945 = vunpack.c.h.b16 %v4590
        %v4946 = vunpack.c.l.b16 %v4591
        %v4947 = vunpack.c.h.b16 %v4591
        %v4948 = vunpack.c.l.b16 %v4592
        %v4949 = vunpack.c.h.b16 %v4592
        %v4950 = vunpack.c.l.b16 %v4593
        %v4951 = vunpack.c.h.b16 %v4593
        %v4952 = vunpack.c.l.b16 %v4594
        %v4953 = vunpack.c.h.b16 %v4594
        %v4954 = vunpack.c.l.b16 %v4595
        %v4955 = vunpack.c.h.b16 %v4595
        %v4956 = vunpack.c.l.b16 %v4596
        %v4957 = vunpack.c.h.b16 %v4596
        %v4958 = vunpack.c.l.b16 %v4597
        %v4959 = vunpack.c.h.b16 %v4597
        %v4960 = vunpack.c.l.b16 %v4598
        %v4961 = vunpack.c.h.b16 %v4598
        %v4962 = vunpack.c.l.b16 %v4599
        %v4963 = vunpack.c.h.b16 %v4599
        %v4964 = vunpack.c.l.b16 %v4600
        %v4965 = vunpack.c.h.b16 %v4600
        %v4966 = vunpack.c.l.b16 %v4601
        %v4967 = vunpack.c.h.b16 %v4601
        %v4968 = vunpack.c.l.b16 %v4602
        %v4969 = vunpack.c.h.b16 %v4602
        %v4970 = vunpack.c.l.b16 %v4603
        %v4971 = vunpack.c.h.b16 %v4603
        %v4972 = vunpack.c.l.b16 %v4604
        %v4973 = vunpack.c.h.b16 %v4604
        %v4974 = vunpack.c.l.b16 %v4605
        %v4975 = vunpack.c.h.b16 %v4605
        %v4976 = vunpack.c.l.b16 %v4606
        %v4977 = vunpack.c.h.b16 %v4606
        %v4978 = vunpack.c.l.b16 %v4607
        %v4979 = vunpack.c.h.b16 %v4607
        %v4980 = vunpack.c.l.b16 %v4608
        %v4981 = vunpack.c.h.b16 %v4608
        %v4982 = vunpack.c.l.b16 %v4609
        %v4983 = vunpack.c.h.b16 %v4609
        %v4984 = vunpack.c.l.b16 %v4610
        %v4985 = vunpack.c.h.b16 %v4610
        %v4986 = vunpack.c.l.b16 %v4611
        %v4987 = vunpack.c.h.b16 %v4611
        %v4988 = vunpack.c.l.b16 %v4612
        %v4989 = vunpack.c.h.b16 %v4612
        %v4990 = vunpack.c.l.b16 %v4613
        %v4991 = vunpack.c.h.b16 %v4613
        %v4992 = vunpack.c.l.b16 %v4614
        %v4993 = vunpack.c.h.b16 %v4614
        %v4994 = vunpack.c.l.b16 %v4615
        %v4995 = vunpack.c.h.b16 %v4615
        %v4996 = vunpack.c.l.b16 %v4616
        %v4997 = vunpack.c.h.b16 %v4616
        %v4998 = vunpack.c.l.b16 %v4617
        %v4999 = vunpack.c.h.b16 %v4617
        %v5000 = vunpack.c.l.b16 %v4618
        %v5001 = vunpack.c.h.b16 %v4618
        %v5002 = vunpack.c.l.b16 %v4619
        %v5003 = vunpack.c.h.b16 %v4619
        %v5004 = vunpack.c.l.b16 %v4620
        %v5005 = vunpack.c.h.b16 %v4620
        %v5006 = vunpack.c.l.b16 %v4621
        %v5007 = vunpack.c.h.b16 %v4621
        %v5008 = vunpack.c.l.b16 %v4622
        %v5009 = vunpack.c.h.b16 %v4622
        %v5010 = vunpack.c.l.b16 %v4623
        %v5011 = vunpack.c.h.b16 %v4623
        %v5012 = vunpack.c.l.b16 %v4624
        %v5013 = vunpack.c.h.b16 %v4624
        %v5014 = vunpack.c.l.b16 %v4625
        %v5015 = vunpack.c.h.b16 %v4625
        %v5016 = vunpack.c.l.b16 %v4626
        %v5017 = vunpack.c.h.b16 %v4626
        %v5018 = vunpack.c.l.b16 %v4627
        %v5019 = vunpack.c.h.b16 %v4627
        %v5020 = vunpack.c.l.b16 %v4628
        %v5021 = vunpack.c.h.b16 %v4628
        %v5022 = vunpack.c.l.b16 %v4629
        %v5023 = vunpack.c.h.b16 %v4629
        %v5024 = vunpack.c.l.b16 %v4630
        %v5025 = vunpack.c.h.b16 %v4630
        %v5026 = vunpack.c.l.b16 %v4631
        %v5027 = vunpack.c.h.b16 %v4631
        %v5028 = vunpack.c.l.b16 %v4632
        %v5029 = vunpack.c.h.b16 %v4632
        %v5030 = vunpack.c.l.b16 %v4633
        %v5031 = vunpack.c.h.b16 %v4633
        %v5032 = vunpack.c.l.b16 %v4634
        %v5033 = vunpack.c.h.b16 %v4634
        %v5034 = vunpack.c.l.b16 %v4635
        %v5035 = vunpack.c.h.b16 %v4635
        %v5036 = vunpack.c.l.b16 %v4636
        %v5037 = vunpack.c.h.b16 %v4636
        %v5038 = vunpack.c.l.b16 %v4637
        %v5039 = vunpack.c.h.b16 %v4637
        %v5040 = vunpack.c.l.b16 %v4638
        %v5041 = vunpack.c.h.b16 %v4638
        %v5042 = vunpack.c.l.b16 %v4639
        %v5043 = vunpack.c.h.b16 %v4639
        %v5044 = vunpack.c.l.b16 %v4640
        %v5045 = vunpack.c.h.b16 %v4640
        %v5046 = vunpack.c.l.b16 %v4641
        %v5047 = vunpack.c.h.b16 %v4641
        %v5048 = vunpack.c.l.b16 %v4642
        %v5049 = vunpack.c.h.b16 %v4642
        %v5050 = vunpack.c.l.b16 %v4643
        %v5051 = vunpack.c.h.b16 %v4643
        %v5052 = vunpack.c.l.b16 %v4644
        %v5053 = vunpack.c.h.b16 %v4644
        %v5054 = vunpack.c.l.b16 %v4645
        %v5055 = vunpack.c.h.b16 %v4645
        %v5056 = vunpack.c.l.b16 %v4646
        %v5057 = vunpack.c.h.b16 %v4646
        %v5058 = vunpack.c.l.b16 %v4647
        %v5059 = vunpack.c.h.b16 %v4647
        %v5060 = vunpack.c.l.b16 %v4648
        %v5061 = vunpack.c.h.b16 %v4648
        %v5062 = vunpack.c.l.b16 %v4649
        %v5063 = vunpack.c.h.b16 %v4649
        %v5064 = vunpack.c.l.b16 %v4650
        %v5065 = vunpack.c.h.b16 %v4650
        %v5066 = vunpack.c.l.b16 %v4651
        %v5067 = vunpack.c.h.b16 %v4651
        %v5068 = vunpack.c.l.b16 %v4652
        %v5069 = vunpack.c.h.b16 %v4652
        %v5070 = vunpack.c.l.b16 %v4653
        %v5071 = vunpack.c.h.b16 %v4653
        %v5072 = vunpack.c.l.b16 %v4654
        %v5073 = vunpack.c.h.b16 %v4654
        %v5074 = vunpack.c.l.b16 %v4655
        %v5075 = vunpack.c.h.b16 %v4655
        %v5076 = vunpack.c.l.b16 %v4656
        %v5077 = vunpack.c.h.b16 %v4656
        %v5078 = vunpack.c.l.b16 %v4657
        %v5079 = vunpack.c.h.b16 %v4657
        %v5080 = vunpack.c.l.b16 %v4658
        %v5081 = vunpack.c.h.b16 %v4658
        %v5082 = vunpack.c.l.b16 %v4659
        %v5083 = vunpack.c.h.b16 %v4659
        %v5084 = vunpack.c.l.b16 %v4660
        %v5085 = vunpack.c.h.b16 %v4660
        %v5086 = vunpack.c.l.b16 %v4661
        %v5087 = vunpack.c.h.b16 %v4661
        %v5088 = vpack.c.b16 %v4840, %v4832
        %v5089 = vpack.c.b16 %v4841, %v4833
        %v5090 = vpack.c.b16 %v4842, %v4834
        %v5091 = vpack.c.b16 %v4843, %v4835
        %v5092 = vpack.c.b16 %v4844, %v4836
        %v5093 = vpack.c.b16 %v4845, %v4837
        %v5094 = vpack.c.b16 %v4846, %v4838
        %v5095 = vpack.c.b16 %v4847, %v4839
        %v5096 = vpack.c.b16 %v4856, %v4848
        %v5097 = vpack.c.b16 %v4857, %v4849
        %v5098 = vpack.c.b16 %v4858, %v4850
        %v5099 = vpack.c.b16 %v4859, %v4851
        %v5100 = vpack.c.b16 %v4860, %v4852
        %v5101 = vpack.c.b16 %v4861, %v4853
        %v5102 = vpack.c.b16 %v4862, %v4854
        %v5103 = vpack.c.b16 %v4863, %v4855
        %v5104 = vpack.c.b16 %v4872, %v4864
        %v5105 = vpack.c.b16 %v4873, %v4865
        %v5106 = vpack.c.b16 %v4874, %v4866
        %v5107 = vpack.c.b16 %v4875, %v4867
        %v5108 = vpack.c.b16 %v4876, %v4868
        %v5109 = vpack.c.b16 %v4877, %v4869
        %v5110 = vpack.c.b16 %v4878, %v4870
        %v5111 = vpack.c.b16 %v4879, %v4871
        %v5112 = vpack.c.b16 %v4888, %v4880
        %v5113 = vpack.c.b16 %v4889, %v4881
        %v5114 = vpack.c.b16 %v4890, %v4882
        %v5115 = vpack.c.b16 %v4891, %v4883
        %v5116 = vpack.c.b16 %v4892, %v4884
        %v5117 = vpack.c.b16 %v4893, %v4885
        %v5118 = vpack.c.b16 %v4894, %v4886
        %v5119 = vpack.c.b16 %v4895, %v4887
        %v5120 = vpack.c.b16 %v4904, %v4896
        %v5121 = vpack.c.b16 %v4905, %v4897
        %v5122 = vpack.c.b16 %v4906, %v4898
        %v5123 = vpack.c.b16 %v4907, %v4899
        %v5124 = vpack.c.b16 %v4908, %v4900
        %v5125 = vpack.c.b16 %v4909, %v4901
        %v5126 = vpack.c.b16 %v4910, %v4902
        %v5127 = vpack.c.b16 %v4911, %v4903
        %v5128 = vpack.c.b16 %v4920, %v4912
        %v5129 = vpack.c.b16 %v4921, %v4913
        %v5130 = vpack.c.b16 %v4922, %v4914
        %v5131 = vpack.c.b16 %v4923, %v4915
        %v5132 = vpack.c.b16 %v4924, %v4916
        %v5133 = vpack.c.b16 %v4925, %v4917
        %v5134 = vpack.c.b16 %v4926, %v4918
        %v5135 = vpack.c.b16 %v4927, %v4919
        %v5136 = vpack.c.b16 %v4936, %v4928
        %v5137 = vpack.c.b16 %v4937, %v4929
        %v5138 = vpack.c.b16 %v4938, %v4930
        %v5139 = vpack.c.b16 %v4939, %v4931
        %v5140 = vpack.c.b16 %v4940, %v4932
        %v5141 = vpack.c.b16 %v4941, %v4933
        %v5142 = vpack.c.b16 %v4942, %v4934
        %v5143 = vpack.c.b16 %v4943, %v4935
        %v5144 = vpack.c.b16 %v4952, %v4944
        %v5145 = vpack.c.b16 %v4953, %v4945
        %v5146 = vpack.c.b16 %v4954, %v4946
        %v5147 = vpack.c.b16 %v4955, %v4947
        %v5148 = vpack.c.b16 %v4956, %v4948
        %v5149 = vpack.c.b16 %v4957, %v4949
        %v5150 = vpack.c.b16 %v4958, %v4950
        %v5151 = vpack.c.b16 %v4959, %v4951
        %v5152 = vpack.c.b16 %v4968, %v4960
        %v5153 = vpack.c.b16 %v4969, %v4961
        %v5154 = vpack.c.b16 %v4970, %v4962
        %v5155 = vpack.c.b16 %v4971, %v4963
        %v5156 = vpack.c.b16 %v4972, %v4964
        %v5157 = vpack.c.b16 %v4973, %v4965
        %v5158 = vpack.c.b16 %v4974, %v4966
        %v5159 = vpack.c.b16 %v4975, %v4967
        %v5160 = vpack.c.b16 %v4984, %v4976
        %v5161 = vpack.c.b16 %v4985, %v4977
        %v5162 = vpack.c.b16 %v4986, %v4978
        %v5163 = vpack.c.b16 %v4987, %v4979
        %v5164 = vpack.c.b16 %v4988, %v4980
        %v5165 = vpack.c.b16 %v4989, %v4981
        %v5166 = vpack.c.b16 %v4990, %v4982
        %v5167 = vpack.c.b16 %v4991, %v4983
        %v5168 = vpack.c.b16 %v5000, %v4992
        %v5169 = vpack.c.b16 %v5001, %v4993
        %v5170 = vpack.c.b16 %v5002, %v4994
        %v5171 = vpack.c.b16 %v5003, %v4995
        %v5172 = vpack.c.b16 %v5004, %v4996
        %v5173 = vpack.c.b16 %v5005, %v4997
        %v5174 = vpack.c.b16 %v5006, %v4998
        %v5175 = vpack.c.b16 %v5007, %v4999
        %v5176 = vpack.c.b16 %v5016, %v5008
        %v5177 = vpack.c.b16 %v5017, %v5009
        %v5178 = vpack.c.b16 %v5018, %v5010
        %v5179 = vpack.c.b16 %v5019, %v5011
        %v5180 = vpack.c.b16 %v5020, %v5012
        %v5181 = vpack.c.b16 %v5021, %v5013
        %v5182 = vpack.c.b16 %v5022, %v5014
        %v5183 = vpack.c.b16 %v5023, %v5015
        %v5184 = vpack.c.b16 %v5032, %v5024
        %v5185 = vpack.c.b16 %v5033, %v5025
        %v5186 = vpack.c.b16 %v5034, %v5026
        %v5187 = vpack.c.b16 %v5035, %v5027
        %v5188 = vpack.c.b16 %v5036, %v5028
        %v5189 = vpack.c.b16 %v5037, %v5029
        %v5190 = vpack.c.b16 %v5038, %v5030
        %v5191 = vpack.c.b16 %v5039, %v5031
        %v5192 = vpack.c.b16 %v5048, %v5040
        %v5193 = vpack.c.b16 %v5049, %v5041
        %v5194 = vpack.c.b16 %v5050, %v5042
        %v5195 = vpack.c.b16 %v5051, %v5043
        %v5196 = vpack.c.b16 %v5052, %v5044
        %v5197 = vpack.c.b16 %v5053, %v5045
        %v5198 = vpack.c.b16 %v5054, %v5046
        %v5199 = vpack.c.b16 %v5055, %v5047
        %v5200 = vpack.c.b16 %v5064, %v5056
        %v5201 = vpack.c.b16 %v5065, %v5057
        %v5202 = vpack.c.b16 %v5066, %v5058
        %v5203 = vpack.c.b16 %v5067, %v5059
        %v5204 = vpack.c.b16 %v5068, %v5060
        %v5205 = vpack.c.b16 %v5069, %v5061
        %v5206 = vpack.c.b16 %v5070, %v5062
        %v5207 = vpack.c.b16 %v5071, %v5063
        %v5208 = vpack.c.b16 %v5080, %v5072
        %v5209 = vpack.c.b16 %v5081, %v5073
        %v5210 = vpack.c.b16 %v5082, %v5074
        %v5211 = vpack.c.b16 %v5083, %v5075
        %v5212 = vpack.c.b16 %v5084, %v5076
        %v5213 = vpack.c.b16 %v5085, %v5077
        %v5214 = vpack.c.b16 %v5086, %v5078
        %v5215 = vpack.c.b16 %v5087, %v5079
        %5344 = vmatprep.subr.bf16.mxu0 %v5145
        %5345 = vmatpush1.bf16.msra.mxu0 %v5144
        %5346 = vmatprep.subr.bf16.mxu0 %v5137
        %5347 = vmatpush1.bf16.msra.mxu0 %v5136
        %5348 = vmatprep.subr.bf16.mxu0 %v5129
        %5349 = vmatpush1.bf16.msra.mxu0 %v5128
        %5350 = vmatprep.subr.bf16.mxu0 %v5121
        %5351 = vmatpush1.bf16.msra.mxu0 %v5120
        %5352 = vmatprep.subr.bf16.mxu0 %v5113
        %5353 = vmatpush1.bf16.msra.mxu0 %v5112
        %5354 = vmatprep.subr.bf16.mxu0 %v5105
        %5355 = vmatpush1.bf16.msra.mxu0 %v5104
        %5356 = vmatprep.subr.bf16.mxu0 %v5097
        %5357 = vmatpush1.bf16.msra.mxu0 %v5096
        %5358 = vmatprep.subr.bf16.mxu0 %v5089
        %5359 = vmatpush1.bf16.msra.mxu0 %v5088
        %5360 = vmatprep.subr.bf16.mxu0 %v5209
        %5361 = vmatpush2.bf16.msra.mxu0 %v5208
        %5362 = vmatprep.subr.bf16.mxu0 %v5201
        %5363 = vmatpush2.bf16.msra.mxu0 %v5200
        %5364 = vmatprep.subr.bf16.mxu0 %v5193
        %5365 = vmatpush2.bf16.msra.mxu0 %v5192
        %5366 = vmatprep.subr.bf16.mxu0 %v5185
        %5367 = vmatpush2.bf16.msra.mxu0 %v5184
        %5368 = vmatprep.subr.bf16.mxu0 %v5177
        %5369 = vmatpush2.bf16.msra.mxu0 %v5176
        %5370 = vmatprep.subr.bf16.mxu0 %v5169
        %5371 = vmatpush2.bf16.msra.mxu0 %v5168
        %5372 = vmatprep.subr.bf16.mxu0 %v5161
        %5373 = vmatpush2.bf16.msra.mxu0 %v5160
        %5374 = vmatprep.subr.bf16.mxu0 %v5153
        %5375 = vmatpush2.bf16.msra.mxu0 %v5152
        %5376 = vmatprep.mubr.bf16.mxu0 %v4533
        %5377 = vmatmul.mubr.bf16.gmra.mxu0 %v4532
        %v5378 = vpop.f32.mrf.mxu0
        %v5379 = vadd.f32 %v4667, %v5378
        %v5380 = vpop.f32.mrf.mxu0
        %v5381 = vadd.f32 %v4671, %v5380
        %v5382 = vpop.f32.mrf.mxu0
        %v5383 = vadd.f32 %v4667, %v5382
        %v5384 = vpop.f32.mrf.mxu0
        %v5385 = vadd.f32 %v4671, %v5384
        %5386 = vdwg.mxu0
        %5387 = vmatprep.subr.bf16.mxu0 %v5147
        %5388 = vmatpush1.bf16.msra.mxu0 %v5146
        %5389 = vmatprep.subr.bf16.mxu0 %v5139
        %5390 = vmatpush1.bf16.msra.mxu0 %v5138
        %5391 = vmatprep.subr.bf16.mxu0 %v5131
        %5392 = vmatpush1.bf16.msra.mxu0 %v5130
        %5393 = vmatprep.subr.bf16.mxu0 %v5123
        %5394 = vmatpush1.bf16.msra.mxu0 %v5122
        %5395 = vmatprep.subr.bf16.mxu0 %v5115
        %5396 = vmatpush1.bf16.msra.mxu0 %v5114
        %5397 = vmatprep.subr.bf16.mxu0 %v5107
        %5398 = vmatpush1.bf16.msra.mxu0 %v5106
        %5399 = vmatprep.subr.bf16.mxu0 %v5099
        %5400 = vmatpush1.bf16.msra.mxu0 %v5098
        %5401 = vmatprep.subr.bf16.mxu0 %v5091
        %5402 = vmatpush1.bf16.msra.mxu0 %v5090
        %5403 = vmatprep.subr.bf16.mxu0 %v5211
        %5404 = vmatpush2.bf16.msra.mxu0 %v5210
        %5405 = vmatprep.subr.bf16.mxu0 %v5203
        %5406 = vmatpush2.bf16.msra.mxu0 %v5202
        %5407 = vmatprep.subr.bf16.mxu0 %v5195
        %5408 = vmatpush2.bf16.msra.mxu0 %v5194
        %5409 = vmatprep.subr.bf16.mxu0 %v5187
        %5410 = vmatpush2.bf16.msra.mxu0 %v5186
        %5411 = vmatprep.subr.bf16.mxu0 %v5179
        %5412 = vmatpush2.bf16.msra.mxu0 %v5178
        %5413 = vmatprep.subr.bf16.mxu0 %v5171
        %5414 = vmatpush2.bf16.msra.mxu0 %v5170
        %5415 = vmatprep.subr.bf16.mxu0 %v5163
        %5416 = vmatpush2.bf16.msra.mxu0 %v5162
        %5417 = vmatprep.subr.bf16.mxu0 %v5155
        %5418 = vmatpush2.bf16.msra.mxu0 %v5154
        %5419 = vmatprep.mubr.bf16.mxu0 %v4533
        %5420 = vmatmul.mubr.bf16.gmra.mxu0 %v4532
        %v5421 = vpop.f32.mrf.mxu0
        %v5422 = vadd.f32 %v4675, %v5421
        %v5423 = vpop.f32.mrf.mxu0
        %v5424 = vadd.f32 %v4679, %v5423
        %v5425 = vpop.f32.mrf.mxu0
        %v5426 = vadd.f32 %v4675, %v5425
        %v5427 = vpop.f32.mrf.mxu0
        %v5428 = vadd.f32 %v4679, %v5427
        %5429 = vdwg.mxu0
        %5430 = vmatprep.subr.bf16.mxu0 %v5149
        %5431 = vmatpush1.bf16.msra.mxu0 %v5148
        %5432 = vmatprep.subr.bf16.mxu0 %v5141
        %5433 = vmatpush1.bf16.msra.mxu0 %v5140
        %5434 = vmatprep.subr.bf16.mxu0 %v5133
        %5435 = vmatpush1.bf16.msra.mxu0 %v5132
        %5436 = vmatprep.subr.bf16.mxu0 %v5125
        %5437 = vmatpush1.bf16.msra.mxu0 %v5124
        %5438 = vmatprep.subr.bf16.mxu0 %v5117
        %5439 = vmatpush1.bf16.msra.mxu0 %v5116
        %5440 = vmatprep.subr.bf16.mxu0 %v5109
        %5441 = vmatpush1.bf16.msra.mxu0 %v5108
        %5442 = vmatprep.subr.bf16.mxu0 %v5101
        %5443 = vmatpush1.bf16.msra.mxu0 %v5100
        %5444 = vmatprep.subr.bf16.mxu0 %v5093
        %5445 = vmatpush1.bf16.msra.mxu0 %v5092
        %5446 = vmatprep.subr.bf16.mxu0 %v5213
        %5447 = vmatpush2.bf16.msra.mxu0 %v5212
        %5448 = vmatprep.subr.bf16.mxu0 %v5205
        %5449 = vmatpush2.bf16.msra.mxu0 %v5204
        %5450 = vmatprep.subr.bf16.mxu0 %v5197
        %5451 = vmatpush2.bf16.msra.mxu0 %v5196
        %5452 = vmatprep.subr.bf16.mxu0 %v5189
        %5453 = vmatpush2.bf16.msra.mxu0 %v5188
        %5454 = vmatprep.subr.bf16.mxu0 %v5181
        %5455 = vmatpush2.bf16.msra.mxu0 %v5180
        %5456 = vmatprep.subr.bf16.mxu0 %v5173
        %5457 = vmatpush2.bf16.msra.mxu0 %v5172
        %5458 = vmatprep.subr.bf16.mxu0 %v5165
        %5459 = vmatpush2.bf16.msra.mxu0 %v5164
        %5460 = vmatprep.subr.bf16.mxu0 %v5157
        %5461 = vmatpush2.bf16.msra.mxu0 %v5156
        %5462 = vmatprep.mubr.bf16.mxu0 %v4533
        %5463 = vmatmul.mubr.bf16.gmra.mxu0 %v4532
        %v5464 = vpop.f32.mrf.mxu0
        %v5465 = vadd.f32 %v4683, %v5464
        %v5466 = vpop.f32.mrf.mxu0
        %v5467 = vadd.f32 %v4687, %v5466
        %v5468 = vpop.f32.mrf.mxu0
        %v5469 = vadd.f32 %v4683, %v5468
        %v5470 = vpop.f32.mrf.mxu0
        %v5471 = vadd.f32 %v4687, %v5470
        %5472 = vdwg.mxu0
        %5473 = vmatprep.subr.bf16.mxu0 %v5151
        %5474 = vmatpush1.bf16.msra.mxu0 %v5150
        %5475 = vmatprep.subr.bf16.mxu0 %v5143
        %5476 = vmatpush1.bf16.msra.mxu0 %v5142
        %5477 = vmatprep.subr.bf16.mxu0 %v5135
        %5478 = vmatpush1.bf16.msra.mxu0 %v5134
        %5479 = vmatprep.subr.bf16.mxu0 %v5127
        %5480 = vmatpush1.bf16.msra.mxu0 %v5126
        %5481 = vmatprep.subr.bf16.mxu0 %v5119
        %5482 = vmatpush1.bf16.msra.mxu0 %v5118
        %5483 = vmatprep.subr.bf16.mxu0 %v5111
        %5484 = vmatpush1.bf16.msra.mxu0 %v5110
        %5485 = vmatprep.subr.bf16.mxu0 %v5103
        %5486 = vmatpush1.bf16.msra.mxu0 %v5102
        %5487 = vmatprep.subr.bf16.mxu0 %v5095
        %5488 = vmatpush1.bf16.msra.mxu0 %v5094
        %5489 = vmatprep.subr.bf16.mxu0 %v5215
        %5490 = vmatpush2.bf16.msra.mxu0 %v5214
        %5491 = vmatprep.subr.bf16.mxu0 %v5207
        %5492 = vmatpush2.bf16.msra.mxu0 %v5206
        %5493 = vmatprep.subr.bf16.mxu0 %v5199
        %5494 = vmatpush2.bf16.msra.mxu0 %v5198
        %5495 = vmatprep.subr.bf16.mxu0 %v5191
        %5496 = vmatpush2.bf16.msra.mxu0 %v5190
        %5497 = vmatprep.subr.bf16.mxu0 %v5183
        %5498 = vmatpush2.bf16.msra.mxu0 %v5182
        %5499 = vmatprep.subr.bf16.mxu0 %v5175
        %5500 = vmatpush2.bf16.msra.mxu0 %v5174
        %5501 = vmatprep.subr.bf16.mxu0 %v5167
        %5502 = vmatpush2.bf16.msra.mxu0 %v5166
        %5503 = vmatprep.subr.bf16.mxu0 %v5159
        %5504 = vmatpush2.bf16.msra.mxu0 %v5158
        %5505 = vmatprep.mubr.bf16.mxu0 %v4533
        %5506 = vmatmul.mubr.bf16.gmra.mxu0 %v4532
        %v5507 = vpop.f32.mrf.mxu0
        %v5508 = vadd.f32 %v4691, %v5507
        %v5509 = vpop.f32.mrf.mxu0
        %v5510 = vadd.f32 %v4695, %v5509
        %v5511 = vpop.f32.mrf.mxu0
        %v5512 = vadd.f32 %v4691, %v5511
        %v5513 = vpop.f32.mrf.mxu0
        %v5514 = vadd.f32 %v4695, %v5513
        %5515 = vdwg.mxu0
        %v5516 = vmax.f32 %v5379, 0.0
        %v5517 = vmax.f32 %v5381, 0.0
        %v5518 = vmax.f32 %v5422, 0.0
        %v5519 = vmax.f32 %v5424, 0.0
        %v5520 = vmax.f32 %v5465, 0.0
        %v5521 = vmax.f32 %v5467, 0.0
        %v5522 = vmax.f32 %v5508, 0.0
        %v5523 = vmax.f32 %v5510, 0.0
        %v5524 = vmax.f32 %v5383, 0.0
        %v5525 = vmax.f32 %v5385, 0.0
        %v5526 = vmax.f32 %v5426, 0.0
        %v5527 = vmax.f32 %v5428, 0.0
        %v5528 = vmax.f32 %v5469, 0.0
        %v5529 = vmax.f32 %v5471, 0.0
        %v5530 = vmax.f32 %v5512, 0.0
        %v5531 = vmax.f32 %v5514, 0.0
        %v5532 = vpack.c.bf16 %v5524, %v5516
        %v5533 = vpack.c.bf16 %v5525, %v5517
        %v5534 = vpack.c.bf16 %v5526, %v5518
        %v5535 = vpack.c.bf16 %v5527, %v5519
        %v5536 = vpack.c.bf16 %v5528, %v5520
        %v5537 = vpack.c.bf16 %v5529, %v5521
        %v5538 = vpack.c.bf16 %v5530, %v5522
        %v5539 = vpack.c.bf16 %v5531, %v5523
        %v5540 = vld [vmem:[#allocation24] sm:$0xff]
        %v5541 = vld [vmem:[#allocation24 + $0x8] sm:$0xff]
        %v5542 = vld [vmem:[#allocation24 + $0x10] sm:$0xff]
        %v5543 = vld [vmem:[#allocation24 + $0x18] sm:$0xff]
        %v5544 = vld [vmem:[#allocation24 + $0x20] sm:$0xff]
        %v5545 = vld [vmem:[#allocation24 + $0x28] sm:$0xff]
        %v5546 = vld [vmem:[#allocation24 + $0x30] sm:$0xff]
        %v5547 = vld [vmem:[#allocation24 + $0x38] sm:$0xff]
        %v5548 = vld [vmem:[#allocation24 + $0x40] sm:$0xff]
        %v5549 = vld [vmem:[#allocation24 + $0x48] sm:$0xff]
        %v5550 = vld [vmem:[#allocation24 + $0x50] sm:$0xff]
        %v5551 = vld [vmem:[#allocation24 + $0x58] sm:$0xff]
        %v5552 = vld [vmem:[#allocation24 + $0x60] sm:$0xff]
        %v5553 = vld [vmem:[#allocation24 + $0x68] sm:$0xff]
        %v5554 = vld [vmem:[#allocation24 + $0x70] sm:$0xff]
        %v5555 = vld [vmem:[#allocation24 + $0x78] sm:$0xff]
        %v5556 = vld [vmem:[#allocation24 + $0x80] sm:$0xff]
        %v5557 = vld [vmem:[#allocation24 + $0x88] sm:$0xff]
        %v5558 = vld [vmem:[#allocation24 + $0x90] sm:$0xff]
        %v5559 = vld [vmem:[#allocation24 + $0x98] sm:$0xff]
        %v5560 = vld [vmem:[#allocation24 + $0xa0] sm:$0xff]
        %v5561 = vld [vmem:[#allocation24 + $0xa8] sm:$0xff]
        %v5562 = vld [vmem:[#allocation24 + $0xb0] sm:$0xff]
        %v5563 = vld [vmem:[#allocation24 + $0xb8] sm:$0xff]
        %v5564 = vld [vmem:[#allocation24 + $0xc0] sm:$0xff]
        %v5565 = vld [vmem:[#allocation24 + $0xc8] sm:$0xff]
        %v5566 = vld [vmem:[#allocation24 + $0xd0] sm:$0xff]
        %v5567 = vld [vmem:[#allocation24 + $0xd8] sm:$0xff]
        %v5568 = vld [vmem:[#allocation24 + $0xe0] sm:$0xff]
        %v5569 = vld [vmem:[#allocation24 + $0xe8] sm:$0xff]
        %v5570 = vld [vmem:[#allocation24 + $0xf0] sm:$0xff]
        %v5571 = vld [vmem:[#allocation24 + $0xf8] sm:$0xff]
        %v5572 = vld [vmem:[#allocation24 + $0x100] sm:$0xff]
        %v5573 = vld [vmem:[#allocation24 + $0x108] sm:$0xff]
        %v5574 = vld [vmem:[#allocation24 + $0x110] sm:$0xff]
        %v5575 = vld [vmem:[#allocation24 + $0x118] sm:$0xff]
        %v5576 = vld [vmem:[#allocation24 + $0x120] sm:$0xff]
        %v5577 = vld [vmem:[#allocation24 + $0x128] sm:$0xff]
        %v5578 = vld [vmem:[#allocation24 + $0x130] sm:$0xff]
        %v5579 = vld [vmem:[#allocation24 + $0x138] sm:$0xff]
        %v5580 = vld [vmem:[#allocation24 + $0x140] sm:$0xff]
        %v5581 = vld [vmem:[#allocation24 + $0x148] sm:$0xff]
        %v5582 = vld [vmem:[#allocation24 + $0x150] sm:$0xff]
        %v5583 = vld [vmem:[#allocation24 + $0x158] sm:$0xff]
        %v5584 = vld [vmem:[#allocation24 + $0x160] sm:$0xff]
        %v5585 = vld [vmem:[#allocation24 + $0x168] sm:$0xff]
        %v5586 = vld [vmem:[#allocation24 + $0x170] sm:$0xff]
        %v5587 = vld [vmem:[#allocation24 + $0x178] sm:$0xff]
        %v5588 = vld [vmem:[#allocation24 + $0x180] sm:$0xff]
        %v5589 = vld [vmem:[#allocation24 + $0x188] sm:$0xff]
        %v5590 = vld [vmem:[#allocation24 + $0x190] sm:$0xff]
        %v5591 = vld [vmem:[#allocation24 + $0x198] sm:$0xff]
        %v5592 = vld [vmem:[#allocation24 + $0x1a0] sm:$0xff]
        %v5593 = vld [vmem:[#allocation24 + $0x1a8] sm:$0xff]
        %v5594 = vld [vmem:[#allocation24 + $0x1b0] sm:$0xff]
        %v5595 = vld [vmem:[#allocation24 + $0x1b8] sm:$0xff]
        %v5596 = vld [vmem:[#allocation24 + $0x1c0] sm:$0xff]
        %v5597 = vld [vmem:[#allocation24 + $0x1c8] sm:$0xff]
        %v5598 = vld [vmem:[#allocation24 + $0x1d0] sm:$0xff]
        %v5599 = vld [vmem:[#allocation24 + $0x1d8] sm:$0xff]
        %v5600 = vld [vmem:[#allocation24 + $0x1e0] sm:$0xff]
        %v5601 = vld [vmem:[#allocation24 + $0x1e8] sm:$0xff]
        %v5602 = vld [vmem:[#allocation24 + $0x1f0] sm:$0xff]
        %v5603 = vld [vmem:[#allocation24 + $0x1f8] sm:$0xff]
        %v5604 = vld [vmem:[#allocation24 + $0x200] sm:$0xff]
        %v5605 = vld [vmem:[#allocation24 + $0x208] sm:$0xff]
        %v5606 = vld [vmem:[#allocation24 + $0x210] sm:$0xff]
        %v5607 = vld [vmem:[#allocation24 + $0x218] sm:$0xff]
        %v5608 = vld [vmem:[#allocation24 + $0x220] sm:$0xff]
        %v5609 = vld [vmem:[#allocation24 + $0x228] sm:$0xff]
        %v5610 = vld [vmem:[#allocation24 + $0x230] sm:$0xff]
        %v5611 = vld [vmem:[#allocation24 + $0x238] sm:$0xff]
        %v5612 = vld [vmem:[#allocation24 + $0x240] sm:$0xff]
        %v5613 = vld [vmem:[#allocation24 + $0x248] sm:$0xff]
        %v5614 = vld [vmem:[#allocation24 + $0x250] sm:$0xff]
        %v5615 = vld [vmem:[#allocation24 + $0x258] sm:$0xff]
        %v5616 = vld [vmem:[#allocation24 + $0x260] sm:$0xff]
        %v5617 = vld [vmem:[#allocation24 + $0x268] sm:$0xff]
        %v5618 = vld [vmem:[#allocation24 + $0x270] sm:$0xff]
        %v5619 = vld [vmem:[#allocation24 + $0x278] sm:$0xff]
        %v5620 = vld [vmem:[#allocation24 + $0x280] sm:$0xff]
        %v5621 = vld [vmem:[#allocation24 + $0x288] sm:$0xff]
        %v5622 = vld [vmem:[#allocation24 + $0x290] sm:$0xff]
        %v5623 = vld [vmem:[#allocation24 + $0x298] sm:$0xff]
        %v5624 = vld [vmem:[#allocation24 + $0x2a0] sm:$0xff]
        %v5625 = vld [vmem:[#allocation24 + $0x2a8] sm:$0xff]
        %v5626 = vld [vmem:[#allocation24 + $0x2b0] sm:$0xff]
        %v5627 = vld [vmem:[#allocation24 + $0x2b8] sm:$0xff]
        %v5628 = vld [vmem:[#allocation24 + $0x2c0] sm:$0xff]
        %v5629 = vld [vmem:[#allocation24 + $0x2c8] sm:$0xff]
        %v5630 = vld [vmem:[#allocation24 + $0x2d0] sm:$0xff]
        %v5631 = vld [vmem:[#allocation24 + $0x2d8] sm:$0xff]
        %v5632 = vld [vmem:[#allocation24 + $0x2e0] sm:$0xff]
        %v5633 = vld [vmem:[#allocation24 + $0x2e8] sm:$0xff]
        %v5634 = vld [vmem:[#allocation24 + $0x2f0] sm:$0xff]
        %v5635 = vld [vmem:[#allocation24 + $0x2f8] sm:$0xff]
        %v5636 = vld [vmem:[#allocation24 + $0x300] sm:$0xff]
        %v5637 = vld [vmem:[#allocation24 + $0x308] sm:$0xff]
        %v5638 = vld [vmem:[#allocation24 + $0x310] sm:$0xff]
        %v5639 = vld [vmem:[#allocation24 + $0x318] sm:$0xff]
        %v5640 = vld [vmem:[#allocation24 + $0x320] sm:$0xff]
        %v5641 = vld [vmem:[#allocation24 + $0x328] sm:$0xff]
        %v5642 = vld [vmem:[#allocation24 + $0x330] sm:$0xff]
        %v5643 = vld [vmem:[#allocation24 + $0x338] sm:$0xff]
        %v5644 = vld [vmem:[#allocation24 + $0x340] sm:$0xff]
        %v5645 = vld [vmem:[#allocation24 + $0x348] sm:$0xff]
        %v5646 = vld [vmem:[#allocation24 + $0x350] sm:$0xff]
        %v5647 = vld [vmem:[#allocation24 + $0x358] sm:$0xff]
        %v5648 = vld [vmem:[#allocation24 + $0x360] sm:$0xff]
        %v5649 = vld [vmem:[#allocation24 + $0x368] sm:$0xff]
        %v5650 = vld [vmem:[#allocation24 + $0x370] sm:$0xff]
        %v5651 = vld [vmem:[#allocation24 + $0x378] sm:$0xff]
        %v5652 = vld [vmem:[#allocation24 + $0x380] sm:$0xff]
        %v5653 = vld [vmem:[#allocation24 + $0x388] sm:$0xff]
        %v5654 = vld [vmem:[#allocation24 + $0x390] sm:$0xff]
        %v5655 = vld [vmem:[#allocation24 + $0x398] sm:$0xff]
        %v5656 = vld [vmem:[#allocation24 + $0x3a0] sm:$0xff]
        %v5657 = vld [vmem:[#allocation24 + $0x3a8] sm:$0xff]
        %v5658 = vld [vmem:[#allocation24 + $0x3b0] sm:$0xff]
        %v5659 = vld [vmem:[#allocation24 + $0x3b8] sm:$0xff]
        %v5660 = vld [vmem:[#allocation24 + $0x3c0] sm:$0xff]
        %v5661 = vld [vmem:[#allocation24 + $0x3c8] sm:$0xff]
        %v5662 = vld [vmem:[#allocation24 + $0x3d0] sm:$0xff]
        %v5663 = vld [vmem:[#allocation24 + $0x3d8] sm:$0xff]
        %v5664 = vld [vmem:[#allocation24 + $0x3e0] sm:$0xff]
        %v5665 = vld [vmem:[#allocation24 + $0x3e8] sm:$0xff]
        %v5666 = vld [vmem:[#allocation24 + $0x3f0] sm:$0xff]
        %v5667 = vld [vmem:[#allocation24 + $0x3f8] sm:$0xff]
        %v5796 = vunpack.c.l.b16 %v5540
        %v5797 = vunpack.c.h.b16 %v5540
        %v5798 = vunpack.c.l.b16 %v5541
        %v5799 = vunpack.c.h.b16 %v5541
        %v5800 = vunpack.c.l.b16 %v5542
        %v5801 = vunpack.c.h.b16 %v5542
        %v5802 = vunpack.c.l.b16 %v5543
        %v5803 = vunpack.c.h.b16 %v5543
        %v5804 = vunpack.c.l.b16 %v5544
        %v5805 = vunpack.c.h.b16 %v5544
        %v5806 = vunpack.c.l.b16 %v5545
        %v5807 = vunpack.c.h.b16 %v5545
        %v5808 = vunpack.c.l.b16 %v5546
        %v5809 = vunpack.c.h.b16 %v5546
        %v5810 = vunpack.c.l.b16 %v5547
        %v5811 = vunpack.c.h.b16 %v5547
        %v5812 = vunpack.c.l.b16 %v5548
        %v5813 = vunpack.c.h.b16 %v5548
        %v5814 = vunpack.c.l.b16 %v5549
        %v5815 = vunpack.c.h.b16 %v5549
        %v5816 = vunpack.c.l.b16 %v5550
        %v5817 = vunpack.c.h.b16 %v5550
        %v5818 = vunpack.c.l.b16 %v5551
        %v5819 = vunpack.c.h.b16 %v5551
        %v5820 = vunpack.c.l.b16 %v5552
        %v5821 = vunpack.c.h.b16 %v5552
        %v5822 = vunpack.c.l.b16 %v5553
        %v5823 = vunpack.c.h.b16 %v5553
        %v5824 = vunpack.c.l.b16 %v5554
        %v5825 = vunpack.c.h.b16 %v5554
        %v5826 = vunpack.c.l.b16 %v5555
        %v5827 = vunpack.c.h.b16 %v5555
        %v5828 = vunpack.c.l.b16 %v5556
        %v5829 = vunpack.c.h.b16 %v5556
        %v5830 = vunpack.c.l.b16 %v5557
        %v5831 = vunpack.c.h.b16 %v5557
        %v5832 = vunpack.c.l.b16 %v5558
        %v5833 = vunpack.c.h.b16 %v5558
        %v5834 = vunpack.c.l.b16 %v5559
        %v5835 = vunpack.c.h.b16 %v5559
        %v5836 = vunpack.c.l.b16 %v5560
        %v5837 = vunpack.c.h.b16 %v5560
        %v5838 = vunpack.c.l.b16 %v5561
        %v5839 = vunpack.c.h.b16 %v5561
        %v5840 = vunpack.c.l.b16 %v5562
        %v5841 = vunpack.c.h.b16 %v5562
        %v5842 = vunpack.c.l.b16 %v5563
        %v5843 = vunpack.c.h.b16 %v5563
        %v5844 = vunpack.c.l.b16 %v5564
        %v5845 = vunpack.c.h.b16 %v5564
        %v5846 = vunpack.c.l.b16 %v5565
        %v5847 = vunpack.c.h.b16 %v5565
        %v5848 = vunpack.c.l.b16 %v5566
        %v5849 = vunpack.c.h.b16 %v5566
        %v5850 = vunpack.c.l.b16 %v5567
        %v5851 = vunpack.c.h.b16 %v5567
        %v5852 = vunpack.c.l.b16 %v5568
        %v5853 = vunpack.c.h.b16 %v5568
        %v5854 = vunpack.c.l.b16 %v5569
        %v5855 = vunpack.c.h.b16 %v5569
        %v5856 = vunpack.c.l.b16 %v5570
        %v5857 = vunpack.c.h.b16 %v5570
        %v5858 = vunpack.c.l.b16 %v5571
        %v5859 = vunpack.c.h.b16 %v5571
        %v5860 = vunpack.c.l.b16 %v5572
        %v5861 = vunpack.c.h.b16 %v5572
        %v5862 = vunpack.c.l.b16 %v5573
        %v5863 = vunpack.c.h.b16 %v5573
        %v5864 = vunpack.c.l.b16 %v5574
        %v5865 = vunpack.c.h.b16 %v5574
        %v5866 = vunpack.c.l.b16 %v5575
        %v5867 = vunpack.c.h.b16 %v5575
        %v5868 = vunpack.c.l.b16 %v5576
        %v5869 = vunpack.c.h.b16 %v5576
        %v5870 = vunpack.c.l.b16 %v5577
        %v5871 = vunpack.c.h.b16 %v5577
        %v5872 = vunpack.c.l.b16 %v5578
        %v5873 = vunpack.c.h.b16 %v5578
        %v5874 = vunpack.c.l.b16 %v5579
        %v5875 = vunpack.c.h.b16 %v5579
        %v5876 = vunpack.c.l.b16 %v5580
        %v5877 = vunpack.c.h.b16 %v5580
        %v5878 = vunpack.c.l.b16 %v5581
        %v5879 = vunpack.c.h.b16 %v5581
        %v5880 = vunpack.c.l.b16 %v5582
        %v5881 = vunpack.c.h.b16 %v5582
        %v5882 = vunpack.c.l.b16 %v5583
        %v5883 = vunpack.c.h.b16 %v5583
        %v5884 = vunpack.c.l.b16 %v5584
        %v5885 = vunpack.c.h.b16 %v5584
        %v5886 = vunpack.c.l.b16 %v5585
        %v5887 = vunpack.c.h.b16 %v5585
        %v5888 = vunpack.c.l.b16 %v5586
        %v5889 = vunpack.c.h.b16 %v5586
        %v5890 = vunpack.c.l.b16 %v5587
        %v5891 = vunpack.c.h.b16 %v5587
        %v5892 = vunpack.c.l.b16 %v5588
        %v5893 = vunpack.c.h.b16 %v5588
        %v5894 = vunpack.c.l.b16 %v5589
        %v5895 = vunpack.c.h.b16 %v5589
        %v5896 = vunpack.c.l.b16 %v5590
        %v5897 = vunpack.c.h.b16 %v5590
        %v5898 = vunpack.c.l.b16 %v5591
        %v5899 = vunpack.c.h.b16 %v5591
        %v5900 = vunpack.c.l.b16 %v5592
        %v5901 = vunpack.c.h.b16 %v5592
        %v5902 = vunpack.c.l.b16 %v5593
        %v5903 = vunpack.c.h.b16 %v5593
        %v5904 = vunpack.c.l.b16 %v5594
        %v5905 = vunpack.c.h.b16 %v5594
        %v5906 = vunpack.c.l.b16 %v5595
        %v5907 = vunpack.c.h.b16 %v5595
        %v5908 = vunpack.c.l.b16 %v5596
        %v5909 = vunpack.c.h.b16 %v5596
        %v5910 = vunpack.c.l.b16 %v5597
        %v5911 = vunpack.c.h.b16 %v5597
        %v5912 = vunpack.c.l.b16 %v5598
        %v5913 = vunpack.c.h.b16 %v5598
        %v5914 = vunpack.c.l.b16 %v5599
        %v5915 = vunpack.c.h.b16 %v5599
        %v5916 = vunpack.c.l.b16 %v5600
        %v5917 = vunpack.c.h.b16 %v5600
        %v5918 = vunpack.c.l.b16 %v5601
        %v5919 = vunpack.c.h.b16 %v5601
        %v5920 = vunpack.c.l.b16 %v5602
        %v5921 = vunpack.c.h.b16 %v5602
        %v5922 = vunpack.c.l.b16 %v5603
        %v5923 = vunpack.c.h.b16 %v5603
        %v5924 = vunpack.c.l.b16 %v5604
        %v5925 = vunpack.c.h.b16 %v5604
        %v5926 = vunpack.c.l.b16 %v5605
        %v5927 = vunpack.c.h.b16 %v5605
        %v5928 = vunpack.c.l.b16 %v5606
        %v5929 = vunpack.c.h.b16 %v5606
        %v5930 = vunpack.c.l.b16 %v5607
        %v5931 = vunpack.c.h.b16 %v5607
        %v5932 = vunpack.c.l.b16 %v5608
        %v5933 = vunpack.c.h.b16 %v5608
        %v5934 = vunpack.c.l.b16 %v5609
        %v5935 = vunpack.c.h.b16 %v5609
        %v5936 = vunpack.c.l.b16 %v5610
        %v5937 = vunpack.c.h.b16 %v5610
        %v5938 = vunpack.c.l.b16 %v5611
        %v5939 = vunpack.c.h.b16 %v5611
        %v5940 = vunpack.c.l.b16 %v5612
        %v5941 = vunpack.c.h.b16 %v5612
        %v5942 = vunpack.c.l.b16 %v5613
        %v5943 = vunpack.c.h.b16 %v5613
        %v5944 = vunpack.c.l.b16 %v5614
        %v5945 = vunpack.c.h.b16 %v5614
        %v5946 = vunpack.c.l.b16 %v5615
        %v5947 = vunpack.c.h.b16 %v5615
        %v5948 = vunpack.c.l.b16 %v5616
        %v5949 = vunpack.c.h.b16 %v5616
        %v5950 = vunpack.c.l.b16 %v5617
        %v5951 = vunpack.c.h.b16 %v5617
        %v5952 = vunpack.c.l.b16 %v5618
        %v5953 = vunpack.c.h.b16 %v5618
        %v5954 = vunpack.c.l.b16 %v5619
        %v5955 = vunpack.c.h.b16 %v5619
        %v5956 = vunpack.c.l.b16 %v5620
        %v5957 = vunpack.c.h.b16 %v5620
        %v5958 = vunpack.c.l.b16 %v5621
        %v5959 = vunpack.c.h.b16 %v5621
        %v5960 = vunpack.c.l.b16 %v5622
        %v5961 = vunpack.c.h.b16 %v5622
        %v5962 = vunpack.c.l.b16 %v5623
        %v5963 = vunpack.c.h.b16 %v5623
        %v5964 = vunpack.c.l.b16 %v5624
        %v5965 = vunpack.c.h.b16 %v5624
        %v5966 = vunpack.c.l.b16 %v5625
        %v5967 = vunpack.c.h.b16 %v5625
        %v5968 = vunpack.c.l.b16 %v5626
        %v5969 = vunpack.c.h.b16 %v5626
        %v5970 = vunpack.c.l.b16 %v5627
        %v5971 = vunpack.c.h.b16 %v5627
        %v5972 = vunpack.c.l.b16 %v5628
        %v5973 = vunpack.c.h.b16 %v5628
        %v5974 = vunpack.c.l.b16 %v5629
        %v5975 = vunpack.c.h.b16 %v5629
        %v5976 = vunpack.c.l.b16 %v5630
        %v5977 = vunpack.c.h.b16 %v5630
        %v5978 = vunpack.c.l.b16 %v5631
        %v5979 = vunpack.c.h.b16 %v5631
        %v5980 = vunpack.c.l.b16 %v5632
        %v5981 = vunpack.c.h.b16 %v5632
        %v5982 = vunpack.c.l.b16 %v5633
        %v5983 = vunpack.c.h.b16 %v5633
        %v5984 = vunpack.c.l.b16 %v5634
        %v5985 = vunpack.c.h.b16 %v5634
        %v5986 = vunpack.c.l.b16 %v5635
        %v5987 = vunpack.c.h.b16 %v5635
        %v5988 = vunpack.c.l.b16 %v5636
        %v5989 = vunpack.c.h.b16 %v5636
        %v5990 = vunpack.c.l.b16 %v5637
        %v5991 = vunpack.c.h.b16 %v5637
        %v5992 = vunpack.c.l.b16 %v5638
        %v5993 = vunpack.c.h.b16 %v5638
        %v5994 = vunpack.c.l.b16 %v5639
        %v5995 = vunpack.c.h.b16 %v5639
        %v5996 = vunpack.c.l.b16 %v5640
        %v5997 = vunpack.c.h.b16 %v5640
        %v5998 = vunpack.c.l.b16 %v5641
        %v5999 = vunpack.c.h.b16 %v5641
        %v6000 = vunpack.c.l.b16 %v5642
        %v6001 = vunpack.c.h.b16 %v5642
        %v6002 = vunpack.c.l.b16 %v5643
        %v6003 = vunpack.c.h.b16 %v5643
        %v6004 = vunpack.c.l.b16 %v5644
        %v6005 = vunpack.c.h.b16 %v5644
        %v6006 = vunpack.c.l.b16 %v5645
        %v6007 = vunpack.c.h.b16 %v5645
        %v6008 = vunpack.c.l.b16 %v5646
        %v6009 = vunpack.c.h.b16 %v5646
        %v6010 = vunpack.c.l.b16 %v5647
        %v6011 = vunpack.c.h.b16 %v5647
        %v6012 = vunpack.c.l.b16 %v5648
        %v6013 = vunpack.c.h.b16 %v5648
        %v6014 = vunpack.c.l.b16 %v5649
        %v6015 = vunpack.c.h.b16 %v5649
        %v6016 = vunpack.c.l.b16 %v5650
        %v6017 = vunpack.c.h.b16 %v5650
        %v6018 = vunpack.c.l.b16 %v5651
        %v6019 = vunpack.c.h.b16 %v5651
        %v6020 = vunpack.c.l.b16 %v5652
        %v6021 = vunpack.c.h.b16 %v5652
        %v6022 = vunpack.c.l.b16 %v5653
        %v6023 = vunpack.c.h.b16 %v5653
        %v6024 = vunpack.c.l.b16 %v5654
        %v6025 = vunpack.c.h.b16 %v5654
        %v6026 = vunpack.c.l.b16 %v5655
        %v6027 = vunpack.c.h.b16 %v5655
        %v6028 = vunpack.c.l.b16 %v5656
        %v6029 = vunpack.c.h.b16 %v5656
        %v6030 = vunpack.c.l.b16 %v5657
        %v6031 = vunpack.c.h.b16 %v5657
        %v6032 = vunpack.c.l.b16 %v5658
        %v6033 = vunpack.c.h.b16 %v5658
        %v6034 = vunpack.c.l.b16 %v5659
        %v6035 = vunpack.c.h.b16 %v5659
        %v6036 = vunpack.c.l.b16 %v5660
        %v6037 = vunpack.c.h.b16 %v5660
        %v6038 = vunpack.c.l.b16 %v5661
        %v6039 = vunpack.c.h.b16 %v5661
        %v6040 = vunpack.c.l.b16 %v5662
        %v6041 = vunpack.c.h.b16 %v5662
        %v6042 = vunpack.c.l.b16 %v5663
        %v6043 = vunpack.c.h.b16 %v5663
        %v6044 = vunpack.c.l.b16 %v5664
        %v6045 = vunpack.c.h.b16 %v5664
        %v6046 = vunpack.c.l.b16 %v5665
        %v6047 = vunpack.c.h.b16 %v5665
        %v6048 = vunpack.c.l.b16 %v5666
        %v6049 = vunpack.c.h.b16 %v5666
        %v6050 = vunpack.c.l.b16 %v5667
        %v6051 = vunpack.c.h.b16 %v5667
        %v6052 = vpack.c.b16 %v5798, %v5796
        %v6053 = vpack.c.b16 %v5799, %v5797
        %v6054 = vpack.c.b16 %v5802, %v5800
        %v6055 = vpack.c.b16 %v5803, %v5801
        %v6056 = vpack.c.b16 %v5806, %v5804
        %v6057 = vpack.c.b16 %v5807, %v5805
        %v6058 = vpack.c.b16 %v5810, %v5808
        %v6059 = vpack.c.b16 %v5811, %v5809
        %v6060 = vpack.c.b16 %v5814, %v5812
        %v6061 = vpack.c.b16 %v5815, %v5813
        %v6062 = vpack.c.b16 %v5818, %v5816
        %v6063 = vpack.c.b16 %v5819, %v5817
        %v6064 = vpack.c.b16 %v5822, %v5820
        %v6065 = vpack.c.b16 %v5823, %v5821
        %v6066 = vpack.c.b16 %v5826, %v5824
        %v6067 = vpack.c.b16 %v5827, %v5825
        %v6068 = vpack.c.b16 %v5830, %v5828
        %v6069 = vpack.c.b16 %v5831, %v5829
        %v6070 = vpack.c.b16 %v5834, %v5832
        %v6071 = vpack.c.b16 %v5835, %v5833
        %v6072 = vpack.c.b16 %v5838, %v5836
        %v6073 = vpack.c.b16 %v5839, %v5837
        %v6074 = vpack.c.b16 %v5842, %v5840
        %v6075 = vpack.c.b16 %v5843, %v5841
        %v6076 = vpack.c.b16 %v5846, %v5844
        %v6077 = vpack.c.b16 %v5847, %v5845
        %v6078 = vpack.c.b16 %v5850, %v5848
        %v6079 = vpack.c.b16 %v5851, %v5849
        %v6080 = vpack.c.b16 %v5854, %v5852
        %v6081 = vpack.c.b16 %v5855, %v5853
        %v6082 = vpack.c.b16 %v5858, %v5856
        %v6083 = vpack.c.b16 %v5859, %v5857
        %v6084 = vpack.c.b16 %v5862, %v5860
        %v6085 = vpack.c.b16 %v5863, %v5861
        %v6086 = vpack.c.b16 %v5866, %v5864
        %v6087 = vpack.c.b16 %v5867, %v5865
        %v6088 = vpack.c.b16 %v5870, %v5868
        %v6089 = vpack.c.b16 %v5871, %v5869
        %v6090 = vpack.c.b16 %v5874, %v5872
        %v6091 = vpack.c.b16 %v5875, %v5873
        %v6092 = vpack.c.b16 %v5878, %v5876
        %v6093 = vpack.c.b16 %v5879, %v5877
        %v6094 = vpack.c.b16 %v5882, %v5880
        %v6095 = vpack.c.b16 %v5883, %v5881
        %v6096 = vpack.c.b16 %v5886, %v5884
        %v6097 = vpack.c.b16 %v5887, %v5885
        %v6098 = vpack.c.b16 %v5890, %v5888
        %v6099 = vpack.c.b16 %v5891, %v5889
        %v6100 = vpack.c.b16 %v5894, %v5892
        %v6101 = vpack.c.b16 %v5895, %v5893
        %v6102 = vpack.c.b16 %v5898, %v5896
        %v6103 = vpack.c.b16 %v5899, %v5897
        %v6104 = vpack.c.b16 %v5902, %v5900
        %v6105 = vpack.c.b16 %v5903, %v5901
        %v6106 = vpack.c.b16 %v5906, %v5904
        %v6107 = vpack.c.b16 %v5907, %v5905
        %v6108 = vpack.c.b16 %v5910, %v5908
        %v6109 = vpack.c.b16 %v5911, %v5909
        %v6110 = vpack.c.b16 %v5914, %v5912
        %v6111 = vpack.c.b16 %v5915, %v5913
        %v6112 = vpack.c.b16 %v5918, %v5916
        %v6113 = vpack.c.b16 %v5919, %v5917
        %v6114 = vpack.c.b16 %v5922, %v5920
        %v6115 = vpack.c.b16 %v5923, %v5921
        %v6116 = vpack.c.b16 %v5926, %v5924
        %v6117 = vpack.c.b16 %v5927, %v5925
        %v6118 = vpack.c.b16 %v5930, %v5928
        %v6119 = vpack.c.b16 %v5931, %v5929
        %v6120 = vpack.c.b16 %v5934, %v5932
        %v6121 = vpack.c.b16 %v5935, %v5933
        %v6122 = vpack.c.b16 %v5938, %v5936
        %v6123 = vpack.c.b16 %v5939, %v5937
        %v6124 = vpack.c.b16 %v5942, %v5940
        %v6125 = vpack.c.b16 %v5943, %v5941
        %v6126 = vpack.c.b16 %v5946, %v5944
        %v6127 = vpack.c.b16 %v5947, %v5945
        %v6128 = vpack.c.b16 %v5950, %v5948
        %v6129 = vpack.c.b16 %v5951, %v5949
        %v6130 = vpack.c.b16 %v5954, %v5952
        %v6131 = vpack.c.b16 %v5955, %v5953
        %v6132 = vpack.c.b16 %v5958, %v5956
        %v6133 = vpack.c.b16 %v5959, %v5957
        %v6134 = vpack.c.b16 %v5962, %v5960
        %v6135 = vpack.c.b16 %v5963, %v5961
        %v6136 = vpack.c.b16 %v5966, %v5964
        %v6137 = vpack.c.b16 %v5967, %v5965
        %v6138 = vpack.c.b16 %v5970, %v5968
        %v6139 = vpack.c.b16 %v5971, %v5969
        %v6140 = vpack.c.b16 %v5974, %v5972
        %v6141 = vpack.c.b16 %v5975, %v5973
        %v6142 = vpack.c.b16 %v5978, %v5976
        %v6143 = vpack.c.b16 %v5979, %v5977
        %v6144 = vpack.c.b16 %v5982, %v5980
        %v6145 = vpack.c.b16 %v5983, %v5981
        %v6146 = vpack.c.b16 %v5986, %v5984
        %v6147 = vpack.c.b16 %v5987, %v5985
        %v6148 = vpack.c.b16 %v5990, %v5988
        %v6149 = vpack.c.b16 %v5991, %v5989
        %v6150 = vpack.c.b16 %v5994, %v5992
        %v6151 = vpack.c.b16 %v5995, %v5993
        %v6152 = vpack.c.b16 %v5998, %v5996
        %v6153 = vpack.c.b16 %v5999, %v5997
        %v6154 = vpack.c.b16 %v6002, %v6000
        %v6155 = vpack.c.b16 %v6003, %v6001
        %v6156 = vpack.c.b16 %v6006, %v6004
        %v6157 = vpack.c.b16 %v6007, %v6005
        %v6158 = vpack.c.b16 %v6010, %v6008
        %v6159 = vpack.c.b16 %v6011, %v6009
        %v6160 = vpack.c.b16 %v6014, %v6012
        %v6161 = vpack.c.b16 %v6015, %v6013
        %v6162 = vpack.c.b16 %v6018, %v6016
        %v6163 = vpack.c.b16 %v6019, %v6017
        %v6164 = vpack.c.b16 %v6022, %v6020
        %v6165 = vpack.c.b16 %v6023, %v6021
        %v6166 = vpack.c.b16 %v6026, %v6024
        %v6167 = vpack.c.b16 %v6027, %v6025
        %v6168 = vpack.c.b16 %v6030, %v6028
        %v6169 = vpack.c.b16 %v6031, %v6029
        %v6170 = vpack.c.b16 %v6034, %v6032
        %v6171 = vpack.c.b16 %v6035, %v6033
        %v6172 = vpack.c.b16 %v6038, %v6036
        %v6173 = vpack.c.b16 %v6039, %v6037
        %v6174 = vpack.c.b16 %v6042, %v6040
        %v6175 = vpack.c.b16 %v6043, %v6041
        %v6176 = vpack.c.b16 %v6046, %v6044
        %v6177 = vpack.c.b16 %v6047, %v6045
        %v6178 = vpack.c.b16 %v6050, %v6048
        %v6179 = vpack.c.b16 %v6051, %v6049
        %6308 = vmatprep.subr.bf16.mxu0 %v6067
        %6309 = vmatpush1.bf16.msra.mxu0 %v6066
        %6310 = vmatprep.subr.bf16.mxu0 %v6065
        %6311 = vmatpush1.bf16.msra.mxu0 %v6064
        %6312 = vmatprep.subr.bf16.mxu0 %v6063
        %6313 = vmatpush1.bf16.msra.mxu0 %v6062
        %6314 = vmatprep.subr.bf16.mxu0 %v6061
        %6315 = vmatpush1.bf16.msra.mxu0 %v6060
        %6316 = vmatprep.subr.bf16.mxu0 %v6059
        %6317 = vmatpush1.bf16.msra.mxu0 %v6058
        %6318 = vmatprep.subr.bf16.mxu0 %v6057
        %6319 = vmatpush1.bf16.msra.mxu0 %v6056
        %6320 = vmatprep.subr.bf16.mxu0 %v6055
        %6321 = vmatpush1.bf16.msra.mxu0 %v6054
        %6322 = vmatprep.subr.bf16.mxu0 %v6053
        %6323 = vmatpush1.bf16.msra.mxu0 %v6052
        %6324 = vmatprep.subr.bf16.mxu0 %v6083
        %6325 = vmatpush2.bf16.msra.mxu0 %v6082
        %6326 = vmatprep.subr.bf16.mxu0 %v6081
        %6327 = vmatpush2.bf16.msra.mxu0 %v6080
        %6328 = vmatprep.subr.bf16.mxu0 %v6079
        %6329 = vmatpush2.bf16.msra.mxu0 %v6078
        %6330 = vmatprep.subr.bf16.mxu0 %v6077
        %6331 = vmatpush2.bf16.msra.mxu0 %v6076
        %6332 = vmatprep.subr.bf16.mxu0 %v6075
        %6333 = vmatpush2.bf16.msra.mxu0 %v6074
        %6334 = vmatprep.subr.bf16.mxu0 %v6073
        %6335 = vmatpush2.bf16.msra.mxu0 %v6072
        %6336 = vmatprep.subr.bf16.mxu0 %v6071
        %6337 = vmatpush2.bf16.msra.mxu0 %v6070
        %6338 = vmatprep.subr.bf16.mxu0 %v6069
        %6339 = vmatpush2.bf16.msra.mxu0 %v6068
        %6340 = vmatprep.mubr.bf16.mxu0 %v5533
        %6341 = vmatmul.mubr.bf16.gmra.mxu0 %v5532
        %v6342 = vpop.f32.mrf.mxu0
        %v6343 = vadd.f32 0.0, %v6342
        %v6344 = vpop.f32.mrf.mxu0
        %v6345 = vadd.f32 0.0, %v6344
        %v6346 = vpop.f32.mrf.mxu0
        %v6347 = vadd.f32 0.0, %v6346
        %v6348 = vpop.f32.mrf.mxu0
        %v6349 = vadd.f32 0.0, %v6348
        %6350 = vdwg.mxu0
        %6351 = vmatprep.subr.bf16.mxu0 %v6099
        %6352 = vmatpush1.bf16.msra.mxu0 %v6098
        %6353 = vmatprep.subr.bf16.mxu0 %v6097
        %6354 = vmatpush1.bf16.msra.mxu0 %v6096
        %6355 = vmatprep.subr.bf16.mxu0 %v6095
        %6356 = vmatpush1.bf16.msra.mxu0 %v6094
        %6357 = vmatprep.subr.bf16.mxu0 %v6093
        %6358 = vmatpush1.bf16.msra.mxu0 %v6092
        %6359 = vmatprep.subr.bf16.mxu0 %v6091
        %6360 = vmatpush1.bf16.msra.mxu0 %v6090
        %6361 = vmatprep.subr.bf16.mxu0 %v6089
        %6362 = vmatpush1.bf16.msra.mxu0 %v6088
        %6363 = vmatprep.subr.bf16.mxu0 %v6087
        %6364 = vmatpush1.bf16.msra.mxu0 %v6086
        %6365 = vmatprep.subr.bf16.mxu0 %v6085
        %6366 = vmatpush1.bf16.msra.mxu0 %v6084
        %6367 = vmatprep.subr.bf16.mxu0 %v6115
        %6368 = vmatpush2.bf16.msra.mxu0 %v6114
        %6369 = vmatprep.subr.bf16.mxu0 %v6113
        %6370 = vmatpush2.bf16.msra.mxu0 %v6112
        %6371 = vmatprep.subr.bf16.mxu0 %v6111
        %6372 = vmatpush2.bf16.msra.mxu0 %v6110
        %6373 = vmatprep.subr.bf16.mxu0 %v6109
        %6374 = vmatpush2.bf16.msra.mxu0 %v6108
        %6375 = vmatprep.subr.bf16.mxu0 %v6107
        %6376 = vmatpush2.bf16.msra.mxu0 %v6106
        %6377 = vmatprep.subr.bf16.mxu0 %v6105
        %6378 = vmatpush2.bf16.msra.mxu0 %v6104
        %6379 = vmatprep.subr.bf16.mxu0 %v6103
        %6380 = vmatpush2.bf16.msra.mxu0 %v6102
        %6381 = vmatprep.subr.bf16.mxu0 %v6101
        %6382 = vmatpush2.bf16.msra.mxu0 %v6100
        %6383 = vmatprep.mubr.bf16.mxu0 %v5535
        %6384 = vmatmul.mubr.bf16.gmra.mxu0 %v5534
        %v6385 = vpop.f32.mrf.mxu0
        %v6386 = vadd.f32 %v6343, %v6385
        %v6387 = vpop.f32.mrf.mxu0
        %v6388 = vadd.f32 %v6345, %v6387
        %v6389 = vpop.f32.mrf.mxu0
        %v6390 = vadd.f32 %v6347, %v6389
        %v6391 = vpop.f32.mrf.mxu0
        %v6392 = vadd.f32 %v6349, %v6391
        %6393 = vdwg.mxu0
        %6394 = vmatprep.subr.bf16.mxu0 %v6131
        %6395 = vmatpush1.bf16.msra.mxu0 %v6130
        %6396 = vmatprep.subr.bf16.mxu0 %v6129
        %6397 = vmatpush1.bf16.msra.mxu0 %v6128
        %6398 = vmatprep.subr.bf16.mxu0 %v6127
        %6399 = vmatpush1.bf16.msra.mxu0 %v6126
        %6400 = vmatprep.subr.bf16.mxu0 %v6125
        %6401 = vmatpush1.bf16.msra.mxu0 %v6124
        %6402 = vmatprep.subr.bf16.mxu0 %v6123
        %6403 = vmatpush1.bf16.msra.mxu0 %v6122
        %6404 = vmatprep.subr.bf16.mxu0 %v6121
        %6405 = vmatpush1.bf16.msra.mxu0 %v6120
        %6406 = vmatprep.subr.bf16.mxu0 %v6119
        %6407 = vmatpush1.bf16.msra.mxu0 %v6118
        %6408 = vmatprep.subr.bf16.mxu0 %v6117
        %6409 = vmatpush1.bf16.msra.mxu0 %v6116
        %6410 = vmatprep.subr.bf16.mxu0 %v6147
        %6411 = vmatpush2.bf16.msra.mxu0 %v6146
        %6412 = vmatprep.subr.bf16.mxu0 %v6145
        %6413 = vmatpush2.bf16.msra.mxu0 %v6144
        %6414 = vmatprep.subr.bf16.mxu0 %v6143
        %6415 = vmatpush2.bf16.msra.mxu0 %v6142
        %6416 = vmatprep.subr.bf16.mxu0 %v6141
        %6417 = vmatpush2.bf16.msra.mxu0 %v6140
        %6418 = vmatprep.subr.bf16.mxu0 %v6139
        %6419 = vmatpush2.bf16.msra.mxu0 %v6138
        %6420 = vmatprep.subr.bf16.mxu0 %v6137
        %6421 = vmatpush2.bf16.msra.mxu0 %v6136
        %6422 = vmatprep.subr.bf16.mxu0 %v6135
        %6423 = vmatpush2.bf16.msra.mxu0 %v6134
        %6424 = vmatprep.subr.bf16.mxu0 %v6133
        %6425 = vmatpush2.bf16.msra.mxu0 %v6132
        %6426 = vmatprep.mubr.bf16.mxu0 %v5537
        %6427 = vmatmul.mubr.bf16.gmra.mxu0 %v5536
        %v6428 = vpop.f32.mrf.mxu0
        %v6429 = vadd.f32 %v6386, %v6428
        %v6430 = vpop.f32.mrf.mxu0
        %v6431 = vadd.f32 %v6388, %v6430
        %v6432 = vpop.f32.mrf.mxu0
        %v6433 = vadd.f32 %v6390, %v6432
        %v6434 = vpop.f32.mrf.mxu0
        %v6435 = vadd.f32 %v6392, %v6434
        %6436 = vdwg.mxu0
        %6437 = vmatprep.subr.bf16.mxu0 %v6163
        %6438 = vmatpush1.bf16.msra.mxu0 %v6162
        %6439 = vmatprep.subr.bf16.mxu0 %v6161
        %6440 = vmatpush1.bf16.msra.mxu0 %v6160
        %6441 = vmatprep.subr.bf16.mxu0 %v6159
        %6442 = vmatpush1.bf16.msra.mxu0 %v6158
        %6443 = vmatprep.subr.bf16.mxu0 %v6157
        %6444 = vmatpush1.bf16.msra.mxu0 %v6156
        %6445 = vmatprep.subr.bf16.mxu0 %v6155
        %6446 = vmatpush1.bf16.msra.mxu0 %v6154
        %6447 = vmatprep.subr.bf16.mxu0 %v6153
        %6448 = vmatpush1.bf16.msra.mxu0 %v6152
        %6449 = vmatprep.subr.bf16.mxu0 %v6151
        %6450 = vmatpush1.bf16.msra.mxu0 %v6150
        %6451 = vmatprep.subr.bf16.mxu0 %v6149
        %6452 = vmatpush1.bf16.msra.mxu0 %v6148
        %6453 = vmatprep.subr.bf16.mxu0 %v6179
        %6454 = vmatpush2.bf16.msra.mxu0 %v6178
        %6455 = vmatprep.subr.bf16.mxu0 %v6177
        %6456 = vmatpush2.bf16.msra.mxu0 %v6176
        %6457 = vmatprep.subr.bf16.mxu0 %v6175
        %6458 = vmatpush2.bf16.msra.mxu0 %v6174
        %6459 = vmatprep.subr.bf16.mxu0 %v6173
        %6460 = vmatpush2.bf16.msra.mxu0 %v6172
        %6461 = vmatprep.subr.bf16.mxu0 %v6171
        %6462 = vmatpush2.bf16.msra.mxu0 %v6170
        %6463 = vmatprep.subr.bf16.mxu0 %v6169
        %6464 = vmatpush2.bf16.msra.mxu0 %v6168
        %6465 = vmatprep.subr.bf16.mxu0 %v6167
        %6466 = vmatpush2.bf16.msra.mxu0 %v6166
        %6467 = vmatprep.subr.bf16.mxu0 %v6165
        %6468 = vmatpush2.bf16.msra.mxu0 %v6164
        %6469 = vmatprep.mubr.bf16.mxu0 %v5539
        %6470 = vmatmul.mubr.bf16.gmra.mxu0 %v5538
        %v6471 = vpop.f32.mrf.mxu0
        %v6472 = vadd.f32 %v6429, %v6471
        %v6473 = vpop.f32.mrf.mxu0
        %v6474 = vadd.f32 %v6431, %v6473
        %v6475 = vpop.f32.mrf.mxu0
        %v6476 = vadd.f32 %v6433, %v6475
        %v6477 = vpop.f32.mrf.mxu0
        %v6478 = vadd.f32 %v6435, %v6477
        %6479 = vdwg.mxu0
        %v6480 = vadd.f32 %v4460, %v6472
        %v6481 = vadd.f32 %v4461, %v6474
        %v6482 = vadd.f32 %v4462, %v6476
        %v6483 = vadd.f32 %v4463, %v6478
        %v6484 = vld [vmem:[%s16] sm:$0x3]
        %v6486 = vlaneseq
        %v6487 = vshrl.u32 %v6486, 7
        %v6488 = vsub.s32 0, %v6487
        %v6489 = vrot.slane %v6484, %v6488
        %v6490 = vlaneseq
        %v6491 = vshrl.u32 %v6490, 7
        %v6492 = vsub.s32 1, %v6491
        %v6493 = vrot.slane %v6484, %v6492
        %v6496 = vadd.f32 %v6480, %v6489
        %v6497 = vadd.f32 %v6481, %v6493
        %v6498 = vadd.f32 %v6482, %v6489
        %v6499 = vadd.f32 %v6483, %v6493
        %s6500 = scalar_lea.vmem %s5, 2
        %v6501 = vld [vmem:[%s6500] sm:$0x3]
        %s6502 = scalar_lea.vmem [#allocation12], 2
        %v6503 = vld [vmem:[%s6502] sm:$0x3]
        %v6504 = vadd.f32 %v6496, %v6497
        %6505 = vadd.xlane.f32.xlu0 %v6504
        %v6506 = vpop.xlane.xlu0 %6505
        %v6507 = vsel %vm2869, %v6498, 0.0
        %v6508 = vsel %vm2869, %v6499, 0.0
        %v6509 = vadd.f32 %v6507, %v6508
        %6510 = vadd.xlane.f32.xlu0 %v6509
        %v6511 = vpop.xlane.xlu0 %6510
        %v6512 = vmul.f32 %v6506, %v2875
        %v6513 = vmul.f32 %v6511, %v2875
        %v6514 = vsub.f32 %v6496, %v6512
        %v6515 = vsub.f32 %v6497, %v6512
        %v6516 = vsub.f32 %v6498, %v6513
        %v6517 = vsub.f32 %v6499, %v6513
        %v6518 = vmul.f32 %v6514, %v6514
        %v6519 = vmul.f32 %v6515, %v6515
        %v6520 = vmul.f32 %v6516, %v6516
        %v6521 = vmul.f32 %v6517, %v6517
        %v6522 = vadd.f32 %v6518, %v6519
        %6523 = vadd.xlane.f32.xlu0 %v6522
        %v6524 = vpop.xlane.xlu0 %6523
        %v6525 = vsel %vm2869, %v6520, 0.0
        %v6526 = vsel %vm2869, %v6521, 0.0
        %v6527 = vadd.f32 %v6525, %v6526
        %6528 = vadd.xlane.f32.xlu0 %v6527
        %v6529 = vpop.xlane.xlu0 %6528
        %v6530 = vmul.f32 %v6524, %v2875
        %v6531 = vmul.f32 %v6529, %v2875
        %v6532 = vadd.f32 %v6530, 1e-06
        %v6533 = vadd.f32 %v6531, 1e-06
        %v6534 = vrsqrt.pop %v6532
        %v6535 = vrsqrt.pop %v6533
        %v6536 = vmul.f32 %v6514, %v6534
        %v6537 = vmul.f32 %v6515, %v6534
        %v6538 = vmul.f32 %v6516, %v6535
        %v6539 = vmul.f32 %v6517, %v6535
        %v6541 = vlaneseq
        %v6542 = vshrl.u32 %v6541, 7
        %v6543 = vsub.s32 0, %v6542
        %v6544 = vrot.slane %v6501, %v6543
        %v6545 = vlaneseq
        %v6546 = vshrl.u32 %v6545, 7
        %v6547 = vsub.s32 1, %v6546
        %v6548 = vrot.slane %v6501, %v6547
        %v6551 = vmul.f32 %v6536, %v6544
        %v6552 = vmul.f32 %v6537, %v6548
        %v6553 = vmul.f32 %v6538, %v6544
        %v6554 = vmul.f32 %v6539, %v6548
        %v6556 = vlaneseq
        %v6557 = vshrl.u32 %v6556, 7
        %v6558 = vsub.s32 0, %v6557
        %v6559 = vrot.slane %v6503, %v6558
        %v6560 = vlaneseq
        %v6561 = vshrl.u32 %v6560, 7
        %v6562 = vsub.s32 1, %v6561
        %v6563 = vrot.slane %v6503, %v6562
        %v6566 = vadd.f32 %v6551, %v6559
        %v6567 = vadd.f32 %v6552, %v6563
        %v6568 = vadd.f32 %v6553, %v6559
        %v6569 = vadd.f32 %v6554, %v6563
        %v6570 = vpack.c.bf16 %v6568, %v6566
        %v6571 = vpack.c.bf16 %v6569, %v6567
        %s6572 = scalar_lea.vmem [#allocation13], 768
        %v6573 = vld [vmem:[%s6572] sm:$0xff]
        %v6574 = vld [vmem:[%s6572 + $0x8] sm:$0xff]
        %v6575 = vld [vmem:[%s6572 + $0x10] sm:$0xff]
        %v6576 = vld [vmem:[%s6572 + $0x18] sm:$0xff]
        %v6577 = vld [vmem:[%s6572 + $0x20] sm:$0xff]
        %v6578 = vld [vmem:[%s6572 + $0x28] sm:$0xff]
        %v6579 = vld [vmem:[%s6572 + $0x30] sm:$0xff]
        %v6580 = vld [vmem:[%s6572 + $0x38] sm:$0xff]
        %v6581 = vld [vmem:[%s6572 + $0x40] sm:$0xff]
        %v6582 = vld [vmem:[%s6572 + $0x48] sm:$0xff]
        %v6583 = vld [vmem:[%s6572 + $0x50] sm:$0xff]
        %v6584 = vld [vmem:[%s6572 + $0x58] sm:$0xff]
        %v6585 = vld [vmem:[%s6572 + $0x60] sm:$0xff]
        %v6586 = vld [vmem:[%s6572 + $0x68] sm:$0xff]
        %v6587 = vld [vmem:[%s6572 + $0x70] sm:$0xff]
        %v6588 = vld [vmem:[%s6572 + $0x78] sm:$0xff]
        %v6589 = vld [vmem:[%s6572 + $0x80] sm:$0xff]
        %v6590 = vld [vmem:[%s6572 + $0x88] sm:$0xff]
        %v6591 = vld [vmem:[%s6572 + $0x90] sm:$0xff]
        %v6592 = vld [vmem:[%s6572 + $0x98] sm:$0xff]
        %v6593 = vld [vmem:[%s6572 + $0xa0] sm:$0xff]
        %v6594 = vld [vmem:[%s6572 + $0xa8] sm:$0xff]
        %v6595 = vld [vmem:[%s6572 + $0xb0] sm:$0xff]
        %v6596 = vld [vmem:[%s6572 + $0xb8] sm:$0xff]
        %v6597 = vld [vmem:[%s6572 + $0xc0] sm:$0xff]
        %v6598 = vld [vmem:[%s6572 + $0xc8] sm:$0xff]
        %v6599 = vld [vmem:[%s6572 + $0xd0] sm:$0xff]
        %v6600 = vld [vmem:[%s6572 + $0xd8] sm:$0xff]
        %v6601 = vld [vmem:[%s6572 + $0xe0] sm:$0xff]
        %v6602 = vld [vmem:[%s6572 + $0xe8] sm:$0xff]
        %v6603 = vld [vmem:[%s6572 + $0xf0] sm:$0xff]
        %v6604 = vld [vmem:[%s6572 + $0xf8] sm:$0xff]
        %v6605 = vld [vmem:[%s6572 + $0x100] sm:$0xff]
        %v6606 = vld [vmem:[%s6572 + $0x108] sm:$0xff]
        %v6607 = vld [vmem:[%s6572 + $0x110] sm:$0xff]
        %v6608 = vld [vmem:[%s6572 + $0x118] sm:$0xff]
        %v6609 = vld [vmem:[%s6572 + $0x120] sm:$0xff]
        %v6610 = vld [vmem:[%s6572 + $0x128] sm:$0xff]
        %v6611 = vld [vmem:[%s6572 + $0x130] sm:$0xff]
        %v6612 = vld [vmem:[%s6572 + $0x138] sm:$0xff]
        %v6613 = vld [vmem:[%s6572 + $0x140] sm:$0xff]
        %v6614 = vld [vmem:[%s6572 + $0x148] sm:$0xff]
        %v6615 = vld [vmem:[%s6572 + $0x150] sm:$0xff]
        %v6616 = vld [vmem:[%s6572 + $0x158] sm:$0xff]
        %v6617 = vld [vmem:[%s6572 + $0x160] sm:$0xff]
        %v6618 = vld [vmem:[%s6572 + $0x168] sm:$0xff]
        %v6619 = vld [vmem:[%s6572 + $0x170] sm:$0xff]
        %v6620 = vld [vmem:[%s6572 + $0x178] sm:$0xff]
        %v6621 = vld [vmem:[%s6572 + $0x180] sm:$0xff]
        %v6622 = vld [vmem:[%s6572 + $0x188] sm:$0xff]
        %v6623 = vld [vmem:[%s6572 + $0x190] sm:$0xff]
        %v6624 = vld [vmem:[%s6572 + $0x198] sm:$0xff]
        %v6625 = vld [vmem:[%s6572 + $0x1a0] sm:$0xff]
        %v6626 = vld [vmem:[%s6572 + $0x1a8] sm:$0xff]
        %v6627 = vld [vmem:[%s6572 + $0x1b0] sm:$0xff]
        %v6628 = vld [vmem:[%s6572 + $0x1b8] sm:$0xff]
        %v6629 = vld [vmem:[%s6572 + $0x1c0] sm:$0xff]
        %v6630 = vld [vmem:[%s6572 + $0x1c8] sm:$0xff]
        %v6631 = vld [vmem:[%s6572 + $0x1d0] sm:$0xff]
        %v6632 = vld [vmem:[%s6572 + $0x1d8] sm:$0xff]
        %v6633 = vld [vmem:[%s6572 + $0x1e0] sm:$0xff]
        %v6634 = vld [vmem:[%s6572 + $0x1e8] sm:$0xff]
        %v6635 = vld [vmem:[%s6572 + $0x1f0] sm:$0xff]
        %v6636 = vld [vmem:[%s6572 + $0x1f8] sm:$0xff]
        %v6637 = vld [vmem:[%s6572 + $0x200] sm:$0xff]
        %v6638 = vld [vmem:[%s6572 + $0x208] sm:$0xff]
        %v6639 = vld [vmem:[%s6572 + $0x210] sm:$0xff]
        %v6640 = vld [vmem:[%s6572 + $0x218] sm:$0xff]
        %v6641 = vld [vmem:[%s6572 + $0x220] sm:$0xff]
        %v6642 = vld [vmem:[%s6572 + $0x228] sm:$0xff]
        %v6643 = vld [vmem:[%s6572 + $0x230] sm:$0xff]
        %v6644 = vld [vmem:[%s6572 + $0x238] sm:$0xff]
        %v6645 = vld [vmem:[%s6572 + $0x240] sm:$0xff]
        %v6646 = vld [vmem:[%s6572 + $0x248] sm:$0xff]
        %v6647 = vld [vmem:[%s6572 + $0x250] sm:$0xff]
        %v6648 = vld [vmem:[%s6572 + $0x258] sm:$0xff]
        %v6649 = vld [vmem:[%s6572 + $0x260] sm:$0xff]
        %v6650 = vld [vmem:[%s6572 + $0x268] sm:$0xff]
        %v6651 = vld [vmem:[%s6572 + $0x270] sm:$0xff]
        %v6652 = vld [vmem:[%s6572 + $0x278] sm:$0xff]
        %v6653 = vld [vmem:[%s6572 + $0x280] sm:$0xff]
        %v6654 = vld [vmem:[%s6572 + $0x288] sm:$0xff]
        %v6655 = vld [vmem:[%s6572 + $0x290] sm:$0xff]
        %v6656 = vld [vmem:[%s6572 + $0x298] sm:$0xff]
        %v6657 = vld [vmem:[%s6572 + $0x2a0] sm:$0xff]
        %v6658 = vld [vmem:[%s6572 + $0x2a8] sm:$0xff]
        %v6659 = vld [vmem:[%s6572 + $0x2b0] sm:$0xff]
        %v6660 = vld [vmem:[%s6572 + $0x2b8] sm:$0xff]
        %v6661 = vld [vmem:[%s6572 + $0x2c0] sm:$0xff]
        %v6662 = vld [vmem:[%s6572 + $0x2c8] sm:$0xff]
        %v6663 = vld [vmem:[%s6572 + $0x2d0] sm:$0xff]
        %v6664 = vld [vmem:[%s6572 + $0x2d8] sm:$0xff]
        %v6665 = vld [vmem:[%s6572 + $0x2e0] sm:$0xff]
        %v6666 = vld [vmem:[%s6572 + $0x2e8] sm:$0xff]
        %v6667 = vld [vmem:[%s6572 + $0x2f0] sm:$0xff]
        %v6668 = vld [vmem:[%s6572 + $0x2f8] sm:$0xff]
        %s6669 = scalar_lea.vmem [#allocation15], 6
        %v6670 = vld [vmem:[%s6669] sm:$0x3f]
        %v6672 = vlaneseq
        %v6673 = vshrl.u32 %v6672, 7
        %v6674 = vsub.s32 0, %v6673
        %v6675 = vrot.slane %v6670, %v6674
        %v6676 = vlaneseq
        %v6677 = vshrl.u32 %v6676, 7
        %v6678 = vsub.s32 1, %v6677
        %v6679 = vrot.slane %v6670, %v6678
        %v6680 = vlaneseq
        %v6681 = vshrl.u32 %v6680, 7
        %v6682 = vsub.s32 2, %v6681
        %v6683 = vrot.slane %v6670, %v6682
        %v6684 = vlaneseq
        %v6685 = vshrl.u32 %v6684, 7
        %v6686 = vsub.s32 3, %v6685
        %v6687 = vrot.slane %v6670, %v6686
        %v6688 = vlaneseq
        %v6689 = vshrl.u32 %v6688, 7
        %v6690 = vsub.s32 4, %v6689
        %v6691 = vrot.slane %v6670, %v6690
        %v6692 = vlaneseq
        %v6693 = vshrl.u32 %v6692, 7
        %v6694 = vsub.s32 5, %v6693
        %v6695 = vrot.slane %v6670, %v6694
        %v6798 = vunpack.c.l.b16 %v6573
        %v6799 = vunpack.c.h.b16 %v6573
        %v6800 = vunpack.c.l.b16 %v6574
        %v6801 = vunpack.c.h.b16 %v6574
        %v6802 = vunpack.c.l.b16 %v6575
        %v6803 = vunpack.c.h.b16 %v6575
        %v6804 = vunpack.c.l.b16 %v6576
        %v6805 = vunpack.c.h.b16 %v6576
        %v6806 = vunpack.c.l.b16 %v6577
        %v6807 = vunpack.c.h.b16 %v6577
        %v6808 = vunpack.c.l.b16 %v6578
        %v6809 = vunpack.c.h.b16 %v6578
        %v6810 = vunpack.c.l.b16 %v6579
        %v6811 = vunpack.c.h.b16 %v6579
        %v6812 = vunpack.c.l.b16 %v6580
        %v6813 = vunpack.c.h.b16 %v6580
        %v6814 = vunpack.c.l.b16 %v6581
        %v6815 = vunpack.c.h.b16 %v6581
        %v6816 = vunpack.c.l.b16 %v6582
        %v6817 = vunpack.c.h.b16 %v6582
        %v6818 = vunpack.c.l.b16 %v6583
        %v6819 = vunpack.c.h.b16 %v6583
        %v6820 = vunpack.c.l.b16 %v6584
        %v6821 = vunpack.c.h.b16 %v6584
        %v6822 = vunpack.c.l.b16 %v6585
        %v6823 = vunpack.c.h.b16 %v6585
        %v6824 = vunpack.c.l.b16 %v6586
        %v6825 = vunpack.c.h.b16 %v6586
        %v6826 = vunpack.c.l.b16 %v6587
        %v6827 = vunpack.c.h.b16 %v6587
        %v6828 = vunpack.c.l.b16 %v6588
        %v6829 = vunpack.c.h.b16 %v6588
        %v6830 = vunpack.c.l.b16 %v6589
        %v6831 = vunpack.c.h.b16 %v6589
        %v6832 = vunpack.c.l.b16 %v6590
        %v6833 = vunpack.c.h.b16 %v6590
        %v6834 = vunpack.c.l.b16 %v6591
        %v6835 = vunpack.c.h.b16 %v6591
        %v6836 = vunpack.c.l.b16 %v6592
        %v6837 = vunpack.c.h.b16 %v6592
        %v6838 = vunpack.c.l.b16 %v6593
        %v6839 = vunpack.c.h.b16 %v6593
        %v6840 = vunpack.c.l.b16 %v6594
        %v6841 = vunpack.c.h.b16 %v6594
        %v6842 = vunpack.c.l.b16 %v6595
        %v6843 = vunpack.c.h.b16 %v6595
        %v6844 = vunpack.c.l.b16 %v6596
        %v6845 = vunpack.c.h.b16 %v6596
        %v6846 = vunpack.c.l.b16 %v6597
        %v6847 = vunpack.c.h.b16 %v6597
        %v6848 = vunpack.c.l.b16 %v6598
        %v6849 = vunpack.c.h.b16 %v6598
        %v6850 = vunpack.c.l.b16 %v6599
        %v6851 = vunpack.c.h.b16 %v6599
        %v6852 = vunpack.c.l.b16 %v6600
        %v6853 = vunpack.c.h.b16 %v6600
        %v6854 = vunpack.c.l.b16 %v6601
        %v6855 = vunpack.c.h.b16 %v6601
        %v6856 = vunpack.c.l.b16 %v6602
        %v6857 = vunpack.c.h.b16 %v6602
        %v6858 = vunpack.c.l.b16 %v6603
        %v6859 = vunpack.c.h.b16 %v6603
        %v6860 = vunpack.c.l.b16 %v6604
        %v6861 = vunpack.c.h.b16 %v6604
        %v6862 = vunpack.c.l.b16 %v6605
        %v6863 = vunpack.c.h.b16 %v6605
        %v6864 = vunpack.c.l.b16 %v6606
        %v6865 = vunpack.c.h.b16 %v6606
        %v6866 = vunpack.c.l.b16 %v6607
        %v6867 = vunpack.c.h.b16 %v6607
        %v6868 = vunpack.c.l.b16 %v6608
        %v6869 = vunpack.c.h.b16 %v6608
        %v6870 = vunpack.c.l.b16 %v6609
        %v6871 = vunpack.c.h.b16 %v6609
        %v6872 = vunpack.c.l.b16 %v6610
        %v6873 = vunpack.c.h.b16 %v6610
        %v6874 = vunpack.c.l.b16 %v6611
        %v6875 = vunpack.c.h.b16 %v6611
        %v6876 = vunpack.c.l.b16 %v6612
        %v6877 = vunpack.c.h.b16 %v6612
        %v6878 = vunpack.c.l.b16 %v6613
        %v6879 = vunpack.c.h.b16 %v6613
        %v6880 = vunpack.c.l.b16 %v6614
        %v6881 = vunpack.c.h.b16 %v6614
        %v6882 = vunpack.c.l.b16 %v6615
        %v6883 = vunpack.c.h.b16 %v6615
        %v6884 = vunpack.c.l.b16 %v6616
        %v6885 = vunpack.c.h.b16 %v6616
        %v6886 = vunpack.c.l.b16 %v6617
        %v6887 = vunpack.c.h.b16 %v6617
        %v6888 = vunpack.c.l.b16 %v6618
        %v6889 = vunpack.c.h.b16 %v6618
        %v6890 = vunpack.c.l.b16 %v6619
        %v6891 = vunpack.c.h.b16 %v6619
        %v6892 = vunpack.c.l.b16 %v6620
        %v6893 = vunpack.c.h.b16 %v6620
        %v6894 = vunpack.c.l.b16 %v6621
        %v6895 = vunpack.c.h.b16 %v6621
        %v6896 = vunpack.c.l.b16 %v6622
        %v6897 = vunpack.c.h.b16 %v6622
        %v6898 = vunpack.c.l.b16 %v6623
        %v6899 = vunpack.c.h.b16 %v6623
        %v6900 = vunpack.c.l.b16 %v6624
        %v6901 = vunpack.c.h.b16 %v6624
        %v6902 = vunpack.c.l.b16 %v6625
        %v6903 = vunpack.c.h.b16 %v6625
        %v6904 = vunpack.c.l.b16 %v6626
        %v6905 = vunpack.c.h.b16 %v6626
        %v6906 = vunpack.c.l.b16 %v6627
        %v6907 = vunpack.c.h.b16 %v6627
        %v6908 = vunpack.c.l.b16 %v6628
        %v6909 = vunpack.c.h.b16 %v6628
        %v6910 = vunpack.c.l.b16 %v6629
        %v6911 = vunpack.c.h.b16 %v6629
        %v6912 = vunpack.c.l.b16 %v6630
        %v6913 = vunpack.c.h.b16 %v6630
        %v6914 = vunpack.c.l.b16 %v6631
        %v6915 = vunpack.c.h.b16 %v6631
        %v6916 = vunpack.c.l.b16 %v6632
        %v6917 = vunpack.c.h.b16 %v6632
        %v6918 = vunpack.c.l.b16 %v6633
        %v6919 = vunpack.c.h.b16 %v6633
        %v6920 = vunpack.c.l.b16 %v6634
        %v6921 = vunpack.c.h.b16 %v6634
        %v6922 = vunpack.c.l.b16 %v6635
        %v6923 = vunpack.c.h.b16 %v6635
        %v6924 = vunpack.c.l.b16 %v6636
        %v6925 = vunpack.c.h.b16 %v6636
        %v6926 = vunpack.c.l.b16 %v6637
        %v6927 = vunpack.c.h.b16 %v6637
        %v6928 = vunpack.c.l.b16 %v6638
        %v6929 = vunpack.c.h.b16 %v6638
        %v6930 = vunpack.c.l.b16 %v6639
        %v6931 = vunpack.c.h.b16 %v6639
        %v6932 = vunpack.c.l.b16 %v6640
        %v6933 = vunpack.c.h.b16 %v6640
        %v6934 = vunpack.c.l.b16 %v6641
        %v6935 = vunpack.c.h.b16 %v6641
        %v6936 = vunpack.c.l.b16 %v6642
        %v6937 = vunpack.c.h.b16 %v6642
        %v6938 = vunpack.c.l.b16 %v6643
        %v6939 = vunpack.c.h.b16 %v6643
        %v6940 = vunpack.c.l.b16 %v6644
        %v6941 = vunpack.c.h.b16 %v6644
        %v6942 = vunpack.c.l.b16 %v6645
        %v6943 = vunpack.c.h.b16 %v6645
        %v6944 = vunpack.c.l.b16 %v6646
        %v6945 = vunpack.c.h.b16 %v6646
        %v6946 = vunpack.c.l.b16 %v6647
        %v6947 = vunpack.c.h.b16 %v6647
        %v6948 = vunpack.c.l.b16 %v6648
        %v6949 = vunpack.c.h.b16 %v6648
        %v6950 = vunpack.c.l.b16 %v6649
        %v6951 = vunpack.c.h.b16 %v6649
        %v6952 = vunpack.c.l.b16 %v6650
        %v6953 = vunpack.c.h.b16 %v6650
        %v6954 = vunpack.c.l.b16 %v6651
        %v6955 = vunpack.c.h.b16 %v6651
        %v6956 = vunpack.c.l.b16 %v6652
        %v6957 = vunpack.c.h.b16 %v6652
        %v6958 = vunpack.c.l.b16 %v6653
        %v6959 = vunpack.c.h.b16 %v6653
        %v6960 = vunpack.c.l.b16 %v6654
        %v6961 = vunpack.c.h.b16 %v6654
        %v6962 = vunpack.c.l.b16 %v6655
        %v6963 = vunpack.c.h.b16 %v6655
        %v6964 = vunpack.c.l.b16 %v6656
        %v6965 = vunpack.c.h.b16 %v6656
        %v6966 = vunpack.c.l.b16 %v6657
        %v6967 = vunpack.c.h.b16 %v6657
        %v6968 = vunpack.c.l.b16 %v6658
        %v6969 = vunpack.c.h.b16 %v6658
        %v6970 = vunpack.c.l.b16 %v6659
        %v6971 = vunpack.c.h.b16 %v6659
        %v6972 = vunpack.c.l.b16 %v6660
        %v6973 = vunpack.c.h.b16 %v6660
        %v6974 = vunpack.c.l.b16 %v6661
        %v6975 = vunpack.c.h.b16 %v6661
        %v6976 = vunpack.c.l.b16 %v6662
        %v6977 = vunpack.c.h.b16 %v6662
        %v6978 = vunpack.c.l.b16 %v6663
        %v6979 = vunpack.c.h.b16 %v6663
        %v6980 = vunpack.c.l.b16 %v6664
        %v6981 = vunpack.c.h.b16 %v6664
        %v6982 = vunpack.c.l.b16 %v6665
        %v6983 = vunpack.c.h.b16 %v6665
        %v6984 = vunpack.c.l.b16 %v6666
        %v6985 = vunpack.c.h.b16 %v6666
        %v6986 = vunpack.c.l.b16 %v6667
        %v6987 = vunpack.c.h.b16 %v6667
        %v6988 = vunpack.c.l.b16 %v6668
        %v6989 = vunpack.c.h.b16 %v6668
        %v6990 = vpack.c.b16 %v6804, %v6798
        %v6991 = vpack.c.b16 %v6805, %v6799
        %v6992 = vpack.c.b16 %v6806, %v6800
        %v6993 = vpack.c.b16 %v6807, %v6801
        %v6994 = vpack.c.b16 %v6808, %v6802
        %v6995 = vpack.c.b16 %v6809, %v6803
        %v6996 = vpack.c.b16 %v6816, %v6810
        %v6997 = vpack.c.b16 %v6817, %v6811
        %v6998 = vpack.c.b16 %v6818, %v6812
        %v6999 = vpack.c.b16 %v6819, %v6813
        %v7000 = vpack.c.b16 %v6820, %v6814
        %v7001 = vpack.c.b16 %v6821, %v6815
        %v7002 = vpack.c.b16 %v6828, %v6822
        %v7003 = vpack.c.b16 %v6829, %v6823
        %v7004 = vpack.c.b16 %v6830, %v6824
        %v7005 = vpack.c.b16 %v6831, %v6825
        %v7006 = vpack.c.b16 %v6832, %v6826
        %v7007 = vpack.c.b16 %v6833, %v6827
        %v7008 = vpack.c.b16 %v6840, %v6834
        %v7009 = vpack.c.b16 %v6841, %v6835
        %v7010 = vpack.c.b16 %v6842, %v6836
        %v7011 = vpack.c.b16 %v6843, %v6837
        %v7012 = vpack.c.b16 %v6844, %v6838
        %v7013 = vpack.c.b16 %v6845, %v6839
        %v7014 = vpack.c.b16 %v6852, %v6846
        %v7015 = vpack.c.b16 %v6853, %v6847
        %v7016 = vpack.c.b16 %v6854, %v6848
        %v7017 = vpack.c.b16 %v6855, %v6849
        %v7018 = vpack.c.b16 %v6856, %v6850
        %v7019 = vpack.c.b16 %v6857, %v6851
        %v7020 = vpack.c.b16 %v6864, %v6858
        %v7021 = vpack.c.b16 %v6865, %v6859
        %v7022 = vpack.c.b16 %v6866, %v6860
        %v7023 = vpack.c.b16 %v6867, %v6861
        %v7024 = vpack.c.b16 %v6868, %v6862
        %v7025 = vpack.c.b16 %v6869, %v6863
        %v7026 = vpack.c.b16 %v6876, %v6870
        %v7027 = vpack.c.b16 %v6877, %v6871
        %v7028 = vpack.c.b16 %v6878, %v6872
        %v7029 = vpack.c.b16 %v6879, %v6873
        %v7030 = vpack.c.b16 %v6880, %v6874
        %v7031 = vpack.c.b16 %v6881, %v6875
        %v7032 = vpack.c.b16 %v6888, %v6882
        %v7033 = vpack.c.b16 %v6889, %v6883
        %v7034 = vpack.c.b16 %v6890, %v6884
        %v7035 = vpack.c.b16 %v6891, %v6885
        %v7036 = vpack.c.b16 %v6892, %v6886
        %v7037 = vpack.c.b16 %v6893, %v6887
        %v7038 = vpack.c.b16 %v6900, %v6894
        %v7039 = vpack.c.b16 %v6901, %v6895
        %v7040 = vpack.c.b16 %v6902, %v6896
        %v7041 = vpack.c.b16 %v6903, %v6897
        %v7042 = vpack.c.b16 %v6904, %v6898
        %v7043 = vpack.c.b16 %v6905, %v6899
        %v7044 = vpack.c.b16 %v6912, %v6906
        %v7045 = vpack.c.b16 %v6913, %v6907
        %v7046 = vpack.c.b16 %v6914, %v6908
        %v7047 = vpack.c.b16 %v6915, %v6909
        %v7048 = vpack.c.b16 %v6916, %v6910
        %v7049 = vpack.c.b16 %v6917, %v6911
        %v7050 = vpack.c.b16 %v6924, %v6918
        %v7051 = vpack.c.b16 %v6925, %v6919
        %v7052 = vpack.c.b16 %v6926, %v6920
        %v7053 = vpack.c.b16 %v6927, %v6921
        %v7054 = vpack.c.b16 %v6928, %v6922
        %v7055 = vpack.c.b16 %v6929, %v6923
        %v7056 = vpack.c.b16 %v6936, %v6930
        %v7057 = vpack.c.b16 %v6937, %v6931
        %v7058 = vpack.c.b16 %v6938, %v6932
        %v7059 = vpack.c.b16 %v6939, %v6933
        %v7060 = vpack.c.b16 %v6940, %v6934
        %v7061 = vpack.c.b16 %v6941, %v6935
        %v7062 = vpack.c.b16 %v6948, %v6942
        %v7063 = vpack.c.b16 %v6949, %v6943
        %v7064 = vpack.c.b16 %v6950, %v6944
        %v7065 = vpack.c.b16 %v6951, %v6945
        %v7066 = vpack.c.b16 %v6952, %v6946
        %v7067 = vpack.c.b16 %v6953, %v6947
        %v7068 = vpack.c.b16 %v6960, %v6954
        %v7069 = vpack.c.b16 %v6961, %v6955
        %v7070 = vpack.c.b16 %v6962, %v6956
        %v7071 = vpack.c.b16 %v6963, %v6957
        %v7072 = vpack.c.b16 %v6964, %v6958
        %v7073 = vpack.c.b16 %v6965, %v6959
        %v7074 = vpack.c.b16 %v6972, %v6966
        %v7075 = vpack.c.b16 %v6973, %v6967
        %v7076 = vpack.c.b16 %v6974, %v6968
        %v7077 = vpack.c.b16 %v6975, %v6969
        %v7078 = vpack.c.b16 %v6976, %v6970
        %v7079 = vpack.c.b16 %v6977, %v6971
        %v7080 = vpack.c.b16 %v6984, %v6978
        %v7081 = vpack.c.b16 %v6985, %v6979
        %v7082 = vpack.c.b16 %v6986, %v6980
        %v7083 = vpack.c.b16 %v6987, %v6981
        %v7084 = vpack.c.b16 %v6988, %v6982
        %v7085 = vpack.c.b16 %v6989, %v6983
        %7182 = vmatprep.subr.bf16.mxu0 %v7033
        %7183 = vmatpush1.bf16.msra.mxu0 %v7032
        %7184 = vmatprep.subr.bf16.mxu0 %v7027
        %7185 = vmatpush1.bf16.msra.mxu0 %v7026
        %7186 = vmatprep.subr.bf16.mxu0 %v7021
        %7187 = vmatpush1.bf16.msra.mxu0 %v7020
        %7188 = vmatprep.subr.bf16.mxu0 %v7015
        %7189 = vmatpush1.bf16.msra.mxu0 %v7014
        %7190 = vmatprep.subr.bf16.mxu0 %v7009
        %7191 = vmatpush1.bf16.msra.mxu0 %v7008
        %7192 = vmatprep.subr.bf16.mxu0 %v7003
        %7193 = vmatpush1.bf16.msra.mxu0 %v7002
        %7194 = vmatprep.subr.bf16.mxu0 %v6997
        %7195 = vmatpush1.bf16.msra.mxu0 %v6996
        %7196 = vmatprep.subr.bf16.mxu0 %v6991
        %7197 = vmatpush1.bf16.msra.mxu0 %v6990
        %7198 = vmatprep.subr.bf16.mxu0 %v7081
        %7199 = vmatpush2.bf16.msra.mxu0 %v7080
        %7200 = vmatprep.subr.bf16.mxu0 %v7075
        %7201 = vmatpush2.bf16.msra.mxu0 %v7074
        %7202 = vmatprep.subr.bf16.mxu0 %v7069
        %7203 = vmatpush2.bf16.msra.mxu0 %v7068
        %7204 = vmatprep.subr.bf16.mxu0 %v7063
        %7205 = vmatpush2.bf16.msra.mxu0 %v7062
        %7206 = vmatprep.subr.bf16.mxu0 %v7057
        %7207 = vmatpush2.bf16.msra.mxu0 %v7056
        %7208 = vmatprep.subr.bf16.mxu0 %v7051
        %7209 = vmatpush2.bf16.msra.mxu0 %v7050
        %7210 = vmatprep.subr.bf16.mxu0 %v7045
        %7211 = vmatpush2.bf16.msra.mxu0 %v7044
        %7212 = vmatprep.subr.bf16.mxu0 %v7039
        %7213 = vmatpush2.bf16.msra.mxu0 %v7038
        %7214 = vmatprep.mubr.bf16.mxu0 %v6571
        %7215 = vmatmul.mubr.bf16.gmra.mxu0 %v6570
        %v7216 = vpop.f32.mrf.mxu0
        %v7217 = vadd.f32 %v6675, %v7216
        %v7218 = vpop.f32.mrf.mxu0
        %v7219 = vadd.f32 %v6679, %v7218
        %v7220 = vpop.f32.mrf.mxu0
        %v7221 = vadd.f32 %v6675, %v7220
        %v7222 = vpop.f32.mrf.mxu0
        %v7223 = vadd.f32 %v6679, %v7222
        %7224 = vdwg.mxu0
        %7225 = vmatprep.subr.bf16.mxu0 %v7035
        %7226 = vmatpush1.bf16.msra.mxu0 %v7034
        %7227 = vmatprep.subr.bf16.mxu0 %v7029
        %7228 = vmatpush1.bf16.msra.mxu0 %v7028
        %7229 = vmatprep.subr.bf16.mxu0 %v7023
        %7230 = vmatpush1.bf16.msra.mxu0 %v7022
        %7231 = vmatprep.subr.bf16.mxu0 %v7017
        %7232 = vmatpush1.bf16.msra.mxu0 %v7016
        %7233 = vmatprep.subr.bf16.mxu0 %v7011
        %7234 = vmatpush1.bf16.msra.mxu0 %v7010
        %7235 = vmatprep.subr.bf16.mxu0 %v7005
        %7236 = vmatpush1.bf16.msra.mxu0 %v7004
        %7237 = vmatprep.subr.bf16.mxu0 %v6999
        %7238 = vmatpush1.bf16.msra.mxu0 %v6998
        %7239 = vmatprep.subr.bf16.mxu0 %v6993
        %7240 = vmatpush1.bf16.msra.mxu0 %v6992
        %7241 = vmatprep.subr.bf16.mxu0 %v7083
        %7242 = vmatpush2.bf16.msra.mxu0 %v7082
        %7243 = vmatprep.subr.bf16.mxu0 %v7077
        %7244 = vmatpush2.bf16.msra.mxu0 %v7076
        %7245 = vmatprep.subr.bf16.mxu0 %v7071
        %7246 = vmatpush2.bf16.msra.mxu0 %v7070
        %7247 = vmatprep.subr.bf16.mxu0 %v7065
        %7248 = vmatpush2.bf16.msra.mxu0 %v7064
        %7249 = vmatprep.subr.bf16.mxu0 %v7059
        %7250 = vmatpush2.bf16.msra.mxu0 %v7058
        %7251 = vmatprep.subr.bf16.mxu0 %v7053
        %7252 = vmatpush2.bf16.msra.mxu0 %v7052
        %7253 = vmatprep.subr.bf16.mxu0 %v7047
        %7254 = vmatpush2.bf16.msra.mxu0 %v7046
        %7255 = vmatprep.subr.bf16.mxu0 %v7041
        %7256 = vmatpush2.bf16.msra.mxu0 %v7040
        %7257 = vmatprep.mubr.bf16.mxu0 %v6571
        %7258 = vmatmul.mubr.bf16.gmra.mxu0 %v6570
        %v7259 = vpop.f32.mrf.mxu0
        %v7260 = vadd.f32 %v6683, %v7259
        %v7261 = vpop.f32.mrf.mxu0
        %v7262 = vadd.f32 %v6687, %v7261
        %v7263 = vpop.f32.mrf.mxu0
        %v7264 = vadd.f32 %v6683, %v7263
        %v7265 = vpop.f32.mrf.mxu0
        %v7266 = vadd.f32 %v6687, %v7265
        %7267 = vdwg.mxu0
        %7268 = vmatprep.subr.bf16.mxu0 %v7037
        %7269 = vmatpush1.bf16.msra.mxu0 %v7036
        %7270 = vmatprep.subr.bf16.mxu0 %v7031
        %7271 = vmatpush1.bf16.msra.mxu0 %v7030
        %7272 = vmatprep.subr.bf16.mxu0 %v7025
        %7273 = vmatpush1.bf16.msra.mxu0 %v7024
        %7274 = vmatprep.subr.bf16.mxu0 %v7019
        %7275 = vmatpush1.bf16.msra.mxu0 %v7018
        %7276 = vmatprep.subr.bf16.mxu0 %v7013
        %7277 = vmatpush1.bf16.msra.mxu0 %v7012
        %7278 = vmatprep.subr.bf16.mxu0 %v7007
        %7279 = vmatpush1.bf16.msra.mxu0 %v7006
        %7280 = vmatprep.subr.bf16.mxu0 %v7001
        %7281 = vmatpush1.bf16.msra.mxu0 %v7000
        %7282 = vmatprep.subr.bf16.mxu0 %v6995
        %7283 = vmatpush1.bf16.msra.mxu0 %v6994
        %7284 = vmatprep.subr.bf16.mxu0 %v7085
        %7285 = vmatpush2.bf16.msra.mxu0 %v7084
        %7286 = vmatprep.subr.bf16.mxu0 %v7079
        %7287 = vmatpush2.bf16.msra.mxu0 %v7078
        %7288 = vmatprep.subr.bf16.mxu0 %v7073
        %7289 = vmatpush2.bf16.msra.mxu0 %v7072
        %7290 = vmatprep.subr.bf16.mxu0 %v7067
        %7291 = vmatpush2.bf16.msra.mxu0 %v7066
        %7292 = vmatprep.subr.bf16.mxu0 %v7061
        %7293 = vmatpush2.bf16.msra.mxu0 %v7060
        %7294 = vmatprep.subr.bf16.mxu0 %v7055
        %7295 = vmatpush2.bf16.msra.mxu0 %v7054
        %7296 = vmatprep.subr.bf16.mxu0 %v7049
        %7297 = vmatpush2.bf16.msra.mxu0 %v7048
        %7298 = vmatprep.subr.bf16.mxu0 %v7043
        %7299 = vmatpush2.bf16.msra.mxu0 %v7042
        %7300 = vmatprep.mubr.bf16.mxu0 %v6571
        %7301 = vmatmul.mubr.bf16.gmra.mxu0 %v6570
        %v7302 = vpop.f32.mrf.mxu0
        %v7303 = vadd.f32 %v6691, %v7302
        %v7304 = vpop.f32.mrf.mxu0
        %v7305 = vadd.f32 %v6695, %v7304
        %v7306 = vpop.f32.mrf.mxu0
        %v7307 = vadd.f32 %v6691, %v7306
        %v7308 = vpop.f32.mrf.mxu0
        %v7309 = vadd.f32 %v6695, %v7308
        %7310 = vdwg.mxu0
        %v7311 = vpack.c.bf16 %v7221, %v7217
        %v7312 = vpack.c.bf16 %v7223, %v7219
        %v7313 = vpack.c.bf16 %v7264, %v7260
        %v7314 = vpack.c.bf16 %v7266, %v7262
        %v7315 = vpack.c.bf16 %v7307, %v7303
        %v7316 = vpack.c.bf16 %v7309, %v7305
        %v7318 = vsel %vm3679, %v7311, 0
        %v7321 = vsel %vm3679, %v7313, 0
        %7323 = vmatprep.subr.bf16.mxu0 0
        %7324 = vmatpush1.bf16.xpose.msra.mxu0 0
        %7325 = vmatprep.subr.bf16.mxu0 0
        %7326 = vmatpush1.bf16.xpose.msra.mxu0 0
        %7327 = vmatprep.subr.bf16.mxu0 0
        %7328 = vmatpush1.bf16.xpose.msra.mxu0 0
        %7329 = vmatprep.subr.bf16.mxu0 0
        %7330 = vmatpush1.bf16.xpose.msra.mxu0 0
        %7331 = vmatprep.subr.bf16.mxu0 0
        %7332 = vmatpush1.bf16.xpose.msra.mxu0 0
        %7333 = vmatprep.subr.bf16.mxu0 0
        %7334 = vmatpush1.bf16.xpose.msra.mxu0 0
        %7335 = vmatprep.subr.bf16.mxu0 0
        %7336 = vmatpush1.bf16.xpose.msra.mxu0 0
        %7337 = vmatprep.subr.bf16.mxu0 0
        %7338 = vmatpush1.bf16.xpose.msra.mxu0 %v7321
        %7339 = vmatprep.subr.bf16.mxu0 0
        %7340 = vmatpush2.bf16.xpose.msra.mxu0 0
        %7341 = vmatprep.subr.bf16.mxu0 0
        %7342 = vmatpush2.bf16.xpose.msra.mxu0 0
        %7343 = vmatprep.subr.bf16.mxu0 0
        %7344 = vmatpush2.bf16.xpose.msra.mxu0 0
        %7345 = vmatprep.subr.bf16.mxu0 0
        %7346 = vmatpush2.bf16.xpose.msra.mxu0 0
        %7347 = vmatprep.subr.bf16.mxu0 0
        %7348 = vmatpush2.bf16.xpose.msra.mxu0 0
        %7349 = vmatprep.subr.bf16.mxu0 0
        %7350 = vmatpush2.bf16.xpose.msra.mxu0 0
        %7351 = vmatprep.subr.bf16.mxu0 0
        %7352 = vmatpush2.bf16.xpose.msra.mxu0 0
        %7353 = vmatprep.subr.bf16.mxu0 0
        %7354 = vmatpush2.bf16.xpose.msra.mxu0 0
        %7355 = vmatprep.mubr.bf16.mxu0 0
        %7356 = vmatmul.mubr.bf16.gmra.mxu0 %v7318
        %v7357 = vpop.f32.mrf.mxu0
        %v7358 = vadd.f32 0.0, %v7357
        %v7359 = vpop.f32.mrf.mxu0
        %v7360 = vpop.f32.mrf.mxu0
        %v7361 = vadd.f32 0.0, %v7360
        %v7362 = vpop.f32.mrf.mxu0
        %7363 = vdwg.mxu0
        %v7364 = vsel %vm3727, %v7358, -inf
        %7365 = vmax.xlane.f32.xlu0 %v7364
        %v7366 = vpop.xlane.xlu0 %7365
        %v7367 = vsel %vm3731, %v7361, -inf
        %7368 = vmax.xlane.f32.xlu0 %v7367
        %v7369 = vpop.xlane.xlu0 %7368
        %v7370 = vsub.f32 %v7358, %v7366
        %v7371 = vsub.f32 %v7361, %v7369
        %v7372 = vmul.f32 %v7370, 1.442695
        %v7373 = vpow.pop %v7372
        %v7374 = vmul.f32 %v7371, 1.442695
        %v7375 = vpow.pop %v7374
        %v7376 = vsel %vm3727, %v7373, 0.0
        %7377 = vadd.xlane.f32.xlu0 %v7376
        %v7378 = vpop.xlane.xlu0 %7377
        %v7379 = vsel %vm3731, %v7375, 0.0
        %7380 = vadd.xlane.f32.xlu0 %v7379
        %v7381 = vpop.xlane.xlu0 %7380
        %v7382 = vpack.c.bf16 %v7375, %v7373
        %v7384 = vsel %vm3727, %v7382, 0
        %v7387 = vand.u32 %v7315, %v3754
        %7389 = vmatprep.subr.bf16.mxu0 0
        %7390 = vmatpush1.bf16.msra.mxu0 0
        %7391 = vmatprep.subr.bf16.mxu0 0
        %7392 = vmatpush1.bf16.msra.mxu0 0
        %7393 = vmatprep.subr.bf16.mxu0 0
        %7394 = vmatpush1.bf16.msra.mxu0 0
        %7395 = vmatprep.subr.bf16.mxu0 0
        %7396 = vmatpush1.bf16.msra.mxu0 0
        %7397 = vmatprep.subr.bf16.mxu0 0
        %7398 = vmatpush1.bf16.msra.mxu0 0
        %7399 = vmatprep.subr.bf16.mxu0 0
        %7400 = vmatpush1.bf16.msra.mxu0 0
        %7401 = vmatprep.subr.bf16.mxu0 0
        %7402 = vmatpush1.bf16.msra.mxu0 0
        %7403 = vmatprep.subr.bf16.mxu0 0
        %7404 = vmatpush1.bf16.msra.mxu0 %v7387
        %7405 = vmatprep.subr.bf16.mxu0 0
        %7406 = vmatpush2.bf16.msra.mxu0 0
        %7407 = vmatprep.subr.bf16.mxu0 0
        %7408 = vmatpush2.bf16.msra.mxu0 0
        %7409 = vmatprep.subr.bf16.mxu0 0
        %7410 = vmatpush2.bf16.msra.mxu0 0
        %7411 = vmatprep.subr.bf16.mxu0 0
        %7412 = vmatpush2.bf16.msra.mxu0 0
        %7413 = vmatprep.subr.bf16.mxu0 0
        %7414 = vmatpush2.bf16.msra.mxu0 0
        %7415 = vmatprep.subr.bf16.mxu0 0
        %7416 = vmatpush2.bf16.msra.mxu0 0
        %7417 = vmatprep.subr.bf16.mxu0 0
        %7418 = vmatpush2.bf16.msra.mxu0 0
        %7419 = vmatprep.subr.bf16.mxu0 0
        %7420 = vmatpush2.bf16.msra.mxu0 0
        %7421 = vmatprep.mubr.bf16.mxu0 0
        %7422 = vmatmul.mubr.bf16.gmra.mxu0 %v7384
        %v7423 = vpop.f32.mrf.mxu0
        %v7424 = vadd.f32 0.0, %v7423
        %v7425 = vpop.f32.mrf.mxu0
        %v7426 = vpop.f32.mrf.mxu0
        %v7427 = vadd.f32 0.0, %v7426
        %v7428 = vpop.f32.mrf.mxu0
        %7429 = vdwg.mxu0
        %v7430 = vrcp.pop %v7378
        %v7431 = vmul.f32 1.0, %v7430
        %v7432 = vrcp.pop %v7381
        %v7433 = vmul.f32 1.0, %v7432
        %v7434 = vmul.f32 %v7424, %v7431
        %v7435 = vmul.f32 %v7427, %v7433
        %7436 = vst.msk [vmem:[#allocation3] sm:$0xff] %vm3679, %v7434
        %7437 = vst.msk [vmem:[#allocation3 + $0x10] sm:$0x1] %vm3806, %v7435
        %7439 = vrot.lane.b32.xlu0 %v7311, 64
        %v7440 = vpop.permute.xlu0 %7439
        %7442 = vrot.lane.b32.xlu0 %v7313, 64
        %v7443 = vpop.permute.xlu0 %7442
        %v7445 = vsel %vm3679, %v7440, 0
        %v7448 = vsel %vm3679, %v7443, 0
        %7450 = vmatprep.subr.bf16.mxu0 0
        %7451 = vmatpush1.bf16.xpose.msra.mxu0 0
        %7452 = vmatprep.subr.bf16.mxu0 0
        %7453 = vmatpush1.bf16.xpose.msra.mxu0 0
        %7454 = vmatprep.subr.bf16.mxu0 0
        %7455 = vmatpush1.bf16.xpose.msra.mxu0 0
        %7456 = vmatprep.subr.bf16.mxu0 0
        %7457 = vmatpush1.bf16.xpose.msra.mxu0 0
        %7458 = vmatprep.subr.bf16.mxu0 0
        %7459 = vmatpush1.bf16.xpose.msra.mxu0 0
        %7460 = vmatprep.subr.bf16.mxu0 0
        %7461 = vmatpush1.bf16.xpose.msra.mxu0 0
        %7462 = vmatprep.subr.bf16.mxu0 0
        %7463 = vmatpush1.bf16.xpose.msra.mxu0 0
        %7464 = vmatprep.subr.bf16.mxu0 0
        %7465 = vmatpush1.bf16.xpose.msra.mxu0 %v7448
        %7466 = vmatprep.subr.bf16.mxu0 0
        %7467 = vmatpush2.bf16.xpose.msra.mxu0 0
        %7468 = vmatprep.subr.bf16.mxu0 0
        %7469 = vmatpush2.bf16.xpose.msra.mxu0 0
        %7470 = vmatprep.subr.bf16.mxu0 0
        %7471 = vmatpush2.bf16.xpose.msra.mxu0 0
        %7472 = vmatprep.subr.bf16.mxu0 0
        %7473 = vmatpush2.bf16.xpose.msra.mxu0 0
        %7474 = vmatprep.subr.bf16.mxu0 0
        %7475 = vmatpush2.bf16.xpose.msra.mxu0 0
        %7476 = vmatprep.subr.bf16.mxu0 0
        %7477 = vmatpush2.bf16.xpose.msra.mxu0 0
        %7478 = vmatprep.subr.bf16.mxu0 0
        %7479 = vmatpush2.bf16.xpose.msra.mxu0 0
        %7480 = vmatprep.subr.bf16.mxu0 0
        %7481 = vmatpush2.bf16.xpose.msra.mxu0 0
        %7482 = vmatprep.mubr.bf16.mxu0 0
        %7483 = vmatmul.mubr.bf16.gmra.mxu0 %v7445
        %v7484 = vpop.f32.mrf.mxu0
        %v7485 = vadd.f32 0.0, %v7484
        %v7486 = vpop.f32.mrf.mxu0
        %v7487 = vpop.f32.mrf.mxu0
        %v7488 = vadd.f32 0.0, %v7487
        %v7489 = vpop.f32.mrf.mxu0
        %7490 = vdwg.mxu0
        %v7491 = vsel %vm3727, %v7485, -inf
        %7492 = vmax.xlane.f32.xlu0 %v7491
        %v7493 = vpop.xlane.xlu0 %7492
        %v7494 = vsel %vm3731, %v7488, -inf
        %7495 = vmax.xlane.f32.xlu0 %v7494
        %v7496 = vpop.xlane.xlu0 %7495
        %v7497 = vsub.f32 %v7485, %v7493
        %v7498 = vsub.f32 %v7488, %v7496
        %v7499 = vmul.f32 %v7497, 1.442695
        %v7500 = vpow.pop %v7499
        %v7501 = vmul.f32 %v7498, 1.442695
        %v7502 = vpow.pop %v7501
        %v7503 = vsel %vm3727, %v7500, 0.0
        %7504 = vadd.xlane.f32.xlu0 %v7503
        %v7505 = vpop.xlane.xlu0 %7504
        %v7506 = vsel %vm3731, %v7502, 0.0
        %7507 = vadd.xlane.f32.xlu0 %v7506
        %v7508 = vpop.xlane.xlu0 %7507
        %v7509 = vpack.c.bf16 %v7502, %v7500
        %7511 = vrot.lane.b32.xlu0 %v7315, 64
        %v7512 = vpop.permute.xlu0 %7511
        %v7514 = vsel %vm3727, %v7509, 0
        %v7517 = vand.u32 %v7512, %v3754
        %7519 = vmatprep.subr.bf16.mxu0 0
        %7520 = vmatpush1.bf16.msra.mxu0 0
        %7521 = vmatprep.subr.bf16.mxu0 0
        %7522 = vmatpush1.bf16.msra.mxu0 0
        %7523 = vmatprep.subr.bf16.mxu0 0
        %7524 = vmatpush1.bf16.msra.mxu0 0
        %7525 = vmatprep.subr.bf16.mxu0 0
        %7526 = vmatpush1.bf16.msra.mxu0 0
        %7527 = vmatprep.subr.bf16.mxu0 0
        %7528 = vmatpush1.bf16.msra.mxu0 0
        %7529 = vmatprep.subr.bf16.mxu0 0
        %7530 = vmatpush1.bf16.msra.mxu0 0
        %7531 = vmatprep.subr.bf16.mxu0 0
        %7532 = vmatpush1.bf16.msra.mxu0 0
        %7533 = vmatprep.subr.bf16.mxu0 0
        %7534 = vmatpush1.bf16.msra.mxu0 %v7517
        %7535 = vmatprep.subr.bf16.mxu0 0
        %7536 = vmatpush2.bf16.msra.mxu0 0
        %7537 = vmatprep.subr.bf16.mxu0 0
        %7538 = vmatpush2.bf16.msra.mxu0 0
        %7539 = vmatprep.subr.bf16.mxu0 0
        %7540 = vmatpush2.bf16.msra.mxu0 0
        %7541 = vmatprep.subr.bf16.mxu0 0
        %7542 = vmatpush2.bf16.msra.mxu0 0
        %7543 = vmatprep.subr.bf16.mxu0 0
        %7544 = vmatpush2.bf16.msra.mxu0 0
        %7545 = vmatprep.subr.bf16.mxu0 0
        %7546 = vmatpush2.bf16.msra.mxu0 0
        %7547 = vmatprep.subr.bf16.mxu0 0
        %7548 = vmatpush2.bf16.msra.mxu0 0
        %7549 = vmatprep.subr.bf16.mxu0 0
        %7550 = vmatpush2.bf16.msra.mxu0 0
        %7551 = vmatprep.mubr.bf16.mxu0 0
        %7552 = vmatmul.mubr.bf16.gmra.mxu0 %v7514
        %v7553 = vpop.f32.mrf.mxu0
        %v7554 = vadd.f32 0.0, %v7553
        %v7555 = vpop.f32.mrf.mxu0
        %v7556 = vpop.f32.mrf.mxu0
        %v7557 = vadd.f32 0.0, %v7556
        %v7558 = vpop.f32.mrf.mxu0
        %7559 = vdwg.mxu0
        %v7560 = vrcp.pop %v7505
        %v7561 = vmul.f32 1.0, %v7560
        %v7562 = vrcp.pop %v7508
        %v7563 = vmul.f32 1.0, %v7562
        %v7564 = vmul.f32 %v7554, %v7561
        %v7565 = vmul.f32 %v7557, %v7563
        %7568 = vrot.lane.b32.xlu0 %v7564, 64
        %v7569 = vpop.permute.xlu0 %7568
        %7570 = vrot.lane.b32.xlu0 %v7565, 64
        %v7571 = vpop.permute.xlu0 %7570
        %7574 = vst.msk [vmem:[#allocation3] sm:$0xff] %vm3944, %v7569
        %7575 = vst.msk [vmem:[#allocation3 + $0x10] sm:$0x1] %vm3946, %v7571
        %v7577 = vsel %vm3679, %v7312, 0
        %v7580 = vsel %vm3679, %v7314, 0
        %7582 = vmatprep.subr.bf16.mxu0 0
        %7583 = vmatpush1.bf16.xpose.msra.mxu0 0
        %7584 = vmatprep.subr.bf16.mxu0 0
        %7585 = vmatpush1.bf16.xpose.msra.mxu0 0
        %7586 = vmatprep.subr.bf16.mxu0 0
        %7587 = vmatpush1.bf16.xpose.msra.mxu0 0
        %7588 = vmatprep.subr.bf16.mxu0 0
        %7589 = vmatpush1.bf16.xpose.msra.mxu0 0
        %7590 = vmatprep.subr.bf16.mxu0 0
        %7591 = vmatpush1.bf16.xpose.msra.mxu0 0
        %7592 = vmatprep.subr.bf16.mxu0 0
        %7593 = vmatpush1.bf16.xpose.msra.mxu0 0
        %7594 = vmatprep.subr.bf16.mxu0 0
        %7595 = vmatpush1.bf16.xpose.msra.mxu0 0
        %7596 = vmatprep.subr.bf16.mxu0 0
        %7597 = vmatpush1.bf16.xpose.msra.mxu0 %v7580
        %7598 = vmatprep.subr.bf16.mxu0 0
        %7599 = vmatpush2.bf16.xpose.msra.mxu0 0
        %7600 = vmatprep.subr.bf16.mxu0 0
        %7601 = vmatpush2.bf16.xpose.msra.mxu0 0
        %7602 = vmatprep.subr.bf16.mxu0 0
        %7603 = vmatpush2.bf16.xpose.msra.mxu0 0
        %7604 = vmatprep.subr.bf16.mxu0 0
        %7605 = vmatpush2.bf16.xpose.msra.mxu0 0
        %7606 = vmatprep.subr.bf16.mxu0 0
        %7607 = vmatpush2.bf16.xpose.msra.mxu0 0
        %7608 = vmatprep.subr.bf16.mxu0 0
        %7609 = vmatpush2.bf16.xpose.msra.mxu0 0
        %7610 = vmatprep.subr.bf16.mxu0 0
        %7611 = vmatpush2.bf16.xpose.msra.mxu0 0
        %7612 = vmatprep.subr.bf16.mxu0 0
        %7613 = vmatpush2.bf16.xpose.msra.mxu0 0
        %7614 = vmatprep.mubr.bf16.mxu0 0
        %7615 = vmatmul.mubr.bf16.gmra.mxu0 %v7577
        %v7616 = vpop.f32.mrf.mxu0
        %v7617 = vadd.f32 0.0, %v7616
        %v7618 = vpop.f32.mrf.mxu0
        %v7619 = vpop.f32.mrf.mxu0
        %v7620 = vadd.f32 0.0, %v7619
        %v7621 = vpop.f32.mrf.mxu0
        %7622 = vdwg.mxu0
        %v7623 = vsel %vm3727, %v7617, -inf
        %7624 = vmax.xlane.f32.xlu0 %v7623
        %v7625 = vpop.xlane.xlu0 %7624
        %v7626 = vsel %vm3731, %v7620, -inf
        %7627 = vmax.xlane.f32.xlu0 %v7626
        %v7628 = vpop.xlane.xlu0 %7627
        %v7629 = vsub.f32 %v7617, %v7625
        %v7630 = vsub.f32 %v7620, %v7628
        %v7631 = vmul.f32 %v7629, 1.442695
        %v7632 = vpow.pop %v7631
        %v7633 = vmul.f32 %v7630, 1.442695
        %v7634 = vpow.pop %v7633
        %v7635 = vsel %vm3727, %v7632, 0.0
        %7636 = vadd.xlane.f32.xlu0 %v7635
        %v7637 = vpop.xlane.xlu0 %7636
        %v7638 = vsel %vm3731, %v7634, 0.0
        %7639 = vadd.xlane.f32.xlu0 %v7638
        %v7640 = vpop.xlane.xlu0 %7639
        %v7641 = vpack.c.bf16 %v7634, %v7632
        %v7643 = vsel %vm3727, %v7641, 0
        %v7646 = vand.u32 %v7316, %v3754
        %7648 = vmatprep.subr.bf16.mxu0 0
        %7649 = vmatpush1.bf16.msra.mxu0 0
        %7650 = vmatprep.subr.bf16.mxu0 0
        %7651 = vmatpush1.bf16.msra.mxu0 0
        %7652 = vmatprep.subr.bf16.mxu0 0
        %7653 = vmatpush1.bf16.msra.mxu0 0
        %7654 = vmatprep.subr.bf16.mxu0 0
        %7655 = vmatpush1.bf16.msra.mxu0 0
        %7656 = vmatprep.subr.bf16.mxu0 0
        %7657 = vmatpush1.bf16.msra.mxu0 0
        %7658 = vmatprep.subr.bf16.mxu0 0
        %7659 = vmatpush1.bf16.msra.mxu0 0
        %7660 = vmatprep.subr.bf16.mxu0 0
        %7661 = vmatpush1.bf16.msra.mxu0 0
        %7662 = vmatprep.subr.bf16.mxu0 0
        %7663 = vmatpush1.bf16.msra.mxu0 %v7646
        %7664 = vmatprep.subr.bf16.mxu0 0
        %7665 = vmatpush2.bf16.msra.mxu0 0
        %7666 = vmatprep.subr.bf16.mxu0 0
        %7667 = vmatpush2.bf16.msra.mxu0 0
        %7668 = vmatprep.subr.bf16.mxu0 0
        %7669 = vmatpush2.bf16.msra.mxu0 0
        %7670 = vmatprep.subr.bf16.mxu0 0
        %7671 = vmatpush2.bf16.msra.mxu0 0
        %7672 = vmatprep.subr.bf16.mxu0 0
        %7673 = vmatpush2.bf16.msra.mxu0 0
        %7674 = vmatprep.subr.bf16.mxu0 0
        %7675 = vmatpush2.bf16.msra.mxu0 0
        %7676 = vmatprep.subr.bf16.mxu0 0
        %7677 = vmatpush2.bf16.msra.mxu0 0
        %7678 = vmatprep.subr.bf16.mxu0 0
        %7679 = vmatpush2.bf16.msra.mxu0 0
        %7680 = vmatprep.mubr.bf16.mxu0 0
        %7681 = vmatmul.mubr.bf16.gmra.mxu0 %v7643
        %v7682 = vpop.f32.mrf.mxu0
        %v7683 = vadd.f32 0.0, %v7682
        %v7684 = vpop.f32.mrf.mxu0
        %v7685 = vpop.f32.mrf.mxu0
        %v7686 = vadd.f32 0.0, %v7685
        %v7687 = vpop.f32.mrf.mxu0
        %7688 = vdwg.mxu0
        %v7689 = vrcp.pop %v7637
        %v7690 = vmul.f32 1.0, %v7689
        %v7691 = vrcp.pop %v7640
        %v7692 = vmul.f32 1.0, %v7691
        %v7693 = vmul.f32 %v7683, %v7690
        %v7694 = vmul.f32 %v7686, %v7692
        %7695 = vst.msk [vmem:[#allocation3 + $0x8] sm:$0xff] %vm3679, %v7693
        %7696 = vst.msk [vmem:[#allocation3 + $0x18] sm:$0x1] %vm3806, %v7694
        %7698 = vrot.lane.b32.xlu0 %v7312, 64
        %v7699 = vpop.permute.xlu0 %7698
        %7701 = vrot.lane.b32.xlu0 %v7314, 64
        %v7702 = vpop.permute.xlu0 %7701
        %v7704 = vsel %vm3679, %v7699, 0
        %v7707 = vsel %vm3679, %v7702, 0
        %7709 = vmatprep.subr.bf16.mxu0 0
        %7710 = vmatpush1.bf16.xpose.msra.mxu0 0
        %7711 = vmatprep.subr.bf16.mxu0 0
        %7712 = vmatpush1.bf16.xpose.msra.mxu0 0
        %7713 = vmatprep.subr.bf16.mxu0 0
        %7714 = vmatpush1.bf16.xpose.msra.mxu0 0
        %7715 = vmatprep.subr.bf16.mxu0 0
        %7716 = vmatpush1.bf16.xpose.msra.mxu0 0
        %7717 = vmatprep.subr.bf16.mxu0 0
        %7718 = vmatpush1.bf16.xpose.msra.mxu0 0
        %7719 = vmatprep.subr.bf16.mxu0 0
        %7720 = vmatpush1.bf16.xpose.msra.mxu0 0
        %7721 = vmatprep.subr.bf16.mxu0 0
        %7722 = vmatpush1.bf16.xpose.msra.mxu0 0
        %7723 = vmatprep.subr.bf16.mxu0 0
        %7724 = vmatpush1.bf16.xpose.msra.mxu0 %v7707
        %7725 = vmatprep.subr.bf16.mxu0 0
        %7726 = vmatpush2.bf16.xpose.msra.mxu0 0
        %7727 = vmatprep.subr.bf16.mxu0 0
        %7728 = vmatpush2.bf16.xpose.msra.mxu0 0
        %7729 = vmatprep.subr.bf16.mxu0 0
        %7730 = vmatpush2.bf16.xpose.msra.mxu0 0
        %7731 = vmatprep.subr.bf16.mxu0 0
        %7732 = vmatpush2.bf16.xpose.msra.mxu0 0
        %7733 = vmatprep.subr.bf16.mxu0 0
        %7734 = vmatpush2.bf16.xpose.msra.mxu0 0
        %7735 = vmatprep.subr.bf16.mxu0 0
        %7736 = vmatpush2.bf16.xpose.msra.mxu0 0
        %7737 = vmatprep.subr.bf16.mxu0 0
        %7738 = vmatpush2.bf16.xpose.msra.mxu0 0
        %7739 = vmatprep.subr.bf16.mxu0 0
        %7740 = vmatpush2.bf16.xpose.msra.mxu0 0
        %7741 = vmatprep.mubr.bf16.mxu0 0
        %7742 = vmatmul.mubr.bf16.gmra.mxu0 %v7704
        %v7743 = vpop.f32.mrf.mxu0
        %v7744 = vadd.f32 0.0, %v7743
        %v7745 = vpop.f32.mrf.mxu0
        %v7746 = vpop.f32.mrf.mxu0
        %v7747 = vadd.f32 0.0, %v7746
        %v7748 = vpop.f32.mrf.mxu0
        %7749 = vdwg.mxu0
        %v7750 = vsel %vm3727, %v7744, -inf
        %7751 = vmax.xlane.f32.xlu0 %v7750
        %v7752 = vpop.xlane.xlu0 %7751
        %v7753 = vsel %vm3731, %v7747, -inf
        %7754 = vmax.xlane.f32.xlu0 %v7753
        %v7755 = vpop.xlane.xlu0 %7754
        %v7756 = vsub.f32 %v7744, %v7752
        %v7757 = vsub.f32 %v7747, %v7755
        %v7758 = vmul.f32 %v7756, 1.442695
        %v7759 = vpow.pop %v7758
        %v7760 = vmul.f32 %v7757, 1.442695
        %v7761 = vpow.pop %v7760
        %v7762 = vsel %vm3727, %v7759, 0.0
        %7763 = vadd.xlane.f32.xlu0 %v7762
        %v7764 = vpop.xlane.xlu0 %7763
        %v7765 = vsel %vm3731, %v7761, 0.0
        %7766 = vadd.xlane.f32.xlu0 %v7765
        %v7767 = vpop.xlane.xlu0 %7766
        %v7768 = vpack.c.bf16 %v7761, %v7759
        %7770 = vrot.lane.b32.xlu0 %v7316, 64
        %v7771 = vpop.permute.xlu0 %7770
        %v7773 = vsel %vm3727, %v7768, 0
        %v7776 = vand.u32 %v7771, %v3754
        %7778 = vmatprep.subr.bf16.mxu0 0
        %7779 = vmatpush1.bf16.msra.mxu0 0
        %7780 = vmatprep.subr.bf16.mxu0 0
        %7781 = vmatpush1.bf16.msra.mxu0 0
        %7782 = vmatprep.subr.bf16.mxu0 0
        %7783 = vmatpush1.bf16.msra.mxu0 0
        %7784 = vmatprep.subr.bf16.mxu0 0
        %7785 = vmatpush1.bf16.msra.mxu0 0
        %7786 = vmatprep.subr.bf16.mxu0 0
        %7787 = vmatpush1.bf16.msra.mxu0 0
        %7788 = vmatprep.subr.bf16.mxu0 0
        %7789 = vmatpush1.bf16.msra.mxu0 0
        %7790 = vmatprep.subr.bf16.mxu0 0
        %7791 = vmatpush1.bf16.msra.mxu0 0
        %7792 = vmatprep.subr.bf16.mxu0 0
        %7793 = vmatpush1.bf16.msra.mxu0 %v7776
        %7794 = vmatprep.subr.bf16.mxu0 0
        %7795 = vmatpush2.bf16.msra.mxu0 0
        %7796 = vmatprep.subr.bf16.mxu0 0
        %7797 = vmatpush2.bf16.msra.mxu0 0
        %7798 = vmatprep.subr.bf16.mxu0 0
        %7799 = vmatpush2.bf16.msra.mxu0 0
        %7800 = vmatprep.subr.bf16.mxu0 0
        %7801 = vmatpush2.bf16.msra.mxu0 0
        %7802 = vmatprep.subr.bf16.mxu0 0
        %7803 = vmatpush2.bf16.msra.mxu0 0
        %7804 = vmatprep.subr.bf16.mxu0 0
        %7805 = vmatpush2.bf16.msra.mxu0 0
        %7806 = vmatprep.subr.bf16.mxu0 0
        %7807 = vmatpush2.bf16.msra.mxu0 0
        %7808 = vmatprep.subr.bf16.mxu0 0
        %7809 = vmatpush2.bf16.msra.mxu0 0
        %7810 = vmatprep.mubr.bf16.mxu0 0
        %7811 = vmatmul.mubr.bf16.gmra.mxu0 %v7773
        %v7812 = vpop.f32.mrf.mxu0
        %v7813 = vadd.f32 0.0, %v7812
        %v7814 = vpop.f32.mrf.mxu0
        %v7815 = vpop.f32.mrf.mxu0
        %v7816 = vadd.f32 0.0, %v7815
        %v7817 = vpop.f32.mrf.mxu0
        %7818 = vdwg.mxu0
        %v7819 = vrcp.pop %v7764
        %v7820 = vmul.f32 1.0, %v7819
        %v7821 = vrcp.pop %v7767
        %v7822 = vmul.f32 1.0, %v7821
        %v7823 = vmul.f32 %v7813, %v7820
        %v7824 = vmul.f32 %v7816, %v7822
        %7827 = vrot.lane.b32.xlu0 %v7823, 64
        %v7828 = vpop.permute.xlu0 %7827
        %7829 = vrot.lane.b32.xlu0 %v7824, 64
        %v7830 = vpop.permute.xlu0 %7829
        %7833 = vst.msk [vmem:[#allocation3 + $0x8] sm:$0xff] %vm3944, %v7828
        %7834 = vst.msk [vmem:[#allocation3 + $0x18] sm:$0x1] %vm3946, %v7830
        %v7835 = vld [vmem:[#allocation3] sm:$0xff]
        %v7836 = vld [vmem:[#allocation3 + $0x8] sm:$0xff]
        %v7837 = vld [vmem:[#allocation3 + $0x10] sm:$0x1]
        %v7838 = vld [vmem:[#allocation3 + $0x18] sm:$0x1]
        %v7839 = vpack.c.bf16 %v7837, %v7835
        %v7840 = vpack.c.bf16 %v7838, %v7836
        %s7841 = scalar_lea.vmem [#allocation16], 256
        %v7842 = vld [vmem:[%s7841] sm:$0xff]
        %v7843 = vld [vmem:[%s7841 + $0x8] sm:$0xff]
        %v7844 = vld [vmem:[%s7841 + $0x10] sm:$0xff]
        %v7845 = vld [vmem:[%s7841 + $0x18] sm:$0xff]
        %v7846 = vld [vmem:[%s7841 + $0x20] sm:$0xff]
        %v7847 = vld [vmem:[%s7841 + $0x28] sm:$0xff]
        %v7848 = vld [vmem:[%s7841 + $0x30] sm:$0xff]
        %v7849 = vld [vmem:[%s7841 + $0x38] sm:$0xff]
        %v7850 = vld [vmem:[%s7841 + $0x40] sm:$0xff]
        %v7851 = vld [vmem:[%s7841 + $0x48] sm:$0xff]
        %v7852 = vld [vmem:[%s7841 + $0x50] sm:$0xff]
        %v7853 = vld [vmem:[%s7841 + $0x58] sm:$0xff]
        %v7854 = vld [vmem:[%s7841 + $0x60] sm:$0xff]
        %v7855 = vld [vmem:[%s7841 + $0x68] sm:$0xff]
        %v7856 = vld [vmem:[%s7841 + $0x70] sm:$0xff]
        %v7857 = vld [vmem:[%s7841 + $0x78] sm:$0xff]
        %v7858 = vld [vmem:[%s7841 + $0x80] sm:$0xff]
        %v7859 = vld [vmem:[%s7841 + $0x88] sm:$0xff]
        %v7860 = vld [vmem:[%s7841 + $0x90] sm:$0xff]
        %v7861 = vld [vmem:[%s7841 + $0x98] sm:$0xff]
        %v7862 = vld [vmem:[%s7841 + $0xa0] sm:$0xff]
        %v7863 = vld [vmem:[%s7841 + $0xa8] sm:$0xff]
        %v7864 = vld [vmem:[%s7841 + $0xb0] sm:$0xff]
        %v7865 = vld [vmem:[%s7841 + $0xb8] sm:$0xff]
        %v7866 = vld [vmem:[%s7841 + $0xc0] sm:$0xff]
        %v7867 = vld [vmem:[%s7841 + $0xc8] sm:$0xff]
        %v7868 = vld [vmem:[%s7841 + $0xd0] sm:$0xff]
        %v7869 = vld [vmem:[%s7841 + $0xd8] sm:$0xff]
        %v7870 = vld [vmem:[%s7841 + $0xe0] sm:$0xff]
        %v7871 = vld [vmem:[%s7841 + $0xe8] sm:$0xff]
        %v7872 = vld [vmem:[%s7841 + $0xf0] sm:$0xff]
        %v7873 = vld [vmem:[%s7841 + $0xf8] sm:$0xff]
        %s7874 = scalar_lea.vmem [#allocation18], 2
        %v7875 = vld [vmem:[%s7874] sm:$0x3]
        %v7877 = vlaneseq
        %v7878 = vshrl.u32 %v7877, 7
        %v7879 = vsub.s32 0, %v7878
        %v7880 = vrot.slane %v7875, %v7879
        %v7881 = vlaneseq
        %v7882 = vshrl.u32 %v7881, 7
        %v7883 = vsub.s32 1, %v7882
        %v7884 = vrot.slane %v7875, %v7883
        %v7919 = vunpack.c.l.b16 %v7842
        %v7920 = vunpack.c.h.b16 %v7842
        %v7921 = vunpack.c.l.b16 %v7843
        %v7922 = vunpack.c.h.b16 %v7843
        %v7923 = vunpack.c.l.b16 %v7844
        %v7924 = vunpack.c.h.b16 %v7844
        %v7925 = vunpack.c.l.b16 %v7845
        %v7926 = vunpack.c.h.b16 %v7845
        %v7927 = vunpack.c.l.b16 %v7846
        %v7928 = vunpack.c.h.b16 %v7846
        %v7929 = vunpack.c.l.b16 %v7847
        %v7930 = vunpack.c.h.b16 %v7847
        %v7931 = vunpack.c.l.b16 %v7848
        %v7932 = vunpack.c.h.b16 %v7848
        %v7933 = vunpack.c.l.b16 %v7849
        %v7934 = vunpack.c.h.b16 %v7849
        %v7935 = vunpack.c.l.b16 %v7850
        %v7936 = vunpack.c.h.b16 %v7850
        %v7937 = vunpack.c.l.b16 %v7851
        %v7938 = vunpack.c.h.b16 %v7851
        %v7939 = vunpack.c.l.b16 %v7852
        %v7940 = vunpack.c.h.b16 %v7852
        %v7941 = vunpack.c.l.b16 %v7853
        %v7942 = vunpack.c.h.b16 %v7853
        %v7943 = vunpack.c.l.b16 %v7854
        %v7944 = vunpack.c.h.b16 %v7854
        %v7945 = vunpack.c.l.b16 %v7855
        %v7946 = vunpack.c.h.b16 %v7855
        %v7947 = vunpack.c.l.b16 %v7856
        %v7948 = vunpack.c.h.b16 %v7856
        %v7949 = vunpack.c.l.b16 %v7857
        %v7950 = vunpack.c.h.b16 %v7857
        %v7951 = vunpack.c.l.b16 %v7858
        %v7952 = vunpack.c.h.b16 %v7858
        %v7953 = vunpack.c.l.b16 %v7859
        %v7954 = vunpack.c.h.b16 %v7859
        %v7955 = vunpack.c.l.b16 %v7860
        %v7956 = vunpack.c.h.b16 %v7860
        %v7957 = vunpack.c.l.b16 %v7861
        %v7958 = vunpack.c.h.b16 %v7861
        %v7959 = vunpack.c.l.b16 %v7862
        %v7960 = vunpack.c.h.b16 %v7862
        %v7961 = vunpack.c.l.b16 %v7863
        %v7962 = vunpack.c.h.b16 %v7863
        %v7963 = vunpack.c.l.b16 %v7864
        %v7964 = vunpack.c.h.b16 %v7864
        %v7965 = vunpack.c.l.b16 %v7865
        %v7966 = vunpack.c.h.b16 %v7865
        %v7967 = vunpack.c.l.b16 %v7866
        %v7968 = vunpack.c.h.b16 %v7866
        %v7969 = vunpack.c.l.b16 %v7867
        %v7970 = vunpack.c.h.b16 %v7867
        %v7971 = vunpack.c.l.b16 %v7868
        %v7972 = vunpack.c.h.b16 %v7868
        %v7973 = vunpack.c.l.b16 %v7869
        %v7974 = vunpack.c.h.b16 %v7869
        %v7975 = vunpack.c.l.b16 %v7870
        %v7976 = vunpack.c.h.b16 %v7870
        %v7977 = vunpack.c.l.b16 %v7871
        %v7978 = vunpack.c.h.b16 %v7871
        %v7979 = vunpack.c.l.b16 %v7872
        %v7980 = vunpack.c.h.b16 %v7872
        %v7981 = vunpack.c.l.b16 %v7873
        %v7982 = vunpack.c.h.b16 %v7873
        %v7983 = vpack.c.b16 %v7921, %v7919
        %v7984 = vpack.c.b16 %v7922, %v7920
        %v7985 = vpack.c.b16 %v7925, %v7923
        %v7986 = vpack.c.b16 %v7926, %v7924
        %v7987 = vpack.c.b16 %v7929, %v7927
        %v7988 = vpack.c.b16 %v7930, %v7928
        %v7989 = vpack.c.b16 %v7933, %v7931
        %v7990 = vpack.c.b16 %v7934, %v7932
        %v7991 = vpack.c.b16 %v7937, %v7935
        %v7992 = vpack.c.b16 %v7938, %v7936
        %v7993 = vpack.c.b16 %v7941, %v7939
        %v7994 = vpack.c.b16 %v7942, %v7940
        %v7995 = vpack.c.b16 %v7945, %v7943
        %v7996 = vpack.c.b16 %v7946, %v7944
        %v7997 = vpack.c.b16 %v7949, %v7947
        %v7998 = vpack.c.b16 %v7950, %v7948
        %v7999 = vpack.c.b16 %v7953, %v7951
        %v8000 = vpack.c.b16 %v7954, %v7952
        %v8001 = vpack.c.b16 %v7957, %v7955
        %v8002 = vpack.c.b16 %v7958, %v7956
        %v8003 = vpack.c.b16 %v7961, %v7959
        %v8004 = vpack.c.b16 %v7962, %v7960
        %v8005 = vpack.c.b16 %v7965, %v7963
        %v8006 = vpack.c.b16 %v7966, %v7964
        %v8007 = vpack.c.b16 %v7969, %v7967
        %v8008 = vpack.c.b16 %v7970, %v7968
        %v8009 = vpack.c.b16 %v7973, %v7971
        %v8010 = vpack.c.b16 %v7974, %v7972
        %v8011 = vpack.c.b16 %v7977, %v7975
        %v8012 = vpack.c.b16 %v7978, %v7976
        %v8013 = vpack.c.b16 %v7981, %v7979
        %v8014 = vpack.c.b16 %v7982, %v7980
        %8047 = vmatprep.subr.bf16.mxu0 %v7998
        %8048 = vmatpush1.bf16.msra.mxu0 %v7997
        %8049 = vmatprep.subr.bf16.mxu0 %v7996
        %8050 = vmatpush1.bf16.msra.mxu0 %v7995
        %8051 = vmatprep.subr.bf16.mxu0 %v7994
        %8052 = vmatpush1.bf16.msra.mxu0 %v7993
        %8053 = vmatprep.subr.bf16.mxu0 %v7992
        %8054 = vmatpush1.bf16.msra.mxu0 %v7991
        %8055 = vmatprep.subr.bf16.mxu0 %v7990
        %8056 = vmatpush1.bf16.msra.mxu0 %v7989
        %8057 = vmatprep.subr.bf16.mxu0 %v7988
        %8058 = vmatpush1.bf16.msra.mxu0 %v7987
        %8059 = vmatprep.subr.bf16.mxu0 %v7986
        %8060 = vmatpush1.bf16.msra.mxu0 %v7985
        %8061 = vmatprep.subr.bf16.mxu0 %v7984
        %8062 = vmatpush1.bf16.msra.mxu0 %v7983
        %8063 = vmatprep.subr.bf16.mxu0 %v8014
        %8064 = vmatpush2.bf16.msra.mxu0 %v8013
        %8065 = vmatprep.subr.bf16.mxu0 %v8012
        %8066 = vmatpush2.bf16.msra.mxu0 %v8011
        %8067 = vmatprep.subr.bf16.mxu0 %v8010
        %8068 = vmatpush2.bf16.msra.mxu0 %v8009
        %8069 = vmatprep.subr.bf16.mxu0 %v8008
        %8070 = vmatpush2.bf16.msra.mxu0 %v8007
        %8071 = vmatprep.subr.bf16.mxu0 %v8006
        %8072 = vmatpush2.bf16.msra.mxu0 %v8005
        %8073 = vmatprep.subr.bf16.mxu0 %v8004
        %8074 = vmatpush2.bf16.msra.mxu0 %v8003
        %8075 = vmatprep.subr.bf16.mxu0 %v8002
        %8076 = vmatpush2.bf16.msra.mxu0 %v8001
        %8077 = vmatprep.subr.bf16.mxu0 %v8000
        %8078 = vmatpush2.bf16.msra.mxu0 %v7999
        %8079 = vmatprep.mubr.bf16.mxu0 %v7840
        %8080 = vmatmul.mubr.bf16.gmra.mxu0 %v7839
        %v8081 = vpop.f32.mrf.mxu0
        %v8082 = vadd.f32 %v7880, %v8081
        %v8083 = vpop.f32.mrf.mxu0
        %v8084 = vadd.f32 %v7884, %v8083
        %v8085 = vpop.f32.mrf.mxu0
        %v8086 = vadd.f32 %v7880, %v8085
        %v8087 = vpop.f32.mrf.mxu0
        %v8088 = vadd.f32 %v7884, %v8087
        %8089 = vdwg.mxu0
        %v8090 = vadd.f32 %v6496, %v8082
        %v8091 = vadd.f32 %v6497, %v8084
        %v8092 = vadd.f32 %v6498, %v8086
        %v8093 = vadd.f32 %v6499, %v8088
        %s8094 = scalar_lea.vmem [#allocation19], 2
        %v8095 = vld [vmem:[%s8094] sm:$0x3]
        %s8096 = scalar_lea.vmem [#allocation21], 2
        %v8097 = vld [vmem:[%s8096] sm:$0x3]
        %v8098 = vadd.f32 %v8090, %v8091
        %8099 = vadd.xlane.f32.xlu0 %v8098
        %v8100 = vpop.xlane.xlu0 %8099
        %v8101 = vsel %vm2869, %v8092, 0.0
        %v8102 = vsel %vm2869, %v8093, 0.0
        %v8103 = vadd.f32 %v8101, %v8102
        %8104 = vadd.xlane.f32.xlu0 %v8103
        %v8105 = vpop.xlane.xlu0 %8104
        %v8106 = vmul.f32 %v8100, %v2875
        %v8107 = vmul.f32 %v8105, %v2875
        %v8108 = vsub.f32 %v8090, %v8106
        %v8109 = vsub.f32 %v8091, %v8106
        %v8110 = vsub.f32 %v8092, %v8107
        %v8111 = vsub.f32 %v8093, %v8107
        %v8112 = vmul.f32 %v8108, %v8108
        %v8113 = vmul.f32 %v8109, %v8109
        %v8114 = vmul.f32 %v8110, %v8110
        %v8115 = vmul.f32 %v8111, %v8111
        %v8116 = vadd.f32 %v8112, %v8113
        %8117 = vadd.xlane.f32.xlu0 %v8116
        %v8118 = vpop.xlane.xlu0 %8117
        %v8119 = vsel %vm2869, %v8114, 0.0
        %v8120 = vsel %vm2869, %v8115, 0.0
        %v8121 = vadd.f32 %v8119, %v8120
        %8122 = vadd.xlane.f32.xlu0 %v8121
        %v8123 = vpop.xlane.xlu0 %8122
        %v8124 = vmul.f32 %v8118, %v2875
        %v8125 = vmul.f32 %v8123, %v2875
        %v8126 = vadd.f32 %v8124, 1e-06
        %v8127 = vadd.f32 %v8125, 1e-06
        %v8128 = vrsqrt.pop %v8126
        %v8129 = vrsqrt.pop %v8127
        %v8130 = vmul.f32 %v8108, %v8128
        %v8131 = vmul.f32 %v8109, %v8128
        %v8132 = vmul.f32 %v8110, %v8129
        %v8133 = vmul.f32 %v8111, %v8129
        %v8135 = vlaneseq
        %v8136 = vshrl.u32 %v8135, 7
        %v8137 = vsub.s32 0, %v8136
        %v8138 = vrot.slane %v8095, %v8137
        %v8139 = vlaneseq
        %v8140 = vshrl.u32 %v8139, 7
        %v8141 = vsub.s32 1, %v8140
        %v8142 = vrot.slane %v8095, %v8141
        %v8145 = vmul.f32 %v8130, %v8138
        %v8146 = vmul.f32 %v8131, %v8142
        %v8147 = vmul.f32 %v8132, %v8138
        %v8148 = vmul.f32 %v8133, %v8142
        %v8150 = vlaneseq
        %v8151 = vshrl.u32 %v8150, 7
        %v8152 = vsub.s32 0, %v8151
        %v8153 = vrot.slane %v8097, %v8152
        %v8154 = vlaneseq
        %v8155 = vshrl.u32 %v8154, 7
        %v8156 = vsub.s32 1, %v8155
        %v8157 = vrot.slane %v8097, %v8156
        %v8160 = vadd.f32 %v8145, %v8153
        %v8161 = vadd.f32 %v8146, %v8157
        %v8162 = vadd.f32 %v8147, %v8153
        %v8163 = vadd.f32 %v8148, %v8157
        %v8164 = vpack.c.bf16 %v8162, %v8160
        %v8165 = vpack.c.bf16 %v8163, %v8161
        %s8166 = scalar_lea.vmem [#allocation22], 1024
        %v8167 = vld [vmem:[%s8166] sm:$0xff]
        %v8168 = vld [vmem:[%s8166 + $0x8] sm:$0xff]
        %v8169 = vld [vmem:[%s8166 + $0x10] sm:$0xff]
        %v8170 = vld [vmem:[%s8166 + $0x18] sm:$0xff]
        %v8171 = vld [vmem:[%s8166 + $0x20] sm:$0xff]
        %v8172 = vld [vmem:[%s8166 + $0x28] sm:$0xff]
        %v8173 = vld [vmem:[%s8166 + $0x30] sm:$0xff]
        %v8174 = vld [vmem:[%s8166 + $0x38] sm:$0xff]
        %v8175 = vld [vmem:[%s8166 + $0x40] sm:$0xff]
        %v8176 = vld [vmem:[%s8166 + $0x48] sm:$0xff]
        %v8177 = vld [vmem:[%s8166 + $0x50] sm:$0xff]
        %v8178 = vld [vmem:[%s8166 + $0x58] sm:$0xff]
        %v8179 = vld [vmem:[%s8166 + $0x60] sm:$0xff]
        %v8180 = vld [vmem:[%s8166 + $0x68] sm:$0xff]
        %v8181 = vld [vmem:[%s8166 + $0x70] sm:$0xff]
        %v8182 = vld [vmem:[%s8166 + $0x78] sm:$0xff]
        %v8183 = vld [vmem:[%s8166 + $0x80] sm:$0xff]
        %v8184 = vld [vmem:[%s8166 + $0x88] sm:$0xff]
        %v8185 = vld [vmem:[%s8166 + $0x90] sm:$0xff]
        %v8186 = vld [vmem:[%s8166 + $0x98] sm:$0xff]
        %v8187 = vld [vmem:[%s8166 + $0xa0] sm:$0xff]
        %v8188 = vld [vmem:[%s8166 + $0xa8] sm:$0xff]
        %v8189 = vld [vmem:[%s8166 + $0xb0] sm:$0xff]
        %v8190 = vld [vmem:[%s8166 + $0xb8] sm:$0xff]
        %v8191 = vld [vmem:[%s8166 + $0xc0] sm:$0xff]
        %v8192 = vld [vmem:[%s8166 + $0xc8] sm:$0xff]
        %v8193 = vld [vmem:[%s8166 + $0xd0] sm:$0xff]
        %v8194 = vld [vmem:[%s8166 + $0xd8] sm:$0xff]
        %v8195 = vld [vmem:[%s8166 + $0xe0] sm:$0xff]
        %v8196 = vld [vmem:[%s8166 + $0xe8] sm:$0xff]
        %v8197 = vld [vmem:[%s8166 + $0xf0] sm:$0xff]
        %v8198 = vld [vmem:[%s8166 + $0xf8] sm:$0xff]
        %v8199 = vld [vmem:[%s8166 + $0x100] sm:$0xff]
        %v8200 = vld [vmem:[%s8166 + $0x108] sm:$0xff]
        %v8201 = vld [vmem:[%s8166 + $0x110] sm:$0xff]
        %v8202 = vld [vmem:[%s8166 + $0x118] sm:$0xff]
        %v8203 = vld [vmem:[%s8166 + $0x120] sm:$0xff]
        %v8204 = vld [vmem:[%s8166 + $0x128] sm:$0xff]
        %v8205 = vld [vmem:[%s8166 + $0x130] sm:$0xff]
        %v8206 = vld [vmem:[%s8166 + $0x138] sm:$0xff]
        %v8207 = vld [vmem:[%s8166 + $0x140] sm:$0xff]
        %v8208 = vld [vmem:[%s8166 + $0x148] sm:$0xff]
        %v8209 = vld [vmem:[%s8166 + $0x150] sm:$0xff]
        %v8210 = vld [vmem:[%s8166 + $0x158] sm:$0xff]
        %v8211 = vld [vmem:[%s8166 + $0x160] sm:$0xff]
        %v8212 = vld [vmem:[%s8166 + $0x168] sm:$0xff]
        %v8213 = vld [vmem:[%s8166 + $0x170] sm:$0xff]
        %v8214 = vld [vmem:[%s8166 + $0x178] sm:$0xff]
        %v8215 = vld [vmem:[%s8166 + $0x180] sm:$0xff]
        %v8216 = vld [vmem:[%s8166 + $0x188] sm:$0xff]
        %v8217 = vld [vmem:[%s8166 + $0x190] sm:$0xff]
        %v8218 = vld [vmem:[%s8166 + $0x198] sm:$0xff]
        %v8219 = vld [vmem:[%s8166 + $0x1a0] sm:$0xff]
        %v8220 = vld [vmem:[%s8166 + $0x1a8] sm:$0xff]
        %v8221 = vld [vmem:[%s8166 + $0x1b0] sm:$0xff]
        %v8222 = vld [vmem:[%s8166 + $0x1b8] sm:$0xff]
        %v8223 = vld [vmem:[%s8166 + $0x1c0] sm:$0xff]
        %v8224 = vld [vmem:[%s8166 + $0x1c8] sm:$0xff]
        %v8225 = vld [vmem:[%s8166 + $0x1d0] sm:$0xff]
        %v8226 = vld [vmem:[%s8166 + $0x1d8] sm:$0xff]
        %v8227 = vld [vmem:[%s8166 + $0x1e0] sm:$0xff]
        %v8228 = vld [vmem:[%s8166 + $0x1e8] sm:$0xff]
        %v8229 = vld [vmem:[%s8166 + $0x1f0] sm:$0xff]
        %v8230 = vld [vmem:[%s8166 + $0x1f8] sm:$0xff]
        %v8231 = vld [vmem:[%s8166 + $0x200] sm:$0xff]
        %v8232 = vld [vmem:[%s8166 + $0x208] sm:$0xff]
        %v8233 = vld [vmem:[%s8166 + $0x210] sm:$0xff]
        %v8234 = vld [vmem:[%s8166 + $0x218] sm:$0xff]
        %v8235 = vld [vmem:[%s8166 + $0x220] sm:$0xff]
        %v8236 = vld [vmem:[%s8166 + $0x228] sm:$0xff]
        %v8237 = vld [vmem:[%s8166 + $0x230] sm:$0xff]
        %v8238 = vld [vmem:[%s8166 + $0x238] sm:$0xff]
        %v8239 = vld [vmem:[%s8166 + $0x240] sm:$0xff]
        %v8240 = vld [vmem:[%s8166 + $0x248] sm:$0xff]
        %v8241 = vld [vmem:[%s8166 + $0x250] sm:$0xff]
        %v8242 = vld [vmem:[%s8166 + $0x258] sm:$0xff]
        %v8243 = vld [vmem:[%s8166 + $0x260] sm:$0xff]
        %v8244 = vld [vmem:[%s8166 + $0x268] sm:$0xff]
        %v8245 = vld [vmem:[%s8166 + $0x270] sm:$0xff]
        %v8246 = vld [vmem:[%s8166 + $0x278] sm:$0xff]
        %v8247 = vld [vmem:[%s8166 + $0x280] sm:$0xff]
        %v8248 = vld [vmem:[%s8166 + $0x288] sm:$0xff]
        %v8249 = vld [vmem:[%s8166 + $0x290] sm:$0xff]
        %v8250 = vld [vmem:[%s8166 + $0x298] sm:$0xff]
        %v8251 = vld [vmem:[%s8166 + $0x2a0] sm:$0xff]
        %v8252 = vld [vmem:[%s8166 + $0x2a8] sm:$0xff]
        %v8253 = vld [vmem:[%s8166 + $0x2b0] sm:$0xff]
        %v8254 = vld [vmem:[%s8166 + $0x2b8] sm:$0xff]
        %v8255 = vld [vmem:[%s8166 + $0x2c0] sm:$0xff]
        %v8256 = vld [vmem:[%s8166 + $0x2c8] sm:$0xff]
        %v8257 = vld [vmem:[%s8166 + $0x2d0] sm:$0xff]
        %v8258 = vld [vmem:[%s8166 + $0x2d8] sm:$0xff]
        %v8259 = vld [vmem:[%s8166 + $0x2e0] sm:$0xff]
        %v8260 = vld [vmem:[%s8166 + $0x2e8] sm:$0xff]
        %v8261 = vld [vmem:[%s8166 + $0x2f0] sm:$0xff]
        %v8262 = vld [vmem:[%s8166 + $0x2f8] sm:$0xff]
        %v8263 = vld [vmem:[%s8166 + $0x300] sm:$0xff]
        %v8264 = vld [vmem:[%s8166 + $0x308] sm:$0xff]
        %v8265 = vld [vmem:[%s8166 + $0x310] sm:$0xff]
        %v8266 = vld [vmem:[%s8166 + $0x318] sm:$0xff]
        %v8267 = vld [vmem:[%s8166 + $0x320] sm:$0xff]
        %v8268 = vld [vmem:[%s8166 + $0x328] sm:$0xff]
        %v8269 = vld [vmem:[%s8166 + $0x330] sm:$0xff]
        %v8270 = vld [vmem:[%s8166 + $0x338] sm:$0xff]
        %v8271 = vld [vmem:[%s8166 + $0x340] sm:$0xff]
        %v8272 = vld [vmem:[%s8166 + $0x348] sm:$0xff]
        %v8273 = vld [vmem:[%s8166 + $0x350] sm:$0xff]
        %v8274 = vld [vmem:[%s8166 + $0x358] sm:$0xff]
        %v8275 = vld [vmem:[%s8166 + $0x360] sm:$0xff]
        %v8276 = vld [vmem:[%s8166 + $0x368] sm:$0xff]
        %v8277 = vld [vmem:[%s8166 + $0x370] sm:$0xff]
        %v8278 = vld [vmem:[%s8166 + $0x378] sm:$0xff]
        %v8279 = vld [vmem:[%s8166 + $0x380] sm:$0xff]
        %v8280 = vld [vmem:[%s8166 + $0x388] sm:$0xff]
        %v8281 = vld [vmem:[%s8166 + $0x390] sm:$0xff]
        %v8282 = vld [vmem:[%s8166 + $0x398] sm:$0xff]
        %v8283 = vld [vmem:[%s8166 + $0x3a0] sm:$0xff]
        %v8284 = vld [vmem:[%s8166 + $0x3a8] sm:$0xff]
        %v8285 = vld [vmem:[%s8166 + $0x3b0] sm:$0xff]
        %v8286 = vld [vmem:[%s8166 + $0x3b8] sm:$0xff]
        %v8287 = vld [vmem:[%s8166 + $0x3c0] sm:$0xff]
        %v8288 = vld [vmem:[%s8166 + $0x3c8] sm:$0xff]
        %v8289 = vld [vmem:[%s8166 + $0x3d0] sm:$0xff]
        %v8290 = vld [vmem:[%s8166 + $0x3d8] sm:$0xff]
        %v8291 = vld [vmem:[%s8166 + $0x3e0] sm:$0xff]
        %v8292 = vld [vmem:[%s8166 + $0x3e8] sm:$0xff]
        %v8293 = vld [vmem:[%s8166 + $0x3f0] sm:$0xff]
        %v8294 = vld [vmem:[%s8166 + $0x3f8] sm:$0xff]
        %s8295 = scalar_lea.vmem %s14, 8
        %v8296 = vld [vmem:[%s8295] sm:$0xff]
        %v8298 = vlaneseq
        %v8299 = vshrl.u32 %v8298, 7
        %v8300 = vsub.s32 0, %v8299
        %v8301 = vrot.slane %v8296, %v8300
        %v8302 = vlaneseq
        %v8303 = vshrl.u32 %v8302, 7
        %v8304 = vsub.s32 1, %v8303
        %v8305 = vrot.slane %v8296, %v8304
        %v8306 = vlaneseq
        %v8307 = vshrl.u32 %v8306, 7
        %v8308 = vsub.s32 2, %v8307
        %v8309 = vrot.slane %v8296, %v8308
        %v8310 = vlaneseq
        %v8311 = vshrl.u32 %v8310, 7
        %v8312 = vsub.s32 3, %v8311
        %v8313 = vrot.slane %v8296, %v8312
        %v8314 = vlaneseq
        %v8315 = vshrl.u32 %v8314, 7
        %v8316 = vsub.s32 4, %v8315
        %v8317 = vrot.slane %v8296, %v8316
        %v8318 = vlaneseq
        %v8319 = vshrl.u32 %v8318, 7
        %v8320 = vsub.s32 5, %v8319
        %v8321 = vrot.slane %v8296, %v8320
        %v8322 = vlaneseq
        %v8323 = vshrl.u32 %v8322, 7
        %v8324 = vsub.s32 6, %v8323
        %v8325 = vrot.slane %v8296, %v8324
        %v8326 = vlaneseq
        %v8327 = vshrl.u32 %v8326, 7
        %v8328 = vsub.s32 7, %v8327
        %v8329 = vrot.slane %v8296, %v8328
        %v8466 = vunpack.c.l.b16 %v8167
        %v8467 = vunpack.c.h.b16 %v8167
        %v8468 = vunpack.c.l.b16 %v8168
        %v8469 = vunpack.c.h.b16 %v8168
        %v8470 = vunpack.c.l.b16 %v8169
        %v8471 = vunpack.c.h.b16 %v8169
        %v8472 = vunpack.c.l.b16 %v8170
        %v8473 = vunpack.c.h.b16 %v8170
        %v8474 = vunpack.c.l.b16 %v8171
        %v8475 = vunpack.c.h.b16 %v8171
        %v8476 = vunpack.c.l.b16 %v8172
        %v8477 = vunpack.c.h.b16 %v8172
        %v8478 = vunpack.c.l.b16 %v8173
        %v8479 = vunpack.c.h.b16 %v8173
        %v8480 = vunpack.c.l.b16 %v8174
        %v8481 = vunpack.c.h.b16 %v8174
        %v8482 = vunpack.c.l.b16 %v8175
        %v8483 = vunpack.c.h.b16 %v8175
        %v8484 = vunpack.c.l.b16 %v8176
        %v8485 = vunpack.c.h.b16 %v8176
        %v8486 = vunpack.c.l.b16 %v8177
        %v8487 = vunpack.c.h.b16 %v8177
        %v8488 = vunpack.c.l.b16 %v8178
        %v8489 = vunpack.c.h.b16 %v8178
        %v8490 = vunpack.c.l.b16 %v8179
        %v8491 = vunpack.c.h.b16 %v8179
        %v8492 = vunpack.c.l.b16 %v8180
        %v8493 = vunpack.c.h.b16 %v8180
        %v8494 = vunpack.c.l.b16 %v8181
        %v8495 = vunpack.c.h.b16 %v8181
        %v8496 = vunpack.c.l.b16 %v8182
        %v8497 = vunpack.c.h.b16 %v8182
        %v8498 = vunpack.c.l.b16 %v8183
        %v8499 = vunpack.c.h.b16 %v8183
        %v8500 = vunpack.c.l.b16 %v8184
        %v8501 = vunpack.c.h.b16 %v8184
        %v8502 = vunpack.c.l.b16 %v8185
        %v8503 = vunpack.c.h.b16 %v8185
        %v8504 = vunpack.c.l.b16 %v8186
        %v8505 = vunpack.c.h.b16 %v8186
        %v8506 = vunpack.c.l.b16 %v8187
        %v8507 = vunpack.c.h.b16 %v8187
        %v8508 = vunpack.c.l.b16 %v8188
        %v8509 = vunpack.c.h.b16 %v8188
        %v8510 = vunpack.c.l.b16 %v8189
        %v8511 = vunpack.c.h.b16 %v8189
        %v8512 = vunpack.c.l.b16 %v8190
        %v8513 = vunpack.c.h.b16 %v8190
        %v8514 = vunpack.c.l.b16 %v8191
        %v8515 = vunpack.c.h.b16 %v8191
        %v8516 = vunpack.c.l.b16 %v8192
        %v8517 = vunpack.c.h.b16 %v8192
        %v8518 = vunpack.c.l.b16 %v8193
        %v8519 = vunpack.c.h.b16 %v8193
        %v8520 = vunpack.c.l.b16 %v8194
        %v8521 = vunpack.c.h.b16 %v8194
        %v8522 = vunpack.c.l.b16 %v8195
        %v8523 = vunpack.c.h.b16 %v8195
        %v8524 = vunpack.c.l.b16 %v8196
        %v8525 = vunpack.c.h.b16 %v8196
        %v8526 = vunpack.c.l.b16 %v8197
        %v8527 = vunpack.c.h.b16 %v8197
        %v8528 = vunpack.c.l.b16 %v8198
        %v8529 = vunpack.c.h.b16 %v8198
        %v8530 = vunpack.c.l.b16 %v8199
        %v8531 = vunpack.c.h.b16 %v8199
        %v8532 = vunpack.c.l.b16 %v8200
        %v8533 = vunpack.c.h.b16 %v8200
        %v8534 = vunpack.c.l.b16 %v8201
        %v8535 = vunpack.c.h.b16 %v8201
        %v8536 = vunpack.c.l.b16 %v8202
        %v8537 = vunpack.c.h.b16 %v8202
        %v8538 = vunpack.c.l.b16 %v8203
        %v8539 = vunpack.c.h.b16 %v8203
        %v8540 = vunpack.c.l.b16 %v8204
        %v8541 = vunpack.c.h.b16 %v8204
        %v8542 = vunpack.c.l.b16 %v8205
        %v8543 = vunpack.c.h.b16 %v8205
        %v8544 = vunpack.c.l.b16 %v8206
        %v8545 = vunpack.c.h.b16 %v8206
        %v8546 = vunpack.c.l.b16 %v8207
        %v8547 = vunpack.c.h.b16 %v8207
        %v8548 = vunpack.c.l.b16 %v8208
        %v8549 = vunpack.c.h.b16 %v8208
        %v8550 = vunpack.c.l.b16 %v8209
        %v8551 = vunpack.c.h.b16 %v8209
        %v8552 = vunpack.c.l.b16 %v8210
        %v8553 = vunpack.c.h.b16 %v8210
        %v8554 = vunpack.c.l.b16 %v8211
        %v8555 = vunpack.c.h.b16 %v8211
        %v8556 = vunpack.c.l.b16 %v8212
        %v8557 = vunpack.c.h.b16 %v8212
        %v8558 = vunpack.c.l.b16 %v8213
        %v8559 = vunpack.c.h.b16 %v8213
        %v8560 = vunpack.c.l.b16 %v8214
        %v8561 = vunpack.c.h.b16 %v8214
        %v8562 = vunpack.c.l.b16 %v8215
        %v8563 = vunpack.c.h.b16 %v8215
        %v8564 = vunpack.c.l.b16 %v8216
        %v8565 = vunpack.c.h.b16 %v8216
        %v8566 = vunpack.c.l.b16 %v8217
        %v8567 = vunpack.c.h.b16 %v8217
        %v8568 = vunpack.c.l.b16 %v8218
        %v8569 = vunpack.c.h.b16 %v8218
        %v8570 = vunpack.c.l.b16 %v8219
        %v8571 = vunpack.c.h.b16 %v8219
        %v8572 = vunpack.c.l.b16 %v8220
        %v8573 = vunpack.c.h.b16 %v8220
        %v8574 = vunpack.c.l.b16 %v8221
        %v8575 = vunpack.c.h.b16 %v8221
        %v8576 = vunpack.c.l.b16 %v8222
        %v8577 = vunpack.c.h.b16 %v8222
        %v8578 = vunpack.c.l.b16 %v8223
        %v8579 = vunpack.c.h.b16 %v8223
        %v8580 = vunpack.c.l.b16 %v8224
        %v8581 = vunpack.c.h.b16 %v8224
        %v8582 = vunpack.c.l.b16 %v8225
        %v8583 = vunpack.c.h.b16 %v8225
        %v8584 = vunpack.c.l.b16 %v8226
        %v8585 = vunpack.c.h.b16 %v8226
        %v8586 = vunpack.c.l.b16 %v8227
        %v8587 = vunpack.c.h.b16 %v8227
        %v8588 = vunpack.c.l.b16 %v8228
        %v8589 = vunpack.c.h.b16 %v8228
        %v8590 = vunpack.c.l.b16 %v8229
        %v8591 = vunpack.c.h.b16 %v8229
        %v8592 = vunpack.c.l.b16 %v8230
        %v8593 = vunpack.c.h.b16 %v8230
        %v8594 = vunpack.c.l.b16 %v8231
        %v8595 = vunpack.c.h.b16 %v8231
        %v8596 = vunpack.c.l.b16 %v8232
        %v8597 = vunpack.c.h.b16 %v8232
        %v8598 = vunpack.c.l.b16 %v8233
        %v8599 = vunpack.c.h.b16 %v8233
        %v8600 = vunpack.c.l.b16 %v8234
        %v8601 = vunpack.c.h.b16 %v8234
        %v8602 = vunpack.c.l.b16 %v8235
        %v8603 = vunpack.c.h.b16 %v8235
        %v8604 = vunpack.c.l.b16 %v8236
        %v8605 = vunpack.c.h.b16 %v8236
        %v8606 = vunpack.c.l.b16 %v8237
        %v8607 = vunpack.c.h.b16 %v8237
        %v8608 = vunpack.c.l.b16 %v8238
        %v8609 = vunpack.c.h.b16 %v8238
        %v8610 = vunpack.c.l.b16 %v8239
        %v8611 = vunpack.c.h.b16 %v8239
        %v8612 = vunpack.c.l.b16 %v8240
        %v8613 = vunpack.c.h.b16 %v8240
        %v8614 = vunpack.c.l.b16 %v8241
        %v8615 = vunpack.c.h.b16 %v8241
        %v8616 = vunpack.c.l.b16 %v8242
        %v8617 = vunpack.c.h.b16 %v8242
        %v8618 = vunpack.c.l.b16 %v8243
        %v8619 = vunpack.c.h.b16 %v8243
        %v8620 = vunpack.c.l.b16 %v8244
        %v8621 = vunpack.c.h.b16 %v8244
        %v8622 = vunpack.c.l.b16 %v8245
        %v8623 = vunpack.c.h.b16 %v8245
        %v8624 = vunpack.c.l.b16 %v8246
        %v8625 = vunpack.c.h.b16 %v8246
        %v8626 = vunpack.c.l.b16 %v8247
        %v8627 = vunpack.c.h.b16 %v8247
        %v8628 = vunpack.c.l.b16 %v8248
        %v8629 = vunpack.c.h.b16 %v8248
        %v8630 = vunpack.c.l.b16 %v8249
        %v8631 = vunpack.c.h.b16 %v8249
        %v8632 = vunpack.c.l.b16 %v8250
        %v8633 = vunpack.c.h.b16 %v8250
        %v8634 = vunpack.c.l.b16 %v8251
        %v8635 = vunpack.c.h.b16 %v8251
        %v8636 = vunpack.c.l.b16 %v8252
        %v8637 = vunpack.c.h.b16 %v8252
        %v8638 = vunpack.c.l.b16 %v8253
        %v8639 = vunpack.c.h.b16 %v8253
        %v8640 = vunpack.c.l.b16 %v8254
        %v8641 = vunpack.c.h.b16 %v8254
        %v8642 = vunpack.c.l.b16 %v8255
        %v8643 = vunpack.c.h.b16 %v8255
        %v8644 = vunpack.c.l.b16 %v8256
        %v8645 = vunpack.c.h.b16 %v8256
        %v8646 = vunpack.c.l.b16 %v8257
        %v8647 = vunpack.c.h.b16 %v8257
        %v8648 = vunpack.c.l.b16 %v8258
        %v8649 = vunpack.c.h.b16 %v8258
        %v8650 = vunpack.c.l.b16 %v8259
        %v8651 = vunpack.c.h.b16 %v8259
        %v8652 = vunpack.c.l.b16 %v8260
        %v8653 = vunpack.c.h.b16 %v8260
        %v8654 = vunpack.c.l.b16 %v8261
        %v8655 = vunpack.c.h.b16 %v8261
        %v8656 = vunpack.c.l.b16 %v8262
        %v8657 = vunpack.c.h.b16 %v8262
        %v8658 = vunpack.c.l.b16 %v8263
        %v8659 = vunpack.c.h.b16 %v8263
        %v8660 = vunpack.c.l.b16 %v8264
        %v8661 = vunpack.c.h.b16 %v8264
        %v8662 = vunpack.c.l.b16 %v8265
        %v8663 = vunpack.c.h.b16 %v8265
        %v8664 = vunpack.c.l.b16 %v8266
        %v8665 = vunpack.c.h.b16 %v8266
        %v8666 = vunpack.c.l.b16 %v8267
        %v8667 = vunpack.c.h.b16 %v8267
        %v8668 = vunpack.c.l.b16 %v8268
        %v8669 = vunpack.c.h.b16 %v8268
        %v8670 = vunpack.c.l.b16 %v8269
        %v8671 = vunpack.c.h.b16 %v8269
        %v8672 = vunpack.c.l.b16 %v8270
        %v8673 = vunpack.c.h.b16 %v8270
        %v8674 = vunpack.c.l.b16 %v8271
        %v8675 = vunpack.c.h.b16 %v8271
        %v8676 = vunpack.c.l.b16 %v8272
        %v8677 = vunpack.c.h.b16 %v8272
        %v8678 = vunpack.c.l.b16 %v8273
        %v8679 = vunpack.c.h.b16 %v8273
        %v8680 = vunpack.c.l.b16 %v8274
        %v8681 = vunpack.c.h.b16 %v8274
        %v8682 = vunpack.c.l.b16 %v8275
        %v8683 = vunpack.c.h.b16 %v8275
        %v8684 = vunpack.c.l.b16 %v8276
        %v8685 = vunpack.c.h.b16 %v8276
        %v8686 = vunpack.c.l.b16 %v8277
        %v8687 = vunpack.c.h.b16 %v8277
        %v8688 = vunpack.c.l.b16 %v8278
        %v8689 = vunpack.c.h.b16 %v8278
        %v8690 = vunpack.c.l.b16 %v8279
        %v8691 = vunpack.c.h.b16 %v8279
        %v8692 = vunpack.c.l.b16 %v8280
        %v8693 = vunpack.c.h.b16 %v8280
        %v8694 = vunpack.c.l.b16 %v8281
        %v8695 = vunpack.c.h.b16 %v8281
        %v8696 = vunpack.c.l.b16 %v8282
        %v8697 = vunpack.c.h.b16 %v8282
        %v8698 = vunpack.c.l.b16 %v8283
        %v8699 = vunpack.c.h.b16 %v8283
        %v8700 = vunpack.c.l.b16 %v8284
        %v8701 = vunpack.c.h.b16 %v8284
        %v8702 = vunpack.c.l.b16 %v8285
        %v8703 = vunpack.c.h.b16 %v8285
        %v8704 = vunpack.c.l.b16 %v8286
        %v8705 = vunpack.c.h.b16 %v8286
        %v8706 = vunpack.c.l.b16 %v8287
        %v8707 = vunpack.c.h.b16 %v8287
        %v8708 = vunpack.c.l.b16 %v8288
        %v8709 = vunpack.c.h.b16 %v8288
        %v8710 = vunpack.c.l.b16 %v8289
        %v8711 = vunpack.c.h.b16 %v8289
        %v8712 = vunpack.c.l.b16 %v8290
        %v8713 = vunpack.c.h.b16 %v8290
        %v8714 = vunpack.c.l.b16 %v8291
        %v8715 = vunpack.c.h.b16 %v8291
        %v8716 = vunpack.c.l.b16 %v8292
        %v8717 = vunpack.c.h.b16 %v8292
        %v8718 = vunpack.c.l.b16 %v8293
        %v8719 = vunpack.c.h.b16 %v8293
        %v8720 = vunpack.c.l.b16 %v8294
        %v8721 = vunpack.c.h.b16 %v8294
        %v8722 = vpack.c.b16 %v8474, %v8466
        %v8723 = vpack.c.b16 %v8475, %v8467
        %v8724 = vpack.c.b16 %v8476, %v8468
        %v8725 = vpack.c.b16 %v8477, %v8469
        %v8726 = vpack.c.b16 %v8478, %v8470
        %v8727 = vpack.c.b16 %v8479, %v8471
        %v8728 = vpack.c.b16 %v8480, %v8472
        %v8729 = vpack.c.b16 %v8481, %v8473
        %v8730 = vpack.c.b16 %v8490, %v8482
        %v8731 = vpack.c.b16 %v8491, %v8483
        %v8732 = vpack.c.b16 %v8492, %v8484
        %v8733 = vpack.c.b16 %v8493, %v8485
        %v8734 = vpack.c.b16 %v8494, %v8486
        %v8735 = vpack.c.b16 %v8495, %v8487
        %v8736 = vpack.c.b16 %v8496, %v8488
        %v8737 = vpack.c.b16 %v8497, %v8489
        %v8738 = vpack.c.b16 %v8506, %v8498
        %v8739 = vpack.c.b16 %v8507, %v8499
        %v8740 = vpack.c.b16 %v8508, %v8500
        %v8741 = vpack.c.b16 %v8509, %v8501
        %v8742 = vpack.c.b16 %v8510, %v8502
        %v8743 = vpack.c.b16 %v8511, %v8503
        %v8744 = vpack.c.b16 %v8512, %v8504
        %v8745 = vpack.c.b16 %v8513, %v8505
        %v8746 = vpack.c.b16 %v8522, %v8514
        %v8747 = vpack.c.b16 %v8523, %v8515
        %v8748 = vpack.c.b16 %v8524, %v8516
        %v8749 = vpack.c.b16 %v8525, %v8517
        %v8750 = vpack.c.b16 %v8526, %v8518
        %v8751 = vpack.c.b16 %v8527, %v8519
        %v8752 = vpack.c.b16 %v8528, %v8520
        %v8753 = vpack.c.b16 %v8529, %v8521
        %v8754 = vpack.c.b16 %v8538, %v8530
        %v8755 = vpack.c.b16 %v8539, %v8531
        %v8756 = vpack.c.b16 %v8540, %v8532
        %v8757 = vpack.c.b16 %v8541, %v8533
        %v8758 = vpack.c.b16 %v8542, %v8534
        %v8759 = vpack.c.b16 %v8543, %v8535
        %v8760 = vpack.c.b16 %v8544, %v8536
        %v8761 = vpack.c.b16 %v8545, %v8537
        %v8762 = vpack.c.b16 %v8554, %v8546
        %v8763 = vpack.c.b16 %v8555, %v8547
        %v8764 = vpack.c.b16 %v8556, %v8548
        %v8765 = vpack.c.b16 %v8557, %v8549
        %v8766 = vpack.c.b16 %v8558, %v8550
        %v8767 = vpack.c.b16 %v8559, %v8551
        %v8768 = vpack.c.b16 %v8560, %v8552
        %v8769 = vpack.c.b16 %v8561, %v8553
        %v8770 = vpack.c.b16 %v8570, %v8562
        %v8771 = vpack.c.b16 %v8571, %v8563
        %v8772 = vpack.c.b16 %v8572, %v8564
        %v8773 = vpack.c.b16 %v8573, %v8565
        %v8774 = vpack.c.b16 %v8574, %v8566
        %v8775 = vpack.c.b16 %v8575, %v8567
        %v8776 = vpack.c.b16 %v8576, %v8568
        %v8777 = vpack.c.b16 %v8577, %v8569
        %v8778 = vpack.c.b16 %v8586, %v8578
        %v8779 = vpack.c.b16 %v8587, %v8579
        %v8780 = vpack.c.b16 %v8588, %v8580
        %v8781 = vpack.c.b16 %v8589, %v8581
        %v8782 = vpack.c.b16 %v8590, %v8582
        %v8783 = vpack.c.b16 %v8591, %v8583
        %v8784 = vpack.c.b16 %v8592, %v8584
        %v8785 = vpack.c.b16 %v8593, %v8585
        %v8786 = vpack.c.b16 %v8602, %v8594
        %v8787 = vpack.c.b16 %v8603, %v8595
        %v8788 = vpack.c.b16 %v8604, %v8596
        %v8789 = vpack.c.b16 %v8605, %v8597
        %v8790 = vpack.c.b16 %v8606, %v8598
        %v8791 = vpack.c.b16 %v8607, %v8599
        %v8792 = vpack.c.b16 %v8608, %v8600
        %v8793 = vpack.c.b16 %v8609, %v8601
        %v8794 = vpack.c.b16 %v8618, %v8610
        %v8795 = vpack.c.b16 %v8619, %v8611
        %v8796 = vpack.c.b16 %v8620, %v8612
        %v8797 = vpack.c.b16 %v8621, %v8613
        %v8798 = vpack.c.b16 %v8622, %v8614
        %v8799 = vpack.c.b16 %v8623, %v8615
        %v8800 = vpack.c.b16 %v8624, %v8616
        %v8801 = vpack.c.b16 %v8625, %v8617
        %v8802 = vpack.c.b16 %v8634, %v8626
        %v8803 = vpack.c.b16 %v8635, %v8627
        %v8804 = vpack.c.b16 %v8636, %v8628
        %v8805 = vpack.c.b16 %v8637, %v8629
        %v8806 = vpack.c.b16 %v8638, %v8630
        %v8807 = vpack.c.b16 %v8639, %v8631
        %v8808 = vpack.c.b16 %v8640, %v8632
        %v8809 = vpack.c.b16 %v8641, %v8633
        %v8810 = vpack.c.b16 %v8650, %v8642
        %v8811 = vpack.c.b16 %v8651, %v8643
        %v8812 = vpack.c.b16 %v8652, %v8644
        %v8813 = vpack.c.b16 %v8653, %v8645
        %v8814 = vpack.c.b16 %v8654, %v8646
        %v8815 = vpack.c.b16 %v8655, %v8647
        %v8816 = vpack.c.b16 %v8656, %v8648
        %v8817 = vpack.c.b16 %v8657, %v8649
        %v8818 = vpack.c.b16 %v8666, %v8658
        %v8819 = vpack.c.b16 %v8667, %v8659
        %v8820 = vpack.c.b16 %v8668, %v8660
        %v8821 = vpack.c.b16 %v8669, %v8661
        %v8822 = vpack.c.b16 %v8670, %v8662
        %v8823 = vpack.c.b16 %v8671, %v8663
        %v8824 = vpack.c.b16 %v8672, %v8664
        %v8825 = vpack.c.b16 %v8673, %v8665
        %v8826 = vpack.c.b16 %v8682, %v8674
        %v8827 = vpack.c.b16 %v8683, %v8675
        %v8828 = vpack.c.b16 %v8684, %v8676
        %v8829 = vpack.c.b16 %v8685, %v8677
        %v8830 = vpack.c.b16 %v8686, %v8678
        %v8831 = vpack.c.b16 %v8687, %v8679
        %v8832 = vpack.c.b16 %v8688, %v8680
        %v8833 = vpack.c.b16 %v8689, %v8681
        %v8834 = vpack.c.b16 %v8698, %v8690
        %v8835 = vpack.c.b16 %v8699, %v8691
        %v8836 = vpack.c.b16 %v8700, %v8692
        %v8837 = vpack.c.b16 %v8701, %v8693
        %v8838 = vpack.c.b16 %v8702, %v8694
        %v8839 = vpack.c.b16 %v8703, %v8695
        %v8840 = vpack.c.b16 %v8704, %v8696
        %v8841 = vpack.c.b16 %v8705, %v8697
        %v8842 = vpack.c.b16 %v8714, %v8706
        %v8843 = vpack.c.b16 %v8715, %v8707
        %v8844 = vpack.c.b16 %v8716, %v8708
        %v8845 = vpack.c.b16 %v8717, %v8709
        %v8846 = vpack.c.b16 %v8718, %v8710
        %v8847 = vpack.c.b16 %v8719, %v8711
        %v8848 = vpack.c.b16 %v8720, %v8712
        %v8849 = vpack.c.b16 %v8721, %v8713
        %8978 = vmatprep.subr.bf16.mxu0 %v8779
        %8979 = vmatpush1.bf16.msra.mxu0 %v8778
        %8980 = vmatprep.subr.bf16.mxu0 %v8771
        %8981 = vmatpush1.bf16.msra.mxu0 %v8770
        %8982 = vmatprep.subr.bf16.mxu0 %v8763
        %8983 = vmatpush1.bf16.msra.mxu0 %v8762
        %8984 = vmatprep.subr.bf16.mxu0 %v8755
        %8985 = vmatpush1.bf16.msra.mxu0 %v8754
        %8986 = vmatprep.subr.bf16.mxu0 %v8747
        %8987 = vmatpush1.bf16.msra.mxu0 %v8746
        %8988 = vmatprep.subr.bf16.mxu0 %v8739
        %8989 = vmatpush1.bf16.msra.mxu0 %v8738
        %8990 = vmatprep.subr.bf16.mxu0 %v8731
        %8991 = vmatpush1.bf16.msra.mxu0 %v8730
        %8992 = vmatprep.subr.bf16.mxu0 %v8723
        %8993 = vmatpush1.bf16.msra.mxu0 %v8722
        %8994 = vmatprep.subr.bf16.mxu0 %v8843
        %8995 = vmatpush2.bf16.msra.mxu0 %v8842
        %8996 = vmatprep.subr.bf16.mxu0 %v8835
        %8997 = vmatpush2.bf16.msra.mxu0 %v8834
        %8998 = vmatprep.subr.bf16.mxu0 %v8827
        %8999 = vmatpush2.bf16.msra.mxu0 %v8826
        %9000 = vmatprep.subr.bf16.mxu0 %v8819
        %9001 = vmatpush2.bf16.msra.mxu0 %v8818
        %9002 = vmatprep.subr.bf16.mxu0 %v8811
        %9003 = vmatpush2.bf16.msra.mxu0 %v8810
        %9004 = vmatprep.subr.bf16.mxu0 %v8803
        %9005 = vmatpush2.bf16.msra.mxu0 %v8802
        %9006 = vmatprep.subr.bf16.mxu0 %v8795
        %9007 = vmatpush2.bf16.msra.mxu0 %v8794
        %9008 = vmatprep.subr.bf16.mxu0 %v8787
        %9009 = vmatpush2.bf16.msra.mxu0 %v8786
        %9010 = vmatprep.mubr.bf16.mxu0 %v8165
        %9011 = vmatmul.mubr.bf16.gmra.mxu0 %v8164
        %v9012 = vpop.f32.mrf.mxu0
        %v9013 = vadd.f32 %v8301, %v9012
        %v9014 = vpop.f32.mrf.mxu0
        %v9015 = vadd.f32 %v8305, %v9014
        %v9016 = vpop.f32.mrf.mxu0
        %v9017 = vadd.f32 %v8301, %v9016
        %v9018 = vpop.f32.mrf.mxu0
        %v9019 = vadd.f32 %v8305, %v9018
        %9020 = vdwg.mxu0
        %9021 = vmatprep.subr.bf16.mxu0 %v8781
        %9022 = vmatpush1.bf16.msra.mxu0 %v8780
        %9023 = vmatprep.subr.bf16.mxu0 %v8773
        %9024 = vmatpush1.bf16.msra.mxu0 %v8772
        %9025 = vmatprep.subr.bf16.mxu0 %v8765
        %9026 = vmatpush1.bf16.msra.mxu0 %v8764
        %9027 = vmatprep.subr.bf16.mxu0 %v8757
        %9028 = vmatpush1.bf16.msra.mxu0 %v8756
        %9029 = vmatprep.subr.bf16.mxu0 %v8749
        %9030 = vmatpush1.bf16.msra.mxu0 %v8748
        %9031 = vmatprep.subr.bf16.mxu0 %v8741
        %9032 = vmatpush1.bf16.msra.mxu0 %v8740
        %9033 = vmatprep.subr.bf16.mxu0 %v8733
        %9034 = vmatpush1.bf16.msra.mxu0 %v8732
        %9035 = vmatprep.subr.bf16.mxu0 %v8725
        %9036 = vmatpush1.bf16.msra.mxu0 %v8724
        %9037 = vmatprep.subr.bf16.mxu0 %v8845
        %9038 = vmatpush2.bf16.msra.mxu0 %v8844
        %9039 = vmatprep.subr.bf16.mxu0 %v8837
        %9040 = vmatpush2.bf16.msra.mxu0 %v8836
        %9041 = vmatprep.subr.bf16.mxu0 %v8829
        %9042 = vmatpush2.bf16.msra.mxu0 %v8828
        %9043 = vmatprep.subr.bf16.mxu0 %v8821
        %9044 = vmatpush2.bf16.msra.mxu0 %v8820
        %9045 = vmatprep.subr.bf16.mxu0 %v8813
        %9046 = vmatpush2.bf16.msra.mxu0 %v8812
        %9047 = vmatprep.subr.bf16.mxu0 %v8805
        %9048 = vmatpush2.bf16.msra.mxu0 %v8804
        %9049 = vmatprep.subr.bf16.mxu0 %v8797
        %9050 = vmatpush2.bf16.msra.mxu0 %v8796
        %9051 = vmatprep.subr.bf16.mxu0 %v8789
        %9052 = vmatpush2.bf16.msra.mxu0 %v8788
        %9053 = vmatprep.mubr.bf16.mxu0 %v8165
        %9054 = vmatmul.mubr.bf16.gmra.mxu0 %v8164
        %v9055 = vpop.f32.mrf.mxu0
        %v9056 = vadd.f32 %v8309, %v9055
        %v9057 = vpop.f32.mrf.mxu0
        %v9058 = vadd.f32 %v8313, %v9057
        %v9059 = vpop.f32.mrf.mxu0
        %v9060 = vadd.f32 %v8309, %v9059
        %v9061 = vpop.f32.mrf.mxu0
        %v9062 = vadd.f32 %v8313, %v9061
        %9063 = vdwg.mxu0
        %9064 = vmatprep.subr.bf16.mxu0 %v8783
        %9065 = vmatpush1.bf16.msra.mxu0 %v8782
        %9066 = vmatprep.subr.bf16.mxu0 %v8775
        %9067 = vmatpush1.bf16.msra.mxu0 %v8774
        %9068 = vmatprep.subr.bf16.mxu0 %v8767
        %9069 = vmatpush1.bf16.msra.mxu0 %v8766
        %9070 = vmatprep.subr.bf16.mxu0 %v8759
        %9071 = vmatpush1.bf16.msra.mxu0 %v8758
        %9072 = vmatprep.subr.bf16.mxu0 %v8751
        %9073 = vmatpush1.bf16.msra.mxu0 %v8750
        %9074 = vmatprep.subr.bf16.mxu0 %v8743
        %9075 = vmatpush1.bf16.msra.mxu0 %v8742
        %9076 = vmatprep.subr.bf16.mxu0 %v8735
        %9077 = vmatpush1.bf16.msra.mxu0 %v8734
        %9078 = vmatprep.subr.bf16.mxu0 %v8727
        %9079 = vmatpush1.bf16.msra.mxu0 %v8726
        %9080 = vmatprep.subr.bf16.mxu0 %v8847
        %9081 = vmatpush2.bf16.msra.mxu0 %v8846
        %9082 = vmatprep.subr.bf16.mxu0 %v8839
        %9083 = vmatpush2.bf16.msra.mxu0 %v8838
        %9084 = vmatprep.subr.bf16.mxu0 %v8831
        %9085 = vmatpush2.bf16.msra.mxu0 %v8830
        %9086 = vmatprep.subr.bf16.mxu0 %v8823
        %9087 = vmatpush2.bf16.msra.mxu0 %v8822
        %9088 = vmatprep.subr.bf16.mxu0 %v8815
        %9089 = vmatpush2.bf16.msra.mxu0 %v8814
        %9090 = vmatprep.subr.bf16.mxu0 %v8807
        %9091 = vmatpush2.bf16.msra.mxu0 %v8806
        %9092 = vmatprep.subr.bf16.mxu0 %v8799
        %9093 = vmatpush2.bf16.msra.mxu0 %v8798
        %9094 = vmatprep.subr.bf16.mxu0 %v8791
        %9095 = vmatpush2.bf16.msra.mxu0 %v8790
        %9096 = vmatprep.mubr.bf16.mxu0 %v8165
        %9097 = vmatmul.mubr.bf16.gmra.mxu0 %v8164
        %v9098 = vpop.f32.mrf.mxu0
        %v9099 = vadd.f32 %v8317, %v9098
        %v9100 = vpop.f32.mrf.mxu0
        %v9101 = vadd.f32 %v8321, %v9100
        %v9102 = vpop.f32.mrf.mxu0
        %v9103 = vadd.f32 %v8317, %v9102
        %v9104 = vpop.f32.mrf.mxu0
        %v9105 = vadd.f32 %v8321, %v9104
        %9106 = vdwg.mxu0
        %9107 = vmatprep.subr.bf16.mxu0 %v8785
        %9108 = vmatpush1.bf16.msra.mxu0 %v8784
        %9109 = vmatprep.subr.bf16.mxu0 %v8777
        %9110 = vmatpush1.bf16.msra.mxu0 %v8776
        %9111 = vmatprep.subr.bf16.mxu0 %v8769
        %9112 = vmatpush1.bf16.msra.mxu0 %v8768
        %9113 = vmatprep.subr.bf16.mxu0 %v8761
        %9114 = vmatpush1.bf16.msra.mxu0 %v8760
        %9115 = vmatprep.subr.bf16.mxu0 %v8753
        %9116 = vmatpush1.bf16.msra.mxu0 %v8752
        %9117 = vmatprep.subr.bf16.mxu0 %v8745
        %9118 = vmatpush1.bf16.msra.mxu0 %v8744
        %9119 = vmatprep.subr.bf16.mxu0 %v8737
        %9120 = vmatpush1.bf16.msra.mxu0 %v8736
        %9121 = vmatprep.subr.bf16.mxu0 %v8729
        %9122 = vmatpush1.bf16.msra.mxu0 %v8728
        %9123 = vmatprep.subr.bf16.mxu0 %v8849
        %9124 = vmatpush2.bf16.msra.mxu0 %v8848
        %9125 = vmatprep.subr.bf16.mxu0 %v8841
        %9126 = vmatpush2.bf16.msra.mxu0 %v8840
        %9127 = vmatprep.subr.bf16.mxu0 %v8833
        %9128 = vmatpush2.bf16.msra.mxu0 %v8832
        %9129 = vmatprep.subr.bf16.mxu0 %v8825
        %9130 = vmatpush2.bf16.msra.mxu0 %v8824
        %9131 = vmatprep.subr.bf16.mxu0 %v8817
        %9132 = vmatpush2.bf16.msra.mxu0 %v8816
        %9133 = vmatprep.subr.bf16.mxu0 %v8809
        %9134 = vmatpush2.bf16.msra.mxu0 %v8808
        %9135 = vmatprep.subr.bf16.mxu0 %v8801
        %9136 = vmatpush2.bf16.msra.mxu0 %v8800
        %9137 = vmatprep.subr.bf16.mxu0 %v8793
        %9138 = vmatpush2.bf16.msra.mxu0 %v8792
        %9139 = vmatprep.mubr.bf16.mxu0 %v8165
        %9140 = vmatmul.mubr.bf16.gmra.mxu0 %v8164
        %v9141 = vpop.f32.mrf.mxu0
        %v9142 = vadd.f32 %v8325, %v9141
        %v9143 = vpop.f32.mrf.mxu0
        %v9144 = vadd.f32 %v8329, %v9143
        %v9145 = vpop.f32.mrf.mxu0
        %v9146 = vadd.f32 %v8325, %v9145
        %v9147 = vpop.f32.mrf.mxu0
        %v9148 = vadd.f32 %v8329, %v9147
        %9149 = vdwg.mxu0
        %v9150 = vmax.f32 %v9013, 0.0
        %v9151 = vmax.f32 %v9015, 0.0
        %v9152 = vmax.f32 %v9056, 0.0
        %v9153 = vmax.f32 %v9058, 0.0
        %v9154 = vmax.f32 %v9099, 0.0
        %v9155 = vmax.f32 %v9101, 0.0
        %v9156 = vmax.f32 %v9142, 0.0
        %v9157 = vmax.f32 %v9144, 0.0
        %v9158 = vmax.f32 %v9017, 0.0
        %v9159 = vmax.f32 %v9019, 0.0
        %v9160 = vmax.f32 %v9060, 0.0
        %v9161 = vmax.f32 %v9062, 0.0
        %v9162 = vmax.f32 %v9103, 0.0
        %v9163 = vmax.f32 %v9105, 0.0
        %v9164 = vmax.f32 %v9146, 0.0
        %v9165 = vmax.f32 %v9148, 0.0
        %v9166 = vpack.c.bf16 %v9158, %v9150
        %v9167 = vpack.c.bf16 %v9159, %v9151
        %v9168 = vpack.c.bf16 %v9160, %v9152
        %v9169 = vpack.c.bf16 %v9161, %v9153
        %v9170 = vpack.c.bf16 %v9162, %v9154
        %v9171 = vpack.c.bf16 %v9163, %v9155
        %v9172 = vpack.c.bf16 %v9164, %v9156
        %v9173 = vpack.c.bf16 %v9165, %v9157
        %s9174 = scalar_lea.vmem [#allocation24], 1024
        %v9175 = vld [vmem:[%s9174] sm:$0xff]
        %v9176 = vld [vmem:[%s9174 + $0x8] sm:$0xff]
        %v9177 = vld [vmem:[%s9174 + $0x10] sm:$0xff]
        %v9178 = vld [vmem:[%s9174 + $0x18] sm:$0xff]
        %v9179 = vld [vmem:[%s9174 + $0x20] sm:$0xff]
        %v9180 = vld [vmem:[%s9174 + $0x28] sm:$0xff]
        %v9181 = vld [vmem:[%s9174 + $0x30] sm:$0xff]
        %v9182 = vld [vmem:[%s9174 + $0x38] sm:$0xff]
        %v9183 = vld [vmem:[%s9174 + $0x40] sm:$0xff]
        %v9184 = vld [vmem:[%s9174 + $0x48] sm:$0xff]
        %v9185 = vld [vmem:[%s9174 + $0x50] sm:$0xff]
        %v9186 = vld [vmem:[%s9174 + $0x58] sm:$0xff]
        %v9187 = vld [vmem:[%s9174 + $0x60] sm:$0xff]
        %v9188 = vld [vmem:[%s9174 + $0x68] sm:$0xff]
        %v9189 = vld [vmem:[%s9174 + $0x70] sm:$0xff]
        %v9190 = vld [vmem:[%s9174 + $0x78] sm:$0xff]
        %v9191 = vld [vmem:[%s9174 + $0x80] sm:$0xff]
        %v9192 = vld [vmem:[%s9174 + $0x88] sm:$0xff]
        %v9193 = vld [vmem:[%s9174 + $0x90] sm:$0xff]
        %v9194 = vld [vmem:[%s9174 + $0x98] sm:$0xff]
        %v9195 = vld [vmem:[%s9174 + $0xa0] sm:$0xff]
        %v9196 = vld [vmem:[%s9174 + $0xa8] sm:$0xff]
        %v9197 = vld [vmem:[%s9174 + $0xb0] sm:$0xff]
        %v9198 = vld [vmem:[%s9174 + $0xb8] sm:$0xff]
        %v9199 = vld [vmem:[%s9174 + $0xc0] sm:$0xff]
        %v9200 = vld [vmem:[%s9174 + $0xc8] sm:$0xff]
        %v9201 = vld [vmem:[%s9174 + $0xd0] sm:$0xff]
        %v9202 = vld [vmem:[%s9174 + $0xd8] sm:$0xff]
        %v9203 = vld [vmem:[%s9174 + $0xe0] sm:$0xff]
        %v9204 = vld [vmem:[%s9174 + $0xe8] sm:$0xff]
        %v9205 = vld [vmem:[%s9174 + $0xf0] sm:$0xff]
        %v9206 = vld [vmem:[%s9174 + $0xf8] sm:$0xff]
        %v9207 = vld [vmem:[%s9174 + $0x100] sm:$0xff]
        %v9208 = vld [vmem:[%s9174 + $0x108] sm:$0xff]
        %v9209 = vld [vmem:[%s9174 + $0x110] sm:$0xff]
        %v9210 = vld [vmem:[%s9174 + $0x118] sm:$0xff]
        %v9211 = vld [vmem:[%s9174 + $0x120] sm:$0xff]
        %v9212 = vld [vmem:[%s9174 + $0x128] sm:$0xff]
        %v9213 = vld [vmem:[%s9174 + $0x130] sm:$0xff]
        %v9214 = vld [vmem:[%s9174 + $0x138] sm:$0xff]
        %v9215 = vld [vmem:[%s9174 + $0x140] sm:$0xff]
        %v9216 = vld [vmem:[%s9174 + $0x148] sm:$0xff]
        %v9217 = vld [vmem:[%s9174 + $0x150] sm:$0xff]
        %v9218 = vld [vmem:[%s9174 + $0x158] sm:$0xff]
        %v9219 = vld [vmem:[%s9174 + $0x160] sm:$0xff]
        %v9220 = vld [vmem:[%s9174 + $0x168] sm:$0xff]
        %v9221 = vld [vmem:[%s9174 + $0x170] sm:$0xff]
        %v9222 = vld [vmem:[%s9174 + $0x178] sm:$0xff]
        %v9223 = vld [vmem:[%s9174 + $0x180] sm:$0xff]
        %v9224 = vld [vmem:[%s9174 + $0x188] sm:$0xff]
        %v9225 = vld [vmem:[%s9174 + $0x190] sm:$0xff]
        %v9226 = vld [vmem:[%s9174 + $0x198] sm:$0xff]
        %v9227 = vld [vmem:[%s9174 + $0x1a0] sm:$0xff]
        %v9228 = vld [vmem:[%s9174 + $0x1a8] sm:$0xff]
        %v9229 = vld [vmem:[%s9174 + $0x1b0] sm:$0xff]
        %v9230 = vld [vmem:[%s9174 + $0x1b8] sm:$0xff]
        %v9231 = vld [vmem:[%s9174 + $0x1c0] sm:$0xff]
        %v9232 = vld [vmem:[%s9174 + $0x1c8] sm:$0xff]
        %v9233 = vld [vmem:[%s9174 + $0x1d0] sm:$0xff]
        %v9234 = vld [vmem:[%s9174 + $0x1d8] sm:$0xff]
        %v9235 = vld [vmem:[%s9174 + $0x1e0] sm:$0xff]
        %v9236 = vld [vmem:[%s9174 + $0x1e8] sm:$0xff]
        %v9237 = vld [vmem:[%s9174 + $0x1f0] sm:$0xff]
        %v9238 = vld [vmem:[%s9174 + $0x1f8] sm:$0xff]
        %v9239 = vld [vmem:[%s9174 + $0x200] sm:$0xff]
        %v9240 = vld [vmem:[%s9174 + $0x208] sm:$0xff]
        %v9241 = vld [vmem:[%s9174 + $0x210] sm:$0xff]
        %v9242 = vld [vmem:[%s9174 + $0x218] sm:$0xff]
        %v9243 = vld [vmem:[%s9174 + $0x220] sm:$0xff]
        %v9244 = vld [vmem:[%s9174 + $0x228] sm:$0xff]
        %v9245 = vld [vmem:[%s9174 + $0x230] sm:$0xff]
        %v9246 = vld [vmem:[%s9174 + $0x238] sm:$0xff]
        %v9247 = vld [vmem:[%s9174 + $0x240] sm:$0xff]
        %v9248 = vld [vmem:[%s9174 + $0x248] sm:$0xff]
        %v9249 = vld [vmem:[%s9174 + $0x250] sm:$0xff]
        %v9250 = vld [vmem:[%s9174 + $0x258] sm:$0xff]
        %v9251 = vld [vmem:[%s9174 + $0x260] sm:$0xff]
        %v9252 = vld [vmem:[%s9174 + $0x268] sm:$0xff]
        %v9253 = vld [vmem:[%s9174 + $0x270] sm:$0xff]
        %v9254 = vld [vmem:[%s9174 + $0x278] sm:$0xff]
        %v9255 = vld [vmem:[%s9174 + $0x280] sm:$0xff]
        %v9256 = vld [vmem:[%s9174 + $0x288] sm:$0xff]
        %v9257 = vld [vmem:[%s9174 + $0x290] sm:$0xff]
        %v9258 = vld [vmem:[%s9174 + $0x298] sm:$0xff]
        %v9259 = vld [vmem:[%s9174 + $0x2a0] sm:$0xff]
        %v9260 = vld [vmem:[%s9174 + $0x2a8] sm:$0xff]
        %v9261 = vld [vmem:[%s9174 + $0x2b0] sm:$0xff]
        %v9262 = vld [vmem:[%s9174 + $0x2b8] sm:$0xff]
        %v9263 = vld [vmem:[%s9174 + $0x2c0] sm:$0xff]
        %v9264 = vld [vmem:[%s9174 + $0x2c8] sm:$0xff]
        %v9265 = vld [vmem:[%s9174 + $0x2d0] sm:$0xff]
        %v9266 = vld [vmem:[%s9174 + $0x2d8] sm:$0xff]
        %v9267 = vld [vmem:[%s9174 + $0x2e0] sm:$0xff]
        %v9268 = vld [vmem:[%s9174 + $0x2e8] sm:$0xff]
        %v9269 = vld [vmem:[%s9174 + $0x2f0] sm:$0xff]
        %v9270 = vld [vmem:[%s9174 + $0x2f8] sm:$0xff]
        %v9271 = vld [vmem:[%s9174 + $0x300] sm:$0xff]
        %v9272 = vld [vmem:[%s9174 + $0x308] sm:$0xff]
        %v9273 = vld [vmem:[%s9174 + $0x310] sm:$0xff]
        %v9274 = vld [vmem:[%s9174 + $0x318] sm:$0xff]
        %v9275 = vld [vmem:[%s9174 + $0x320] sm:$0xff]
        %v9276 = vld [vmem:[%s9174 + $0x328] sm:$0xff]
        %v9277 = vld [vmem:[%s9174 + $0x330] sm:$0xff]
        %v9278 = vld [vmem:[%s9174 + $0x338] sm:$0xff]
        %v9279 = vld [vmem:[%s9174 + $0x340] sm:$0xff]
        %v9280 = vld [vmem:[%s9174 + $0x348] sm:$0xff]
        %v9281 = vld [vmem:[%s9174 + $0x350] sm:$0xff]
        %v9282 = vld [vmem:[%s9174 + $0x358] sm:$0xff]
        %v9283 = vld [vmem:[%s9174 + $0x360] sm:$0xff]
        %v9284 = vld [vmem:[%s9174 + $0x368] sm:$0xff]
        %v9285 = vld [vmem:[%s9174 + $0x370] sm:$0xff]
        %v9286 = vld [vmem:[%s9174 + $0x378] sm:$0xff]
        %v9287 = vld [vmem:[%s9174 + $0x380] sm:$0xff]
        %v9288 = vld [vmem:[%s9174 + $0x388] sm:$0xff]
        %v9289 = vld [vmem:[%s9174 + $0x390] sm:$0xff]
        %v9290 = vld [vmem:[%s9174 + $0x398] sm:$0xff]
        %v9291 = vld [vmem:[%s9174 + $0x3a0] sm:$0xff]
        %v9292 = vld [vmem:[%s9174 + $0x3a8] sm:$0xff]
        %v9293 = vld [vmem:[%s9174 + $0x3b0] sm:$0xff]
        %v9294 = vld [vmem:[%s9174 + $0x3b8] sm:$0xff]
        %v9295 = vld [vmem:[%s9174 + $0x3c0] sm:$0xff]
        %v9296 = vld [vmem:[%s9174 + $0x3c8] sm:$0xff]
        %v9297 = vld [vmem:[%s9174 + $0x3d0] sm:$0xff]
        %v9298 = vld [vmem:[%s9174 + $0x3d8] sm:$0xff]
        %v9299 = vld [vmem:[%s9174 + $0x3e0] sm:$0xff]
        %v9300 = vld [vmem:[%s9174 + $0x3e8] sm:$0xff]
        %v9301 = vld [vmem:[%s9174 + $0x3f0] sm:$0xff]
        %v9302 = vld [vmem:[%s9174 + $0x3f8] sm:$0xff]
        %v9431 = vunpack.c.l.b16 %v9175
        %v9432 = vunpack.c.h.b16 %v9175
        %v9433 = vunpack.c.l.b16 %v9176
        %v9434 = vunpack.c.h.b16 %v9176
        %v9435 = vunpack.c.l.b16 %v9177
        %v9436 = vunpack.c.h.b16 %v9177
        %v9437 = vunpack.c.l.b16 %v9178
        %v9438 = vunpack.c.h.b16 %v9178
        %v9439 = vunpack.c.l.b16 %v9179
        %v9440 = vunpack.c.h.b16 %v9179
        %v9441 = vunpack.c.l.b16 %v9180
        %v9442 = vunpack.c.h.b16 %v9180
        %v9443 = vunpack.c.l.b16 %v9181
        %v9444 = vunpack.c.h.b16 %v9181
        %v9445 = vunpack.c.l.b16 %v9182
        %v9446 = vunpack.c.h.b16 %v9182
        %v9447 = vunpack.c.l.b16 %v9183
        %v9448 = vunpack.c.h.b16 %v9183
        %v9449 = vunpack.c.l.b16 %v9184
        %v9450 = vunpack.c.h.b16 %v9184
        %v9451 = vunpack.c.l.b16 %v9185
        %v9452 = vunpack.c.h.b16 %v9185
        %v9453 = vunpack.c.l.b16 %v9186
        %v9454 = vunpack.c.h.b16 %v9186
        %v9455 = vunpack.c.l.b16 %v9187
        %v9456 = vunpack.c.h.b16 %v9187
        %v9457 = vunpack.c.l.b16 %v9188
        %v9458 = vunpack.c.h.b16 %v9188
        %v9459 = vunpack.c.l.b16 %v9189
        %v9460 = vunpack.c.h.b16 %v9189
        %v9461 = vunpack.c.l.b16 %v9190
        %v9462 = vunpack.c.h.b16 %v9190
        %v9463 = vunpack.c.l.b16 %v9191
        %v9464 = vunpack.c.h.b16 %v9191
        %v9465 = vunpack.c.l.b16 %v9192
        %v9466 = vunpack.c.h.b16 %v9192
        %v9467 = vunpack.c.l.b16 %v9193
        %v9468 = vunpack.c.h.b16 %v9193
        %v9469 = vunpack.c.l.b16 %v9194
        %v9470 = vunpack.c.h.b16 %v9194
        %v9471 = vunpack.c.l.b16 %v9195
        %v9472 = vunpack.c.h.b16 %v9195
        %v9473 = vunpack.c.l.b16 %v9196
        %v9474 = vunpack.c.h.b16 %v9196
        %v9475 = vunpack.c.l.b16 %v9197
        %v9476 = vunpack.c.h.b16 %v9197
        %v9477 = vunpack.c.l.b16 %v9198
        %v9478 = vunpack.c.h.b16 %v9198
        %v9479 = vunpack.c.l.b16 %v9199
        %v9480 = vunpack.c.h.b16 %v9199
        %v9481 = vunpack.c.l.b16 %v9200
        %v9482 = vunpack.c.h.b16 %v9200
        %v9483 = vunpack.c.l.b16 %v9201
        %v9484 = vunpack.c.h.b16 %v9201
        %v9485 = vunpack.c.l.b16 %v9202
        %v9486 = vunpack.c.h.b16 %v9202
        %v9487 = vunpack.c.l.b16 %v9203
        %v9488 = vunpack.c.h.b16 %v9203
        %v9489 = vunpack.c.l.b16 %v9204
        %v9490 = vunpack.c.h.b16 %v9204
        %v9491 = vunpack.c.l.b16 %v9205
        %v9492 = vunpack.c.h.b16 %v9205
        %v9493 = vunpack.c.l.b16 %v9206
        %v9494 = vunpack.c.h.b16 %v9206
        %v9495 = vunpack.c.l.b16 %v9207
        %v9496 = vunpack.c.h.b16 %v9207
        %v9497 = vunpack.c.l.b16 %v9208
        %v9498 = vunpack.c.h.b16 %v9208
        %v9499 = vunpack.c.l.b16 %v9209
        %v9500 = vunpack.c.h.b16 %v9209
        %v9501 = vunpack.c.l.b16 %v9210
        %v9502 = vunpack.c.h.b16 %v9210
        %v9503 = vunpack.c.l.b16 %v9211
        %v9504 = vunpack.c.h.b16 %v9211
        %v9505 = vunpack.c.l.b16 %v9212
        %v9506 = vunpack.c.h.b16 %v9212
        %v9507 = vunpack.c.l.b16 %v9213
        %v9508 = vunpack.c.h.b16 %v9213
        %v9509 = vunpack.c.l.b16 %v9214
        %v9510 = vunpack.c.h.b16 %v9214
        %v9511 = vunpack.c.l.b16 %v9215
        %v9512 = vunpack.c.h.b16 %v9215
        %v9513 = vunpack.c.l.b16 %v9216
        %v9514 = vunpack.c.h.b16 %v9216
        %v9515 = vunpack.c.l.b16 %v9217
        %v9516 = vunpack.c.h.b16 %v9217
        %v9517 = vunpack.c.l.b16 %v9218
        %v9518 = vunpack.c.h.b16 %v9218
        %v9519 = vunpack.c.l.b16 %v9219
        %v9520 = vunpack.c.h.b16 %v9219
        %v9521 = vunpack.c.l.b16 %v9220
        %v9522 = vunpack.c.h.b16 %v9220
        %v9523 = vunpack.c.l.b16 %v9221
        %v9524 = vunpack.c.h.b16 %v9221
        %v9525 = vunpack.c.l.b16 %v9222
        %v9526 = vunpack.c.h.b16 %v9222
        %v9527 = vunpack.c.l.b16 %v9223
        %v9528 = vunpack.c.h.b16 %v9223
        %v9529 = vunpack.c.l.b16 %v9224
        %v9530 = vunpack.c.h.b16 %v9224
        %v9531 = vunpack.c.l.b16 %v9225
        %v9532 = vunpack.c.h.b16 %v9225
        %v9533 = vunpack.c.l.b16 %v9226
        %v9534 = vunpack.c.h.b16 %v9226
        %v9535 = vunpack.c.l.b16 %v9227
        %v9536 = vunpack.c.h.b16 %v9227
        %v9537 = vunpack.c.l.b16 %v9228
        %v9538 = vunpack.c.h.b16 %v9228
        %v9539 = vunpack.c.l.b16 %v9229
        %v9540 = vunpack.c.h.b16 %v9229
        %v9541 = vunpack.c.l.b16 %v9230
        %v9542 = vunpack.c.h.b16 %v9230
        %v9543 = vunpack.c.l.b16 %v9231
        %v9544 = vunpack.c.h.b16 %v9231
        %v9545 = vunpack.c.l.b16 %v9232
        %v9546 = vunpack.c.h.b16 %v9232
        %v9547 = vunpack.c.l.b16 %v9233
        %v9548 = vunpack.c.h.b16 %v9233
        %v9549 = vunpack.c.l.b16 %v9234
        %v9550 = vunpack.c.h.b16 %v9234
        %v9551 = vunpack.c.l.b16 %v9235
        %v9552 = vunpack.c.h.b16 %v9235
        %v9553 = vunpack.c.l.b16 %v9236
        %v9554 = vunpack.c.h.b16 %v9236
        %v9555 = vunpack.c.l.b16 %v9237
        %v9556 = vunpack.c.h.b16 %v9237
        %v9557 = vunpack.c.l.b16 %v9238
        %v9558 = vunpack.c.h.b16 %v9238
        %v9559 = vunpack.c.l.b16 %v9239
        %v9560 = vunpack.c.h.b16 %v9239
        %v9561 = vunpack.c.l.b16 %v9240
        %v9562 = vunpack.c.h.b16 %v9240
        %v9563 = vunpack.c.l.b16 %v9241
        %v9564 = vunpack.c.h.b16 %v9241
        %v9565 = vunpack.c.l.b16 %v9242
        %v9566 = vunpack.c.h.b16 %v9242
        %v9567 = vunpack.c.l.b16 %v9243
        %v9568 = vunpack.c.h.b16 %v9243
        %v9569 = vunpack.c.l.b16 %v9244
        %v9570 = vunpack.c.h.b16 %v9244
        %v9571 = vunpack.c.l.b16 %v9245
        %v9572 = vunpack.c.h.b16 %v9245
        %v9573 = vunpack.c.l.b16 %v9246
        %v9574 = vunpack.c.h.b16 %v9246
        %v9575 = vunpack.c.l.b16 %v9247
        %v9576 = vunpack.c.h.b16 %v9247
        %v9577 = vunpack.c.l.b16 %v9248
        %v9578 = vunpack.c.h.b16 %v9248
        %v9579 = vunpack.c.l.b16 %v9249
        %v9580 = vunpack.c.h.b16 %v9249
        %v9581 = vunpack.c.l.b16 %v9250
        %v9582 = vunpack.c.h.b16 %v9250
        %v9583 = vunpack.c.l.b16 %v9251
        %v9584 = vunpack.c.h.b16 %v9251
        %v9585 = vunpack.c.l.b16 %v9252
        %v9586 = vunpack.c.h.b16 %v9252
        %v9587 = vunpack.c.l.b16 %v9253
        %v9588 = vunpack.c.h.b16 %v9253
        %v9589 = vunpack.c.l.b16 %v9254
        %v9590 = vunpack.c.h.b16 %v9254
        %v9591 = vunpack.c.l.b16 %v9255
        %v9592 = vunpack.c.h.b16 %v9255
        %v9593 = vunpack.c.l.b16 %v9256
        %v9594 = vunpack.c.h.b16 %v9256
        %v9595 = vunpack.c.l.b16 %v9257
        %v9596 = vunpack.c.h.b16 %v9257
        %v9597 = vunpack.c.l.b16 %v9258
        %v9598 = vunpack.c.h.b16 %v9258
        %v9599 = vunpack.c.l.b16 %v9259
        %v9600 = vunpack.c.h.b16 %v9259
        %v9601 = vunpack.c.l.b16 %v9260
        %v9602 = vunpack.c.h.b16 %v9260
        %v9603 = vunpack.c.l.b16 %v9261
        %v9604 = vunpack.c.h.b16 %v9261
        %v9605 = vunpack.c.l.b16 %v9262
        %v9606 = vunpack.c.h.b16 %v9262
        %v9607 = vunpack.c.l.b16 %v9263
        %v9608 = vunpack.c.h.b16 %v9263
        %v9609 = vunpack.c.l.b16 %v9264
        %v9610 = vunpack.c.h.b16 %v9264
        %v9611 = vunpack.c.l.b16 %v9265
        %v9612 = vunpack.c.h.b16 %v9265
        %v9613 = vunpack.c.l.b16 %v9266
        %v9614 = vunpack.c.h.b16 %v9266
        %v9615 = vunpack.c.l.b16 %v9267
        %v9616 = vunpack.c.h.b16 %v9267
        %v9617 = vunpack.c.l.b16 %v9268
        %v9618 = vunpack.c.h.b16 %v9268
        %v9619 = vunpack.c.l.b16 %v9269
        %v9620 = vunpack.c.h.b16 %v9269
        %v9621 = vunpack.c.l.b16 %v9270
        %v9622 = vunpack.c.h.b16 %v9270
        %v9623 = vunpack.c.l.b16 %v9271
        %v9624 = vunpack.c.h.b16 %v9271
        %v9625 = vunpack.c.l.b16 %v9272
        %v9626 = vunpack.c.h.b16 %v9272
        %v9627 = vunpack.c.l.b16 %v9273
        %v9628 = vunpack.c.h.b16 %v9273
        %v9629 = vunpack.c.l.b16 %v9274
        %v9630 = vunpack.c.h.b16 %v9274
        %v9631 = vunpack.c.l.b16 %v9275
        %v9632 = vunpack.c.h.b16 %v9275
        %v9633 = vunpack.c.l.b16 %v9276
        %v9634 = vunpack.c.h.b16 %v9276
        %v9635 = vunpack.c.l.b16 %v9277
        %v9636 = vunpack.c.h.b16 %v9277
        %v9637 = vunpack.c.l.b16 %v9278
        %v9638 = vunpack.c.h.b16 %v9278
        %v9639 = vunpack.c.l.b16 %v9279
        %v9640 = vunpack.c.h.b16 %v9279
        %v9641 = vunpack.c.l.b16 %v9280
        %v9642 = vunpack.c.h.b16 %v9280
        %v9643 = vunpack.c.l.b16 %v9281
        %v9644 = vunpack.c.h.b16 %v9281
        %v9645 = vunpack.c.l.b16 %v9282
        %v9646 = vunpack.c.h.b16 %v9282
        %v9647 = vunpack.c.l.b16 %v9283
        %v9648 = vunpack.c.h.b16 %v9283
        %v9649 = vunpack.c.l.b16 %v9284
        %v9650 = vunpack.c.h.b16 %v9284
        %v9651 = vunpack.c.l.b16 %v9285
        %v9652 = vunpack.c.h.b16 %v9285
        %v9653 = vunpack.c.l.b16 %v9286
        %v9654 = vunpack.c.h.b16 %v9286
        %v9655 = vunpack.c.l.b16 %v9287
        %v9656 = vunpack.c.h.b16 %v9287
        %v9657 = vunpack.c.l.b16 %v9288
        %v9658 = vunpack.c.h.b16 %v9288
        %v9659 = vunpack.c.l.b16 %v9289
        %v9660 = vunpack.c.h.b16 %v9289
        %v9661 = vunpack.c.l.b16 %v9290
        %v9662 = vunpack.c.h.b16 %v9290
        %v9663 = vunpack.c.l.b16 %v9291
        %v9664 = vunpack.c.h.b16 %v9291
        %v9665 = vunpack.c.l.b16 %v9292
        %v9666 = vunpack.c.h.b16 %v9292
        %v9667 = vunpack.c.l.b16 %v9293
        %v9668 = vunpack.c.h.b16 %v9293
        %v9669 = vunpack.c.l.b16 %v9294
        %v9670 = vunpack.c.h.b16 %v9294
        %v9671 = vunpack.c.l.b16 %v9295
        %v9672 = vunpack.c.h.b16 %v9295
        %v9673 = vunpack.c.l.b16 %v9296
        %v9674 = vunpack.c.h.b16 %v9296
        %v9675 = vunpack.c.l.b16 %v9297
        %v9676 = vunpack.c.h.b16 %v9297
        %v9677 = vunpack.c.l.b16 %v9298
        %v9678 = vunpack.c.h.b16 %v9298
        %v9679 = vunpack.c.l.b16 %v9299
        %v9680 = vunpack.c.h.b16 %v9299
        %v9681 = vunpack.c.l.b16 %v9300
        %v9682 = vunpack.c.h.b16 %v9300
        %v9683 = vunpack.c.l.b16 %v9301
        %v9684 = vunpack.c.h.b16 %v9301
        %v9685 = vunpack.c.l.b16 %v9302
        %v9686 = vunpack.c.h.b16 %v9302
        %v9687 = vpack.c.b16 %v9433, %v9431
        %v9688 = vpack.c.b16 %v9434, %v9432
        %v9689 = vpack.c.b16 %v9437, %v9435
        %v9690 = vpack.c.b16 %v9438, %v9436
        %v9691 = vpack.c.b16 %v9441, %v9439
        %v9692 = vpack.c.b16 %v9442, %v9440
        %v9693 = vpack.c.b16 %v9445, %v9443
        %v9694 = vpack.c.b16 %v9446, %v9444
        %v9695 = vpack.c.b16 %v9449, %v9447
        %v9696 = vpack.c.b16 %v9450, %v9448
        %v9697 = vpack.c.b16 %v9453, %v9451
        %v9698 = vpack.c.b16 %v9454, %v9452
        %v9699 = vpack.c.b16 %v9457, %v9455
        %v9700 = vpack.c.b16 %v9458, %v9456
        %v9701 = vpack.c.b16 %v9461, %v9459
        %v9702 = vpack.c.b16 %v9462, %v9460
        %v9703 = vpack.c.b16 %v9465, %v9463
        %v9704 = vpack.c.b16 %v9466, %v9464
        %v9705 = vpack.c.b16 %v9469, %v9467
        %v9706 = vpack.c.b16 %v9470, %v9468
        %v9707 = vpack.c.b16 %v9473, %v9471
        %v9708 = vpack.c.b16 %v9474, %v9472
        %v9709 = vpack.c.b16 %v9477, %v9475
        %v9710 = vpack.c.b16 %v9478, %v9476
        %v9711 = vpack.c.b16 %v9481, %v9479
        %v9712 = vpack.c.b16 %v9482, %v9480
        %v9713 = vpack.c.b16 %v9485, %v9483
        %v9714 = vpack.c.b16 %v9486, %v9484
        %v9715 = vpack.c.b16 %v9489, %v9487
        %v9716 = vpack.c.b16 %v9490, %v9488
        %v9717 = vpack.c.b16 %v9493, %v9491
        %v9718 = vpack.c.b16 %v9494, %v9492
        %v9719 = vpack.c.b16 %v9497, %v9495
        %v9720 = vpack.c.b16 %v9498, %v9496
        %v9721 = vpack.c.b16 %v9501, %v9499
        %v9722 = vpack.c.b16 %v9502, %v9500
        %v9723 = vpack.c.b16 %v9505, %v9503
        %v9724 = vpack.c.b16 %v9506, %v9504
        %v9725 = vpack.c.b16 %v9509, %v9507
        %v9726 = vpack.c.b16 %v9510, %v9508
        %v9727 = vpack.c.b16 %v9513, %v9511
        %v9728 = vpack.c.b16 %v9514, %v9512
        %v9729 = vpack.c.b16 %v9517, %v9515
        %v9730 = vpack.c.b16 %v9518, %v9516
        %v9731 = vpack.c.b16 %v9521, %v9519
        %v9732 = vpack.c.b16 %v9522, %v9520
        %v9733 = vpack.c.b16 %v9525, %v9523
        %v9734 = vpack.c.b16 %v9526, %v9524
        %v9735 = vpack.c.b16 %v9529, %v9527
        %v9736 = vpack.c.b16 %v9530, %v9528
        %v9737 = vpack.c.b16 %v9533, %v9531
        %v9738 = vpack.c.b16 %v9534, %v9532
        %v9739 = vpack.c.b16 %v9537, %v9535
        %v9740 = vpack.c.b16 %v9538, %v9536
        %v9741 = vpack.c.b16 %v9541, %v9539
        %v9742 = vpack.c.b16 %v9542, %v9540
        %v9743 = vpack.c.b16 %v9545, %v9543
        %v9744 = vpack.c.b16 %v9546, %v9544
        %v9745 = vpack.c.b16 %v9549, %v9547
        %v9746 = vpack.c.b16 %v9550, %v9548
        %v9747 = vpack.c.b16 %v9553, %v9551
        %v9748 = vpack.c.b16 %v9554, %v9552
        %v9749 = vpack.c.b16 %v9557, %v9555
        %v9750 = vpack.c.b16 %v9558, %v9556
        %v9751 = vpack.c.b16 %v9561, %v9559
        %v9752 = vpack.c.b16 %v9562, %v9560
        %v9753 = vpack.c.b16 %v9565, %v9563
        %v9754 = vpack.c.b16 %v9566, %v9564
        %v9755 = vpack.c.b16 %v9569, %v9567
        %v9756 = vpack.c.b16 %v9570, %v9568
        %v9757 = vpack.c.b16 %v9573, %v9571
        %v9758 = vpack.c.b16 %v9574, %v9572
        %v9759 = vpack.c.b16 %v9577, %v9575
        %v9760 = vpack.c.b16 %v9578, %v9576
        %v9761 = vpack.c.b16 %v9581, %v9579
        %v9762 = vpack.c.b16 %v9582, %v9580
        %v9763 = vpack.c.b16 %v9585, %v9583
        %v9764 = vpack.c.b16 %v9586, %v9584
        %v9765 = vpack.c.b16 %v9589, %v9587
        %v9766 = vpack.c.b16 %v9590, %v9588
        %v9767 = vpack.c.b16 %v9593, %v9591
        %v9768 = vpack.c.b16 %v9594, %v9592
        %v9769 = vpack.c.b16 %v9597, %v9595
        %v9770 = vpack.c.b16 %v9598, %v9596
        %v9771 = vpack.c.b16 %v9601, %v9599
        %v9772 = vpack.c.b16 %v9602, %v9600
        %v9773 = vpack.c.b16 %v9605, %v9603
        %v9774 = vpack.c.b16 %v9606, %v9604
        %v9775 = vpack.c.b16 %v9609, %v9607
        %v9776 = vpack.c.b16 %v9610, %v9608
        %v9777 = vpack.c.b16 %v9613, %v9611
        %v9778 = vpack.c.b16 %v9614, %v9612
        %v9779 = vpack.c.b16 %v9617, %v9615
        %v9780 = vpack.c.b16 %v9618, %v9616
        %v9781 = vpack.c.b16 %v9621, %v9619
        %v9782 = vpack.c.b16 %v9622, %v9620
        %v9783 = vpack.c.b16 %v9625, %v9623
        %v9784 = vpack.c.b16 %v9626, %v9624
        %v9785 = vpack.c.b16 %v9629, %v9627
        %v9786 = vpack.c.b16 %v9630, %v9628
        %v9787 = vpack.c.b16 %v9633, %v9631
        %v9788 = vpack.c.b16 %v9634, %v9632
        %v9789 = vpack.c.b16 %v9637, %v9635
        %v9790 = vpack.c.b16 %v9638, %v9636
        %v9791 = vpack.c.b16 %v9641, %v9639
        %v9792 = vpack.c.b16 %v9642, %v9640
        %v9793 = vpack.c.b16 %v9645, %v9643
        %v9794 = vpack.c.b16 %v9646, %v9644
        %v9795 = vpack.c.b16 %v9649, %v9647
        %v9796 = vpack.c.b16 %v9650, %v9648
        %v9797 = vpack.c.b16 %v9653, %v9651
        %v9798 = vpack.c.b16 %v9654, %v9652
        %v9799 = vpack.c.b16 %v9657, %v9655
        %v9800 = vpack.c.b16 %v9658, %v9656
        %v9801 = vpack.c.b16 %v9661, %v9659
        %v9802 = vpack.c.b16 %v9662, %v9660
        %v9803 = vpack.c.b16 %v9665, %v9663
        %v9804 = vpack.c.b16 %v9666, %v9664
        %v9805 = vpack.c.b16 %v9669, %v9667
        %v9806 = vpack.c.b16 %v9670, %v9668
        %v9807 = vpack.c.b16 %v9673, %v9671
        %v9808 = vpack.c.b16 %v9674, %v9672
        %v9809 = vpack.c.b16 %v9677, %v9675
        %v9810 = vpack.c.b16 %v9678, %v9676
        %v9811 = vpack.c.b16 %v9681, %v9679
        %v9812 = vpack.c.b16 %v9682, %v9680
        %v9813 = vpack.c.b16 %v9685, %v9683
        %v9814 = vpack.c.b16 %v9686, %v9684
        %9943 = vmatprep.subr.bf16.mxu0 %v9702
        %9944 = vmatpush1.bf16.msra.mxu0 %v9701
        %9945 = vmatprep.subr.bf16.mxu0 %v9700
        %9946 = vmatpush1.bf16.msra.mxu0 %v9699
        %9947 = vmatprep.subr.bf16.mxu0 %v9698
        %9948 = vmatpush1.bf16.msra.mxu0 %v9697
        %9949 = vmatprep.subr.bf16.mxu0 %v9696
        %9950 = vmatpush1.bf16.msra.mxu0 %v9695
        %9951 = vmatprep.subr.bf16.mxu0 %v9694
        %9952 = vmatpush1.bf16.msra.mxu0 %v9693
        %9953 = vmatprep.subr.bf16.mxu0 %v9692
        %9954 = vmatpush1.bf16.msra.mxu0 %v9691
        %9955 = vmatprep.subr.bf16.mxu0 %v9690
        %9956 = vmatpush1.bf16.msra.mxu0 %v9689
        %9957 = vmatprep.subr.bf16.mxu0 %v9688
        %9958 = vmatpush1.bf16.msra.mxu0 %v9687
        %9959 = vmatprep.subr.bf16.mxu0 %v9718
        %9960 = vmatpush2.bf16.msra.mxu0 %v9717
        %9961 = vmatprep.subr.bf16.mxu0 %v9716
        %9962 = vmatpush2.bf16.msra.mxu0 %v9715
        %9963 = vmatprep.subr.bf16.mxu0 %v9714
        %9964 = vmatpush2.bf16.msra.mxu0 %v9713
        %9965 = vmatprep.subr.bf16.mxu0 %v9712
        %9966 = vmatpush2.bf16.msra.mxu0 %v9711
        %9967 = vmatprep.subr.bf16.mxu0 %v9710
        %9968 = vmatpush2.bf16.msra.mxu0 %v9709
        %9969 = vmatprep.subr.bf16.mxu0 %v9708
        %9970 = vmatpush2.bf16.msra.mxu0 %v9707
        %9971 = vmatprep.subr.bf16.mxu0 %v9706
        %9972 = vmatpush2.bf16.msra.mxu0 %v9705
        %9973 = vmatprep.subr.bf16.mxu0 %v9704
        %9974 = vmatpush2.bf16.msra.mxu0 %v9703
        %9975 = vmatprep.mubr.bf16.mxu0 %v9167
        %9976 = vmatmul.mubr.bf16.gmra.mxu0 %v9166
        %v9977 = vpop.f32.mrf.mxu0
        %v9978 = vadd.f32 0.0, %v9977
        %v9979 = vpop.f32.mrf.mxu0
        %v9980 = vadd.f32 0.0, %v9979
        %v9981 = vpop.f32.mrf.mxu0
        %v9982 = vadd.f32 0.0, %v9981
        %v9983 = vpop.f32.mrf.mxu0
        %v9984 = vadd.f32 0.0, %v9983
        %9985 = vdwg.mxu0
        %9986 = vmatprep.subr.bf16.mxu0 %v9734
        %9987 = vmatpush1.bf16.msra.mxu0 %v9733
        %9988 = vmatprep.subr.bf16.mxu0 %v9732
        %9989 = vmatpush1.bf16.msra.mxu0 %v9731
        %9990 = vmatprep.subr.bf16.mxu0 %v9730
        %9991 = vmatpush1.bf16.msra.mxu0 %v9729
        %9992 = vmatprep.subr.bf16.mxu0 %v9728
        %9993 = vmatpush1.bf16.msra.mxu0 %v9727
        %9994 = vmatprep.subr.bf16.mxu0 %v9726
        %9995 = vmatpush1.bf16.msra.mxu0 %v9725
        %9996 = vmatprep.subr.bf16.mxu0 %v9724
        %9997 = vmatpush1.bf16.msra.mxu0 %v9723
        %9998 = vmatprep.subr.bf16.mxu0 %v9722
        %9999 = vmatpush1.bf16.msra.mxu0 %v9721
        %10000 = vmatprep.subr.bf16.mxu0 %v9720
        %10001 = vmatpush1.bf16.msra.mxu0 %v9719
        %10002 = vmatprep.subr.bf16.mxu0 %v9750
        %10003 = vmatpush2.bf16.msra.mxu0 %v9749
        %10004 = vmatprep.subr.bf16.mxu0 %v9748
        %10005 = vmatpush2.bf16.msra.mxu0 %v9747
        %10006 = vmatprep.subr.bf16.mxu0 %v9746
        %10007 = vmatpush2.bf16.msra.mxu0 %v9745
        %10008 = vmatprep.subr.bf16.mxu0 %v9744
        %10009 = vmatpush2.bf16.msra.mxu0 %v9743
        %10010 = vmatprep.subr.bf16.mxu0 %v9742
        %10011 = vmatpush2.bf16.msra.mxu0 %v9741
        %10012 = vmatprep.subr.bf16.mxu0 %v9740
        %10013 = vmatpush2.bf16.msra.mxu0 %v9739
        %10014 = vmatprep.subr.bf16.mxu0 %v9738
        %10015 = vmatpush2.bf16.msra.mxu0 %v9737
        %10016 = vmatprep.subr.bf16.mxu0 %v9736
        %10017 = vmatpush2.bf16.msra.mxu0 %v9735
        %10018 = vmatprep.mubr.bf16.mxu0 %v9169
        %10019 = vmatmul.mubr.bf16.gmra.mxu0 %v9168
        %v10020 = vpop.f32.mrf.mxu0
        %v10021 = vadd.f32 %v9978, %v10020
        %v10022 = vpop.f32.mrf.mxu0
        %v10023 = vadd.f32 %v9980, %v10022
        %v10024 = vpop.f32.mrf.mxu0
        %v10025 = vadd.f32 %v9982, %v10024
        %v10026 = vpop.f32.mrf.mxu0
        %v10027 = vadd.f32 %v9984, %v10026
        %10028 = vdwg.mxu0
        %10029 = vmatprep.subr.bf16.mxu0 %v9766
        %10030 = vmatpush1.bf16.msra.mxu0 %v9765
        %10031 = vmatprep.subr.bf16.mxu0 %v9764
        %10032 = vmatpush1.bf16.msra.mxu0 %v9763
        %10033 = vmatprep.subr.bf16.mxu0 %v9762
        %10034 = vmatpush1.bf16.msra.mxu0 %v9761
        %10035 = vmatprep.subr.bf16.mxu0 %v9760
        %10036 = vmatpush1.bf16.msra.mxu0 %v9759
        %10037 = vmatprep.subr.bf16.mxu0 %v9758
        %10038 = vmatpush1.bf16.msra.mxu0 %v9757
        %10039 = vmatprep.subr.bf16.mxu0 %v9756
        %10040 = vmatpush1.bf16.msra.mxu0 %v9755
        %10041 = vmatprep.subr.bf16.mxu0 %v9754
        %10042 = vmatpush1.bf16.msra.mxu0 %v9753
        %10043 = vmatprep.subr.bf16.mxu0 %v9752
        %10044 = vmatpush1.bf16.msra.mxu0 %v9751
        %10045 = vmatprep.subr.bf16.mxu0 %v9782
        %10046 = vmatpush2.bf16.msra.mxu0 %v9781
        %10047 = vmatprep.subr.bf16.mxu0 %v9780
        %10048 = vmatpush2.bf16.msra.mxu0 %v9779
        %10049 = vmatprep.subr.bf16.mxu0 %v9778
        %10050 = vmatpush2.bf16.msra.mxu0 %v9777
        %10051 = vmatprep.subr.bf16.mxu0 %v9776
        %10052 = vmatpush2.bf16.msra.mxu0 %v9775
        %10053 = vmatprep.subr.bf16.mxu0 %v9774
        %10054 = vmatpush2.bf16.msra.mxu0 %v9773
        %10055 = vmatprep.subr.bf16.mxu0 %v9772
        %10056 = vmatpush2.bf16.msra.mxu0 %v9771
        %10057 = vmatprep.subr.bf16.mxu0 %v9770
        %10058 = vmatpush2.bf16.msra.mxu0 %v9769
        %10059 = vmatprep.subr.bf16.mxu0 %v9768
        %10060 = vmatpush2.bf16.msra.mxu0 %v9767
        %10061 = vmatprep.mubr.bf16.mxu0 %v9171
        %10062 = vmatmul.mubr.bf16.gmra.mxu0 %v9170
        %v10063 = vpop.f32.mrf.mxu0
        %v10064 = vadd.f32 %v10021, %v10063
        %v10065 = vpop.f32.mrf.mxu0
        %v10066 = vadd.f32 %v10023, %v10065
        %v10067 = vpop.f32.mrf.mxu0
        %v10068 = vadd.f32 %v10025, %v10067
        %v10069 = vpop.f32.mrf.mxu0
        %v10070 = vadd.f32 %v10027, %v10069
        %10071 = vdwg.mxu0
        %10072 = vmatprep.subr.bf16.mxu0 %v9798
        %10073 = vmatpush1.bf16.msra.mxu0 %v9797
        %10074 = vmatprep.subr.bf16.mxu0 %v9796
        %10075 = vmatpush1.bf16.msra.mxu0 %v9795
        %10076 = vmatprep.subr.bf16.mxu0 %v9794
        %10077 = vmatpush1.bf16.msra.mxu0 %v9793
        %10078 = vmatprep.subr.bf16.mxu0 %v9792
        %10079 = vmatpush1.bf16.msra.mxu0 %v9791
        %10080 = vmatprep.subr.bf16.mxu0 %v9790
        %10081 = vmatpush1.bf16.msra.mxu0 %v9789
        %10082 = vmatprep.subr.bf16.mxu0 %v9788
        %10083 = vmatpush1.bf16.msra.mxu0 %v9787
        %10084 = vmatprep.subr.bf16.mxu0 %v9786
        %10085 = vmatpush1.bf16.msra.mxu0 %v9785
        %10086 = vmatprep.subr.bf16.mxu0 %v9784
        %10087 = vmatpush1.bf16.msra.mxu0 %v9783
        %10088 = vmatprep.subr.bf16.mxu0 %v9814
        %10089 = vmatpush2.bf16.msra.mxu0 %v9813
        %10090 = vmatprep.subr.bf16.mxu0 %v9812
        %10091 = vmatpush2.bf16.msra.mxu0 %v9811
        %10092 = vmatprep.subr.bf16.mxu0 %v9810
        %10093 = vmatpush2.bf16.msra.mxu0 %v9809
        %10094 = vmatprep.subr.bf16.mxu0 %v9808
        %10095 = vmatpush2.bf16.msra.mxu0 %v9807
        %10096 = vmatprep.subr.bf16.mxu0 %v9806
        %10097 = vmatpush2.bf16.msra.mxu0 %v9805
        %10098 = vmatprep.subr.bf16.mxu0 %v9804
        %10099 = vmatpush2.bf16.msra.mxu0 %v9803
        %10100 = vmatprep.subr.bf16.mxu0 %v9802
        %10101 = vmatpush2.bf16.msra.mxu0 %v9801
        %10102 = vmatprep.subr.bf16.mxu0 %v9800
        %10103 = vmatpush2.bf16.msra.mxu0 %v9799
        %10104 = vmatprep.mubr.bf16.mxu0 %v9173
        %10105 = vmatmul.mubr.bf16.gmra.mxu0 %v9172
        %v10106 = vpop.f32.mrf.mxu0
        %v10107 = vadd.f32 %v10064, %v10106
        %v10108 = vpop.f32.mrf.mxu0
        %v10109 = vadd.f32 %v10066, %v10108
        %v10110 = vpop.f32.mrf.mxu0
        %v10111 = vadd.f32 %v10068, %v10110
        %v10112 = vpop.f32.mrf.mxu0
        %v10113 = vadd.f32 %v10070, %v10112
        %10114 = vdwg.mxu0
        %v10115 = vadd.f32 %v8090, %v10107
        %v10116 = vadd.f32 %v8091, %v10109
        %v10117 = vadd.f32 %v8092, %v10111
        %v10118 = vadd.f32 %v8093, %v10113
        %s10119 = scalar_lea.vmem %s16, 2
        %v10120 = vld [vmem:[%s10119] sm:$0x3]
        %v10122 = vlaneseq
        %v10123 = vshrl.u32 %v10122, 7
        %v10124 = vsub.s32 0, %v10123
        %v10125 = vrot.slane %v10120, %v10124
        %v10126 = vlaneseq
        %v10127 = vshrl.u32 %v10126, 7
        %v10128 = vsub.s32 1, %v10127
        %v10129 = vrot.slane %v10120, %v10128
        %v10132 = vadd.f32 %v10115, %v10125
        %v10133 = vadd.f32 %v10116, %v10129
        %v10134 = vadd.f32 %v10117, %v10125
        %v10135 = vadd.f32 %v10118, %v10129
        %v10136 = vld [vmem:[%s17] sm:$0x3]
        %v10137 = vld [vmem:[%s18] sm:$0x3]
        %v10138 = vadd.f32 %v10132, %v10133
        %10139 = vadd.xlane.f32.xlu0 %v10138
        %v10140 = vpop.xlane.xlu0 %10139
        %v10141 = vsel %vm2869, %v10134, 0.0
        %v10142 = vsel %vm2869, %v10135, 0.0
        %v10143 = vadd.f32 %v10141, %v10142
        %10144 = vadd.xlane.f32.xlu0 %v10143
        %v10145 = vpop.xlane.xlu0 %10144
        %v10146 = vmul.f32 %v10140, %v2875
        %v10147 = vmul.f32 %v10145, %v2875
        %v10148 = vsub.f32 %v10132, %v10146
        %v10149 = vsub.f32 %v10133, %v10146
        %v10150 = vsub.f32 %v10134, %v10147
        %v10151 = vsub.f32 %v10135, %v10147
        %v10152 = vmul.f32 %v10148, %v10148
        %v10153 = vmul.f32 %v10149, %v10149
        %v10154 = vmul.f32 %v10150, %v10150
        %v10155 = vmul.f32 %v10151, %v10151
        %v10156 = vadd.f32 %v10152, %v10153
        %10157 = vadd.xlane.f32.xlu0 %v10156
        %v10158 = vpop.xlane.xlu0 %10157
        %v10159 = vsel %vm2869, %v10154, 0.0
        %v10160 = vsel %vm2869, %v10155, 0.0
        %v10161 = vadd.f32 %v10159, %v10160
        %10162 = vadd.xlane.f32.xlu0 %v10161
        %v10163 = vpop.xlane.xlu0 %10162
        %v10164 = vmul.f32 %v10158, %v2875
        %v10165 = vmul.f32 %v10163, %v2875
        %v10166 = vadd.f32 %v10164, 1e-06
        %v10167 = vadd.f32 %v10165, 1e-06
        %v10168 = vrsqrt.pop %v10166
        %v10169 = vrsqrt.pop %v10167
        %v10170 = vmul.f32 %v10148, %v10168
        %v10171 = vmul.f32 %v10149, %v10168
        %v10172 = vmul.f32 %v10150, %v10169
        %v10173 = vmul.f32 %v10151, %v10169
        %v10175 = vlaneseq
        %v10176 = vshrl.u32 %v10175, 7
        %v10177 = vsub.s32 0, %v10176
        %v10178 = vrot.slane %v10136, %v10177
        %v10179 = vlaneseq
        %v10180 = vshrl.u32 %v10179, 7
        %v10181 = vsub.s32 1, %v10180
        %v10182 = vrot.slane %v10136, %v10181
        %v10185 = vmul.f32 %v10170, %v10178
        %v10186 = vmul.f32 %v10171, %v10182
        %v10187 = vmul.f32 %v10172, %v10178
        %v10188 = vmul.f32 %v10173, %v10182
        %v10190 = vlaneseq
        %v10191 = vshrl.u32 %v10190, 7
        %v10192 = vsub.s32 0, %v10191
        %v10193 = vrot.slane %v10137, %v10192
        %v10194 = vlaneseq
        %v10195 = vshrl.u32 %v10194, 7
        %v10196 = vsub.s32 1, %v10195
        %v10197 = vrot.slane %v10137, %v10196
        %v10200 = vadd.f32 %v10185, %v10193
        %v10201 = vadd.f32 %v10186, %v10197
        %v10202 = vadd.f32 %v10187, %v10193
        %v10203 = vadd.f32 %v10188, %v10197
        %v10204 = vpack.c.bf16 %v10202, %v10200
        %v10205 = vpack.c.bf16 %v10203, %v10201
        %v10206 = vld [vmem:[#allocation25] sm:$0xf]
        %v10207 = vld [vmem:[#allocation25 + $0x4] sm:$0xf]
        %v10208 = vld [vmem:[#allocation25 + $0x8] sm:$0xf]
        %v10209 = vld [vmem:[#allocation25 + $0xc] sm:$0xf]
        %v10210 = vld [vmem:[#allocation25 + $0x10] sm:$0xf]
        %v10211 = vld [vmem:[#allocation25 + $0x14] sm:$0xf]
        %v10212 = vld [vmem:[#allocation25 + $0x18] sm:$0xf]
        %v10213 = vld [vmem:[#allocation25 + $0x1c] sm:$0xf]
        %v10214 = vld [vmem:[#allocation25 + $0x20] sm:$0xf]
        %v10215 = vld [vmem:[#allocation25 + $0x24] sm:$0xf]
        %v10216 = vld [vmem:[#allocation25 + $0x28] sm:$0xf]
        %v10217 = vld [vmem:[#allocation25 + $0x2c] sm:$0xf]
        %v10218 = vld [vmem:[#allocation25 + $0x30] sm:$0xf]
        %v10219 = vld [vmem:[#allocation25 + $0x34] sm:$0xf]
        %v10220 = vld [vmem:[#allocation25 + $0x38] sm:$0xf]
        %v10221 = vld [vmem:[#allocation25 + $0x3c] sm:$0xf]
        %v10222 = vld [vmem:[#allocation25 + $0x40] sm:$0xf]
        %v10223 = vld [vmem:[#allocation25 + $0x44] sm:$0xf]
        %v10224 = vld [vmem:[#allocation25 + $0x48] sm:$0xf]
        %v10225 = vld [vmem:[#allocation25 + $0x4c] sm:$0xf]
        %v10226 = vld [vmem:[#allocation25 + $0x50] sm:$0xf]
        %v10227 = vld [vmem:[#allocation25 + $0x54] sm:$0xf]
        %v10228 = vld [vmem:[#allocation25 + $0x58] sm:$0xf]
        %v10229 = vld [vmem:[#allocation25 + $0x5c] sm:$0xf]
        %v10230 = vld [vmem:[#allocation25 + $0x60] sm:$0xf]
        %v10231 = vld [vmem:[#allocation25 + $0x64] sm:$0xf]
        %v10232 = vld [vmem:[#allocation25 + $0x68] sm:$0xf]
        %v10233 = vld [vmem:[#allocation25 + $0x6c] sm:$0xf]
        %v10234 = vld [vmem:[#allocation25 + $0x70] sm:$0xf]
        %v10235 = vld [vmem:[#allocation25 + $0x74] sm:$0xf]
        %v10236 = vld [vmem:[#allocation25 + $0x78] sm:$0xf]
        %v10237 = vld [vmem:[#allocation25 + $0x7c] sm:$0xf]
        %v10238 = vld [vmem:[%s20] sm:$0x1]
        %v10240 = vlaneseq
        %v10241 = vshrl.u32 %v10240, 7
        %v10242 = vsub.s32 0, %v10241
        %v10243 = vrot.slane %v10238, %v10242
        %v10277 = vunpack.c.l.b16 %v10206
        %v10278 = vunpack.c.l.b16 %v10207
        %v10279 = vunpack.c.l.b16 %v10208
        %v10280 = vunpack.c.l.b16 %v10209
        %v10281 = vunpack.c.l.b16 %v10210
        %v10282 = vunpack.c.l.b16 %v10211
        %v10283 = vunpack.c.l.b16 %v10212
        %v10284 = vunpack.c.l.b16 %v10213
        %v10285 = vunpack.c.l.b16 %v10214
        %v10286 = vunpack.c.l.b16 %v10215
        %v10287 = vunpack.c.l.b16 %v10216
        %v10288 = vunpack.c.l.b16 %v10217
        %v10289 = vunpack.c.l.b16 %v10218
        %v10290 = vunpack.c.l.b16 %v10219
        %v10291 = vunpack.c.l.b16 %v10220
        %v10292 = vunpack.c.l.b16 %v10221
        %v10293 = vunpack.c.l.b16 %v10222
        %v10294 = vunpack.c.l.b16 %v10223
        %v10295 = vunpack.c.l.b16 %v10224
        %v10296 = vunpack.c.l.b16 %v10225
        %v10297 = vunpack.c.l.b16 %v10226
        %v10298 = vunpack.c.l.b16 %v10227
        %v10299 = vunpack.c.l.b16 %v10228
        %v10300 = vunpack.c.l.b16 %v10229
        %v10301 = vunpack.c.l.b16 %v10230
        %v10302 = vunpack.c.l.b16 %v10231
        %v10303 = vunpack.c.l.b16 %v10232
        %v10304 = vunpack.c.l.b16 %v10233
        %v10305 = vunpack.c.l.b16 %v10234
        %v10306 = vunpack.c.l.b16 %v10235
        %v10307 = vunpack.c.l.b16 %v10236
        %v10308 = vunpack.c.l.b16 %v10237
        %v10309 = vpack.c.b16 %v10278, %v10277
        %v10310 = vpack.c.b16 %v10280, %v10279
        %v10311 = vpack.c.b16 %v10282, %v10281
        %v10312 = vpack.c.b16 %v10284, %v10283
        %v10313 = vpack.c.b16 %v10286, %v10285
        %v10314 = vpack.c.b16 %v10288, %v10287
        %v10315 = vpack.c.b16 %v10290, %v10289
        %v10316 = vpack.c.b16 %v10292, %v10291
        %v10317 = vpack.c.b16 %v10294, %v10293
        %v10318 = vpack.c.b16 %v10296, %v10295
        %v10319 = vpack.c.b16 %v10298, %v10297
        %v10320 = vpack.c.b16 %v10300, %v10299
        %v10321 = vpack.c.b16 %v10302, %v10301
        %v10322 = vpack.c.b16 %v10304, %v10303
        %v10323 = vpack.c.b16 %v10306, %v10305
        %v10324 = vpack.c.b16 %v10308, %v10307
        %10341 = vmatprep.subr.bf16.mxu0 0
        %10342 = vmatpush1.bf16.msra.mxu0 %v10316
        %10343 = vmatprep.subr.bf16.mxu0 0
        %10344 = vmatpush1.bf16.msra.mxu0 %v10315
        %10345 = vmatprep.subr.bf16.mxu0 0
        %10346 = vmatpush1.bf16.msra.mxu0 %v10314
        %10347 = vmatprep.subr.bf16.mxu0 0
        %10348 = vmatpush1.bf16.msra.mxu0 %v10313
        %10349 = vmatprep.subr.bf16.mxu0 0
        %10350 = vmatpush1.bf16.msra.mxu0 %v10312
        %10351 = vmatprep.subr.bf16.mxu0 0
        %10352 = vmatpush1.bf16.msra.mxu0 %v10311
        %10353 = vmatprep.subr.bf16.mxu0 0
        %10354 = vmatpush1.bf16.msra.mxu0 %v10310
        %10355 = vmatprep.subr.bf16.mxu0 0
        %10356 = vmatpush1.bf16.msra.mxu0 %v10309
        %10357 = vmatprep.subr.bf16.mxu0 0
        %10358 = vmatpush2.bf16.msra.mxu0 %v10324
        %10359 = vmatprep.subr.bf16.mxu0 0
        %10360 = vmatpush2.bf16.msra.mxu0 %v10323
        %10361 = vmatprep.subr.bf16.mxu0 0
        %10362 = vmatpush2.bf16.msra.mxu0 %v10322
        %10363 = vmatprep.subr.bf16.mxu0 0
        %10364 = vmatpush2.bf16.msra.mxu0 %v10321
        %10365 = vmatprep.subr.bf16.mxu0 0
        %10366 = vmatpush2.bf16.msra.mxu0 %v10320
        %10367 = vmatprep.subr.bf16.mxu0 0
        %10368 = vmatpush2.bf16.msra.mxu0 %v10319
        %10369 = vmatprep.subr.bf16.mxu0 0
        %10370 = vmatpush2.bf16.msra.mxu0 %v10318
        %10371 = vmatprep.subr.bf16.mxu0 0
        %10372 = vmatpush2.bf16.msra.mxu0 %v10317
        %10373 = vmatprep.mubr.bf16.mxu0 %v10205
        %10374 = vmatmul.mubr.bf16.gmra.mxu0 %v10204
        %v10375 = vpop.f32.mrf.mxu0
        %v10376 = vadd.f32 %v10243, %v10375
        %v10377 = vpop.f32.mrf.mxu0
        %v10378 = vpop.f32.mrf.mxu0
        %v10379 = vpop.f32.mrf.mxu0
        %10380 = vdwg.mxu0
        %10381 = vst [vmem:[%s883] sm:$0x1] %v10376
        %s10382 = sand.u32 %s506, 1
        %s10383 = scalar_lea.sflag [#allocation6], %s10382
        %s10384 = sand.u32 %s506, 1
        %s10385 = scalar_lea.vmem [#allocation27], %s10384
        // Predicated region
        $region161: #{tpu_custom_call.1} parent=103 // pred_check
          %p10386 = pneg %p516
        $region162: #{tpu_custom_call.1} parent=103 // pred_check_branch
          %10388 = sbr.rel (%p10386) target = $region164
        $region163: #{tpu_custom_call.1} parent=103 // pred_region
          %s10390 = ssub.s32 16, 16
          %10391 = vsyncadd %s10383, %s10390
          %s10392 = smul.addr %s47, 16
          %s10393 = scalar_lea.hbm %s21, %s10392
          %s10395 = sshll.u32 %s10385, 4
          %s10396 = int_to_ptr.vmem [resolvable:$true] %s10395
          %10398 = dma.vmem_to_hbm [thread:$0]  %s10396, 16, %s10393, %s10383
        $region164: #{tpu_custom_call.1} parent=103 // pred_fallthru
          _
      $region104: #{tpu_custom_call.1} parent=5 // pred_fallthru
        _
      %p10399 = scmp.le.s32.totalorder 2, %s42
      // Predicated region
      $region165: #{tpu_custom_call.1} parent=5 // pred_check
        %p10400 = pneg %p10399
      $region166: #{tpu_custom_call.1} parent=5 // pred_check_branch
        %10402 = sbr.rel (%p10400) target = $region168
      $region167: #{tpu_custom_call.1} parent=5 // pred_region
        %s10403 = ssub.s32 %s42, 2
        // Predicated region
        $region169: #{tpu_custom_call.1} parent=167 // pred_check
          %p10404 = pneg %p522
        $region170: #{tpu_custom_call.1} parent=167 // pred_check_branch
          %10406 = sbr.rel (%p10404) target = $region172
        $region171: #{tpu_custom_call.1} parent=167 // pred_region
          %s10407 = sand.u32 %s507, 1
          %s10408 = scalar_lea.sflag [#allocation6], %s10407
          %s10409 = sand.u32 %s507, 1
          %s10410 = scalar_lea.vmem [#allocation27], %s10409
          %10411 = dma.done %s10408, 16
        $region172: #{tpu_custom_call.1} parent=167 // pred_fallthru
          _
      $region168: #{tpu_custom_call.1} parent=5 // pred_fallthru
        _
    $region6: #{tpu_custom_call.1} parent=1 // loop_footer
      %s46 = sadd.s32 1, %s42
    $region7: #{tpu_custom_call.1} parent=1 // loop_footer_branch
      %41 = sbr.rel target = $region3
    $region8: #{tpu_custom_call.1} parent=1 // loop_exit
      _
    %10412 = vsyncpa [#allocation5], 1
    %s10413 = scalar_lea.sflag [#allocation5], 1
    %10414 = vsyncpa %s10413, 1
    %10415 = vsyncpa [#allocation8], 1
    %s10416 = scalar_lea.sflag [#allocation8], 1
    %10417 = vsyncpa %s10416, 1
    %10418 = vsyncpa [#allocation11], 1
    %10419 = vsyncpa [#allocation14], 1
    %10420 = vsyncpa [#allocation17], 1
    %10421 = vsyncpa [#allocation20], 1
    %10422 = vsyncpa [#allocation23], 1
    %10423 = vsyncpa [#allocation26], 1
    %10424 = vsyncpa [#allocation6], 1
    %s10425 = scalar_lea.sflag [#allocation6], 1
    %10426 = vsyncpa %s10425, 1

</llo_original>
